<compile_context>
chip_gen: v5e
topology: v5e:2x2
jax: 0.10.0
libtpu: 0.0.40
codegen_flags: <defaults>
</compile_context>

<pallas_src>
import functools

import jax
import jax.numpy as jnp
from jax.experimental import pallas as pl
from jax.experimental.pallas import tpu as pltpu


# ------------------------------------------------------------------------------------
# small config / helpers
# ------------------------------------------------------------------------------------
_TEMPORAL_ROW_CAP = 1024   # rows (G*S) per temporal-attention grid step; v6e/v5e (128
                           # MiB VMEM) can raise to 2048-4096, keep <=1024 on v7x.
_MLP_ROW_CAP = 512         # rows per MLP grid step; keeps the (rb, 4C) f32 GELU
                           # intermediate VMEM-safe on v7x; v6e can raise to 1024.

_BUFFERED_ONE = None
_VMEM_LIMIT = None


def _probe_kernel(x_ref, o_ref):
    o_ref[...] = x_ref[...]


def _buffered_one_supported():
    """Probe pl.Buffered(1) (single-buffered constant blocks) once; fall back to the
    default double buffering if the installed JAX rejects it."""
    global _BUFFERED_ONE
    if _BUFFERED_ONE is not None:
        return _BUFFERED_ONE
    try:
        f = pl.pallas_call(
            _probe_kernel,
            out_shape=jax.ShapeDtypeStruct((16, 128), jnp.float32),
            grid=(2,),
            in_specs=[pl.BlockSpec((8, 128), lambda i: (0, 0),
                                   pipeline_mode=pl.Buffered(1))],
            out_specs=pl.BlockSpec((8, 128), lambda i: (i, 0)),
        )
        jax.block_until_ready(f(jnp.ones((8, 128), jnp.float32)))
        _BUFFERED_ONE = True
    except Exception:
        _BUFFERED_ONE = False
    return _BUFFERED_ONE


def _const_spec(shape):
    """BlockSpec for a grid-invariant (resident) weight/bias: constant index_map and,
    when supported, a single buffer (double-buffering constants only doubles VMEM)."""
    idx = lambda i: (0,) * len(shape)
    if _buffered_one_supported():
        return pl.BlockSpec(shape, idx, pipeline_mode=pl.Buffered(1))
    return pl.BlockSpec(shape, idx)


def _vmem_limit_bytes():
    """Explicit scoped-VMEM limit: the defaults (16 MiB v5e / 32 MiB v6e+v7x) are too
    small for resident weights + activations at real TimeSformer dims (C=768,
    hidden=3072).  Target ~(physical - 8 MiB), capped at 100 MiB."""
    global _VMEM_LIMIT
    if _VMEM_LIMIT is None:
        try:
            cap = int(pltpu.get_tpu_info().vmem_capacity_bytes)
        except Exception:
            cap = 64 * 1024 * 1024
        _VMEM_LIMIT = max(32 * 1024 * 1024,
                          min(cap - 8 * 1024 * 1024, 100 * 1024 * 1024))
    return _VMEM_LIMIT


def _compiler_params():
    return pltpu.CompilerParams(dimension_semantics=("parallel",),
                                vmem_limit_bytes=_vmem_limit_bytes())


def _pick_group(n, s, row_cap):
    """Sequences per grid step: batch ~row_cap rows (g*s) to amortize the ~0.35us/step
    overhead and give the MXU long M dims, keep >=2 grid steps when possible (v7x
    megacore), and require g | n so no padding is needed."""
    g = max(1, min(n, row_cap // max(s, 1)))
    if n >= 2:
        g = min(g, max(1, n // 2))
    while n % g:
        g -= 1
    return g


def _pick_row_block(r, cap=_MLP_ROW_CAP):
    """Largest row block that divides r exactly (no pad / slice HBM copies), is a
    multiple of 8 (sublane rule) and <= cap; prefers >=2 grid steps for megacore."""
    if r <= cap:
        for rb in range(min(cap, r // 2), 0, -1):
            if r % rb == 0 and rb % 8 == 0:
                return rb
        return r
    for rb in range(cap, 0, -1):
        if r % rb == 0 and rb % 8 == 0:
            return rb
    return r  # fallback: one block (block dim == full dim satisfies the (8,128) rule)


def _attn_chunks(gh, s, budget=8 * 1024 * 1024):
    """Split the (G*H) batched-attention axis so the f32 logits stay under ~budget;
    returns a divisor of gh (1 at small dims, 2 at real spatial dims)."""
    n = max(1, -(-(gh * s * s * 4) // budget))
    n = min(n, gh)
    while gh % n:
        n += 1
    return n


# ------------------------------------------------------------------------------------
# in-kernel math (f32 VPU/EUP; bf16 MXU operands with f32 accumulation)
# ------------------------------------------------------------------------------------
def _layernorm(x, gamma, beta, eps=1e-5):
    mu = jnp.mean(x, axis=-1, keepdims=True)
    var = jnp.mean(jnp.square(x - mu), axis=-1, keepdims=True)
    return (x - mu) * jax.lax.rsqrt(var + eps) * gamma + beta


def _gelu_tanh(x):
    # torch.nn.GELU(approximate='tanh'); tanh runs on the EUP (otherwise-idle slot)
    # instead of the previous ~10 full-size VALU ops of a hand-rolled erf.
    # TODO(synk): PyTorch's default exact-erf GELU differs by <~3e-4 abs; use
    # jax.lax.erf here if bit-level parity is required.
    c = 0.7978845608028654  # sqrt(2/pi)
    return 0.5 * x * (1.0 + jnp.tanh(c * (x + 0.044715 * (x * x * x))))


def _mha_core(xb, gamma, beta, wqkv, wproj, bproj, num_heads, eps, chunks):
    """LayerNorm + multi-head self-attention + output projection.

    xb: (G, S, C) f32.  Weights are bf16 with the attention scale pre-folded into the
    q columns of wqkv.  Heads are batched into single einsums (one relayout in, one
    out); `chunks` (static divisor of G*H) bounds the f32 logits' VMEM footprint.
    Returns (G, S, C) f32.
    """
    G, S, C = xb.shape
    H = num_heads
    hd = C // H

    xn = _layernorm(xb, gamma, beta, eps).astype(jnp.bfloat16).reshape(G * S, C)
    qkv = jnp.dot(xn, wqkv, preferred_element_type=jnp.float32)
    qkv = qkv.astype(jnp.bfloat16)                       # drop the f32 qkv early

    def heads(i):                                        # -> (G*H, S, hd) bf16
        part = qkv[:, i * C:(i + 1) * C].reshape(G, S, H, hd)
        return part.transpose(0, 2, 1, 3).reshape(G * H, S, hd)

    q, k, v = heads(0), heads(1), heads(2)

    outs = []
    cs = (G * H) // chunks
    for i in range(chunks):                              # static, usually 1-2
        sl = slice(i * cs, (i + 1) * cs)
        logits = jnp.einsum('bqd,bkd->bqk', q[sl], k[sl],
                            preferred_element_type=jnp.float32)
        logits = logits - jnp.max(logits, axis=-1, keepdims=True)
        p = jnp.exp(logits)
        p = p * pl.reciprocal(jnp.sum(p, axis=-1, keepdims=True), approx=True)
        outs.append(jnp.einsum('bqk,bkd->bqd', p.astype(jnp.bfloat16), v[sl],
                               preferred_element_type=jnp.float32))
    ctx = outs[0] if chunks == 1 else jnp.concatenate(outs, axis=0)   # (G*H, S, hd)

    ctx = ctx.reshape(G, H, S, hd).transpose(0, 2, 1, 3).reshape(G * S, C)
    out = jnp.dot(ctx.astype(jnp.bfloat16), wproj,
                  preferred_element_type=jnp.float32) + bproj
    return out.reshape(G, S, C)


# ------------------------------------------------------------------------------------
# Kernel 1: temporal branch  —  temporal_fc(attn(LN(x))) + x   (fully fused)
# ------------------------------------------------------------------------------------
def _temporal_mha_kernel(x_ref, g_ref, b_ref, wqkv_ref, wproj_ref, bproj_ref,
                         fcw_ref, fcb_ref, o_ref, *, num_heads, eps, chunks):
    xb = x_ref[...].astype(jnp.float32)                  # (G, T, C) raw rows
    G, S, C = xb.shape
    attn = _mha_core(xb, g_ref[...], b_ref[...], wqkv_ref[...], wproj_ref[...],
                     bproj_ref[...], num_heads, eps, chunks)
    y = jnp.dot(attn.reshape(G * S, C).astype(jnp.bfloat16), fcw_ref[...],
                preferred_element_type=jnp.float32) + fcb_ref[...]
    o_ref[...] = (y.reshape(G, S, C) + xb).astype(o_ref.dtype)


def temporal_attention(x_seq, gamma, beta, wqkv, wproj, bproj, fc_w, fc_b, num_heads):
    N, S, C = x_seq.shape
    G = _pick_group(N, S, _TEMPORAL_ROW_CAP)
    chunks = _attn_chunks(G * num_heads, S)
    seq_spec = pl.BlockSpec((G, S, C), lambda i: (i, 0, 0))
    return pl.pallas_call(
        functools.partial(_temporal_mha_kernel, num_heads=num_heads, eps=1e-5,
                          chunks=chunks),
        out_shape=jax.ShapeDtypeStruct((N, S, C), x_seq.dtype),
        grid=(N // G,),
        in_specs=[seq_spec,
                  _const_spec((1, C)), _const_spec((1, C)),
                  _const_spec((C, 3 * C)), _const_spec((C, C)), _const_spec((1, C)),
                  _const_spec((C, C)), _const_spec((1, C))],
        out_specs=seq_spec,
        compiler_params=_compiler_params(),
    )(x_seq, gamma, beta, wqkv, wproj, bproj, fc_w, fc_b)


# ------------------------------------------------------------------------------------
# Kernel 2: spatial branch.  The '(b (k t)) -> ((b t) k)' transpose is folded into the
# BlockSpecs: input is the k-major (B, K, T, C) view, the relayout to T sequences of
# (cls + K patches) happens in VMEM, and the patch output is written back k-major.
# ------------------------------------------------------------------------------------
def _spatial_mha_kernel(x_ref, cls_ref, g_ref, b_ref, wqkv_ref, wproj_ref, bproj_ref,
                        op_ref, oc_ref, *, num_heads, eps, chunks):
    xp = x_ref[0].astype(jnp.float32)                    # (K, T, C), k-major
    K, T, C = xp.shape
    xp = xp.transpose(1, 0, 2)                           # (T, K, C): per-frame seqs
    cls = cls_ref[0].astype(jnp.float32)                 # (1, C)
    cls = jnp.broadcast_to(cls[None, :, :], (T, 1, C))
    seq = jnp.concatenate([cls, xp], axis=1)             # (T, K+1, C)

    out = _mha_core(seq, g_ref[...], b_ref[...], wqkv_ref[...], wproj_ref[...],
                    bproj_ref[...], num_heads, eps, chunks)      # (T, K+1, C) f32

    oc_ref[0] = out[:, 0, :].astype(oc_ref.dtype)                        # (T, C)
    op_ref[0] = out[:, 1:, :].transpose(1, 0, 2).astype(op_ref.dtype)    # (K, T, C)


def spatial_attention(x4d, cls_tok, gamma, beta, wqkv, wproj, bproj, num_heads):
    B, K, T, C = x4d.shape
    chunks = _attn_chunks(T * num_heads, K + 1)
    return pl.pallas_call(
        functools.partial(_spatial_mha_kernel, num_heads=num_heads, eps=1e-5,
                          chunks=chunks),
        out_shape=(jax.ShapeDtypeStruct((B, K, T, C), x4d.dtype),   # patch out, k-major
                   jax.ShapeDtypeStruct((B, T, C), x4d.dtype)),     # per-frame cls out
        grid=(B,),
        in_specs=[pl.BlockSpec((1, K, T, C), lambda b: (b, 0, 0, 0)),
                  pl.BlockSpec((1, 1, C), lambda b: (b, 0, 0)),
                  _const_spec((1, C)), _const_spec((1, C)),
                  _const_spec((C, 3 * C)), _const_spec((C, C)), _const_spec((1, C))],
        out_specs=(pl.BlockSpec((1, K, T, C), lambda b: (b, 0, 0, 0)),
                   pl.BlockSpec((1, T, C), lambda b: (b, 0, 0))),
        compiler_params=_compiler_params(),
    )(x4d, cls_tok, gamma, beta, wqkv, wproj, bproj)


# ------------------------------------------------------------------------------------
# Kernel 3: fused  s = a + b ;  out = s + Mlp(LayerNorm(s))   (row tiled)
# ------------------------------------------------------------------------------------
def _mlp_kernel(a_ref, b_ref, g_ref, bt_ref, w1_ref, b1_ref, w2_ref, b2_ref, o_ref,
                *, eps):
    s = a_ref[...].astype(jnp.float32) + b_ref[...].astype(jnp.float32)   # (RB, C)
    xn = _layernorm(s, g_ref[...], bt_ref[...], eps)
    h = jnp.dot(xn.astype(jnp.bfloat16), w1_ref[...],
                preferred_element_type=jnp.float32) + b1_ref[...]         # (RB, 4C)
    h = _gelu_tanh(h)
    y = jnp.dot(h.astype(jnp.bfloat16), w2_ref[...],
                preferred_element_type=jnp.float32) + b2_ref[...]
    o_ref[...] = (s + y).astype(o_ref.dtype)


def mlp_residual_sum(a, b, gamma, beta, w1, b1, w2, b2):
    R, C = a.shape
    hidden = w1.shape[1]
    rb = _pick_row_block(R)
    row_spec = pl.BlockSpec((rb, C), lambda i: (i, 0))
    return pl.pallas_call(
        functools.partial(_mlp_kernel, eps=1e-5),
        out_shape=jax.ShapeDtypeStruct((R, C), a.dtype),
        grid=(R // rb,),
        in_specs=[row_spec, row_spec,
                  _const_spec((1, C)), _const_spec((1, C)),
                  _const_spec((C, hidden)), _const_spec((1, hidden)),
                  _const_spec((hidden, C)), _const_spec((1, C))],
        out_specs=row_spec,
        compiler_params=_compiler_params(),
    )(a, b, gamma, beta, w1, b1, w2, b2)


# ------------------------------------------------------------------------------------
# Block forward (minimal XLA glue; params must come from prepare_params)
# ------------------------------------------------------------------------------------
def block_forward(x, params, B, T, K, num_heads):
    B_, M, C = x.shape
    assert B_ == B and T * K + 1 == M and C % num_heads == 0

    # ---- temporal: LN + MHA + proj + temporal_fc + residual, one fused kernel ----
    xt = x[:, 1:, :].reshape(B * K, T, C)                 # 'b (k t) c -> (b k) t c'
    xt2 = temporal_attention(
        xt, params["temporal_norm1_g"], params["temporal_norm1_b"],
        params["temporal_qkv_w"], params["temporal_proj_w"], params["temporal_proj_b"],
        params["temporal_fc_w"], params["temporal_fc_b"], num_heads)
    xt2_4d = xt2.reshape(B, K, T, C)                      # free k-major view

    # ---- spatial attention: transpose folded into the kernel's BlockSpecs ----
    cls_in = x[:, 0:1, :]                                 # (B, 1, C)
    sp_patch, sp_cls = spatial_attention(
        xt2_4d, cls_in, params["norm1_g"], params["norm1_b"],
        params["qkv_w"], params["proj_w"], params["proj_b"], num_heads)
    cls_mean = jnp.mean(sp_cls, axis=1, keepdims=True)    # (B, 1, C)

    # ---- fused (a + b) + Mlp(LN(a + b)): patch rows + cls rows (same kernel) ----
    patch_out = mlp_residual_sum(
        xt2_4d.reshape(B * K * T, C), sp_patch.reshape(B * K * T, C),
        params["norm2_g"], params["norm2_b"],
        params["fc1_w"], params["fc1_b"], params["fc2_w"], params["fc2_b"])
    cls_out = mlp_residual_sum(
        cls_in.reshape(B, C), cls_mean.reshape(B, C),
        params["norm2_g"], params["norm2_b"],
        params["fc1_w"], params["fc1_b"], params["fc2_w"], params["fc2_b"])

    # TODO(synk): the x[:,1:] slice above and this final concat are the only remaining
    # full-activation XLA copies; folding them away needs element-offset index maps.
    return jnp.concatenate([cls_out.reshape(B, 1, C),
                            patch_out.reshape(B, K * T, C)], axis=1)


# ------------------------------------------------------------------------------------
# parameters: synthetic init (PyTorch shapes) + one-time device-side preparation
# ------------------------------------------------------------------------------------
def init_params(key, dim, mlp_ratio=4.0):
    hidden = int(dim * mlp_ratio)
    ks = jax.random.split(key, 12)

    def w(k, fi, fo):
        return jax.random.normal(k, (fi, fo), jnp.float32) * 0.02

    def b(k, n):
        return jax.random.normal(k, (1, n), jnp.float32) * 0.02

    return {
        "temporal_norm1_g": jnp.ones((1, dim), jnp.float32),
        "temporal_norm1_b": jnp.zeros((1, dim), jnp.float32),
        "temporal_qkv_w": w(ks[0], dim, 3 * dim),          # qkv_bias=False
        "temporal_proj_w": w(ks[1], dim, dim),
        "temporal_proj_b": b(ks[2], dim),
        "temporal_fc_w": w(ks[3], dim, dim),
        "temporal_fc_b": b(ks[4], dim),
        "norm1_g": jnp.ones((1, dim), jnp.float32),
        "norm1_b": jnp.zeros((1, dim), jnp.float32),
        "qkv_w": w(ks[5], dim, 3 * dim),
        "proj_w": w(ks[6], dim, dim),
        "proj_b": b(ks[7], dim),
        "norm2_g": jnp.ones((1, dim), jnp.float32),
        "norm2_b": jnp.zeros((1, dim), jnp.float32),
        "fc1_w": w(ks[8], dim, hidden),
        "fc1_b": b(ks[9], hidden),
        "fc2_w": w(ks[10], hidden, dim),
        "fc2_b": b(ks[11], dim),
    }


def prepare_params(params, num_heads):
    """One-time prep: fold the attention scale into the q columns of the qkv weights
    and cast every MXU weight to bf16 (removes per-forward casts / HBM traffic).
    Biases and LayerNorm parameters stay f32."""
    p = dict(params)
    dim = params["proj_w"].shape[0]
    scale = (dim // num_heads) ** -0.5
    for pre in ("temporal_", ""):
        wq = params[pre + "qkv_w"].astype(jnp.float32)
        wq = wq.at[:, :dim].multiply(scale)
        p[pre + "qkv_w"] = wq.astype(jnp.bfloat16)
        p[pre + "proj_w"] = params[pre + "proj_w"].astype(jnp.bfloat16)
    p["temporal_fc_w"] = params["temporal_fc_w"].astype(jnp.bfloat16)
    p["fc1_w"] = params["fc1_w"].astype(jnp.bfloat16)
    p["fc2_w"] = params["fc2_w"].astype(jnp.bfloat16)
    return p


# ------------------------------------------------------------------------------------
# pure-JAX reference (same prepared params; exact softmax, f32 matmuls)
# ------------------------------------------------------------------------------------
def _reference_forward(x, p, B, T, K, num_heads):
    C = x.shape[-1]
    H = num_heads
    hd = C // H

    def ln(v, g, b):
        mu = v.mean(-1, keepdims=True)
        var = ((v - mu) ** 2).mean(-1, keepdims=True)
        return (v - mu) * jax.lax.rsqrt(var + 1e-5) * g + b

    def attn(seq, pre):
        qkv = seq @ p[pre + "qkv_w"].astype(jnp.float32)        # scale already folded
        q, k, v = qkv[..., :C], qkv[..., C:2 * C], qkv[..., 2 * C:]

        def split(z):
            n, s, _ = z.shape
            return z.reshape(n, s, H, hd).transpose(0, 2, 1, 3)

        q, k, v = split(q), split(k), split(v)
        a = jax.nn.softmax(jnp.einsum('nhqd,nhkd->nhqk', q, k), axis=-1)
        o = jnp.einsum('nhqk,nhkd->nhqd', a, v).transpose(0, 2, 1, 3).reshape(seq.shape)
        return o @ p[pre + "proj_w"].astype(jnp.float32) + p[pre + "proj_b"]

    xt = x[:, 1:, :].reshape(B * K, T, C)
    rt = attn(ln(xt, p["temporal_norm1_g"], p["temporal_norm1_b"]), "temporal_")
    xt2 = rt @ p["temporal_fc_w"].astype(jnp.float32) + p["temporal_fc_b"] + xt
    xt2_b = xt2.reshape(B, K * T, C)
    cls0 = x[:, 0:1, :]
    xs = xt2.reshape(B, K, T, C).transpose(0, 2, 1, 3).reshape(B * T, K, C)
    xs = jnp.concatenate(
        [jnp.broadcast_to(cls0, (B, T, C)).reshape(B * T, 1, C), xs], axis=1)
    rs = attn(ln(xs, p["norm1_g"], p["norm1_b"]), "")
    cls_m = rs[:, 0, :].reshape(B, T, C).mean(axis=1, keepdims=True)
    res = rs[:, 1:, :].reshape(B, T, K, C).transpose(0, 2, 1, 3).reshape(B, K * T, C)
    xn = jnp.concatenate([cls0, xt2_b], 1) + jnp.concatenate([cls_m, res], 1)
    h = ln(xn, p["norm2_g"], p["norm2_b"]) @ p["fc1_w"].astype(jnp.float32) + p["fc1_b"]
    h = jax.nn.gelu(h, approximate=True)
    return xn + h @ p["fc2_w"].astype(jnp.float32) + p["fc2_b"]


if __name__ == "__main__":
    B, T, K = 2, 4, 8          # batch, frames, spatial patches
    dim, num_heads = 64, 4     # head_dim = 16
    M = T * K + 1

    key = jax.random.PRNGKey(0)
    kx, kp = jax.random.split(key)
    x = jax.random.normal(kx, (B, M, dim), jnp.float32)
    params = prepare_params(init_params(kp, dim), num_heads)

    _buffered_one_supported()   # run the Buffered(1) probe once, outside jit

    fwd = jax.jit(functools.partial(block_forward, B=B, T=T, K=K, num_heads=num_heads))
    out = jax.block_until_ready(fwd(x, params))

    ref = _reference_forward(x, params, B, T, K, num_heads)
    err = float(jnp.max(jnp.abs(out - ref)))

    assert out.shape == (B, M, dim)
    assert bool(jnp.all(jnp.isfinite(out)))
    assert err < 1e-1, f"mismatch vs reference: {err}"
    print("KERNEL_OK")
</pallas_src>

<mosaic_0001>
module attributes {stable_mosaic.version = 11 : i64} {
  func.func @_probe_kernel(%arg0: i32, %arg1: memref<8x128xf32, #tpu.memory_space<vmem>>, %arg2: memref<8x128xf32, #tpu.memory_space<vmem>>) attributes {dimension_semantics = [#tpu.dimension_semantics<arbitrary>], iteration_bounds = array<i64: 2>, scalar_prefetch = 0 : i64, scratch_operands = 0 : i64, tpu.core_type = #tpu.core_type<tc>, window_params = [{pipeline_mode = #tpu.pipeline_mode<synchronous>, transform_indices = @transform_0, window_bounds = array<i64: 8, 128>}, {transform_indices = @transform_1, window_bounds = array<i64: 8, 128>}]} {
    %c0 = arith.constant 0 : index
    %c0_0 = arith.constant 0 : index
    %0 = vector.load %arg1[%c0, %c0_0] : memref<8x128xf32, #tpu.memory_space<vmem>>, vector<8x128xf32>
    %c0_1 = arith.constant 0 : index
    %c0_2 = arith.constant 0 : index
    %1 = vector.load %arg2[%c0_1, %c0_2] : memref<8x128xf32, #tpu.memory_space<vmem>>, vector<8x128xf32>
    tpu.vector_store %arg2[%c0_1, %c0_2], %0 {strides = array<i32>} : memref<8x128xf32, #tpu.memory_space<vmem>>, vector<8x128xf32>,
    return
  }
  func.func @transform_0(%arg0: i32) -> (i32, i32) {
    %c0_i32 = arith.constant 0 : i32
    %c0_i32_0 = arith.constant 0 : i32
    %c0_i32_1 = arith.constant 0 : i32
    return %c0_i32, %c0_i32_0 : i32, i32
  }
  func.func @transform_1(%arg0: i32) -> (i32, i32) {
    %c0_i32 = arith.constant 0 : i32
    %c0_i32_0 = arith.constant 0 : i32
    return %arg0, %c0_i32 : i32, i32
  }
}

module attributes {stable_mosaic.version = 11 : i64} {
  func.func @_spatial_mha_kernel(%arg0: i32, %arg1: memref<1x8x4x64xf32, #tpu.memory_space<vmem>>, %arg2: memref<1x1x64xf32, #tpu.memory_space<vmem>>, %arg3: memref<1x64xf32, #tpu.memory_space<vmem>>, %arg4: memref<1x64xf32, #tpu.memory_space<vmem>>, %arg5: memref<64x192xbf16, #tpu.memory_space<vmem>>, %arg6: memref<64x64xbf16, #tpu.memory_space<vmem>>, %arg7: memref<1x64xf32, #tpu.memory_space<vmem>>, %arg8: memref<1x8x4x64xf32, #tpu.memory_space<vmem>>, %arg9: memref<1x4x64xf32, #tpu.memory_space<vmem>>) attributes {dimension_semantics = [#tpu.dimension_semantics<parallel>], iteration_bounds = array<i64: 2>, scalar_prefetch = 0 : i64, scratch_operands = 0 : i64, tpu.core_type = #tpu.core_type<tc>, window_params = [{transform_indices = @transform_0, window_bounds = array<i64: 1, 8, 4, 64>}, {transform_indices = @transform_1, window_bounds = array<i64: 1, 1, 64>}, {pipeline_mode = #tpu.pipeline_mode<synchronous>, transform_indices = @transform_2, window_bounds = array<i64: 1, 64>}, {pipeline_mode = #tpu.pipeline_mode<synchronous>, transform_indices = @transform_3, window_bounds = array<i64: 1, 64>}, {pipeline_mode = #tpu.pipeline_mode<synchronous>, transform_indices = @transform_4, window_bounds = array<i64: 64, 192>}, {pipeline_mode = #tpu.pipeline_mode<synchronous>, transform_indices = @transform_5, window_bounds = array<i64: 64, 64>}, {pipeline_mode = #tpu.pipeline_mode<synchronous>, transform_indices = @transform_6, window_bounds = array<i64: 1, 64>}, {transform_indices = @transform_7, window_bounds = array<i64: 1, 8, 4, 64>}, {transform_indices = @transform_8, window_bounds = array<i64: 1, 4, 64>}]} {
    %c0 = arith.constant 0 : index
    %c0_0 = arith.constant 0 : index
    %c0_1 = arith.constant 0 : index
    %c0_2 = arith.constant 0 : index
    %0 = vector.load %arg1[%c0, %c0_0, %c0_1, %c0_2] : memref<1x8x4x64xf32, #tpu.memory_space<vmem>>, vector<1x8x4x64xf32>
    %1 = vector.shape_cast %0 : vector<1x8x4x64xf32> to vector<8x4x64xf32>
    %2 = tpu.transpose %1, [1, 0, 2] : vector<8x4x64xf32> -> vector<4x8x64xf32>
    %c0_3 = arith.constant 0 : index
    %c0_4 = arith.constant 0 : index
    %c0_5 = arith.constant 0 : index
    %3 = vector.load %arg2[%c0_3, %c0_4, %c0_5] : memref<1x1x64xf32, #tpu.memory_space<vmem>>, vector<1x1x64xf32>
    %4 = vector.shape_cast %3 : vector<1x1x64xf32> to vector<1x64xf32>
    %5 = vector.shape_cast %4 : vector<1x64xf32> to vector<1x1x64xf32>
    %6 = vector.shape_cast %5 : vector<1x1x64xf32> to vector<1x1x64xf32>
    %7 = vector.broadcast %6 : vector<1x1x64xf32> to vector<4x1x64xf32>
    %8 = tpu.concatenate %7, %2 in 1 : vector<4x1x64xf32>, vector<4x8x64xf32> -> vector<4x9x64xf32>
    %c0_6 = arith.constant 0 : index
    %c0_7 = arith.constant 0 : index
    %9 = vector.load %arg3[%c0_6, %c0_7] : memref<1x64xf32, #tpu.memory_space<vmem>>, vector<1x64xf32>
    %c0_8 = arith.constant 0 : index
    %c0_9 = arith.constant 0 : index
    %10 = vector.load %arg4[%c0_8, %c0_9] : memref<1x64xf32, #tpu.memory_space<vmem>>, vector<1x64xf32>
    %c0_10 = arith.constant 0 : index
    %c0_11 = arith.constant 0 : index
    %11 = vector.load %arg5[%c0_10, %c0_11] : memref<64x192xbf16, #tpu.memory_space<vmem>>, vector<64x192xbf16>
    %c0_12 = arith.constant 0 : index
    %c0_13 = arith.constant 0 : index
    %12 = vector.load %arg6[%c0_12, %c0_13] : memref<64x64xbf16, #tpu.memory_space<vmem>>, vector<64x64xbf16>
    %c0_14 = arith.constant 0 : index
    %c0_15 = arith.constant 0 : index
    %13 = vector.load %arg7[%c0_14, %c0_15] : memref<1x64xf32, #tpu.memory_space<vmem>>, vector<1x64xf32>
    %cst = arith.constant dense<0.000000e+00> : vector<4x9xf32>
    %14 = vector.multi_reduction <add>, %8, %cst [2] : vector<4x9x64xf32> to vector<4x9xf32>
    %15 = vector.shape_cast %14 : vector<4x9xf32> to vector<4x9x1xf32>
    %cst_16 = arith.constant 6.400000e+01 : f32
    %16 = vector.broadcast %cst_16 : f32 to vector<4x9x1xf32>
    %17 = arith.divf %15, %16 : vector<4x9x1xf32>
    %18 = vector.broadcast %17 : vector<4x9x1xf32> to vector<4x9x64xf32>
    %19 = arith.subf %8, %18 : vector<4x9x64xf32>
    %20 = arith.mulf %19, %19 : vector<4x9x64xf32>
    %cst_17 = arith.constant dense<0.000000e+00> : vector<4x9xf32>
    %21 = vector.multi_reduction <add>, %20, %cst_17 [2] : vector<4x9x64xf32> to vector<4x9xf32>
    %22 = vector.shape_cast %21 : vector<4x9xf32> to vector<4x9x1xf32>
    %cst_18 = arith.constant 6.400000e+01 : f32
    %23 = vector.broadcast %cst_18 : f32 to vector<4x9x1xf32>
    %24 = arith.divf %22, %23 : vector<4x9x1xf32>
    %25 = vector.broadcast %17 : vector<4x9x1xf32> to vector<4x9x64xf32>
    %26 = arith.subf %8, %25 : vector<4x9x64xf32>
    %cst_19 = arith.constant 9.99999974E-6 : f32
    %27 = vector.broadcast %cst_19 : f32 to vector<4x9x1xf32>
    %28 = arith.addf %24, %27 : vector<4x9x1xf32>
    %29 = math.rsqrt %28 : vector<4x9x1xf32>
    %30 = vector.broadcast %29 : vector<4x9x1xf32> to vector<4x9x64xf32>
    %31 = arith.mulf %26, %30 : vector<4x9x64xf32>
    %32 = vector.shape_cast %9 : vector<1x64xf32> to vector<1x1x64xf32>
    %33 = vector.broadcast %32 : vector<1x1x64xf32> to vector<4x9x64xf32>
    %34 = arith.mulf %31, %33 : vector<4x9x64xf32>
    %35 = vector.shape_cast %10 : vector<1x64xf32> to vector<1x1x64xf32>
    %36 = vector.broadcast %35 : vector<1x1x64xf32> to vector<4x9x64xf32>
    %37 = arith.addf %34, %36 : vector<4x9x64xf32>
    %38 = arith.truncf %37 : vector<4x9x64xf32> to vector<4x9x64xbf16>
    %39 = vector.shape_cast %38 : vector<4x9x64xbf16> to vector<36x64xbf16>
    %cst_20 = arith.constant dense<0.000000e+00> : vector<36x192xf32>
    %40 = tpu.matmul %39, %11, %cst_20 {dimension_numbers = #tpu.dot_dimension_numbers<[1], [0], [0], [1], [0, 0, 1, 1], [], []>} : vector<36x64xbf16>, vector<64x192xbf16>, vector<36x192xf32> -> vector<36x192xf32>
    %41 = arith.truncf %40 : vector<36x192xf32> to vector<36x192xbf16>
    %42 = vector.extract_strided_slice %41 {offsets = [0, 0], sizes = [36, 64], strides = [1, 1]} : vector<36x192xbf16> to vector<36x64xbf16>
    %43 = vector.shape_cast %42 : vector<36x64xbf16> to vector<4x9x4x16xbf16>
    %44 = tpu.transpose %43, [0, 2, 1, 3] : vector<4x9x4x16xbf16> -> vector<4x4x9x16xbf16>
    %45 = vector.shape_cast %44 : vector<4x4x9x16xbf16> to vector<16x9x16xbf16>
    %46 = vector.extract_strided_slice %41 {offsets = [0, 64], sizes = [36, 64], strides = [1, 1]} : vector<36x192xbf16> to vector<36x64xbf16>
    %47 = vector.shape_cast %46 : vector<36x64xbf16> to vector<4x9x4x16xbf16>
    %48 = tpu.transpose %47, [0, 2, 1, 3] : vector<4x9x4x16xbf16> -> vector<4x4x9x16xbf16>
    %49 = vector.shape_cast %48 : vector<4x4x9x16xbf16> to vector<16x9x16xbf16>
    %50 = vector.extract_strided_slice %41 {offsets = [0, 128], sizes = [36, 64], strides = [1, 1]} : vector<36x192xbf16> to vector<36x64xbf16>
    %51 = vector.shape_cast %50 : vector<36x64xbf16> to vector<4x9x4x16xbf16>
    %52 = tpu.transpose %51, [0, 2, 1, 3] : vector<4x9x4x16xbf16> -> vector<4x4x9x16xbf16>
    %53 = vector.shape_cast %52 : vector<4x4x9x16xbf16> to vector<16x9x16xbf16>
    "tpu.trace_start"() <{level = 10 : i32, message = "bqd,bkd->bqk"}> : () -> ()
    %cst_21 = arith.constant dense<0.000000e+00> : vector<16x9x9xf32>
    %54 = tpu.matmul %45, %49, %cst_21 {dimension_numbers = #tpu.dot_dimension_numbers<[2], [2], [1], [1], [0, 0, 0, 1, 1, 1], [0], [0]>} : vector<16x9x16xbf16>, vector<16x9x16xbf16>, vector<16x9x9xf32> -> vector<16x9x9xf32>
    "tpu.trace_stop"() : () -> ()
    %cst_22 = arith.constant dense<0xFF800000> : vector<16x9xf32>
    %55 = vector.multi_reduction <maximumf>, %54, %cst_22 [2] : vector<16x9x9xf32> to vector<16x9xf32>
    %56 = vector.shape_cast %55 : vector<16x9xf32> to vector<16x9x1xf32>
    %57 = vector.broadcast %56 : vector<16x9x1xf32> to vector<16x9x9xf32>
    %58 = arith.subf %54, %57 : vector<16x9x9xf32>
    %59 = math.exp %58 : vector<16x9x9xf32>
    %cst_23 = arith.constant dense<0.000000e+00> : vector<16x9xf32>
    %60 = vector.multi_reduction <add>, %59, %cst_23 [2] : vector<16x9x9xf32> to vector<16x9xf32>
    %61 = vector.shape_cast %60 : vector<16x9xf32> to vector<16x9x1xf32>
    %62 = tpu.reciprocal %61 {approx = true} : vector<16x9x1xf32> -> vector<16x9x1xf32>
    %63 = vector.broadcast %62 : vector<16x9x1xf32> to vector<16x9x9xf32>
    %64 = arith.mulf %59, %63 : vector<16x9x9xf32>
    %65 = arith.truncf %64 : vector<16x9x9xf32> to vector<16x9x9xbf16>
    "tpu.trace_start"() <{level = 10 : i32, message = "bqk,bkd->bqd"}> : () -> ()
    %cst_24 = arith.constant dense<0.000000e+00> : vector<16x9x16xf32>
    %66 = tpu.matmul %65, %53, %cst_24 {dimension_numbers = #tpu.dot_dimension_numbers<[2], [1], [1], [2], [0, 0, 0, 1, 1, 2], [0], [0]>} : vector<16x9x9xbf16>, vector<16x9x16xbf16>, vector<16x9x16xf32> -> vector<16x9x16xf32>
    "tpu.trace_stop"() : () -> ()
    %67 = vector.shape_cast %66 : vector<16x9x16xf32> to vector<4x4x9x16xf32>
    %68 = tpu.transpose %67, [0, 2, 1, 3] : vector<4x4x9x16xf32> -> vector<4x9x4x16xf32>
    %69 = vector.shape_cast %68 : vector<4x9x4x16xf32> to vector<36x64xf32>
    %70 = arith.truncf %69 : vector<36x64xf32> to vector<36x64xbf16>
    %cst_25 = arith.constant dense<0.000000e+00> : vector<36x64xf32>
    %71 = tpu.matmul %70, %12, %cst_25 {dimension_numbers = #tpu.dot_dimension_numbers<[1], [0], [0], [1], [0, 0, 1, 1], [], []>} : vector<36x64xbf16>, vector<64x64xbf16>, vector<36x64xf32> -> vector<36x64xf32>
    %72 = vector.broadcast %13 : vector<1x64xf32> to vector<36x64xf32>
    %73 = arith.addf %71, %72 : vector<36x64xf32>
    %74 = vector.shape_cast %73 : vector<36x64xf32> to vector<4x9x64xf32>
    %75 = vector.extract_strided_slice %74 {offsets = [0, 0, 0], sizes = [4, 1, 64], strides = [1, 1, 1]} : vector<4x9x64xf32> to vector<4x1x64xf32>
    %76 = vector.shape_cast %75 : vector<4x1x64xf32> to vector<4x64xf32>
    %c0_26 = arith.constant 0 : index
    %c0_27 = arith.constant 0 : index
    %c0_28 = arith.constant 0 : index
    %77 = vector.load %arg9[%c0_26, %c0_27, %c0_28] : memref<1x4x64xf32, #tpu.memory_space<vmem>>, vector<1x4x64xf32>
    %78 = vector.shape_cast %77 : vector<1x4x64xf32> to vector<4x64xf32>
    %79 = vector.shape_cast %76 : vector<4x64xf32> to vector<1x4x64xf32>
    tpu.vector_store %arg9[%c0_26, %c0_27, %c0_28], %79 {strides = array<i32>} : memref<1x4x64xf32, #tpu.memory_space<vmem>>, vector<1x4x64xf32>,
    %80 = vector.extract_strided_slice %74 {offsets = [0, 1, 0], sizes = [4, 8, 64], strides = [1, 1, 1]} : vector<4x9x64xf32> to vector<4x8x64xf32>
    %81 = tpu.transpose %80, [1, 0, 2] : vector<4x8x64xf32> -> vector<8x4x64xf32>
    %c0_29 = arith.constant 0 : index
    %c0_30 = arith.constant 0 : index
    %c0_31 = arith.constant 0 : index
    %c0_32 = arith.constant 0 : index
    %82 = vector.load %arg8[%c0_29, %c0_30, %c0_31, %c0_32] : memref<1x8x4x64xf32, #tpu.memory_space<vmem>>, vector<1x8x4x64xf32>
    %83 = vector.shape_cast %82 : vector<1x8x4x64xf32> to vector<8x4x64xf32>
    %84 = vector.shape_cast %81 : vector<8x4x64xf32> to vector<1x8x4x64xf32>
    tpu.vector_store %arg8[%c0_29, %c0_30, %c0_31, %c0_32], %84 {strides = array<i32>} : memref<1x8x4x64xf32, #tpu.memory_space<vmem>>, vector<1x8x4x64xf32>,
    return
  }
  func.func @transform_0(%arg0: i32) -> (i32, i32, i32, i32) {
    %c0_i32 = arith.constant 0 : i32
    %c0_i32_0 = arith.constant 0 : i32
    %c0_i32_1 = arith.constant 0 : i32
    %c0_i32_2 = arith.constant 0 : i32
    return %arg0, %c0_i32, %c0_i32_0, %c0_i32_1 : i32, i32, i32, i32
  }
  func.func @transform_1(%arg0: i32) -> (i32, i32, i32) {
    %c0_i32 = arith.constant 0 : i32
    %c0_i32_0 = arith.constant 0 : i32
    %c0_i32_1 = arith.constant 0 : i32
    return %arg0, %c0_i32, %c0_i32_0 : i32, i32, i32
  }
  func.func @transform_2(%arg0: i32) -> (i32, i32) {
    %c0_i32 = arith.constant 0 : i32
    %c0_i32_0 = arith.constant 0 : i32
    %c0_i32_1 = arith.constant 0 : i32
    return %c0_i32, %c0_i32_0 : i32, i32
  }
  func.func @transform_3(%arg0: i32) -> (i32, i32) {
    %c0_i32 = arith.constant 0 : i32
    %c0_i32_0 = arith.constant 0 : i32
    %c0_i32_1 = arith.constant 0 : i32
    return %c0_i32, %c0_i32_0 : i32, i32
  }
  func.func @transform_4(%arg0: i32) -> (i32, i32) {
    %c0_i32 = arith.constant 0 : i32
    %c0_i32_0 = arith.constant 0 : i32
    %c0_i32_1 = arith.constant 0 : i32
    return %c0_i32, %c0_i32_0 : i32, i32
  }
  func.func @transform_5(%arg0: i32) -> (i32, i32) {
    %c0_i32 = arith.constant 0 : i32
    %c0_i32_0 = arith.constant 0 : i32
    %c0_i32_1 = arith.constant 0 : i32
    return %c0_i32, %c0_i32_0 : i32, i32
  }
  func.func @transform_6(%arg0: i32) -> (i32, i32) {
    %c0_i32 = arith.constant 0 : i32
    %c0_i32_0 = arith.constant 0 : i32
    %c0_i32_1 = arith.constant 0 : i32
    return %c0_i32, %c0_i32_0 : i32, i32
  }
  func.func @transform_7(%arg0: i32) -> (i32, i32, i32, i32) {
    %c0_i32 = arith.constant 0 : i32
    %c0_i32_0 = arith.constant 0 : i32
    %c0_i32_1 = arith.constant 0 : i32
    %c0_i32_2 = arith.constant 0 : i32
    return %arg0, %c0_i32, %c0_i32_0, %c0_i32_1 : i32, i32, i32, i32
  }
  func.func @transform_8(%arg0: i32) -> (i32, i32, i32) {
    %c0_i32 = arith.constant 0 : i32
    %c0_i32_0 = arith.constant 0 : i32
    %c0_i32_1 = arith.constant 0 : i32
    return %arg0, %c0_i32, %c0_i32_0 : i32, i32, i32
  }
}

module attributes {stable_mosaic.version = 11 : i64} {
  func.func @_temporal_mha_kernel(%arg0: i32, %arg1: memref<8x4x64xf32, #tpu.memory_space<vmem>>, %arg2: memref<1x64xf32, #tpu.memory_space<vmem>>, %arg3: memref<1x64xf32, #tpu.memory_space<vmem>>, %arg4: memref<64x192xbf16, #tpu.memory_space<vmem>>, %arg5: memref<64x64xbf16, #tpu.memory_space<vmem>>, %arg6: memref<1x64xf32, #tpu.memory_space<vmem>>, %arg7: memref<64x64xbf16, #tpu.memory_space<vmem>>, %arg8: memref<1x64xf32, #tpu.memory_space<vmem>>, %arg9: memref<8x4x64xf32, #tpu.memory_space<vmem>>) attributes {dimension_semantics = [#tpu.dimension_semantics<parallel>], iteration_bounds = array<i64: 2>, scalar_prefetch = 0 : i64, scratch_operands = 0 : i64, tpu.core_type = #tpu.core_type<tc>, window_params = [{transform_indices = @transform_0, window_bounds = array<i64: 8, 4, 64>}, {pipeline_mode = #tpu.pipeline_mode<synchronous>, transform_indices = @transform_1, window_bounds = array<i64: 1, 64>}, {pipeline_mode = #tpu.pipeline_mode<synchronous>, transform_indices = @transform_2, window_bounds = array<i64: 1, 64>}, {pipeline_mode = #tpu.pipeline_mode<synchronous>, transform_indices = @transform_3, window_bounds = array<i64: 64, 192>}, {pipeline_mode = #tpu.pipeline_mode<synchronous>, transform_indices = @transform_4, window_bounds = array<i64: 64, 64>}, {pipeline_mode = #tpu.pipeline_mode<synchronous>, transform_indices = @transform_5, window_bounds = array<i64: 1, 64>}, {pipeline_mode = #tpu.pipeline_mode<synchronous>, transform_indices = @transform_6, window_bounds = array<i64: 64, 64>}, {pipeline_mode = #tpu.pipeline_mode<synchronous>, transform_indices = @transform_7, window_bounds = array<i64: 1, 64>}, {transform_indices = @transform_8, window_bounds = array<i64: 8, 4, 64>}]} {
    %c0 = arith.constant 0 : index
    %c0_0 = arith.constant 0 : index
    %c0_1 = arith.constant 0 : index
    %0 = vector.load %arg1[%c0, %c0_0, %c0_1] : memref<8x4x64xf32, #tpu.memory_space<vmem>>, vector<8x4x64xf32>
    %c0_2 = arith.constant 0 : index
    %c0_3 = arith.constant 0 : index
    %1 = vector.load %arg2[%c0_2, %c0_3] : memref<1x64xf32, #tpu.memory_space<vmem>>, vector<1x64xf32>
    %c0_4 = arith.constant 0 : index
    %c0_5 = arith.constant 0 : index
    %2 = vector.load %arg3[%c0_4, %c0_5] : memref<1x64xf32, #tpu.memory_space<vmem>>, vector<1x64xf32>
    %c0_6 = arith.constant 0 : index
    %c0_7 = arith.constant 0 : index
    %3 = vector.load %arg4[%c0_6, %c0_7] : memref<64x192xbf16, #tpu.memory_space<vmem>>, vector<64x192xbf16>
    %c0_8 = arith.constant 0 : index
    %c0_9 = arith.constant 0 : index
    %4 = vector.load %arg5[%c0_8, %c0_9] : memref<64x64xbf16, #tpu.memory_space<vmem>>, vector<64x64xbf16>
    %c0_10 = arith.constant 0 : index
    %c0_11 = arith.constant 0 : index
    %5 = vector.load %arg6[%c0_10, %c0_11] : memref<1x64xf32, #tpu.memory_space<vmem>>, vector<1x64xf32>
    %cst = arith.constant dense<0.000000e+00> : vector<8x4xf32>
    %6 = vector.multi_reduction <add>, %0, %cst [2] : vector<8x4x64xf32> to vector<8x4xf32>
    %7 = vector.shape_cast %6 : vector<8x4xf32> to vector<8x4x1xf32>
    %cst_12 = arith.constant 6.400000e+01 : f32
    %8 = vector.broadcast %cst_12 : f32 to vector<8x4x1xf32>
    %9 = arith.divf %7, %8 : vector<8x4x1xf32>
    %10 = vector.broadcast %9 : vector<8x4x1xf32> to vector<8x4x64xf32>
    %11 = arith.subf %0, %10 : vector<8x4x64xf32>
    %12 = arith.mulf %11, %11 : vector<8x4x64xf32>
    %cst_13 = arith.constant dense<0.000000e+00> : vector<8x4xf32>
    %13 = vector.multi_reduction <add>, %12, %cst_13 [2] : vector<8x4x64xf32> to vector<8x4xf32>
    %14 = vector.shape_cast %13 : vector<8x4xf32> to vector<8x4x1xf32>
    %cst_14 = arith.constant 6.400000e+01 : f32
    %15 = vector.broadcast %cst_14 : f32 to vector<8x4x1xf32>
    %16 = arith.divf %14, %15 : vector<8x4x1xf32>
    %17 = vector.broadcast %9 : vector<8x4x1xf32> to vector<8x4x64xf32>
    %18 = arith.subf %0, %17 : vector<8x4x64xf32>
    %cst_15 = arith.constant 9.99999974E-6 : f32
    %19 = vector.broadcast %cst_15 : f32 to vector<8x4x1xf32>
    %20 = arith.addf %16, %19 : vector<8x4x1xf32>
    %21 = math.rsqrt %20 : vector<8x4x1xf32>
    %22 = vector.broadcast %21 : vector<8x4x1xf32> to vector<8x4x64xf32>
    %23 = arith.mulf %18, %22 : vector<8x4x64xf32>
    %24 = vector.shape_cast %1 : vector<1x64xf32> to vector<1x1x64xf32>
    %25 = vector.broadcast %24 : vector<1x1x64xf32> to vector<8x4x64xf32>
    %26 = arith.mulf %23, %25 : vector<8x4x64xf32>
    %27 = vector.shape_cast %2 : vector<1x64xf32> to vector<1x1x64xf32>
    %28 = vector.broadcast %27 : vector<1x1x64xf32> to vector<8x4x64xf32>
    %29 = arith.addf %26, %28 : vector<8x4x64xf32>
    %30 = arith.truncf %29 : vector<8x4x64xf32> to vector<8x4x64xbf16>
    %31 = vector.shape_cast %30 : vector<8x4x64xbf16> to vector<32x64xbf16>
    %cst_16 = arith.constant dense<0.000000e+00> : vector<32x192xf32>
    %32 = tpu.matmul %31, %3, %cst_16 {dimension_numbers = #tpu.dot_dimension_numbers<[1], [0], [0], [1], [0, 0, 1, 1], [], []>} : vector<32x64xbf16>, vector<64x192xbf16>, vector<32x192xf32> -> vector<32x192xf32>
    %33 = arith.truncf %32 : vector<32x192xf32> to vector<32x192xbf16>
    %34 = vector.extract_strided_slice %33 {offsets = [0, 0], sizes = [32, 64], strides = [1, 1]} : vector<32x192xbf16> to vector<32x64xbf16>
    %35 = vector.shape_cast %34 : vector<32x64xbf16> to vector<8x4x4x16xbf16>
    %36 = tpu.transpose %35, [0, 2, 1, 3] : vector<8x4x4x16xbf16> -> vector<8x4x4x16xbf16>
    %37 = vector.shape_cast %36 : vector<8x4x4x16xbf16> to vector<32x4x16xbf16>
    %38 = vector.extract_strided_slice %33 {offsets = [0, 64], sizes = [32, 64], strides = [1, 1]} : vector<32x192xbf16> to vector<32x64xbf16>
    %39 = vector.shape_cast %38 : vector<32x64xbf16> to vector<8x4x4x16xbf16>
    %40 = tpu.transpose %39, [0, 2, 1, 3] : vector<8x4x4x16xbf16> -> vector<8x4x4x16xbf16>
    %41 = vector.shape_cast %40 : vector<8x4x4x16xbf16> to vector<32x4x16xbf16>
    %42 = vector.extract_strided_slice %33 {offsets = [0, 128], sizes = [32, 64], strides = [1, 1]} : vector<32x192xbf16> to vector<32x64xbf16>
    %43 = vector.shape_cast %42 : vector<32x64xbf16> to vector<8x4x4x16xbf16>
    %44 = tpu.transpose %43, [0, 2, 1, 3] : vector<8x4x4x16xbf16> -> vector<8x4x4x16xbf16>
    %45 = vector.shape_cast %44 : vector<8x4x4x16xbf16> to vector<32x4x16xbf16>
    "tpu.trace_start"() <{level = 10 : i32, message = "bqd,bkd->bqk"}> : () -> ()
    %cst_17 = arith.constant dense<0.000000e+00> : vector<32x4x4xf32>
    %46 = tpu.matmul %37, %41, %cst_17 {dimension_numbers = #tpu.dot_dimension_numbers<[2], [2], [1], [1], [0, 0, 0, 1, 1, 1], [0], [0]>} : vector<32x4x16xbf16>, vector<32x4x16xbf16>, vector<32x4x4xf32> -> vector<32x4x4xf32>
    "tpu.trace_stop"() : () -> ()
    %cst_18 = arith.constant dense<0xFF800000> : vector<32x4xf32>
    %47 = vector.multi_reduction <maximumf>, %46, %cst_18 [2] : vector<32x4x4xf32> to vector<32x4xf32>
    %48 = vector.shape_cast %47 : vector<32x4xf32> to vector<32x4x1xf32>
    %49 = vector.broadcast %48 : vector<32x4x1xf32> to vector<32x4x4xf32>
    %50 = arith.subf %46, %49 : vector<32x4x4xf32>
    %51 = math.exp %50 : vector<32x4x4xf32>
    %cst_19 = arith.constant dense<0.000000e+00> : vector<32x4xf32>
    %52 = vector.multi_reduction <add>, %51, %cst_19 [2] : vector<32x4x4xf32> to vector<32x4xf32>
    %53 = vector.shape_cast %52 : vector<32x4xf32> to vector<32x4x1xf32>
    %54 = tpu.reciprocal %53 {approx = true} : vector<32x4x1xf32> -> vector<32x4x1xf32>
    %55 = vector.broadcast %54 : vector<32x4x1xf32> to vector<32x4x4xf32>
    %56 = arith.mulf %51, %55 : vector<32x4x4xf32>
    %57 = arith.truncf %56 : vector<32x4x4xf32> to vector<32x4x4xbf16>
    "tpu.trace_start"() <{level = 10 : i32, message = "bqk,bkd->bqd"}> : () -> ()
    %cst_20 = arith.constant dense<0.000000e+00> : vector<32x4x16xf32>
    %58 = tpu.matmul %57, %45, %cst_20 {dimension_numbers = #tpu.dot_dimension_numbers<[2], [1], [1], [2], [0, 0, 0, 1, 1, 2], [0], [0]>} : vector<32x4x4xbf16>, vector<32x4x16xbf16>, vector<32x4x16xf32> -> vector<32x4x16xf32>
    "tpu.trace_stop"() : () -> ()
    %59 = vector.shape_cast %58 : vector<32x4x16xf32> to vector<8x4x4x16xf32>
    %60 = tpu.transpose %59, [0, 2, 1, 3] : vector<8x4x4x16xf32> -> vector<8x4x4x16xf32>
    %61 = vector.shape_cast %60 : vector<8x4x4x16xf32> to vector<32x64xf32>
    %62 = arith.truncf %61 : vector<32x64xf32> to vector<32x64xbf16>
    %cst_21 = arith.constant dense<0.000000e+00> : vector<32x64xf32>
    %63 = tpu.matmul %62, %4, %cst_21 {dimension_numbers = #tpu.dot_dimension_numbers<[1], [0], [0], [1], [0, 0, 1, 1], [], []>} : vector<32x64xbf16>, vector<64x64xbf16>, vector<32x64xf32> -> vector<32x64xf32>
    %64 = vector.broadcast %5 : vector<1x64xf32> to vector<32x64xf32>
    %65 = arith.addf %63, %64 : vector<32x64xf32>
    %66 = vector.shape_cast %65 : vector<32x64xf32> to vector<8x4x64xf32>
    %67 = vector.shape_cast %66 : vector<8x4x64xf32> to vector<32x64xf32>
    %68 = arith.truncf %67 : vector<32x64xf32> to vector<32x64xbf16>
    %c0_22 = arith.constant 0 : index
    %c0_23 = arith.constant 0 : index
    %69 = vector.load %arg7[%c0_22, %c0_23] : memref<64x64xbf16, #tpu.memory_space<vmem>>, vector<64x64xbf16>
    %cst_24 = arith.constant dense<0.000000e+00> : vector<32x64xf32>
    %70 = tpu.matmul %68, %69, %cst_24 {dimension_numbers = #tpu.dot_dimension_numbers<[1], [0], [0], [1], [0, 0, 1, 1], [], []>} : vector<32x64xbf16>, vector<64x64xbf16>, vector<32x64xf32> -> vector<32x64xf32>
    %c0_25 = arith.constant 0 : index
    %c0_26 = arith.constant 0 : index
    %71 = vector.load %arg8[%c0_25, %c0_26] : memref<1x64xf32, #tpu.memory_space<vmem>>, vector<1x64xf32>
    %72 = vector.broadcast %71 : vector<1x64xf32> to vector<32x64xf32>
    %73 = arith.addf %70, %72 : vector<32x64xf32>
    %74 = vector.shape_cast %73 : vector<32x64xf32> to vector<8x4x64xf32>
    %75 = arith.addf %74, %0 : vector<8x4x64xf32>
    %c0_27 = arith.constant 0 : index
    %c0_28 = arith.constant 0 : index
    %c0_29 = arith.constant 0 : index
    %76 = vector.load %arg9[%c0_27, %c0_28, %c0_29] : memref<8x4x64xf32, #tpu.memory_space<vmem>>, vector<8x4x64xf32>
    tpu.vector_store %arg9[%c0_27, %c0_28, %c0_29], %75 {strides = array<i32>} : memref<8x4x64xf32, #tpu.memory_space<vmem>>, vector<8x4x64xf32>,
    return
  }
  func.func @transform_0(%arg0: i32) -> (i32, i32, i32) {
    %c0_i32 = arith.constant 0 : i32
    %c0_i32_0 = arith.constant 0 : i32
    %c0_i32_1 = arith.constant 0 : i32
    return %arg0, %c0_i32, %c0_i32_0 : i32, i32, i32
  }
  func.func @transform_1(%arg0: i32) -> (i32, i32) {
    %c0_i32 = arith.constant 0 : i32
    %c0_i32_0 = arith.constant 0 : i32
    %c0_i32_1 = arith.constant 0 : i32
    return %c0_i32, %c0_i32_0 : i32, i32
  }
  func.func @transform_2(%arg0: i32) -> (i32, i32) {
    %c0_i32 = arith.constant 0 : i32
    %c0_i32_0 = arith.constant 0 : i32
    %c0_i32_1 = arith.constant 0 : i32
    return %c0_i32, %c0_i32_0 : i32, i32
  }
  func.func @transform_3(%arg0: i32) -> (i32, i32) {
    %c0_i32 = arith.constant 0 : i32
    %c0_i32_0 = arith.constant 0 : i32
    %c0_i32_1 = arith.constant 0 : i32
    return %c0_i32, %c0_i32_0 : i32, i32
  }
  func.func @transform_4(%arg0: i32) -> (i32, i32) {
    %c0_i32 = arith.constant 0 : i32
    %c0_i32_0 = arith.constant 0 : i32
    %c0_i32_1 = arith.constant 0 : i32
    return %c0_i32, %c0_i32_0 : i32, i32
  }
  func.func @transform_5(%arg0: i32) -> (i32, i32) {
    %c0_i32 = arith.constant 0 : i32
    %c0_i32_0 = arith.constant 0 : i32
    %c0_i32_1 = arith.constant 0 : i32
    return %c0_i32, %c0_i32_0 : i32, i32
  }
  func.func @transform_6(%arg0: i32) -> (i32, i32) {
    %c0_i32 = arith.constant 0 : i32
    %c0_i32_0 = arith.constant 0 : i32
    %c0_i32_1 = arith.constant 0 : i32
    return %c0_i32, %c0_i32_0 : i32, i32
  }
  func.func @transform_7(%arg0: i32) -> (i32, i32) {
    %c0_i32 = arith.constant 0 : i32
    %c0_i32_0 = arith.constant 0 : i32
    %c0_i32_1 = arith.constant 0 : i32
    return %c0_i32, %c0_i32_0 : i32, i32
  }
  func.func @transform_8(%arg0: i32) -> (i32, i32, i32) {
    %c0_i32 = arith.constant 0 : i32
    %c0_i32_0 = arith.constant 0 : i32
    %c0_i32_1 = arith.constant 0 : i32
    return %arg0, %c0_i32, %c0_i32_0 : i32, i32, i32
  }
}

module attributes {stable_mosaic.version = 11 : i64} {
  func.func @_mlp_kernel(%arg0: i32, %arg1: memref<32x64xf32, #tpu.memory_space<vmem>>, %arg2: memref<32x64xf32, #tpu.memory_space<vmem>>, %arg3: memref<1x64xf32, #tpu.memory_space<vmem>>, %arg4: memref<1x64xf32, #tpu.memory_space<vmem>>, %arg5: memref<64x256xbf16, #tpu.memory_space<vmem>>, %arg6: memref<1x256xf32, #tpu.memory_space<vmem>>, %arg7: memref<256x64xbf16, #tpu.memory_space<vmem>>, %arg8: memref<1x64xf32, #tpu.memory_space<vmem>>, %arg9: memref<32x64xf32, #tpu.memory_space<vmem>>) attributes {dimension_semantics = [#tpu.dimension_semantics<parallel>], iteration_bounds = array<i64: 2>, scalar_prefetch = 0 : i64, scratch_operands = 0 : i64, tpu.core_type = #tpu.core_type<tc>, window_params = [{transform_indices = @transform_0, window_bounds = array<i64: 32, 64>}, {transform_indices = @transform_1, window_bounds = array<i64: 32, 64>}, {pipeline_mode = #tpu.pipeline_mode<synchronous>, transform_indices = @transform_2, window_bounds = array<i64: 1, 64>}, {pipeline_mode = #tpu.pipeline_mode<synchronous>, transform_indices = @transform_3, window_bounds = array<i64: 1, 64>}, {pipeline_mode = #tpu.pipeline_mode<synchronous>, transform_indices = @transform_4, window_bounds = array<i64: 64, 256>}, {pipeline_mode = #tpu.pipeline_mode<synchronous>, transform_indices = @transform_5, window_bounds = array<i64: 1, 256>}, {pipeline_mode = #tpu.pipeline_mode<synchronous>, transform_indices = @transform_6, window_bounds = array<i64: 256, 64>}, {pipeline_mode = #tpu.pipeline_mode<synchronous>, transform_indices = @transform_7, window_bounds = array<i64: 1, 64>}, {transform_indices = @transform_8, window_bounds = array<i64: 32, 64>}]} {
    %c0 = arith.constant 0 : index
    %c0_0 = arith.constant 0 : index
    %0 = vector.load %arg1[%c0, %c0_0] : memref<32x64xf32, #tpu.memory_space<vmem>>, vector<32x64xf32>
    %c0_1 = arith.constant 0 : index
    %c0_2 = arith.constant 0 : index
    %1 = vector.load %arg2[%c0_1, %c0_2] : memref<32x64xf32, #tpu.memory_space<vmem>>, vector<32x64xf32>
    %2 = arith.addf %0, %1 : vector<32x64xf32>
    %c0_3 = arith.constant 0 : index
    %c0_4 = arith.constant 0 : index
    %3 = vector.load %arg3[%c0_3, %c0_4] : memref<1x64xf32, #tpu.memory_space<vmem>>, vector<1x64xf32>
    %c0_5 = arith.constant 0 : index
    %c0_6 = arith.constant 0 : index
    %4 = vector.load %arg4[%c0_5, %c0_6] : memref<1x64xf32, #tpu.memory_space<vmem>>, vector<1x64xf32>
    %cst = arith.constant dense<0.000000e+00> : vector<32xf32>
    %5 = vector.multi_reduction <add>, %2, %cst [1] : vector<32x64xf32> to vector<32xf32>
    %6 = vector.shape_cast %5 : vector<32xf32> to vector<32x1xf32>
    %cst_7 = arith.constant 6.400000e+01 : f32
    %7 = vector.broadcast %cst_7 : f32 to vector<32x1xf32>
    %8 = arith.divf %6, %7 : vector<32x1xf32>
    %9 = vector.broadcast %8 : vector<32x1xf32> to vector<32x64xf32>
    %10 = arith.subf %2, %9 : vector<32x64xf32>
    %11 = arith.mulf %10, %10 : vector<32x64xf32>
    %cst_8 = arith.constant dense<0.000000e+00> : vector<32xf32>
    %12 = vector.multi_reduction <add>, %11, %cst_8 [1] : vector<32x64xf32> to vector<32xf32>
    %13 = vector.shape_cast %12 : vector<32xf32> to vector<32x1xf32>
    %cst_9 = arith.constant 6.400000e+01 : f32
    %14 = vector.broadcast %cst_9 : f32 to vector<32x1xf32>
    %15 = arith.divf %13, %14 : vector<32x1xf32>
    %16 = vector.broadcast %8 : vector<32x1xf32> to vector<32x64xf32>
    %17 = arith.subf %2, %16 : vector<32x64xf32>
    %cst_10 = arith.constant 9.99999974E-6 : f32
    %18 = vector.broadcast %cst_10 : f32 to vector<32x1xf32>
    %19 = arith.addf %15, %18 : vector<32x1xf32>
    %20 = math.rsqrt %19 : vector<32x1xf32>
    %21 = vector.broadcast %20 : vector<32x1xf32> to vector<32x64xf32>
    %22 = arith.mulf %17, %21 : vector<32x64xf32>
    %23 = vector.broadcast %3 : vector<1x64xf32> to vector<32x64xf32>
    %24 = arith.mulf %22, %23 : vector<32x64xf32>
    %25 = vector.broadcast %4 : vector<1x64xf32> to vector<32x64xf32>
    %26 = arith.addf %24, %25 : vector<32x64xf32>
    %27 = arith.truncf %26 : vector<32x64xf32> to vector<32x64xbf16>
    %c0_11 = arith.constant 0 : index
    %c0_12 = arith.constant 0 : index
    %28 = vector.load %arg5[%c0_11, %c0_12] : memref<64x256xbf16, #tpu.memory_space<vmem>>, vector<64x256xbf16>
    %cst_13 = arith.constant dense<0.000000e+00> : vector<32x256xf32>
    %29 = tpu.matmul %27, %28, %cst_13 {dimension_numbers = #tpu.dot_dimension_numbers<[1], [0], [0], [1], [0, 0, 1, 1], [], []>} : vector<32x64xbf16>, vector<64x256xbf16>, vector<32x256xf32> -> vector<32x256xf32>
    %c0_14 = arith.constant 0 : index
    %c0_15 = arith.constant 0 : index
    %30 = vector.load %arg6[%c0_14, %c0_15] : memref<1x256xf32, #tpu.memory_space<vmem>>, vector<1x256xf32>
    %31 = vector.broadcast %30 : vector<1x256xf32> to vector<32x256xf32>
    %32 = arith.addf %29, %31 : vector<32x256xf32>
    %cst_16 = arith.constant 5.000000e-01 : f32
    %33 = vector.broadcast %cst_16 : f32 to vector<32x256xf32>
    %34 = arith.mulf %33, %32 : vector<32x256xf32>
    %35 = arith.mulf %32, %32 : vector<32x256xf32>
    %36 = arith.mulf %35, %32 : vector<32x256xf32>
    %cst_17 = arith.constant 4.471500e-02 : f32
    %37 = vector.broadcast %cst_17 : f32 to vector<32x256xf32>
    %38 = arith.mulf %37, %36 : vector<32x256xf32>
    %39 = arith.addf %32, %38 : vector<32x256xf32>
    %cst_18 = arith.constant 0.797884583 : f32
    %40 = vector.broadcast %cst_18 : f32 to vector<32x256xf32>
    %41 = arith.mulf %40, %39 : vector<32x256xf32>
    %42 = math.tanh %41 : vector<32x256xf32>
    %cst_19 = arith.constant 1.000000e+00 : f32
    %43 = vector.broadcast %cst_19 : f32 to vector<32x256xf32>
    %44 = arith.addf %43, %42 : vector<32x256xf32>
    %45 = arith.mulf %34, %44 : vector<32x256xf32>
    %46 = arith.truncf %45 : vector<32x256xf32> to vector<32x256xbf16>
    %c0_20 = arith.constant 0 : index
    %c0_21 = arith.constant 0 : index
    %47 = vector.load %arg7[%c0_20, %c0_21] : memref<256x64xbf16, #tpu.memory_space<vmem>>, vector<256x64xbf16>
    %cst_22 = arith.constant dense<0.000000e+00> : vector<32x64xf32>
    %48 = tpu.matmul %46, %47, %cst_22 {dimension_numbers = #tpu.dot_dimension_numbers<[1], [0], [0], [1], [0, 0, 1, 1], [], []>} : vector<32x256xbf16>, vector<256x64xbf16>, vector<32x64xf32> -> vector<32x64xf32>
    %c0_23 = arith.constant 0 : index
    %c0_24 = arith.constant 0 : index
    %49 = vector.load %arg8[%c0_23, %c0_24] : memref<1x64xf32, #tpu.memory_space<vmem>>, vector<1x64xf32>
    %50 = vector.broadcast %49 : vector<1x64xf32> to vector<32x64xf32>
    %51 = arith.addf %48, %50 : vector<32x64xf32>
    %52 = arith.addf %2, %51 : vector<32x64xf32>
    %c0_25 = arith.constant 0 : index
    %c0_26 = arith.constant 0 : index
    %53 = vector.load %arg9[%c0_25, %c0_26] : memref<32x64xf32, #tpu.memory_space<vmem>>, vector<32x64xf32>
    tpu.vector_store %arg9[%c0_25, %c0_26], %52 {strides = array<i32>} : memref<32x64xf32, #tpu.memory_space<vmem>>, vector<32x64xf32>,
    return
  }
  func.func @transform_0(%arg0: i32) -> (i32, i32) {
    %c0_i32 = arith.constant 0 : i32
    %c0_i32_0 = arith.constant 0 : i32
    return %arg0, %c0_i32 : i32, i32
  }
  func.func @transform_1(%arg0: i32) -> (i32, i32) {
    %c0_i32 = arith.constant 0 : i32
    %c0_i32_0 = arith.constant 0 : i32
    return %arg0, %c0_i32 : i32, i32
  }
  func.func @transform_2(%arg0: i32) -> (i32, i32) {
    %c0_i32 = arith.constant 0 : i32
    %c0_i32_0 = arith.constant 0 : i32
    %c0_i32_1 = arith.constant 0 : i32
    return %c0_i32, %c0_i32_0 : i32, i32
  }
  func.func @transform_3(%arg0: i32) -> (i32, i32) {
    %c0_i32 = arith.constant 0 : i32
    %c0_i32_0 = arith.constant 0 : i32
    %c0_i32_1 = arith.constant 0 : i32
    return %c0_i32, %c0_i32_0 : i32, i32
  }
  func.func @transform_4(%arg0: i32) -> (i32, i32) {
    %c0_i32 = arith.constant 0 : i32
    %c0_i32_0 = arith.constant 0 : i32
    %c0_i32_1 = arith.constant 0 : i32
    return %c0_i32, %c0_i32_0 : i32, i32
  }
  func.func @transform_5(%arg0: i32) -> (i32, i32) {
    %c0_i32 = arith.constant 0 : i32
    %c0_i32_0 = arith.constant 0 : i32
    %c0_i32_1 = arith.constant 0 : i32
    return %c0_i32, %c0_i32_0 : i32, i32
  }
  func.func @transform_6(%arg0: i32) -> (i32, i32) {
    %c0_i32 = arith.constant 0 : i32
    %c0_i32_0 = arith.constant 0 : i32
    %c0_i32_1 = arith.constant 0 : i32
    return %c0_i32, %c0_i32_0 : i32, i32
  }
  func.func @transform_7(%arg0: i32) -> (i32, i32) {
    %c0_i32 = arith.constant 0 : i32
    %c0_i32_0 = arith.constant 0 : i32
    %c0_i32_1 = arith.constant 0 : i32
    return %c0_i32, %c0_i32_0 : i32, i32
  }
  func.func @transform_8(%arg0: i32) -> (i32, i32) {
    %c0_i32 = arith.constant 0 : i32
    %c0_i32_0 = arith.constant 0 : i32
    return %arg0, %c0_i32 : i32, i32
  }
}

module attributes {stable_mosaic.version = 11 : i64} {
  func.func @_mlp_kernel(%arg0: i32, %arg1: memref<2x64xf32, #tpu.memory_space<vmem>>, %arg2: memref<2x64xf32, #tpu.memory_space<vmem>>, %arg3: memref<1x64xf32, #tpu.memory_space<vmem>>, %arg4: memref<1x64xf32, #tpu.memory_space<vmem>>, %arg5: memref<64x256xbf16, #tpu.memory_space<vmem>>, %arg6: memref<1x256xf32, #tpu.memory_space<vmem>>, %arg7: memref<256x64xbf16, #tpu.memory_space<vmem>>, %arg8: memref<1x64xf32, #tpu.memory_space<vmem>>, %arg9: memref<2x64xf32, #tpu.memory_space<vmem>>) attributes {dimension_semantics = [#tpu.dimension_semantics<parallel>], iteration_bounds = array<i64: 1>, scalar_prefetch = 0 : i64, scratch_operands = 0 : i64, tpu.core_type = #tpu.core_type<tc>, window_params = [{transform_indices = @transform_0, window_bounds = array<i64: 2, 64>}, {transform_indices = @transform_1, window_bounds = array<i64: 2, 64>}, {pipeline_mode = #tpu.pipeline_mode<synchronous>, transform_indices = @transform_2, window_bounds = array<i64: 1, 64>}, {pipeline_mode = #tpu.pipeline_mode<synchronous>, transform_indices = @transform_3, window_bounds = array<i64: 1, 64>}, {pipeline_mode = #tpu.pipeline_mode<synchronous>, transform_indices = @transform_4, window_bounds = array<i64: 64, 256>}, {pipeline_mode = #tpu.pipeline_mode<synchronous>, transform_indices = @transform_5, window_bounds = array<i64: 1, 256>}, {pipeline_mode = #tpu.pipeline_mode<synchronous>, transform_indices = @transform_6, window_bounds = array<i64: 256, 64>}, {pipeline_mode = #tpu.pipeline_mode<synchronous>, transform_indices = @transform_7, window_bounds = array<i64: 1, 64>}, {transform_indices = @transform_8, window_bounds = array<i64: 2, 64>}]} {
    %c0 = arith.constant 0 : index
    %c0_0 = arith.constant 0 : index
    %0 = vector.load %arg1[%c0, %c0_0] : memref<2x64xf32, #tpu.memory_space<vmem>>, vector<2x64xf32>
    %c0_1 = arith.constant 0 : index
    %c0_2 = arith.constant 0 : index
    %1 = vector.load %arg2[%c0_1, %c0_2] : memref<2x64xf32, #tpu.memory_space<vmem>>, vector<2x64xf32>
    %2 = arith.addf %0, %1 : vector<2x64xf32>
    %c0_3 = arith.constant 0 : index
    %c0_4 = arith.constant 0 : index
    %3 = vector.load %arg3[%c0_3, %c0_4] : memref<1x64xf32, #tpu.memory_space<vmem>>, vector<1x64xf32>
    %c0_5 = arith.constant 0 : index
    %c0_6 = arith.constant 0 : index
    %4 = vector.load %arg4[%c0_5, %c0_6] : memref<1x64xf32, #tpu.memory_space<vmem>>, vector<1x64xf32>
    %cst = arith.constant dense<0.000000e+00> : vector<2xf32>
    %5 = vector.multi_reduction <add>, %2, %cst [1] : vector<2x64xf32> to vector<2xf32>
    %6 = vector.shape_cast %5 : vector<2xf32> to vector<2x1xf32>
    %cst_7 = arith.constant 6.400000e+01 : f32
    %7 = vector.broadcast %cst_7 : f32 to vector<2x1xf32>
    %8 = arith.divf %6, %7 : vector<2x1xf32>
    %9 = vector.broadcast %8 : vector<2x1xf32> to vector<2x64xf32>
    %10 = arith.subf %2, %9 : vector<2x64xf32>
    %11 = arith.mulf %10, %10 : vector<2x64xf32>
    %cst_8 = arith.constant dense<0.000000e+00> : vector<2xf32>
    %12 = vector.multi_reduction <add>, %11, %cst_8 [1] : vector<2x64xf32> to vector<2xf32>
    %13 = vector.shape_cast %12 : vector<2xf32> to vector<2x1xf32>
    %cst_9 = arith.constant 6.400000e+01 : f32
    %14 = vector.broadcast %cst_9 : f32 to vector<2x1xf32>
    %15 = arith.divf %13, %14 : vector<2x1xf32>
    %16 = vector.broadcast %8 : vector<2x1xf32> to vector<2x64xf32>
    %17 = arith.subf %2, %16 : vector<2x64xf32>
    %cst_10 = arith.constant 9.99999974E-6 : f32
    %18 = vector.broadcast %cst_10 : f32 to vector<2x1xf32>
    %19 = arith.addf %15, %18 : vector<2x1xf32>
    %20 = math.rsqrt %19 : vector<2x1xf32>
    %21 = vector.broadcast %20 : vector<2x1xf32> to vector<2x64xf32>
    %22 = arith.mulf %17, %21 : vector<2x64xf32>
    %23 = vector.broadcast %3 : vector<1x64xf32> to vector<2x64xf32>
    %24 = arith.mulf %22, %23 : vector<2x64xf32>
    %25 = vector.broadcast %4 : vector<1x64xf32> to vector<2x64xf32>
    %26 = arith.addf %24, %25 : vector<2x64xf32>
    %27 = arith.truncf %26 : vector<2x64xf32> to vector<2x64xbf16>
    %c0_11 = arith.constant 0 : index
    %c0_12 = arith.constant 0 : index
    %28 = vector.load %arg5[%c0_11, %c0_12] : memref<64x256xbf16, #tpu.memory_space<vmem>>, vector<64x256xbf16>
    %cst_13 = arith.constant dense<0.000000e+00> : vector<2x256xf32>
    %29 = tpu.matmul %27, %28, %cst_13 {dimension_numbers = #tpu.dot_dimension_numbers<[1], [0], [0], [1], [0, 0, 1, 1], [], []>} : vector<2x64xbf16>, vector<64x256xbf16>, vector<2x256xf32> -> vector<2x256xf32>
    %c0_14 = arith.constant 0 : index
    %c0_15 = arith.constant 0 : index
    %30 = vector.load %arg6[%c0_14, %c0_15] : memref<1x256xf32, #tpu.memory_space<vmem>>, vector<1x256xf32>
    %31 = vector.broadcast %30 : vector<1x256xf32> to vector<2x256xf32>
    %32 = arith.addf %29, %31 : vector<2x256xf32>
    %cst_16 = arith.constant 5.000000e-01 : f32
    %33 = vector.broadcast %cst_16 : f32 to vector<2x256xf32>
    %34 = arith.mulf %33, %32 : vector<2x256xf32>
    %35 = arith.mulf %32, %32 : vector<2x256xf32>
    %36 = arith.mulf %35, %32 : vector<2x256xf32>
    %cst_17 = arith.constant 4.471500e-02 : f32
    %37 = vector.broadcast %cst_17 : f32 to vector<2x256xf32>
    %38 = arith.mulf %37, %36 : vector<2x256xf32>
    %39 = arith.addf %32, %38 : vector<2x256xf32>
    %cst_18 = arith.constant 0.797884583 : f32
    %40 = vector.broadcast %cst_18 : f32 to vector<2x256xf32>
    %41 = arith.mulf %40, %39 : vector<2x256xf32>
    %42 = math.tanh %41 : vector<2x256xf32>
    %cst_19 = arith.constant 1.000000e+00 : f32
    %43 = vector.broadcast %cst_19 : f32 to vector<2x256xf32>
    %44 = arith.addf %43, %42 : vector<2x256xf32>
    %45 = arith.mulf %34, %44 : vector<2x256xf32>
    %46 = arith.truncf %45 : vector<2x256xf32> to vector<2x256xbf16>
    %c0_20 = arith.constant 0 : index
    %c0_21 = arith.constant 0 : index
    %47 = vector.load %arg7[%c0_20, %c0_21] : memref<256x64xbf16, #tpu.memory_space<vmem>>, vector<256x64xbf16>
    %cst_22 = arith.constant dense<0.000000e+00> : vector<2x64xf32>
    %48 = tpu.matmul %46, %47, %cst_22 {dimension_numbers = #tpu.dot_dimension_numbers<[1], [0], [0], [1], [0, 0, 1, 1], [], []>} : vector<2x256xbf16>, vector<256x64xbf16>, vector<2x64xf32> -> vector<2x64xf32>
    %c0_23 = arith.constant 0 : index
    %c0_24 = arith.constant 0 : index
    %49 = vector.load %arg8[%c0_23, %c0_24] : memref<1x64xf32, #tpu.memory_space<vmem>>, vector<1x64xf32>
    %50 = vector.broadcast %49 : vector<1x64xf32> to vector<2x64xf32>
    %51 = arith.addf %48, %50 : vector<2x64xf32>
    %52 = arith.addf %2, %51 : vector<2x64xf32>
    %c0_25 = arith.constant 0 : index
    %c0_26 = arith.constant 0 : index
    %53 = vector.load %arg9[%c0_25, %c0_26] : memref<2x64xf32, #tpu.memory_space<vmem>>, vector<2x64xf32>
    tpu.vector_store %arg9[%c0_25, %c0_26], %52 {strides = array<i32>} : memref<2x64xf32, #tpu.memory_space<vmem>>, vector<2x64xf32>,
    return
  }
  func.func @transform_0(%arg0: i32) -> (i32, i32) {
    %c0_i32 = arith.constant 0 : i32
    %c0_i32_0 = arith.constant 0 : i32
    return %arg0, %c0_i32 : i32, i32
  }
  func.func @transform_1(%arg0: i32) -> (i32, i32) {
    %c0_i32 = arith.constant 0 : i32
    %c0_i32_0 = arith.constant 0 : i32
    return %arg0, %c0_i32 : i32, i32
  }
  func.func @transform_2(%arg0: i32) -> (i32, i32) {
    %c0_i32 = arith.constant 0 : i32
    %c0_i32_0 = arith.constant 0 : i32
    %c0_i32_1 = arith.constant 0 : i32
    return %c0_i32, %c0_i32_0 : i32, i32
  }
  func.func @transform_3(%arg0: i32) -> (i32, i32) {
    %c0_i32 = arith.constant 0 : i32
    %c0_i32_0 = arith.constant 0 : i32
    %c0_i32_1 = arith.constant 0 : i32
    return %c0_i32, %c0_i32_0 : i32, i32
  }
  func.func @transform_4(%arg0: i32) -> (i32, i32) {
    %c0_i32 = arith.constant 0 : i32
    %c0_i32_0 = arith.constant 0 : i32
    %c0_i32_1 = arith.constant 0 : i32
    return %c0_i32, %c0_i32_0 : i32, i32
  }
  func.func @transform_5(%arg0: i32) -> (i32, i32) {
    %c0_i32 = arith.constant 0 : i32
    %c0_i32_0 = arith.constant 0 : i32
    %c0_i32_1 = arith.constant 0 : i32
    return %c0_i32, %c0_i32_0 : i32, i32
  }
  func.func @transform_6(%arg0: i32) -> (i32, i32) {
    %c0_i32 = arith.constant 0 : i32
    %c0_i32_0 = arith.constant 0 : i32
    %c0_i32_1 = arith.constant 0 : i32
    return %c0_i32, %c0_i32_0 : i32, i32
  }
  func.func @transform_7(%arg0: i32) -> (i32, i32) {
    %c0_i32 = arith.constant 0 : i32
    %c0_i32_0 = arith.constant 0 : i32
    %c0_i32_1 = arith.constant 0 : i32
    return %c0_i32, %c0_i32_0 : i32, i32
  }
  func.func @transform_8(%arg0: i32) -> (i32, i32) {
    %c0_i32 = arith.constant 0 : i32
    %c0_i32_0 = arith.constant 0 : i32
    return %arg0, %c0_i32 : i32, i32
  }
}

</mosaic_0001>

<llo_original>
// kernel: tpu_custom_call.1
$region0: #{tpu_custom_call.1}
  #allocation0 [shape = 'u32[]', space=smem, size = 0x4, offset = 0x4, fixed_abs, tag = 'smem constant byte address 0x4 - core index']
  #allocation1 [shape = 'u32[72,128]{1,0:T(1,128)}', space=vmem, size = 0x9000, scoped, tag = 'internal scratch']
  %s0 = inlined_call_operand.hbm [shape: f32[8,128], index: 0, kind: input, shape index: {}]
  %s1 = inlined_call_operand.hbm [shape: f32[16,128], index: 1, kind: output, shape index: {}]
  %s2 = sld [smem:[#allocation0]]
  $region41: #{tpu_custom_call.1} parent=0
    _
  %s4 = ssub.s32 1, %s2
  %s5 = scalar_select 0, %s4, %s2
  $region1: #{tpu_custom_call.1} parent=0
    #allocation2 [shape = 'u8[4096]{0}', space=vmem, size = 0x1000, scoped, tag = 'input window, operand 0, single buffered']
    #allocation3 [shape = 's32[2]{0}', space=sflag, size = 0x8, scoped, tag = 'scoped memory for tpu_custom_call.1']
    #allocation4 [shape = 's32[2]{0}', space=sflag, size = 0x8, scoped, tag = 'scoped memory for tpu_custom_call.1']
    #allocation5 [shape = 'u8[8192]{0}', space=vmem, size = 0x2000, scoped, tag = 'output window, operand 0']
    %6 = vsyncpa [#allocation3], 0
    %7 = vsyncpa [#allocation4], 0
    %s8 = scalar_lea.sflag [#allocation4], 1
    %9 = vsyncpa %s8, 0
    loop: start=0, step=1, limit=4
    $region2: #{tpu_custom_call.1} parent=1 // loop_pre_header
      _
    $region3: #{tpu_custom_call.1} parent=1 // loop_header
      %s11 = sphi 0, %s15
      %p12 = scmp.ge.s32.totalorder %s11, 4
      %s19 = sphi 0, %s19
      %s21 = sphi 0, %s19
      %s22 = sphi 0, %s21
      %s36 = sphi 0, %s22
      %s42 = sphi 0, %s44
      %s45 = sphi 0, %s42
      %s46 = sphi 0, %s45
      %s62 = sphi 0, %s46
    $region4: #{tpu_custom_call.1} parent=1 // loop_header_branch
      %14 = sbr.rel (%p12) target = $region8
    $region5: #{tpu_custom_call.1} parent=1 // loop_body
      %s16 = ssub.s32 %s11, 1
      %s17 = ssub.s32 %s11, 2
      %s18 = sadd.s32 %s11, 1
      %s20 = sadd.s32 %s19, 1
      %p23 = scmp.eq.s32.totalorder %s11, 1
      %p24 = scmp.ne.s32.totalorder %s19, %s21
      %p25 = scmp.eq.s32.totalorder %s11, 0
      %p26 = por %p24, %p25
      %p27 = scmp.ne.s32.totalorder %s19, %s21
      %p28 = scmp.eq.s32.totalorder %s16, 1
      %p29 = por %p27, %p28
      %p30 = scmp.ne.s32.totalorder %s21, %s22
      %p31 = scmp.eq.s32.totalorder %s16, 0
      %p32 = por %p30, %p31
      %p33 = scmp.ne.s32.totalorder %s21, %s22
      %p34 = scmp.eq.s32.totalorder %s17, 1
      %p35 = por %p33, %p34
      %p37 = scmp.ne.s32.totalorder %s22, %s36
      %p38 = scmp.eq.s32.totalorder %s17, 0
      %p39 = por %p37, %p38
      %s40 = ssub.s32 %s11, %s18
      %p41 = scmp.eq.s32.totalorder %s40, 0
      %s43 = sadd.s32 %s42, 1
      %s44 = scalar_select %p41, %s42, %s43
      %p47 = pneg %p41
      %p48 = scmp.eq.s32.totalorder %s11, 1
      %p49 = por %p47, %p48
      %p50 = scmp.ne.s32.totalorder %s42, %s45
      %p51 = scmp.eq.s32.totalorder %s11, 0
      %p52 = por %p50, %p51
      %p53 = scmp.ne.s32.totalorder %s42, %s45
      %p54 = scmp.eq.s32.totalorder %s16, 1
      %p55 = por %p53, %p54
      %p56 = scmp.ne.s32.totalorder %s45, %s46
      %p57 = scmp.eq.s32.totalorder %s16, 0
      %p58 = por %p56, %p57
      %p59 = scmp.ne.s32.totalorder %s45, %s46
      %p60 = scmp.eq.s32.totalorder %s17, 1
      %p61 = por %p59, %p60
      %p63 = scmp.ne.s32.totalorder %s46, %s62
      %p64 = scmp.eq.s32.totalorder %s17, 0
      %p65 = por %p63, %p64
      %p66 = scmp.le.s32.totalorder 1, %s11
      %p67 = scmp.lt.s32.totalorder %s11, 3
      %p68 = pnand %p66, %p67
      %p69 = pneg %p68
      // Predicated region
      $region9: #{tpu_custom_call.1} parent=5 // pred_check
        _
      $region10: #{tpu_custom_call.1} parent=5 // pred_check_branch
        %71 = sbr.rel (%p68) target = $region12
      $region11: #{tpu_custom_call.1} parent=5 // pred_region
        %s72 = ssub.s32 %s11, 1
        // Predicated region
        $region13: #{tpu_custom_call.1} parent=11 // pred_check
          %p73 = pneg %p32
        $region14: #{tpu_custom_call.1} parent=11 // pred_check_branch
          %75 = sbr.rel (%p73) target = $region16
        $region15: #{tpu_custom_call.1} parent=11 // pred_region
          %77 = vsyncadd [#allocation3], 0
          %s79 = sshll.u32 %s0, 4
          %s80 = int_to_ptr.hbm [resolvable:$true] %s79
          %s81 = sshll.u32 [#allocation2], 4
          %s82 = int_to_ptr.vmem [resolvable:$true] %s81
          %84 = dma.hbm_to_vmem [thread:$0]  %s80, 128, %s82, [#allocation3]
        $region16: #{tpu_custom_call.1} parent=11 // pred_fallthru
          _
      $region12: #{tpu_custom_call.1} parent=5 // pred_fallthru
        _
      %p85 = scmp.lt.s32.totalorder %s11, 2
      // Predicated region
      $region17: #{tpu_custom_call.1} parent=5 // pred_check
        %p86 = pneg %p85
      $region18: #{tpu_custom_call.1} parent=5 // pred_check_branch
        %88 = sbr.rel (%p86) target = $region20
      $region19: #{tpu_custom_call.1} parent=5 // pred_region
        _
      $region20: #{tpu_custom_call.1} parent=5 // pred_fallthru
        _
      %p89 = scmp.le.s32.totalorder 1, %s11
      %p90 = scmp.lt.s32.totalorder %s11, 3
      %p91 = pnand %p89, %p90
      %p92 = pneg %p91
      // Predicated region
      $region21: #{tpu_custom_call.1} parent=5 // pred_check
        _
      $region22: #{tpu_custom_call.1} parent=5 // pred_check_branch
        %94 = sbr.rel (%p91) target = $region24
      $region23: #{tpu_custom_call.1} parent=5 // pred_region
        %s95 = ssub.s32 %s11, 1
        // Predicated region
        $region25: #{tpu_custom_call.1} parent=23 // pred_check
          %p96 = pneg %p32
        $region26: #{tpu_custom_call.1} parent=23 // pred_check_branch
          %98 = sbr.rel (%p96) target = $region28
        $region27: #{tpu_custom_call.1} parent=23 // pred_region
          %100 = dma.done [#allocation3], 128
        $region28: #{tpu_custom_call.1} parent=23 // pred_fallthru
          _
        %p101 = pneg %p32
        %p102 = pneg %p29
        %p103 = pneg %p58
        %p104 = pneg %p55
        %s105 = sand.u32 %s45, 1
        %s106 = scalar_lea.sflag [#allocation4], %s105
        %s107 = sand.u32 %s45, 1
        %s108 = smul.addr %s107, 8
        %s109 = scalar_lea.vmem [#allocation5], %s108
        %v110 = vld [vmem:[#allocation2] sm:$0xff]
        %111 = vst [vmem:[%s109] sm:$0xff] %v110
        %s112 = sand.u32 %s45, 1
        %s113 = scalar_lea.sflag [#allocation4], %s112
        %s114 = sand.u32 %s45, 1
        %s115 = smul.addr %s114, 8
        %s116 = scalar_lea.vmem [#allocation5], %s115
        // Predicated region
        $region29: #{tpu_custom_call.1} parent=23 // pred_check
          %p117 = pneg %p55
        $region30: #{tpu_custom_call.1} parent=23 // pred_check_branch
          %119 = sbr.rel (%p117) target = $region32
        $region31: #{tpu_custom_call.1} parent=23 // pred_region
          %121 = vsyncadd %s113, 0
          %s122 = smul.addr %s16, 8
          %s123 = scalar_lea.hbm %s1, %s122
          %s125 = sshll.u32 %s116, 4
          %s126 = int_to_ptr.vmem [resolvable:$true] %s125
          %s127 = sshll.u32 %s123, 4
          %s128 = int_to_ptr.hbm [resolvable:$true] %s127
          %130 = dma.vmem_to_hbm [thread:$0]  %s126, 128, %s128, %s113
        $region32: #{tpu_custom_call.1} parent=23 // pred_fallthru
          _
      $region24: #{tpu_custom_call.1} parent=5 // pred_fallthru
        _
      %p131 = scmp.le.s32.totalorder 2, %s11
      // Predicated region
      $region33: #{tpu_custom_call.1} parent=5 // pred_check
        %p132 = pneg %p131
      $region34: #{tpu_custom_call.1} parent=5 // pred_check_branch
        %134 = sbr.rel (%p132) target = $region36
      $region35: #{tpu_custom_call.1} parent=5 // pred_region
        %s135 = ssub.s32 %s11, 2
        // Predicated region
        $region37: #{tpu_custom_call.1} parent=35 // pred_check
          %p136 = pneg %p61
        $region38: #{tpu_custom_call.1} parent=35 // pred_check_branch
          %138 = sbr.rel (%p136) target = $region40
        $region39: #{tpu_custom_call.1} parent=35 // pred_region
          %s139 = sand.u32 %s46, 1
          %s140 = scalar_lea.sflag [#allocation4], %s139
          %s141 = sand.u32 %s46, 1
          %s142 = smul.addr %s141, 8
          %s143 = scalar_lea.vmem [#allocation5], %s142
          %145 = dma.done %s140, 128
        $region40: #{tpu_custom_call.1} parent=35 // pred_fallthru
          _
      $region36: #{tpu_custom_call.1} parent=5 // pred_fallthru
        _
    $region6: #{tpu_custom_call.1} parent=1 // loop_footer
      %s15 = sadd.s32 1, %s11
    $region7: #{tpu_custom_call.1} parent=1 // loop_footer_branch
      %10 = sbr.rel target = $region3
    $region8: #{tpu_custom_call.1} parent=1 // loop_exit
      _
    %146 = vsyncpa [#allocation3], 1
    %s147 = scalar_lea.sflag [#allocation3], 1
    %148 = vsyncpa %s147, 1
    %149 = vsyncpa [#allocation4], 1
    %s150 = scalar_lea.sflag [#allocation4], 1
    %151 = vsyncpa %s150, 1

// kernel: block_forward.6
$region0: #{block_forward.6}
  #allocation0 [shape = 'u32[]', space=smem, size = 0x4, offset = 0x4, fixed_abs, tag = 'smem constant byte address 0x4 - core index']
  #allocation1 [shape = 'u32[72,128]{1,0:T(1,128)}', space=vmem, size = 0x9000, scoped, tag = 'internal scratch']
  %s0 = inlined_call_operand.vmem [shape: f32[64,64], index: 0, kind: input, shape index: {}]
  %s1 = inlined_call_operand.vmem [shape: f32[64,64], index: 1, kind: input, shape index: {}]
  %s2 = inlined_call_operand.vmem [shape: f32[1,64], index: 2, kind: input, shape index: {}]
  %s3 = inlined_call_operand.vmem [shape: f32[1,64], index: 3, kind: input, shape index: {}]
  %s4 = inlined_call_operand.vmem [shape: bf16[64,256], index: 4, kind: input, shape index: {}]
  %s5 = inlined_call_operand.vmem [shape: f32[1,256], index: 5, kind: input, shape index: {}]
  %s6 = inlined_call_operand.vmem [shape: bf16[256,64], index: 6, kind: input, shape index: {}]
  %s7 = inlined_call_operand.vmem [shape: f32[1,64], index: 7, kind: input, shape index: {}]
  %s8 = inlined_call_operand.vmem [shape: f32[64,64], index: 8, kind: output, shape index: {}]
  %s9 = sld [smem:[#allocation0]]
  $region65: #{block_forward.6} parent=0
    _
  %s11 = ssub.s32 1, %s9
  %s12 = scalar_select 0, %s11, %s9
  loop: start=0, step=1, limit=4
  $region2: #{block_forward.6} parent=0 // loop_pre_header
    _
  $region3: #{block_forward.6} parent=0 // loop_header
    %s14 = sphi 0, %s18
    %p15 = scmp.ge.s32.totalorder %s14, 4
    %s24 = sphi 0, %s26
    %s27 = sphi 0, %s24
    %s28 = sphi 0, %s27
    %s44 = sphi 0, %s28
    %s50 = sphi 0, %s52
    %s53 = sphi 0, %s50
    %s54 = sphi 0, %s53
    %s70 = sphi 0, %s54
    %s74 = sphi 0, %s74
    %s76 = sphi 0, %s74
    %s77 = sphi 0, %s76
    %s91 = sphi 0, %s77
    %s95 = sphi 0, %s95
    %s97 = sphi 0, %s95
    %s98 = sphi 0, %s97
    %s112 = sphi 0, %s98
    %s116 = sphi 0, %s116
    %s118 = sphi 0, %s116
    %s119 = sphi 0, %s118
    %s133 = sphi 0, %s119
    %s137 = sphi 0, %s137
    %s139 = sphi 0, %s137
    %s140 = sphi 0, %s139
    %s154 = sphi 0, %s140
    %s158 = sphi 0, %s158
    %s160 = sphi 0, %s158
    %s161 = sphi 0, %s160
    %s175 = sphi 0, %s161
    %s179 = sphi 0, %s179
    %s181 = sphi 0, %s179
    %s182 = sphi 0, %s181
    %s196 = sphi 0, %s182
    %s202 = sphi 0, %s204
    %s205 = sphi 0, %s202
    %s206 = sphi 0, %s205
    %s222 = sphi 0, %s206
  $region4: #{block_forward.6} parent=0 // loop_header_branch
    %17 = sbr.rel (%p15) target = $region8
  $region5: #{block_forward.6} parent=0 // loop_body
    %s19 = ssub.s32 %s14, 1
    %s20 = ssub.s32 %s14, 2
    %s21 = sadd.s32 %s14, 1
    %s22 = ssub.s32 %s14, %s21
    %p23 = scmp.eq.s32.totalorder %s22, 0
    %s25 = sadd.s32 %s24, 1
    %s26 = scalar_select %p23, %s24, %s25
    %p29 = pneg %p23
    %p30 = scmp.eq.s32.totalorder %s14, 1
    %p31 = por %p29, %p30
    %p32 = scmp.ne.s32.totalorder %s24, %s27
    %p33 = scmp.eq.s32.totalorder %s14, 0
    %p34 = por %p32, %p33
    %p35 = scmp.ne.s32.totalorder %s24, %s27
    %p36 = scmp.eq.s32.totalorder %s19, 1
    %p37 = por %p35, %p36
    %p38 = scmp.ne.s32.totalorder %s27, %s28
    %p39 = scmp.eq.s32.totalorder %s19, 0
    %p40 = por %p38, %p39
    %p41 = scmp.ne.s32.totalorder %s27, %s28
    %p42 = scmp.eq.s32.totalorder %s20, 1
    %p43 = por %p41, %p42
    %p45 = scmp.ne.s32.totalorder %s28, %s44
    %p46 = scmp.eq.s32.totalorder %s20, 0
    %p47 = por %p45, %p46
    %s48 = ssub.s32 %s14, %s21
    %p49 = scmp.eq.s32.totalorder %s48, 0
    %s51 = sadd.s32 %s50, 1
    %s52 = scalar_select %p49, %s50, %s51
    %p55 = pneg %p49
    %p56 = scmp.eq.s32.totalorder %s14, 1
    %p57 = por %p55, %p56
    %p58 = scmp.ne.s32.totalorder %s50, %s53
    %p59 = scmp.eq.s32.totalorder %s14, 0
    %p60 = por %p58, %p59
    %p61 = scmp.ne.s32.totalorder %s50, %s53
    %p62 = scmp.eq.s32.totalorder %s19, 1
    %p63 = por %p61, %p62
    %p64 = scmp.ne.s32.totalorder %s53, %s54
    %p65 = scmp.eq.s32.totalorder %s19, 0
    %p66 = por %p64, %p65
    %p67 = scmp.ne.s32.totalorder %s53, %s54
    %p68 = scmp.eq.s32.totalorder %s20, 1
    %p69 = por %p67, %p68
    %p71 = scmp.ne.s32.totalorder %s54, %s70
    %p72 = scmp.eq.s32.totalorder %s20, 0
    %p73 = por %p71, %p72
    %s75 = sadd.s32 %s74, 1
    %p78 = scmp.eq.s32.totalorder %s14, 1
    %p79 = scmp.ne.s32.totalorder %s74, %s76
    %p80 = scmp.eq.s32.totalorder %s14, 0
    %p81 = por %p79, %p80
    %p82 = scmp.ne.s32.totalorder %s74, %s76
    %p83 = scmp.eq.s32.totalorder %s19, 1
    %p84 = por %p82, %p83
    %p85 = scmp.ne.s32.totalorder %s76, %s77
    %p86 = scmp.eq.s32.totalorder %s19, 0
    %p87 = por %p85, %p86
    %p88 = scmp.ne.s32.totalorder %s76, %s77
    %p89 = scmp.eq.s32.totalorder %s20, 1
    %p90 = por %p88, %p89
    %p92 = scmp.ne.s32.totalorder %s77, %s91
    %p93 = scmp.eq.s32.totalorder %s20, 0
    %p94 = por %p92, %p93
    %s96 = sadd.s32 %s95, 1
    %p99 = scmp.eq.s32.totalorder %s14, 1
    %p100 = scmp.ne.s32.totalorder %s95, %s97
    %p101 = scmp.eq.s32.totalorder %s14, 0
    %p102 = por %p100, %p101
    %p103 = scmp.ne.s32.totalorder %s95, %s97
    %p104 = scmp.eq.s32.totalorder %s19, 1
    %p105 = por %p103, %p104
    %p106 = scmp.ne.s32.totalorder %s97, %s98
    %p107 = scmp.eq.s32.totalorder %s19, 0
    %p108 = por %p106, %p107
    %p109 = scmp.ne.s32.totalorder %s97, %s98
    %p110 = scmp.eq.s32.totalorder %s20, 1
    %p111 = por %p109, %p110
    %p113 = scmp.ne.s32.totalorder %s98, %s112
    %p114 = scmp.eq.s32.totalorder %s20, 0
    %p115 = por %p113, %p114
    %s117 = sadd.s32 %s116, 1
    %p120 = scmp.eq.s32.totalorder %s14, 1
    %p121 = scmp.ne.s32.totalorder %s116, %s118
    %p122 = scmp.eq.s32.totalorder %s14, 0
    %p123 = por %p121, %p122
    %p124 = scmp.ne.s32.totalorder %s116, %s118
    %p125 = scmp.eq.s32.totalorder %s19, 1
    %p126 = por %p124, %p125
    %p127 = scmp.ne.s32.totalorder %s118, %s119
    %p128 = scmp.eq.s32.totalorder %s19, 0
    %p129 = por %p127, %p128
    %p130 = scmp.ne.s32.totalorder %s118, %s119
    %p131 = scmp.eq.s32.totalorder %s20, 1
    %p132 = por %p130, %p131
    %p134 = scmp.ne.s32.totalorder %s119, %s133
    %p135 = scmp.eq.s32.totalorder %s20, 0
    %p136 = por %p134, %p135
    %s138 = sadd.s32 %s137, 1
    %p141 = scmp.eq.s32.totalorder %s14, 1
    %p142 = scmp.ne.s32.totalorder %s137, %s139
    %p143 = scmp.eq.s32.totalorder %s14, 0
    %p144 = por %p142, %p143
    %p145 = scmp.ne.s32.totalorder %s137, %s139
    %p146 = scmp.eq.s32.totalorder %s19, 1
    %p147 = por %p145, %p146
    %p148 = scmp.ne.s32.totalorder %s139, %s140
    %p149 = scmp.eq.s32.totalorder %s19, 0
    %p150 = por %p148, %p149
    %p151 = scmp.ne.s32.totalorder %s139, %s140
    %p152 = scmp.eq.s32.totalorder %s20, 1
    %p153 = por %p151, %p152
    %p155 = scmp.ne.s32.totalorder %s140, %s154
    %p156 = scmp.eq.s32.totalorder %s20, 0
    %p157 = por %p155, %p156
    %s159 = sadd.s32 %s158, 1
    %p162 = scmp.eq.s32.totalorder %s14, 1
    %p163 = scmp.ne.s32.totalorder %s158, %s160
    %p164 = scmp.eq.s32.totalorder %s14, 0
    %p165 = por %p163, %p164
    %p166 = scmp.ne.s32.totalorder %s158, %s160
    %p167 = scmp.eq.s32.totalorder %s19, 1
    %p168 = por %p166, %p167
    %p169 = scmp.ne.s32.totalorder %s160, %s161
    %p170 = scmp.eq.s32.totalorder %s19, 0
    %p171 = por %p169, %p170
    %p172 = scmp.ne.s32.totalorder %s160, %s161
    %p173 = scmp.eq.s32.totalorder %s20, 1
    %p174 = por %p172, %p173
    %p176 = scmp.ne.s32.totalorder %s161, %s175
    %p177 = scmp.eq.s32.totalorder %s20, 0
    %p178 = por %p176, %p177
    %s180 = sadd.s32 %s179, 1
    %p183 = scmp.eq.s32.totalorder %s14, 1
    %p184 = scmp.ne.s32.totalorder %s179, %s181
    %p185 = scmp.eq.s32.totalorder %s14, 0
    %p186 = por %p184, %p185
    %p187 = scmp.ne.s32.totalorder %s179, %s181
    %p188 = scmp.eq.s32.totalorder %s19, 1
    %p189 = por %p187, %p188
    %p190 = scmp.ne.s32.totalorder %s181, %s182
    %p191 = scmp.eq.s32.totalorder %s19, 0
    %p192 = por %p190, %p191
    %p193 = scmp.ne.s32.totalorder %s181, %s182
    %p194 = scmp.eq.s32.totalorder %s20, 1
    %p195 = por %p193, %p194
    %p197 = scmp.ne.s32.totalorder %s182, %s196
    %p198 = scmp.eq.s32.totalorder %s20, 0
    %p199 = por %p197, %p198
    %s200 = ssub.s32 %s14, %s21
    %p201 = scmp.eq.s32.totalorder %s200, 0
    %s203 = sadd.s32 %s202, 1
    %s204 = scalar_select %p201, %s202, %s203
    %p207 = pneg %p201
    %p208 = scmp.eq.s32.totalorder %s14, 1
    %p209 = por %p207, %p208
    %p210 = scmp.ne.s32.totalorder %s202, %s205
    %p211 = scmp.eq.s32.totalorder %s14, 0
    %p212 = por %p210, %p211
    %p213 = scmp.ne.s32.totalorder %s202, %s205
    %p214 = scmp.eq.s32.totalorder %s19, 1
    %p215 = por %p213, %p214
    %p216 = scmp.ne.s32.totalorder %s205, %s206
    %p217 = scmp.eq.s32.totalorder %s19, 0
    %p218 = por %p216, %p217
    %p219 = scmp.ne.s32.totalorder %s205, %s206
    %p220 = scmp.eq.s32.totalorder %s20, 1
    %p221 = por %p219, %p220
    %p223 = scmp.ne.s32.totalorder %s206, %s222
    %p224 = scmp.eq.s32.totalorder %s20, 0
    %p225 = por %p223, %p224
    %p226 = scmp.le.s32.totalorder 1, %s14
    %p227 = scmp.lt.s32.totalorder %s14, 3
    %p228 = pnand %p226, %p227
    %p229 = pneg %p228
    // Predicated region
    $region9: #{block_forward.6} parent=5 // pred_check
      _
    $region10: #{block_forward.6} parent=5 // pred_check_branch
      %231 = sbr.rel (%p228) target = $region12
    $region11: #{block_forward.6} parent=5 // pred_region
      %s232 = ssub.s32 %s14, 1
      // Predicated region
      $region13: #{block_forward.6} parent=11 // pred_check
        %p233 = pneg %p87
      $region14: #{block_forward.6} parent=11 // pred_check_branch
        %235 = sbr.rel (%p233) target = $region16
      $region15: #{block_forward.6} parent=11 // pred_region
        _
      $region16: #{block_forward.6} parent=11 // pred_fallthru
        _
      // Predicated region
      $region17: #{block_forward.6} parent=11 // pred_check
        %p236 = pneg %p108
      $region18: #{block_forward.6} parent=11 // pred_check_branch
        %238 = sbr.rel (%p236) target = $region20
      $region19: #{block_forward.6} parent=11 // pred_region
        _
      $region20: #{block_forward.6} parent=11 // pred_fallthru
        _
      // Predicated region
      $region21: #{block_forward.6} parent=11 // pred_check
        %p239 = pneg %p129
      $region22: #{block_forward.6} parent=11 // pred_check_branch
        %241 = sbr.rel (%p239) target = $region24
      $region23: #{block_forward.6} parent=11 // pred_region
        _
      $region24: #{block_forward.6} parent=11 // pred_fallthru
        _
      // Predicated region
      $region25: #{block_forward.6} parent=11 // pred_check
        %p242 = pneg %p150
      $region26: #{block_forward.6} parent=11 // pred_check_branch
        %244 = sbr.rel (%p242) target = $region28
      $region27: #{block_forward.6} parent=11 // pred_region
        _
      $region28: #{block_forward.6} parent=11 // pred_fallthru
        _
      // Predicated region
      $region29: #{block_forward.6} parent=11 // pred_check
        %p245 = pneg %p171
      $region30: #{block_forward.6} parent=11 // pred_check_branch
        %247 = sbr.rel (%p245) target = $region32
      $region31: #{block_forward.6} parent=11 // pred_region
        _
      $region32: #{block_forward.6} parent=11 // pred_fallthru
        _
      // Predicated region
      $region33: #{block_forward.6} parent=11 // pred_check
        %p248 = pneg %p192
      $region34: #{block_forward.6} parent=11 // pred_check_branch
        %250 = sbr.rel (%p248) target = $region36
      $region35: #{block_forward.6} parent=11 // pred_region
        _
      $region36: #{block_forward.6} parent=11 // pred_fallthru
        _
    $region12: #{block_forward.6} parent=5 // pred_fallthru
      _
    %p251 = scmp.lt.s32.totalorder %s14, 2
    // Predicated region
    $region37: #{block_forward.6} parent=5 // pred_check
      %p252 = pneg %p251
    $region38: #{block_forward.6} parent=5 // pred_check_branch
      %254 = sbr.rel (%p252) target = $region40
    $region39: #{block_forward.6} parent=5 // pred_region
      // Predicated region
      $region41: #{block_forward.6} parent=39 // pred_check
        %p255 = pneg %p34
      $region42: #{block_forward.6} parent=39 // pred_check_branch
        %257 = sbr.rel (%p255) target = $region44
      $region43: #{block_forward.6} parent=39 // pred_region
        %s258 = smul.u32 4, %s14
        %p259 = scmp.lt.s32.totalorder %s258, 7
        %s260 = scalar_select %p259, %s258, 7
        %s261 = smul.addr %s260, 8
        %s262 = scalar_lea.vmem %s0, %s261
        %s263 = smul.u32 4, %s14
      $region44: #{block_forward.6} parent=39 // pred_fallthru
        _
      // Predicated region
      $region45: #{block_forward.6} parent=39 // pred_check
        %p264 = pneg %p60
      $region46: #{block_forward.6} parent=39 // pred_check_branch
        %266 = sbr.rel (%p264) target = $region48
      $region47: #{block_forward.6} parent=39 // pred_region
        %s267 = smul.u32 4, %s14
        %p268 = scmp.lt.s32.totalorder %s267, 7
        %s269 = scalar_select %p268, %s267, 7
        %s270 = smul.addr %s269, 8
        %s271 = scalar_lea.vmem %s1, %s270
        %s272 = smul.u32 4, %s14
      $region48: #{block_forward.6} parent=39 // pred_fallthru
        _
    $region40: #{block_forward.6} parent=5 // pred_fallthru
      _
    %p273 = scmp.le.s32.totalorder 1, %s14
    %p274 = scmp.lt.s32.totalorder %s14, 3
    %p275 = pnand %p273, %p274
    %p276 = pneg %p275
    // Predicated region
    $region49: #{block_forward.6} parent=5 // pred_check
      _
    $region50: #{block_forward.6} parent=5 // pred_check_branch
      %278 = sbr.rel (%p275) target = $region52
    $region51: #{block_forward.6} parent=5 // pred_region
      %s279 = ssub.s32 %s14, 1
      %s280 = smul.u32 4, %s19
      %p281 = scmp.lt.s32.totalorder %s280, 7
      %s282 = scalar_select %p281, %s280, 7
      %s283 = smul.addr %s282, 8
      %s284 = scalar_lea.vmem %s0, %s283
      %p285 = pneg %p40
      %p286 = pneg %p37
      %s287 = smul.u32 4, %s19
      %p288 = scmp.lt.s32.totalorder %s287, 7
      %s289 = scalar_select %p288, %s287, 7
      %s290 = smul.addr %s289, 8
      %s291 = scalar_lea.vmem %s1, %s290
      %p292 = pneg %p66
      %p293 = pneg %p63
      %p294 = pneg %p87
      %p295 = pneg %p84
      %p296 = pneg %p108
      %p297 = pneg %p105
      %p298 = pneg %p129
      %p299 = pneg %p126
      %p300 = pneg %p150
      %p301 = pneg %p147
      %p302 = pneg %p171
      %p303 = pneg %p168
      %p304 = pneg %p192
      %p305 = pneg %p189
      %p306 = pneg %p218
      %p307 = pneg %p215
      %s308 = smul.u32 4, %s19
      %p309 = scmp.lt.s32.totalorder %s308, 7
      %s310 = scalar_select %p309, %s308, 7
      %s311 = smul.addr %s310, 8
      %s312 = scalar_lea.vmem %s8, %s311
      %s313 = smul.u32 4, %s19
      %p314 = scmp.lt.s32.totalorder %s313, 7
      %s315 = scalar_select %p314, %s313, 7
      %s316 = smul.addr %s315, 8
      %s317 = scalar_lea.vmem %s0, %s316
      %s318 = smul.u32 4, %s19
      %s319 = smul.u32 4, %s19
      %p320 = scmp.lt.s32.totalorder %s319, 7
      %s321 = scalar_select %p320, %s319, 7
      %s322 = smul.addr %s321, 8
      %s323 = scalar_lea.vmem %s1, %s322
      %s324 = smul.u32 4, %s19
      %s325 = smul.u32 4, %s19
      %p326 = scmp.lt.s32.totalorder %s325, 7
      %s327 = scalar_select %p326, %s325, 7
      %s328 = smul.addr %s327, 8
      %s329 = scalar_lea.vmem %s8, %s328
      %s330 = smul.u32 4, %s19
      %v332 = vld [vmem:[%s317] sm:$0xff]
      %v333 = vld [vmem:[%s317 + $0x8] sm:$0xff]
      %v334 = vld [vmem:[%s317 + $0x10] sm:$0xff]
      %v335 = vld [vmem:[%s317 + $0x18] sm:$0xff]
      %v336 = vld [vmem:[%s323] sm:$0xff]
      %v337 = vld [vmem:[%s323 + $0x8] sm:$0xff]
      %v338 = vld [vmem:[%s323 + $0x10] sm:$0xff]
      %v339 = vld [vmem:[%s323 + $0x18] sm:$0xff]
      %v340 = vadd.f32 %v332, %v336
      %v341 = vadd.f32 %v333, %v337
      %v342 = vadd.f32 %v334, %v338
      %v343 = vadd.f32 %v335, %v339
      %v344 = vld [vmem:[%s2] sm:$0x1]
      %v345 = vld [vmem:[%s3] sm:$0x1]
      %vm346 = vcmask 523264
      %v347 = vsel %vm346, %v340, 0.0
      %348 = vadd.xlane.f32.xlu0 %v347
      %v349 = vpop.xlane.xlu0 %348
      %v350 = vsel %vm346, %v341, 0.0
      %351 = vadd.xlane.f32.xlu0 %v350
      %v352 = vpop.xlane.xlu0 %351
      %v353 = vsel %vm346, %v342, 0.0
      %354 = vadd.xlane.f32.xlu0 %v353
      %v355 = vpop.xlane.xlu0 %354
      %v356 = vsel %vm346, %v343, 0.0
      %357 = vadd.xlane.f32.xlu0 %v356
      %v358 = vpop.xlane.xlu0 %357
      %v359 = vrcp.pop 64.0
      %v360 = vmul.f32 64.0, %v359
      %v361 = vsub.f32 1.0, %v360
      %v362 = vmul.f32 %v359, %v361
      %v363 = vadd.f32 %v359, %v362
      %vm364 = vweird.f32 %v359
      %v365 = vsel %vm364, %v359, %v363
      %v366 = vmul.f32 %v349, %v365
      %v367 = vmul.f32 %v352, %v365
      %v368 = vmul.f32 %v355, %v365
      %v369 = vmul.f32 %v358, %v365
      %v370 = vsub.f32 %v340, %v366
      %v371 = vsub.f32 %v341, %v367
      %v372 = vsub.f32 %v342, %v368
      %v373 = vsub.f32 %v343, %v369
      %v374 = vmul.f32 %v370, %v370
      %v375 = vmul.f32 %v371, %v371
      %v376 = vmul.f32 %v372, %v372
      %v377 = vmul.f32 %v373, %v373
      %v378 = vsel %vm346, %v374, 0.0
      %379 = vadd.xlane.f32.xlu0 %v378
      %v380 = vpop.xlane.xlu0 %379
      %v381 = vsel %vm346, %v375, 0.0
      %382 = vadd.xlane.f32.xlu0 %v381
      %v383 = vpop.xlane.xlu0 %382
      %v384 = vsel %vm346, %v376, 0.0
      %385 = vadd.xlane.f32.xlu0 %v384
      %v386 = vpop.xlane.xlu0 %385
      %v387 = vsel %vm346, %v377, 0.0
      %388 = vadd.xlane.f32.xlu0 %v387
      %v389 = vpop.xlane.xlu0 %388
      %v390 = vmul.f32 %v380, %v365
      %v391 = vmul.f32 %v383, %v365
      %v392 = vmul.f32 %v386, %v365
      %v393 = vmul.f32 %v389, %v365
      %v394 = vadd.f32 %v390, 1e-05
      %v395 = vadd.f32 %v391, 1e-05
      %v396 = vadd.f32 %v392, 1e-05
      %v397 = vadd.f32 %v393, 1e-05
      %v398 = vrsqrt.pop %v394
      %v399 = vmul.f32 %v398, %v394
      %v400 = vmul.f32 %v399, %v398
      %v401 = vmul.f32 0.5, %v400
      %v402 = vsub.f32 1.5, %v401
      %v403 = vmul.f32 %v398, %v402
      %vm404 = vweird.f32 %v394
      %vm405 = vweird.f32 %v398
      %vm406 = vmor %vm404, %vm405
      %v407 = vsel %vm406, %v398, %v403
      %v408 = vrsqrt.pop %v395
      %v409 = vmul.f32 %v408, %v395
      %v410 = vmul.f32 %v409, %v408
      %v411 = vmul.f32 0.5, %v410
      %v412 = vsub.f32 1.5, %v411
      %v413 = vmul.f32 %v408, %v412
      %vm414 = vweird.f32 %v395
      %vm415 = vweird.f32 %v408
      %vm416 = vmor %vm414, %vm415
      %v417 = vsel %vm416, %v408, %v413
      %v418 = vrsqrt.pop %v396
      %v419 = vmul.f32 %v418, %v396
      %v420 = vmul.f32 %v419, %v418
      %v421 = vmul.f32 0.5, %v420
      %v422 = vsub.f32 1.5, %v421
      %v423 = vmul.f32 %v418, %v422
      %vm424 = vweird.f32 %v396
      %vm425 = vweird.f32 %v418
      %vm426 = vmor %vm424, %vm425
      %v427 = vsel %vm426, %v418, %v423
      %v428 = vrsqrt.pop %v397
      %v429 = vmul.f32 %v428, %v397
      %v430 = vmul.f32 %v429, %v428
      %v431 = vmul.f32 0.5, %v430
      %v432 = vsub.f32 1.5, %v431
      %v433 = vmul.f32 %v428, %v432
      %vm434 = vweird.f32 %v397
      %vm435 = vweird.f32 %v428
      %vm436 = vmor %vm434, %vm435
      %v437 = vsel %vm436, %v428, %v433
      %v438 = vmul.f32 %v370, %v407
      %v439 = vmul.f32 %v371, %v417
      %v440 = vmul.f32 %v372, %v427
      %v441 = vmul.f32 %v373, %v437
      %v443 = vperm.slane %v344, 0
      %v445 = vmul.f32 %v438, %v443
      %v446 = vmul.f32 %v439, %v443
      %v447 = vmul.f32 %v440, %v443
      %v448 = vmul.f32 %v441, %v443
      %v450 = vperm.slane %v345, 0
      %v452 = vadd.f32 %v445, %v450
      %v453 = vadd.f32 %v446, %v450
      %v454 = vadd.f32 %v447, %v450
      %v455 = vadd.f32 %v448, %v450
      %v456 = vpack.c.bf16 %v453, %v452
      %v457 = vpack.c.bf16 %v455, %v454
      %v458 = vld [vmem:[%s4] sm:$0xff]
      %v459 = vld [vmem:[%s4 + $0x8] sm:$0xff]
      %v460 = vld [vmem:[%s4 + $0x10] sm:$0xff]
      %v461 = vld [vmem:[%s4 + $0x18] sm:$0xff]
      %v462 = vld [vmem:[%s4 + $0x20] sm:$0xff]
      %v463 = vld [vmem:[%s4 + $0x28] sm:$0xff]
      %v464 = vld [vmem:[%s4 + $0x30] sm:$0xff]
      %v465 = vld [vmem:[%s4 + $0x38] sm:$0xff]
      %v466 = vld [vmem:[%s5] sm:$0x3]
      %v468 = vperm.slane %v466, 0
      %v469 = vperm.slane %v466, 1
      %v480 = vunpack.c.l.b16 %v458
      %v481 = vunpack.c.h.b16 %v458
      %v482 = vunpack.c.l.b16 %v459
      %v483 = vunpack.c.h.b16 %v459
      %v484 = vunpack.c.l.b16 %v460
      %v485 = vunpack.c.h.b16 %v460
      %v486 = vunpack.c.l.b16 %v461
      %v487 = vunpack.c.h.b16 %v461
      %v488 = vunpack.c.l.b16 %v462
      %v489 = vunpack.c.h.b16 %v462
      %v490 = vunpack.c.l.b16 %v463
      %v491 = vunpack.c.h.b16 %v463
      %v492 = vunpack.c.l.b16 %v464
      %v493 = vunpack.c.h.b16 %v464
      %v494 = vunpack.c.l.b16 %v465
      %v495 = vunpack.c.h.b16 %v465
      %v496 = vpack.c.b16 %v482, %v480
      %v497 = vpack.c.b16 %v483, %v481
      %v498 = vpack.c.b16 %v486, %v484
      %v499 = vpack.c.b16 %v487, %v485
      %v500 = vpack.c.b16 %v490, %v488
      %v501 = vpack.c.b16 %v491, %v489
      %v502 = vpack.c.b16 %v494, %v492
      %v503 = vpack.c.b16 %v495, %v493
      %v513 = vsel %vm346, %v456, 0
      %v516 = vsel %vm346, %v457, 0
      %518 = vmatpush.bf16.msra.mxu0 0
      %519 = vmatpush.bf16.msra.mxu0 0
      %520 = vmatpush.bf16.msra.mxu0 0
      %521 = vmatpush.bf16.msra.mxu0 0
      %522 = vmatpush.bf16.msra.mxu0 %v502
      %523 = vmatpush.bf16.msra.mxu0 %v500
      %524 = vmatpush.bf16.msra.mxu0 %v498
      %525 = vmatpush.bf16.msra.mxu0 %v496
      %526 = vmatmul.bf16.gmra.mxu0 %v513
      %v527 = vpop.f32.mrf.mxu0
      %v528 = vadd.f32 %v468, %v527
      %v529 = vpop.f32.mrf.mxu0
      %v530 = vadd.f32 %v468, %v529
      %531 = vmatmul.bf16.gmra.mxu0 %v516
      %v532 = vpop.f32.mrf.mxu0
      %v533 = vadd.f32 %v468, %v532
      %v534 = vpop.f32.mrf.mxu0
      %v535 = vadd.f32 %v468, %v534
      %536 = vdwg.mxu0
      %537 = vmatpush.bf16.msra.mxu0 0
      %538 = vmatpush.bf16.msra.mxu0 0
      %539 = vmatpush.bf16.msra.mxu0 0
      %540 = vmatpush.bf16.msra.mxu0 0
      %541 = vmatpush.bf16.msra.mxu0 %v503
      %542 = vmatpush.bf16.msra.mxu0 %v501
      %543 = vmatpush.bf16.msra.mxu0 %v499
      %544 = vmatpush.bf16.msra.mxu0 %v497
      %545 = vmatmul.bf16.gmra.mxu0 %v513
      %v546 = vpop.f32.mrf.mxu0
      %v547 = vadd.f32 %v469, %v546
      %v548 = vpop.f32.mrf.mxu0
      %v549 = vadd.f32 %v469, %v548
      %550 = vmatmul.bf16.gmra.mxu0 %v516
      %v551 = vpop.f32.mrf.mxu0
      %v552 = vadd.f32 %v469, %v551
      %v553 = vpop.f32.mrf.mxu0
      %v554 = vadd.f32 %v469, %v553
      %555 = vdwg.mxu0
      %v556 = vmul.f32 %v528, 0.5
      %v557 = vmul.f32 %v547, 0.5
      %v558 = vmul.f32 %v530, 0.5
      %v559 = vmul.f32 %v549, 0.5
      %v560 = vmul.f32 %v533, 0.5
      %v561 = vmul.f32 %v552, 0.5
      %v562 = vmul.f32 %v535, 0.5
      %v563 = vmul.f32 %v554, 0.5
      %v564 = vmul.f32 %v528, %v528
      %v565 = vmul.f32 %v547, %v547
      %v566 = vmul.f32 %v530, %v530
      %v567 = vmul.f32 %v549, %v549
      %v568 = vmul.f32 %v533, %v533
      %v569 = vmul.f32 %v552, %v552
      %v570 = vmul.f32 %v535, %v535
      %v571 = vmul.f32 %v554, %v554
      %v572 = vmul.f32 %v564, %v528
      %v573 = vmul.f32 %v565, %v547
      %v574 = vmul.f32 %v566, %v530
      %v575 = vmul.f32 %v567, %v549
      %v576 = vmul.f32 %v568, %v533
      %v577 = vmul.f32 %v569, %v552
      %v578 = vmul.f32 %v570, %v535
      %v579 = vmul.f32 %v571, %v554
      %v580 = vmul.f32 %v572, 0.044715
      %v581 = vmul.f32 %v573, 0.044715
      %v582 = vmul.f32 %v574, 0.044715
      %v583 = vmul.f32 %v575, 0.044715
      %v584 = vmul.f32 %v576, 0.044715
      %v585 = vmul.f32 %v577, 0.044715
      %v586 = vmul.f32 %v578, 0.044715
      %v587 = vmul.f32 %v579, 0.044715
      %v588 = vadd.f32 %v528, %v580
      %v589 = vadd.f32 %v547, %v581
      %v590 = vadd.f32 %v530, %v582
      %v591 = vadd.f32 %v549, %v583
      %v592 = vadd.f32 %v533, %v584
      %v593 = vadd.f32 %v552, %v585
      %v594 = vadd.f32 %v535, %v586
      %v595 = vadd.f32 %v554, %v587
      %v596 = vmul.f32 %v588, 0.7978846
      %v597 = vmul.f32 %v589, 0.7978846
      %v598 = vmul.f32 %v590, 0.7978846
      %v599 = vmul.f32 %v591, 0.7978846
      %v600 = vmul.f32 %v592, 0.7978846
      %v601 = vmul.f32 %v593, 0.7978846
      %v602 = vmul.f32 %v594, 0.7978846
      %v603 = vmul.f32 %v595, 0.7978846
      %v604 = vtanh.pop %v596
      %v605 = vtanh.pop %v597
      %v606 = vtanh.pop %v598
      %v607 = vtanh.pop %v599
      %v608 = vtanh.pop %v600
      %v609 = vtanh.pop %v601
      %v610 = vtanh.pop %v602
      %v611 = vtanh.pop %v603
      %v612 = vadd.f32 %v604, 1.0
      %v613 = vadd.f32 %v605, 1.0
      %v614 = vadd.f32 %v606, 1.0
      %v615 = vadd.f32 %v607, 1.0
      %v616 = vadd.f32 %v608, 1.0
      %v617 = vadd.f32 %v609, 1.0
      %v618 = vadd.f32 %v610, 1.0
      %v619 = vadd.f32 %v611, 1.0
      %v620 = vmul.f32 %v556, %v612
      %v621 = vmul.f32 %v557, %v613
      %v622 = vmul.f32 %v558, %v614
      %v623 = vmul.f32 %v559, %v615
      %v624 = vmul.f32 %v560, %v616
      %v625 = vmul.f32 %v561, %v617
      %v626 = vmul.f32 %v562, %v618
      %v627 = vmul.f32 %v563, %v619
      %v628 = vpack.c.bf16 %v622, %v620
      %v629 = vpack.c.bf16 %v623, %v621
      %v630 = vpack.c.bf16 %v626, %v624
      %v631 = vpack.c.bf16 %v627, %v625
      %v632 = vld [vmem:[%s6] sm:$0xf]
      %v633 = vld [vmem:[%s6 + $0x4] sm:$0xf]
      %v634 = vld [vmem:[%s6 + $0x8] sm:$0xf]
      %v635 = vld [vmem:[%s6 + $0xc] sm:$0xf]
      %v636 = vld [vmem:[%s6 + $0x10] sm:$0xf]
      %v637 = vld [vmem:[%s6 + $0x14] sm:$0xf]
      %v638 = vld [vmem:[%s6 + $0x18] sm:$0xf]
      %v639 = vld [vmem:[%s6 + $0x1c] sm:$0xf]
      %v640 = vld [vmem:[%s6 + $0x20] sm:$0xf]
      %v641 = vld [vmem:[%s6 + $0x24] sm:$0xf]
      %v642 = vld [vmem:[%s6 + $0x28] sm:$0xf]
      %v643 = vld [vmem:[%s6 + $0x2c] sm:$0xf]
      %v644 = vld [vmem:[%s6 + $0x30] sm:$0xf]
      %v645 = vld [vmem:[%s6 + $0x34] sm:$0xf]
      %v646 = vld [vmem:[%s6 + $0x38] sm:$0xf]
      %v647 = vld [vmem:[%s6 + $0x3c] sm:$0xf]
      %v648 = vld [vmem:[%s6 + $0x40] sm:$0xf]
      %v649 = vld [vmem:[%s6 + $0x44] sm:$0xf]
      %v650 = vld [vmem:[%s6 + $0x48] sm:$0xf]
      %v651 = vld [vmem:[%s6 + $0x4c] sm:$0xf]
      %v652 = vld [vmem:[%s6 + $0x50] sm:$0xf]
      %v653 = vld [vmem:[%s6 + $0x54] sm:$0xf]
      %v654 = vld [vmem:[%s6 + $0x58] sm:$0xf]
      %v655 = vld [vmem:[%s6 + $0x5c] sm:$0xf]
      %v656 = vld [vmem:[%s6 + $0x60] sm:$0xf]
      %v657 = vld [vmem:[%s6 + $0x64] sm:$0xf]
      %v658 = vld [vmem:[%s6 + $0x68] sm:$0xf]
      %v659 = vld [vmem:[%s6 + $0x6c] sm:$0xf]
      %v660 = vld [vmem:[%s6 + $0x70] sm:$0xf]
      %v661 = vld [vmem:[%s6 + $0x74] sm:$0xf]
      %v662 = vld [vmem:[%s6 + $0x78] sm:$0xf]
      %v663 = vld [vmem:[%s6 + $0x7c] sm:$0xf]
      %v664 = vld [vmem:[%s7] sm:$0x1]
      %v666 = vperm.slane %v664, 0
      %v700 = vunpack.c.l.b16 %v632
      %v701 = vunpack.c.l.b16 %v633
      %v702 = vunpack.c.l.b16 %v634
      %v703 = vunpack.c.l.b16 %v635
      %v704 = vunpack.c.l.b16 %v636
      %v705 = vunpack.c.l.b16 %v637
      %v706 = vunpack.c.l.b16 %v638
      %v707 = vunpack.c.l.b16 %v639
      %v708 = vunpack.c.l.b16 %v640
      %v709 = vunpack.c.l.b16 %v641
      %v710 = vunpack.c.l.b16 %v642
      %v711 = vunpack.c.l.b16 %v643
      %v712 = vunpack.c.l.b16 %v644
      %v713 = vunpack.c.l.b16 %v645
      %v714 = vunpack.c.l.b16 %v646
      %v715 = vunpack.c.l.b16 %v647
      %v716 = vunpack.c.l.b16 %v648
      %v717 = vunpack.c.l.b16 %v649
      %v718 = vunpack.c.l.b16 %v650
      %v719 = vunpack.c.l.b16 %v651
      %v720 = vunpack.c.l.b16 %v652
      %v721 = vunpack.c.l.b16 %v653
      %v722 = vunpack.c.l.b16 %v654
      %v723 = vunpack.c.l.b16 %v655
      %v724 = vunpack.c.l.b16 %v656
      %v725 = vunpack.c.l.b16 %v657
      %v726 = vunpack.c.l.b16 %v658
      %v727 = vunpack.c.l.b16 %v659
      %v728 = vunpack.c.l.b16 %v660
      %v729 = vunpack.c.l.b16 %v661
      %v730 = vunpack.c.l.b16 %v662
      %v731 = vunpack.c.l.b16 %v663
      %v732 = vpack.c.b16 %v701, %v700
      %v733 = vpack.c.b16 %v703, %v702
      %v734 = vpack.c.b16 %v705, %v704
      %v735 = vpack.c.b16 %v707, %v706
      %v736 = vpack.c.b16 %v709, %v708
      %v737 = vpack.c.b16 %v711, %v710
      %v738 = vpack.c.b16 %v713, %v712
      %v739 = vpack.c.b16 %v715, %v714
      %v740 = vpack.c.b16 %v717, %v716
      %v741 = vpack.c.b16 %v719, %v718
      %v742 = vpack.c.b16 %v721, %v720
      %v743 = vpack.c.b16 %v723, %v722
      %v744 = vpack.c.b16 %v725, %v724
      %v745 = vpack.c.b16 %v727, %v726
      %v746 = vpack.c.b16 %v729, %v728
      %v747 = vpack.c.b16 %v731, %v730
      %764 = vmatpush.bf16.msra.mxu0 %v739
      %765 = vmatpush.bf16.msra.mxu0 %v738
      %766 = vmatpush.bf16.msra.mxu0 %v737
      %767 = vmatpush.bf16.msra.mxu0 %v736
      %768 = vmatpush.bf16.msra.mxu0 %v735
      %769 = vmatpush.bf16.msra.mxu0 %v734
      %770 = vmatpush.bf16.msra.mxu0 %v733
      %771 = vmatpush.bf16.msra.mxu0 %v732
      %772 = vmatmul.bf16.gmra.mxu0 %v628
      %v773 = vpop.f32.mrf.mxu0
      %v774 = vadd.f32 %v666, %v773
      %v775 = vpop.f32.mrf.mxu0
      %v776 = vadd.f32 %v666, %v775
      %777 = vmatmul.bf16.gmra.mxu0 %v630
      %v778 = vpop.f32.mrf.mxu0
      %v779 = vadd.f32 %v666, %v778
      %v780 = vpop.f32.mrf.mxu0
      %v781 = vadd.f32 %v666, %v780
      %782 = vdwg.mxu0
      %783 = vmatpush.bf16.msra.mxu0 %v747
      %784 = vmatpush.bf16.msra.mxu0 %v746
      %785 = vmatpush.bf16.msra.mxu0 %v745
      %786 = vmatpush.bf16.msra.mxu0 %v744
      %787 = vmatpush.bf16.msra.mxu0 %v743
      %788 = vmatpush.bf16.msra.mxu0 %v742
      %789 = vmatpush.bf16.msra.mxu0 %v741
      %790 = vmatpush.bf16.msra.mxu0 %v740
      %791 = vmatmul.bf16.gmra.mxu0 %v629
      %v792 = vpop.f32.mrf.mxu0
      %v793 = vadd.f32 %v774, %v792
      %v794 = vpop.f32.mrf.mxu0
      %v795 = vadd.f32 %v776, %v794
      %796 = vmatmul.bf16.gmra.mxu0 %v631
      %v797 = vpop.f32.mrf.mxu0
      %v798 = vadd.f32 %v779, %v797
      %v799 = vpop.f32.mrf.mxu0
      %v800 = vadd.f32 %v781, %v799
      %801 = vdwg.mxu0
      %v802 = vadd.f32 %v340, %v793
      %v803 = vadd.f32 %v341, %v795
      %v804 = vadd.f32 %v342, %v798
      %v805 = vadd.f32 %v343, %v800
      %806 = vst.msk [vmem:[%s329] sm:$0xff] %vm346, %v802
      %807 = vst.msk [vmem:[%s329 + $0x8] sm:$0xff] %vm346, %v803
      %808 = vst.msk [vmem:[%s329 + $0x10] sm:$0xff] %vm346, %v804
      %809 = vst.msk [vmem:[%s329 + $0x18] sm:$0xff] %vm346, %v805
      %s810 = smul.u32 4, %s19
      %p811 = scmp.lt.s32.totalorder %s810, 7
      %s812 = scalar_select %p811, %s810, 7
      %s813 = smul.addr %s812, 8
      %s814 = scalar_lea.vmem %s8, %s813
      // Predicated region
      $region53: #{block_forward.6} parent=51 // pred_check
        %p815 = pneg %p215
      $region54: #{block_forward.6} parent=51 // pred_check_branch
        %817 = sbr.rel (%p815) target = $region56
      $region55: #{block_forward.6} parent=51 // pred_region
        %s818 = smul.u32 4, %s19
      $region56: #{block_forward.6} parent=51 // pred_fallthru
        _
    $region52: #{block_forward.6} parent=5 // pred_fallthru
      _
    %p819 = scmp.le.s32.totalorder 2, %s14
    // Predicated region
    $region57: #{block_forward.6} parent=5 // pred_check
      %p820 = pneg %p819
    $region58: #{block_forward.6} parent=5 // pred_check_branch
      %822 = sbr.rel (%p820) target = $region60
    $region59: #{block_forward.6} parent=5 // pred_region
      %s823 = ssub.s32 %s14, 2
      // Predicated region
      $region61: #{block_forward.6} parent=59 // pred_check
        %p824 = pneg %p221
      $region62: #{block_forward.6} parent=59 // pred_check_branch
        %826 = sbr.rel (%p824) target = $region64
      $region63: #{block_forward.6} parent=59 // pred_region
        %s827 = smul.u32 4, %s20
        %p828 = scmp.lt.s32.totalorder %s827, 7
        %s829 = scalar_select %p828, %s827, 7
        %s830 = smul.addr %s829, 8
        %s831 = scalar_lea.vmem %s8, %s830
      $region64: #{block_forward.6} parent=59 // pred_fallthru
        _
    $region60: #{block_forward.6} parent=5 // pred_fallthru
      _
  $region6: #{block_forward.6} parent=0 // loop_footer
    %s18 = sadd.s32 1, %s14
  $region7: #{block_forward.6} parent=0 // loop_footer_branch
    %13 = sbr.rel target = $region3
  $region8: #{block_forward.6} parent=0 // loop_exit
    _

// kernel: block_forward.7
$region0: #{block_forward.7}
  #allocation0 [shape = 'u32[]', space=smem, size = 0x4, offset = 0x4, fixed_abs, tag = 'smem constant byte address 0x4 - core index']
  #allocation1 [shape = 'u32[72,128]{1,0:T(1,128)}', space=vmem, size = 0x9000, scoped, tag = 'internal scratch']
  %s0 = inlined_call_operand.vmem [shape: f32[2,64], index: 0, kind: input, shape index: {}]
  %s1 = inlined_call_operand.vmem [shape: f32[2,64], index: 1, kind: input, shape index: {}]
  %s2 = inlined_call_operand.vmem [shape: f32[1,64], index: 2, kind: input, shape index: {}]
  %s3 = inlined_call_operand.vmem [shape: f32[1,64], index: 3, kind: input, shape index: {}]
  %s4 = inlined_call_operand.vmem [shape: bf16[64,256], index: 4, kind: input, shape index: {}]
  %s5 = inlined_call_operand.vmem [shape: f32[1,256], index: 5, kind: input, shape index: {}]
  %s6 = inlined_call_operand.vmem [shape: bf16[256,64], index: 6, kind: input, shape index: {}]
  %s7 = inlined_call_operand.vmem [shape: f32[1,64], index: 7, kind: input, shape index: {}]
  %s8 = inlined_call_operand.vmem [shape: f32[2,64], index: 8, kind: output, shape index: {}]
  %s9 = sld [smem:[#allocation0]]
  $region42: #{block_forward.7} parent=0
    _
  %s11 = ssub.s32 1, %s9
  %s12 = scalar_select 0, %s11, %s9
  // Predicated region
  $region2: #{block_forward.7} parent=0 // pred_check
    _
  $region3: #{block_forward.7} parent=0 // pred_check_branch
    %14 = sbr.rel (0) target = $region5
  $region4: #{block_forward.7} parent=0 // pred_region
    _
  $region5: #{block_forward.7} parent=0 // pred_fallthru
    _
  // Predicated region
  $region6: #{block_forward.7} parent=0 // pred_check
    _
  $region7: #{block_forward.7} parent=0 // pred_check_branch
    %16 = sbr.rel (0) target = $region9
  $region8: #{block_forward.7} parent=0 // pred_region
    _
  $region9: #{block_forward.7} parent=0 // pred_fallthru
    _
  // Predicated region
  $region10: #{block_forward.7} parent=0 // pred_check
    _
  $region11: #{block_forward.7} parent=0 // pred_check_branch
    %18 = sbr.rel (0) target = $region13
  $region12: #{block_forward.7} parent=0 // pred_region
    _
  $region13: #{block_forward.7} parent=0 // pred_fallthru
    _
  // Predicated region
  $region14: #{block_forward.7} parent=0 // pred_check
    _
  $region15: #{block_forward.7} parent=0 // pred_check_branch
    %20 = sbr.rel (0) target = $region17
  $region16: #{block_forward.7} parent=0 // pred_region
    _
  $region17: #{block_forward.7} parent=0 // pred_fallthru
    _
  // Predicated region
  $region18: #{block_forward.7} parent=0 // pred_check
    _
  $region19: #{block_forward.7} parent=0 // pred_check_branch
    %22 = sbr.rel (0) target = $region21
  $region20: #{block_forward.7} parent=0 // pred_region
    _
  $region21: #{block_forward.7} parent=0 // pred_fallthru
    _
  // Predicated region
  $region22: #{block_forward.7} parent=0 // pred_check
    _
  $region23: #{block_forward.7} parent=0 // pred_check_branch
    %24 = sbr.rel (0) target = $region25
  $region24: #{block_forward.7} parent=0 // pred_region
    _
  $region25: #{block_forward.7} parent=0 // pred_fallthru
    _
  // Predicated region
  $region26: #{block_forward.7} parent=0 // pred_check
    _
  $region27: #{block_forward.7} parent=0 // pred_check_branch
    %26 = sbr.rel (0) target = $region29
  $region28: #{block_forward.7} parent=0 // pred_region
    _
  $region29: #{block_forward.7} parent=0 // pred_fallthru
    _
  // Predicated region
  $region30: #{block_forward.7} parent=0 // pred_check
    _
  $region31: #{block_forward.7} parent=0 // pred_check_branch
    %28 = sbr.rel (0) target = $region33
  $region32: #{block_forward.7} parent=0 // pred_region
    _
  $region33: #{block_forward.7} parent=0 // pred_fallthru
    _
  %v30 = vld [vmem:[%s0] sm:$0x3]
  %v31 = vld [vmem:[%s1] sm:$0x3]
  %v32 = vadd.f32 %v30, %v31
  %v33 = vld [vmem:[%s2] sm:$0x1]
  %v34 = vld [vmem:[%s3] sm:$0x1]
  %vm35 = vcmask 517120
  %v36 = vsel %vm35, %v32, 0.0
  %37 = vadd.xlane.f32.xlu0 %v36
  %v38 = vpop.xlane.xlu0 %37
  %v39 = vrcp.pop 64.0
  %v40 = vmul.f32 64.0, %v39
  %v41 = vsub.f32 1.0, %v40
  %v42 = vmul.f32 %v39, %v41
  %v43 = vadd.f32 %v39, %v42
  %vm44 = vweird.f32 %v39
  %v45 = vsel %vm44, %v39, %v43
  %v46 = vmul.f32 %v38, %v45
  %v47 = vsub.f32 %v32, %v46
  %v48 = vmul.f32 %v47, %v47
  %v49 = vsel %vm35, %v48, 0.0
  %50 = vadd.xlane.f32.xlu0 %v49
  %v51 = vpop.xlane.xlu0 %50
  %v52 = vmul.f32 %v51, %v45
  %v53 = vadd.f32 %v52, 1e-05
  %v54 = vrsqrt.pop %v53
  %v55 = vmul.f32 %v54, %v53
  %v56 = vmul.f32 %v55, %v54
  %v57 = vmul.f32 0.5, %v56
  %v58 = vsub.f32 1.5, %v57
  %v59 = vmul.f32 %v54, %v58
  %vm60 = vweird.f32 %v53
  %vm61 = vweird.f32 %v54
  %vm62 = vmor %vm60, %vm61
  %v63 = vsel %vm62, %v54, %v59
  %v64 = vmul.f32 %v47, %v63
  %v66 = vperm.slane %v33, 0
  %v68 = vmul.f32 %v64, %v66
  %v70 = vperm.slane %v34, 0
  %v72 = vadd.f32 %v68, %v70
  %v73 = vpack.c.bf16 %v72, %v72
  %v74 = vld [vmem:[%s4] sm:$0xff]
  %v75 = vld [vmem:[%s4 + $0x8] sm:$0xff]
  %v76 = vld [vmem:[%s4 + $0x10] sm:$0xff]
  %v77 = vld [vmem:[%s4 + $0x18] sm:$0xff]
  %v78 = vld [vmem:[%s4 + $0x20] sm:$0xff]
  %v79 = vld [vmem:[%s4 + $0x28] sm:$0xff]
  %v80 = vld [vmem:[%s4 + $0x30] sm:$0xff]
  %v81 = vld [vmem:[%s4 + $0x38] sm:$0xff]
  %v82 = vld [vmem:[%s5] sm:$0x3]
  %v84 = vperm.slane %v82, 0
  %v85 = vperm.slane %v82, 1
  %v96 = vunpack.c.l.b16 %v74
  %v97 = vunpack.c.h.b16 %v74
  %v98 = vunpack.c.l.b16 %v75
  %v99 = vunpack.c.h.b16 %v75
  %v100 = vunpack.c.l.b16 %v76
  %v101 = vunpack.c.h.b16 %v76
  %v102 = vunpack.c.l.b16 %v77
  %v103 = vunpack.c.h.b16 %v77
  %v104 = vunpack.c.l.b16 %v78
  %v105 = vunpack.c.h.b16 %v78
  %v106 = vunpack.c.l.b16 %v79
  %v107 = vunpack.c.h.b16 %v79
  %v108 = vunpack.c.l.b16 %v80
  %v109 = vunpack.c.h.b16 %v80
  %v110 = vunpack.c.l.b16 %v81
  %v111 = vunpack.c.h.b16 %v81
  %v112 = vpack.c.b16 %v98, %v96
  %v113 = vpack.c.b16 %v99, %v97
  %v114 = vpack.c.b16 %v102, %v100
  %v115 = vpack.c.b16 %v103, %v101
  %v116 = vpack.c.b16 %v106, %v104
  %v117 = vpack.c.b16 %v107, %v105
  %v118 = vpack.c.b16 %v110, %v108
  %v119 = vpack.c.b16 %v111, %v109
  %vm128 = vcmask 523264
  %v130 = vsel %vm128, %v73, 0
  %132 = vmatpush.bf16.msra.mxu0 0
  %133 = vmatpush.bf16.msra.mxu0 0
  %134 = vmatpush.bf16.msra.mxu0 0
  %135 = vmatpush.bf16.msra.mxu0 0
  %136 = vmatpush.bf16.msra.mxu0 %v118
  %137 = vmatpush.bf16.msra.mxu0 %v116
  %138 = vmatpush.bf16.msra.mxu0 %v114
  %139 = vmatpush.bf16.msra.mxu0 %v112
  %140 = vmatmul.bf16.gmra.mxu0 %v130
  %v141 = vpop.f32.mrf.mxu0
  %v142 = vadd.f32 %v84, %v141
  %v143 = vpop.f32.mrf.mxu0
  %144 = vdwg.mxu0
  %145 = vmatpush.bf16.msra.mxu0 0
  %146 = vmatpush.bf16.msra.mxu0 0
  %147 = vmatpush.bf16.msra.mxu0 0
  %148 = vmatpush.bf16.msra.mxu0 0
  %149 = vmatpush.bf16.msra.mxu0 %v119
  %150 = vmatpush.bf16.msra.mxu0 %v117
  %151 = vmatpush.bf16.msra.mxu0 %v115
  %152 = vmatpush.bf16.msra.mxu0 %v113
  %153 = vmatmul.bf16.gmra.mxu0 %v130
  %v154 = vpop.f32.mrf.mxu0
  %v155 = vadd.f32 %v85, %v154
  %v156 = vpop.f32.mrf.mxu0
  %157 = vdwg.mxu0
  %v158 = vmul.f32 %v142, 0.5
  %v159 = vmul.f32 %v155, 0.5
  %v160 = vmul.f32 %v142, %v142
  %v161 = vmul.f32 %v155, %v155
  %v162 = vmul.f32 %v160, %v142
  %v163 = vmul.f32 %v161, %v155
  %v164 = vmul.f32 %v162, 0.044715
  %v165 = vmul.f32 %v163, 0.044715
  %v166 = vadd.f32 %v142, %v164
  %v167 = vadd.f32 %v155, %v165
  %v168 = vmul.f32 %v166, 0.7978846
  %v169 = vmul.f32 %v167, 0.7978846
  %v170 = vtanh.pop %v168
  %v171 = vtanh.pop %v169
  %v172 = vadd.f32 %v170, 1.0
  %v173 = vadd.f32 %v171, 1.0
  %v174 = vmul.f32 %v158, %v172
  %v175 = vmul.f32 %v159, %v173
  %v176 = vpack.c.bf16 %v174, %v174
  %v177 = vpack.c.bf16 %v175, %v175
  %v178 = vld [vmem:[%s6] sm:$0xf]
  %v179 = vld [vmem:[%s6 + $0x4] sm:$0xf]
  %v180 = vld [vmem:[%s6 + $0x8] sm:$0xf]
  %v181 = vld [vmem:[%s6 + $0xc] sm:$0xf]
  %v182 = vld [vmem:[%s6 + $0x10] sm:$0xf]
  %v183 = vld [vmem:[%s6 + $0x14] sm:$0xf]
  %v184 = vld [vmem:[%s6 + $0x18] sm:$0xf]
  %v185 = vld [vmem:[%s6 + $0x1c] sm:$0xf]
  %v186 = vld [vmem:[%s6 + $0x20] sm:$0xf]
  %v187 = vld [vmem:[%s6 + $0x24] sm:$0xf]
  %v188 = vld [vmem:[%s6 + $0x28] sm:$0xf]
  %v189 = vld [vmem:[%s6 + $0x2c] sm:$0xf]
  %v190 = vld [vmem:[%s6 + $0x30] sm:$0xf]
  %v191 = vld [vmem:[%s6 + $0x34] sm:$0xf]
  %v192 = vld [vmem:[%s6 + $0x38] sm:$0xf]
  %v193 = vld [vmem:[%s6 + $0x3c] sm:$0xf]
  %v194 = vld [vmem:[%s6 + $0x40] sm:$0xf]
  %v195 = vld [vmem:[%s6 + $0x44] sm:$0xf]
  %v196 = vld [vmem:[%s6 + $0x48] sm:$0xf]
  %v197 = vld [vmem:[%s6 + $0x4c] sm:$0xf]
  %v198 = vld [vmem:[%s6 + $0x50] sm:$0xf]
  %v199 = vld [vmem:[%s6 + $0x54] sm:$0xf]
  %v200 = vld [vmem:[%s6 + $0x58] sm:$0xf]
  %v201 = vld [vmem:[%s6 + $0x5c] sm:$0xf]
  %v202 = vld [vmem:[%s6 + $0x60] sm:$0xf]
  %v203 = vld [vmem:[%s6 + $0x64] sm:$0xf]
  %v204 = vld [vmem:[%s6 + $0x68] sm:$0xf]
  %v205 = vld [vmem:[%s6 + $0x6c] sm:$0xf]
  %v206 = vld [vmem:[%s6 + $0x70] sm:$0xf]
  %v207 = vld [vmem:[%s6 + $0x74] sm:$0xf]
  %v208 = vld [vmem:[%s6 + $0x78] sm:$0xf]
  %v209 = vld [vmem:[%s6 + $0x7c] sm:$0xf]
  %v210 = vld [vmem:[%s7] sm:$0x1]
  %v212 = vperm.slane %v210, 0
  %v246 = vunpack.c.l.b16 %v178
  %v247 = vunpack.c.l.b16 %v179
  %v248 = vunpack.c.l.b16 %v180
  %v249 = vunpack.c.l.b16 %v181
  %v250 = vunpack.c.l.b16 %v182
  %v251 = vunpack.c.l.b16 %v183
  %v252 = vunpack.c.l.b16 %v184
  %v253 = vunpack.c.l.b16 %v185
  %v254 = vunpack.c.l.b16 %v186
  %v255 = vunpack.c.l.b16 %v187
  %v256 = vunpack.c.l.b16 %v188
  %v257 = vunpack.c.l.b16 %v189
  %v258 = vunpack.c.l.b16 %v190
  %v259 = vunpack.c.l.b16 %v191
  %v260 = vunpack.c.l.b16 %v192
  %v261 = vunpack.c.l.b16 %v193
  %v262 = vunpack.c.l.b16 %v194
  %v263 = vunpack.c.l.b16 %v195
  %v264 = vunpack.c.l.b16 %v196
  %v265 = vunpack.c.l.b16 %v197
  %v266 = vunpack.c.l.b16 %v198
  %v267 = vunpack.c.l.b16 %v199
  %v268 = vunpack.c.l.b16 %v200
  %v269 = vunpack.c.l.b16 %v201
  %v270 = vunpack.c.l.b16 %v202
  %v271 = vunpack.c.l.b16 %v203
  %v272 = vunpack.c.l.b16 %v204
  %v273 = vunpack.c.l.b16 %v205
  %v274 = vunpack.c.l.b16 %v206
  %v275 = vunpack.c.l.b16 %v207
  %v276 = vunpack.c.l.b16 %v208
  %v277 = vunpack.c.l.b16 %v209
  %v278 = vpack.c.b16 %v247, %v246
  %v279 = vpack.c.b16 %v249, %v248
  %v280 = vpack.c.b16 %v251, %v250
  %v281 = vpack.c.b16 %v253, %v252
  %v282 = vpack.c.b16 %v255, %v254
  %v283 = vpack.c.b16 %v257, %v256
  %v284 = vpack.c.b16 %v259, %v258
  %v285 = vpack.c.b16 %v261, %v260
  %v286 = vpack.c.b16 %v263, %v262
  %v287 = vpack.c.b16 %v265, %v264
  %v288 = vpack.c.b16 %v267, %v266
  %v289 = vpack.c.b16 %v269, %v268
  %v290 = vpack.c.b16 %v271, %v270
  %v291 = vpack.c.b16 %v273, %v272
  %v292 = vpack.c.b16 %v275, %v274
  %v293 = vpack.c.b16 %v277, %v276
  %310 = vmatpush.bf16.msra.mxu0 %v285
  %311 = vmatpush.bf16.msra.mxu0 %v284
  %312 = vmatpush.bf16.msra.mxu0 %v283
  %313 = vmatpush.bf16.msra.mxu0 %v282
  %314 = vmatpush.bf16.msra.mxu0 %v281
  %315 = vmatpush.bf16.msra.mxu0 %v280
  %316 = vmatpush.bf16.msra.mxu0 %v279
  %317 = vmatpush.bf16.msra.mxu0 %v278
  %318 = vmatmul.bf16.gmra.mxu0 %v176
  %v319 = vpop.f32.mrf.mxu0
  %v320 = vadd.f32 %v212, %v319
  %v321 = vpop.f32.mrf.mxu0
  %322 = vdwg.mxu0
  %323 = vmatpush.bf16.msra.mxu0 %v293
  %324 = vmatpush.bf16.msra.mxu0 %v292
  %325 = vmatpush.bf16.msra.mxu0 %v291
  %326 = vmatpush.bf16.msra.mxu0 %v290
  %327 = vmatpush.bf16.msra.mxu0 %v289
  %328 = vmatpush.bf16.msra.mxu0 %v288
  %329 = vmatpush.bf16.msra.mxu0 %v287
  %330 = vmatpush.bf16.msra.mxu0 %v286
  %331 = vmatmul.bf16.gmra.mxu0 %v177
  %v332 = vpop.f32.mrf.mxu0
  %v333 = vadd.f32 %v320, %v332
  %v334 = vpop.f32.mrf.mxu0
  %335 = vdwg.mxu0
  %v336 = vadd.f32 %v32, %v333
  %337 = vst.msk [vmem:[%s8] sm:$0x3] %vm35, %v336
  // Predicated region
  $region34: #{block_forward.7} parent=0 // pred_check
    _
  $region35: #{block_forward.7} parent=0 // pred_check_branch
    %339 = sbr.rel (0) target = $region37
  $region36: #{block_forward.7} parent=0 // pred_region
    _
  $region37: #{block_forward.7} parent=0 // pred_fallthru
    _
  // Predicated region
  $region38: #{block_forward.7} parent=0 // pred_check
    _
  $region39: #{block_forward.7} parent=0 // pred_check_branch
    %341 = sbr.rel (0) target = $region41
  $region40: #{block_forward.7} parent=0 // pred_region
    _
  $region41: #{block_forward.7} parent=0 // pred_fallthru
    _

// kernel: block_forward.5
$region0: #{block_forward.5}
  #allocation0 [shape = 'u32[]', space=smem, size = 0x4, offset = 0x4, fixed_abs, tag = 'smem constant byte address 0x4 - core index']
  #allocation1 [shape = 'u32[72,128]{1,0:T(1,128)}', space=vmem, size = 0x9000, scoped, tag = 'internal scratch']
  %s0 = inlined_call_operand.vmem [shape: f32[2,8,4,64], index: 0, kind: input, shape index: {}]
  %s1 = inlined_call_operand.vmem [shape: f32[2,1,64], index: 1, kind: input, shape index: {}]
  %s2 = inlined_call_operand.vmem [shape: f32[1,64], index: 2, kind: input, shape index: {}]
  %s3 = inlined_call_operand.vmem [shape: f32[1,64], index: 3, kind: input, shape index: {}]
  %s4 = inlined_call_operand.vmem [shape: bf16[64,192], index: 4, kind: input, shape index: {}]
  %s5 = inlined_call_operand.hbm [shape: bf16[64,64], index: 5, kind: input, shape index: {}]
  %s6 = inlined_call_operand.vmem [shape: f32[1,64], index: 6, kind: input, shape index: {}]
  %s7 = inlined_call_operand.vmem [shape: f32[2,8,4,64], index: 7, kind: output, shape index: {0}]
  %s8 = inlined_call_operand.vmem [shape: f32[2,4,64], index: 8, kind: output, shape index: {1}]
  %9 = xla_tuple %s7, %s8
  %s10 = sld [smem:[#allocation0]]
  $region73: #{block_forward.5} parent=0
    _
  %s12 = ssub.s32 1, %s10
  %s13 = scalar_select 0, %s12, %s10
  $region1: #{block_forward.5} parent=0
    #allocation2 [shape = 'u8[16384]{0}', space=vmem, size = 0x4000, scoped, tag = 'input window, operand 5, single buffered']
    #allocation3 [shape = 's32[2]{0}', space=sflag, size = 0x8, scoped, tag = 'scoped memory for block_forward.5']
    %14 = vsyncpa [#allocation3], 0
    loop: start=0, step=1, limit=4
    $region2: #{block_forward.5} parent=1 // loop_pre_header
      _
    $region3: #{block_forward.5} parent=1 // loop_header
      %s16 = sphi 0, %s20
      %p17 = scmp.ge.s32.totalorder %s16, 4
      %s26 = sphi 0, %s28
      %s29 = sphi 0, %s26
      %s30 = sphi 0, %s29
      %s46 = sphi 0, %s30
      %s52 = sphi 0, %s54
      %s55 = sphi 0, %s52
      %s56 = sphi 0, %s55
      %s72 = sphi 0, %s56
      %s76 = sphi 0, %s76
      %s78 = sphi 0, %s76
      %s79 = sphi 0, %s78
      %s93 = sphi 0, %s79
      %s97 = sphi 0, %s97
      %s99 = sphi 0, %s97
      %s100 = sphi 0, %s99
      %s114 = sphi 0, %s100
      %s118 = sphi 0, %s118
      %s120 = sphi 0, %s118
      %s121 = sphi 0, %s120
      %s135 = sphi 0, %s121
      %s139 = sphi 0, %s139
      %s141 = sphi 0, %s139
      %s142 = sphi 0, %s141
      %s156 = sphi 0, %s142
      %s160 = sphi 0, %s160
      %s162 = sphi 0, %s160
      %s163 = sphi 0, %s162
      %s177 = sphi 0, %s163
      %s183 = sphi 0, %s185
      %s186 = sphi 0, %s183
      %s187 = sphi 0, %s186
      %s203 = sphi 0, %s187
      %s209 = sphi 0, %s211
      %s212 = sphi 0, %s209
      %s213 = sphi 0, %s212
      %s229 = sphi 0, %s213
    $region4: #{block_forward.5} parent=1 // loop_header_branch
      %19 = sbr.rel (%p17) target = $region8
    $region5: #{block_forward.5} parent=1 // loop_body
      %s21 = ssub.s32 %s16, 1
      %s22 = ssub.s32 %s16, 2
      %s23 = sadd.s32 %s16, 1
      %s24 = ssub.s32 %s16, %s23
      %p25 = scmp.eq.s32.totalorder %s24, 0
      %s27 = sadd.s32 %s26, 1
      %s28 = scalar_select %p25, %s26, %s27
      %p31 = pneg %p25
      %p32 = scmp.eq.s32.totalorder %s16, 1
      %p33 = por %p31, %p32
      %p34 = scmp.ne.s32.totalorder %s26, %s29
      %p35 = scmp.eq.s32.totalorder %s16, 0
      %p36 = por %p34, %p35
      %p37 = scmp.ne.s32.totalorder %s26, %s29
      %p38 = scmp.eq.s32.totalorder %s21, 1
      %p39 = por %p37, %p38
      %p40 = scmp.ne.s32.totalorder %s29, %s30
      %p41 = scmp.eq.s32.totalorder %s21, 0
      %p42 = por %p40, %p41
      %p43 = scmp.ne.s32.totalorder %s29, %s30
      %p44 = scmp.eq.s32.totalorder %s22, 1
      %p45 = por %p43, %p44
      %p47 = scmp.ne.s32.totalorder %s30, %s46
      %p48 = scmp.eq.s32.totalorder %s22, 0
      %p49 = por %p47, %p48
      %s50 = ssub.s32 %s16, %s23
      %p51 = scmp.eq.s32.totalorder %s50, 0
      %s53 = sadd.s32 %s52, 1
      %s54 = scalar_select %p51, %s52, %s53
      %p57 = pneg %p51
      %p58 = scmp.eq.s32.totalorder %s16, 1
      %p59 = por %p57, %p58
      %p60 = scmp.ne.s32.totalorder %s52, %s55
      %p61 = scmp.eq.s32.totalorder %s16, 0
      %p62 = por %p60, %p61
      %p63 = scmp.ne.s32.totalorder %s52, %s55
      %p64 = scmp.eq.s32.totalorder %s21, 1
      %p65 = por %p63, %p64
      %p66 = scmp.ne.s32.totalorder %s55, %s56
      %p67 = scmp.eq.s32.totalorder %s21, 0
      %p68 = por %p66, %p67
      %p69 = scmp.ne.s32.totalorder %s55, %s56
      %p70 = scmp.eq.s32.totalorder %s22, 1
      %p71 = por %p69, %p70
      %p73 = scmp.ne.s32.totalorder %s56, %s72
      %p74 = scmp.eq.s32.totalorder %s22, 0
      %p75 = por %p73, %p74
      %s77 = sadd.s32 %s76, 1
      %p80 = scmp.eq.s32.totalorder %s16, 1
      %p81 = scmp.ne.s32.totalorder %s76, %s78
      %p82 = scmp.eq.s32.totalorder %s16, 0
      %p83 = por %p81, %p82
      %p84 = scmp.ne.s32.totalorder %s76, %s78
      %p85 = scmp.eq.s32.totalorder %s21, 1
      %p86 = por %p84, %p85
      %p87 = scmp.ne.s32.totalorder %s78, %s79
      %p88 = scmp.eq.s32.totalorder %s21, 0
      %p89 = por %p87, %p88
      %p90 = scmp.ne.s32.totalorder %s78, %s79
      %p91 = scmp.eq.s32.totalorder %s22, 1
      %p92 = por %p90, %p91
      %p94 = scmp.ne.s32.totalorder %s79, %s93
      %p95 = scmp.eq.s32.totalorder %s22, 0
      %p96 = por %p94, %p95
      %s98 = sadd.s32 %s97, 1
      %p101 = scmp.eq.s32.totalorder %s16, 1
      %p102 = scmp.ne.s32.totalorder %s97, %s99
      %p103 = scmp.eq.s32.totalorder %s16, 0
      %p104 = por %p102, %p103
      %p105 = scmp.ne.s32.totalorder %s97, %s99
      %p106 = scmp.eq.s32.totalorder %s21, 1
      %p107 = por %p105, %p106
      %p108 = scmp.ne.s32.totalorder %s99, %s100
      %p109 = scmp.eq.s32.totalorder %s21, 0
      %p110 = por %p108, %p109
      %p111 = scmp.ne.s32.totalorder %s99, %s100
      %p112 = scmp.eq.s32.totalorder %s22, 1
      %p113 = por %p111, %p112
      %p115 = scmp.ne.s32.totalorder %s100, %s114
      %p116 = scmp.eq.s32.totalorder %s22, 0
      %p117 = por %p115, %p116
      %s119 = sadd.s32 %s118, 1
      %p122 = scmp.eq.s32.totalorder %s16, 1
      %p123 = scmp.ne.s32.totalorder %s118, %s120
      %p124 = scmp.eq.s32.totalorder %s16, 0
      %p125 = por %p123, %p124
      %p126 = scmp.ne.s32.totalorder %s118, %s120
      %p127 = scmp.eq.s32.totalorder %s21, 1
      %p128 = por %p126, %p127
      %p129 = scmp.ne.s32.totalorder %s120, %s121
      %p130 = scmp.eq.s32.totalorder %s21, 0
      %p131 = por %p129, %p130
      %p132 = scmp.ne.s32.totalorder %s120, %s121
      %p133 = scmp.eq.s32.totalorder %s22, 1
      %p134 = por %p132, %p133
      %p136 = scmp.ne.s32.totalorder %s121, %s135
      %p137 = scmp.eq.s32.totalorder %s22, 0
      %p138 = por %p136, %p137
      %s140 = sadd.s32 %s139, 1
      %p143 = scmp.eq.s32.totalorder %s16, 1
      %p144 = scmp.ne.s32.totalorder %s139, %s141
      %p145 = scmp.eq.s32.totalorder %s16, 0
      %p146 = por %p144, %p145
      %p147 = scmp.ne.s32.totalorder %s139, %s141
      %p148 = scmp.eq.s32.totalorder %s21, 1
      %p149 = por %p147, %p148
      %p150 = scmp.ne.s32.totalorder %s141, %s142
      %p151 = scmp.eq.s32.totalorder %s21, 0
      %p152 = por %p150, %p151
      %p153 = scmp.ne.s32.totalorder %s141, %s142
      %p154 = scmp.eq.s32.totalorder %s22, 1
      %p155 = por %p153, %p154
      %p157 = scmp.ne.s32.totalorder %s142, %s156
      %p158 = scmp.eq.s32.totalorder %s22, 0
      %p159 = por %p157, %p158
      %s161 = sadd.s32 %s160, 1
      %p164 = scmp.eq.s32.totalorder %s16, 1
      %p165 = scmp.ne.s32.totalorder %s160, %s162
      %p166 = scmp.eq.s32.totalorder %s16, 0
      %p167 = por %p165, %p166
      %p168 = scmp.ne.s32.totalorder %s160, %s162
      %p169 = scmp.eq.s32.totalorder %s21, 1
      %p170 = por %p168, %p169
      %p171 = scmp.ne.s32.totalorder %s162, %s163
      %p172 = scmp.eq.s32.totalorder %s21, 0
      %p173 = por %p171, %p172
      %p174 = scmp.ne.s32.totalorder %s162, %s163
      %p175 = scmp.eq.s32.totalorder %s22, 1
      %p176 = por %p174, %p175
      %p178 = scmp.ne.s32.totalorder %s163, %s177
      %p179 = scmp.eq.s32.totalorder %s22, 0
      %p180 = por %p178, %p179
      %s181 = ssub.s32 %s16, %s23
      %p182 = scmp.eq.s32.totalorder %s181, 0
      %s184 = sadd.s32 %s183, 1
      %s185 = scalar_select %p182, %s183, %s184
      %p188 = pneg %p182
      %p189 = scmp.eq.s32.totalorder %s16, 1
      %p190 = por %p188, %p189
      %p191 = scmp.ne.s32.totalorder %s183, %s186
      %p192 = scmp.eq.s32.totalorder %s16, 0
      %p193 = por %p191, %p192
      %p194 = scmp.ne.s32.totalorder %s183, %s186
      %p195 = scmp.eq.s32.totalorder %s21, 1
      %p196 = por %p194, %p195
      %p197 = scmp.ne.s32.totalorder %s186, %s187
      %p198 = scmp.eq.s32.totalorder %s21, 0
      %p199 = por %p197, %p198
      %p200 = scmp.ne.s32.totalorder %s186, %s187
      %p201 = scmp.eq.s32.totalorder %s22, 1
      %p202 = por %p200, %p201
      %p204 = scmp.ne.s32.totalorder %s187, %s203
      %p205 = scmp.eq.s32.totalorder %s22, 0
      %p206 = por %p204, %p205
      %s207 = ssub.s32 %s16, %s23
      %p208 = scmp.eq.s32.totalorder %s207, 0
      %s210 = sadd.s32 %s209, 1
      %s211 = scalar_select %p208, %s209, %s210
      %p214 = pneg %p208
      %p215 = scmp.eq.s32.totalorder %s16, 1
      %p216 = por %p214, %p215
      %p217 = scmp.ne.s32.totalorder %s209, %s212
      %p218 = scmp.eq.s32.totalorder %s16, 0
      %p219 = por %p217, %p218
      %p220 = scmp.ne.s32.totalorder %s209, %s212
      %p221 = scmp.eq.s32.totalorder %s21, 1
      %p222 = por %p220, %p221
      %p223 = scmp.ne.s32.totalorder %s212, %s213
      %p224 = scmp.eq.s32.totalorder %s21, 0
      %p225 = por %p223, %p224
      %p226 = scmp.ne.s32.totalorder %s212, %s213
      %p227 = scmp.eq.s32.totalorder %s22, 1
      %p228 = por %p226, %p227
      %p230 = scmp.ne.s32.totalorder %s213, %s229
      %p231 = scmp.eq.s32.totalorder %s22, 0
      %p232 = por %p230, %p231
      %p233 = scmp.le.s32.totalorder 1, %s16
      %p234 = scmp.lt.s32.totalorder %s16, 3
      %p235 = pnand %p233, %p234
      %p236 = pneg %p235
      // Predicated region
      $region9: #{block_forward.5} parent=5 // pred_check
        _
      $region10: #{block_forward.5} parent=5 // pred_check_branch
        %238 = sbr.rel (%p235) target = $region12
      $region11: #{block_forward.5} parent=5 // pred_region
        %s239 = ssub.s32 %s16, 1
        // Predicated region
        $region13: #{block_forward.5} parent=11 // pred_check
          %p240 = pneg %p89
        $region14: #{block_forward.5} parent=11 // pred_check_branch
          %242 = sbr.rel (%p240) target = $region16
        $region15: #{block_forward.5} parent=11 // pred_region
          _
        $region16: #{block_forward.5} parent=11 // pred_fallthru
          _
        // Predicated region
        $region17: #{block_forward.5} parent=11 // pred_check
          %p243 = pneg %p110
        $region18: #{block_forward.5} parent=11 // pred_check_branch
          %245 = sbr.rel (%p243) target = $region20
        $region19: #{block_forward.5} parent=11 // pred_region
          _
        $region20: #{block_forward.5} parent=11 // pred_fallthru
          _
        // Predicated region
        $region21: #{block_forward.5} parent=11 // pred_check
          %p246 = pneg %p131
        $region22: #{block_forward.5} parent=11 // pred_check_branch
          %248 = sbr.rel (%p246) target = $region24
        $region23: #{block_forward.5} parent=11 // pred_region
          _
        $region24: #{block_forward.5} parent=11 // pred_fallthru
          _
        // Predicated region
        $region25: #{block_forward.5} parent=11 // pred_check
          %p249 = pneg %p152
        $region26: #{block_forward.5} parent=11 // pred_check_branch
          %251 = sbr.rel (%p249) target = $region28
        $region27: #{block_forward.5} parent=11 // pred_region
          %253 = vsyncadd [#allocation3], 0
          %s254 = sshll.u32 %s5, 4
          %s255 = int_to_ptr.hbm [resolvable:$true] %s254
          %s256 = sshll.u32 [#allocation2], 4
          %s257 = int_to_ptr.vmem [resolvable:$true] %s256
          %262 = dma.hbm_to_vmem [thread:$0]  %s255, 512, %s257, [#allocation3], 64, 64, 4
        $region28: #{block_forward.5} parent=11 // pred_fallthru
          _
        // Predicated region
        $region29: #{block_forward.5} parent=11 // pred_check
          %p263 = pneg %p173
        $region30: #{block_forward.5} parent=11 // pred_check_branch
          %265 = sbr.rel (%p263) target = $region32
        $region31: #{block_forward.5} parent=11 // pred_region
          _
        $region32: #{block_forward.5} parent=11 // pred_fallthru
          _
      $region12: #{block_forward.5} parent=5 // pred_fallthru
        _
      %p266 = scmp.lt.s32.totalorder %s16, 2
      // Predicated region
      $region33: #{block_forward.5} parent=5 // pred_check
        %p267 = pneg %p266
      $region34: #{block_forward.5} parent=5 // pred_check_branch
        %269 = sbr.rel (%p267) target = $region36
      $region35: #{block_forward.5} parent=5 // pred_region
        // Predicated region
        $region37: #{block_forward.5} parent=35 // pred_check
          %p270 = pneg %p36
        $region38: #{block_forward.5} parent=35 // pred_check_branch
          %272 = sbr.rel (%p270) target = $region40
        $region39: #{block_forward.5} parent=35 // pred_region
          %p273 = scmp.lt.s32.totalorder %s16, 1
          %s274 = scalar_select %p273, %s16, 1
          %s275 = smul.addr %s274, 8
          %s276 = smul.addr %s275, 4
          %s277 = scalar_lea.vmem %s0, %s276
        $region40: #{block_forward.5} parent=35 // pred_fallthru
          _
        // Predicated region
        $region41: #{block_forward.5} parent=35 // pred_check
          %p278 = pneg %p62
        $region42: #{block_forward.5} parent=35 // pred_check_branch
          %280 = sbr.rel (%p278) target = $region44
        $region43: #{block_forward.5} parent=35 // pred_region
          %p281 = scmp.lt.s32.totalorder %s16, 1
          %s282 = scalar_select %p281, %s16, 1
          %s283 = scalar_lea.vmem %s1, %s282
        $region44: #{block_forward.5} parent=35 // pred_fallthru
          _
      $region36: #{block_forward.5} parent=5 // pred_fallthru
        _
      %p284 = scmp.le.s32.totalorder 1, %s16
      %p285 = scmp.lt.s32.totalorder %s16, 3
      %p286 = pnand %p284, %p285
      %p287 = pneg %p286
      // Predicated region
      $region45: #{block_forward.5} parent=5 // pred_check
        _
      $region46: #{block_forward.5} parent=5 // pred_check_branch
        %289 = sbr.rel (%p286) target = $region48
      $region47: #{block_forward.5} parent=5 // pred_region
        %s290 = ssub.s32 %s16, 1
        // Predicated region
        $region49: #{block_forward.5} parent=47 // pred_check
          %p291 = pneg %p152
        $region50: #{block_forward.5} parent=47 // pred_check_branch
          %293 = sbr.rel (%p291) target = $region52
        $region51: #{block_forward.5} parent=47 // pred_region
          %295 = dma.done [#allocation3], 512
        $region52: #{block_forward.5} parent=47 // pred_fallthru
          _
        %p296 = scmp.lt.s32.totalorder %s21, 1
        %s297 = scalar_select %p296, %s21, 1
        %s298 = smul.addr %s297, 8
        %s299 = smul.addr %s298, 4
        %s300 = scalar_lea.vmem %s0, %s299
        %p301 = pneg %p42
        %p302 = pneg %p39
        %p303 = scmp.lt.s32.totalorder %s21, 1
        %s304 = scalar_select %p303, %s21, 1
        %s305 = scalar_lea.vmem %s1, %s304
        %p306 = pneg %p68
        %p307 = pneg %p65
        %p308 = pneg %p89
        %p309 = pneg %p86
        %p310 = pneg %p110
        %p311 = pneg %p107
        %p312 = pneg %p131
        %p313 = pneg %p128
        %p314 = pneg %p152
        %p315 = pneg %p149
        %p316 = pneg %p173
        %p317 = pneg %p170
        %p318 = pneg %p199
        %p319 = pneg %p196
        %p320 = scmp.lt.s32.totalorder %s21, 1
        %s321 = scalar_select %p320, %s21, 1
        %s322 = smul.addr %s321, 8
        %s323 = smul.addr %s322, 4
        %s324 = scalar_lea.vmem %s7, %s323
        %p325 = pneg %p225
        %p326 = pneg %p222
        %p327 = scmp.lt.s32.totalorder %s21, 1
        %s328 = scalar_select %p327, %s21, 1
        %s329 = smul.addr %s328, 4
        %s330 = scalar_lea.vmem %s8, %s329
        %p331 = scmp.lt.s32.totalorder %s21, 1
        %s332 = scalar_select %p331, %s21, 1
        %s333 = smul.addr %s332, 8
        %s334 = smul.addr %s333, 4
        %s335 = scalar_lea.vmem %s0, %s334
        %p336 = scmp.lt.s32.totalorder %s21, 1
        %s337 = scalar_select %p336, %s21, 1
        %s338 = scalar_lea.vmem %s1, %s337
        %p339 = scmp.lt.s32.totalorder %s21, 1
        %s340 = scalar_select %p339, %s21, 1
        %s341 = smul.addr %s340, 8
        %s342 = smul.addr %s341, 4
        %s343 = scalar_lea.vmem %s7, %s342
        %p344 = scmp.lt.s32.totalorder %s21, 1
        %s345 = scalar_select %p344, %s21, 1
        %s346 = smul.addr %s345, 4
        %s347 = scalar_lea.vmem %s8, %s346
        %v349 = vld [vmem:[%s335] sm:$0xf]
        %v350 = vld [vmem:[%s335 + $0x4] sm:$0xf]
        %v351 = vld [vmem:[%s335 + $0x8] sm:$0xf]
        %v352 = vld [vmem:[%s335 + $0xc] sm:$0xf]
        %v353 = vld [vmem:[%s335 + $0x10] sm:$0xf]
        %v354 = vld [vmem:[%s335 + $0x14] sm:$0xf]
        %v355 = vld [vmem:[%s335 + $0x18] sm:$0xf]
        %v356 = vld [vmem:[%s335 + $0x1c] sm:$0xf]
        %v357 = vrot.slane %v351, 4
        %vm358 = vcmask 1047556
        %v359 = vsel %vm358, %v357, %v349
        %v361 = vunpack.c.l.s4 1983009808
        %v362 = vunpack.c.0.s8 %v361
        %v363 = vperm.slane %v359, %v362
        %v364 = vrot.slane %v352, 4
        %v365 = vsel %vm358, %v364, %v350
        %v367 = vunpack.c.l.s4 1983009808
        %v368 = vunpack.c.0.s8 %v367
        %v369 = vperm.slane %v365, %v368
        %v370 = vrot.slane %v355, 4
        %v371 = vsel %vm358, %v370, %v353
        %v373 = vunpack.c.l.s4 1983009808
        %v374 = vunpack.c.0.s8 %v373
        %v375 = vperm.slane %v371, %v374
        %v376 = vrot.slane %v356, 4
        %v377 = vsel %vm358, %v376, %v354
        %v379 = vunpack.c.l.s4 1983009808
        %v380 = vunpack.c.0.s8 %v379
        %v381 = vperm.slane %v377, %v380
        %v382 = vrot.slane %v369, 4
        %v383 = vsel %vm358, %v382, %v363
        %v384 = vrot.slane %v363, 4
        %v385 = vsel %vm358, %v369, %v384
        %v387 = vunpack.c.l.s4 1934713408
        %v388 = vunpack.c.0.s8 %v387
        %v389 = vperm.slane %v383, %v388
        %v391 = vunpack.c.l.s4 1934713408
        %v392 = vunpack.c.0.s8 %v391
        %v393 = vperm.slane %v385, %v392
        %v394 = vrot.slane %v381, 4
        %v395 = vsel %vm358, %v394, %v375
        %v396 = vrot.slane %v375, 4
        %v397 = vsel %vm358, %v381, %v396
        %v399 = vunpack.c.l.s4 1934713408
        %v400 = vunpack.c.0.s8 %v399
        %v401 = vperm.slane %v395, %v400
        %v403 = vunpack.c.l.s4 1934713408
        %v404 = vunpack.c.0.s8 %v403
        %v405 = vperm.slane %v397, %v404
        %v406 = vrot.slane %v401, 4
        %v407 = vsel %vm358, %v406, %v389
        %v408 = vrot.slane %v389, 4
        %v409 = vsel %vm358, %v401, %v408
        %v410 = vrot.slane %v405, 4
        %v411 = vsel %vm358, %v410, %v393
        %v412 = vrot.slane %v393, 4
        %v413 = vsel %vm358, %v405, %v412
        %v414 = vld [vmem:[%s338] sm:$0x1]
        %v419 = vrot.slane %v407, 7
        %v420 = vrot.slane %v409, 7
        %v421 = vrot.slane %v411, 7
        %v422 = vrot.slane %v413, 7
        %vm427 = vcmask 1040384
        %v428 = vsel %vm427, %v414, %v419
        %v429 = vsel %vm427, %v414, %v420
        %v430 = vsel %vm427, %v414, %v421
        %v431 = vsel %vm427, %v414, %v422
        %v432 = vld [vmem:[%s2] sm:$0x1]
        %v433 = vld [vmem:[%s3] sm:$0x1]
        %v434 = vld [vmem:[%s4] sm:$0xff]
        %v435 = vld [vmem:[%s4 + $0x8] sm:$0xff]
        %v436 = vld [vmem:[%s4 + $0x10] sm:$0xff]
        %v437 = vld [vmem:[%s4 + $0x18] sm:$0xff]
        %v438 = vld [vmem:[%s4 + $0x20] sm:$0xff]
        %v439 = vld [vmem:[%s4 + $0x28] sm:$0xff]
        %v440 = vld [vmem:[%s4 + $0x30] sm:$0xff]
        %v441 = vld [vmem:[%s4 + $0x38] sm:$0xff]
        %v442 = vld [vmem:[#allocation2] sm:$0xf]
        %v443 = vld [vmem:[#allocation2 + $0x4] sm:$0xf]
        %v444 = vld [vmem:[#allocation2 + $0x8] sm:$0xf]
        %v445 = vld [vmem:[#allocation2 + $0xc] sm:$0xf]
        %v446 = vld [vmem:[#allocation2 + $0x10] sm:$0xf]
        %v447 = vld [vmem:[#allocation2 + $0x14] sm:$0xf]
        %v448 = vld [vmem:[#allocation2 + $0x18] sm:$0xf]
        %v449 = vld [vmem:[#allocation2 + $0x1c] sm:$0xf]
        %v450 = vld [vmem:[%s6] sm:$0x1]
        %vm451 = vcmask 523264
        %v452 = vsel %vm451, %v428, 0.0
        %453 = vadd.xlane.f32.xlu0 %v452
        %v454 = vpop.xlane.xlu0 %453
        %vm455 = vcmask 516096
        %v456 = vsel %vm455, %v419, 0.0
        %457 = vadd.xlane.f32.xlu0 %v456
        %v458 = vpop.xlane.xlu0 %457
        %v459 = vsel %vm451, %v429, 0.0
        %460 = vadd.xlane.f32.xlu0 %v459
        %v461 = vpop.xlane.xlu0 %460
        %v462 = vsel %vm455, %v420, 0.0
        %463 = vadd.xlane.f32.xlu0 %v462
        %v464 = vpop.xlane.xlu0 %463
        %v465 = vsel %vm451, %v430, 0.0
        %466 = vadd.xlane.f32.xlu0 %v465
        %v467 = vpop.xlane.xlu0 %466
        %v468 = vsel %vm455, %v421, 0.0
        %469 = vadd.xlane.f32.xlu0 %v468
        %v470 = vpop.xlane.xlu0 %469
        %v471 = vsel %vm451, %v431, 0.0
        %472 = vadd.xlane.f32.xlu0 %v471
        %v473 = vpop.xlane.xlu0 %472
        %v474 = vsel %vm455, %v422, 0.0
        %475 = vadd.xlane.f32.xlu0 %v474
        %v476 = vpop.xlane.xlu0 %475
        %v477 = vrcp.pop 64.0
        %v478 = vmul.f32 64.0, %v477
        %v479 = vsub.f32 1.0, %v478
        %v480 = vmul.f32 %v477, %v479
        %v481 = vadd.f32 %v477, %v480
        %vm482 = vweird.f32 %v477
        %v483 = vsel %vm482, %v477, %v481
        %v484 = vmul.f32 %v454, %v483
        %v485 = vmul.f32 %v458, %v483
        %v486 = vmul.f32 %v461, %v483
        %v487 = vmul.f32 %v464, %v483
        %v488 = vmul.f32 %v467, %v483
        %v489 = vmul.f32 %v470, %v483
        %v490 = vmul.f32 %v473, %v483
        %v491 = vmul.f32 %v476, %v483
        %v492 = vsub.f32 %v428, %v484
        %v493 = vsub.f32 %v419, %v485
        %v494 = vsub.f32 %v429, %v486
        %v495 = vsub.f32 %v420, %v487
        %v496 = vsub.f32 %v430, %v488
        %v497 = vsub.f32 %v421, %v489
        %v498 = vsub.f32 %v431, %v490
        %v499 = vsub.f32 %v422, %v491
        %v500 = vmul.f32 %v492, %v492
        %v501 = vmul.f32 %v493, %v493
        %v502 = vmul.f32 %v494, %v494
        %v503 = vmul.f32 %v495, %v495
        %v504 = vmul.f32 %v496, %v496
        %v505 = vmul.f32 %v497, %v497
        %v506 = vmul.f32 %v498, %v498
        %v507 = vmul.f32 %v499, %v499
        %v508 = vsel %vm451, %v500, 0.0
        %509 = vadd.xlane.f32.xlu0 %v508
        %v510 = vpop.xlane.xlu0 %509
        %v511 = vsel %vm455, %v501, 0.0
        %512 = vadd.xlane.f32.xlu0 %v511
        %v513 = vpop.xlane.xlu0 %512
        %v514 = vsel %vm451, %v502, 0.0
        %515 = vadd.xlane.f32.xlu0 %v514
        %v516 = vpop.xlane.xlu0 %515
        %v517 = vsel %vm455, %v503, 0.0
        %518 = vadd.xlane.f32.xlu0 %v517
        %v519 = vpop.xlane.xlu0 %518
        %v520 = vsel %vm451, %v504, 0.0
        %521 = vadd.xlane.f32.xlu0 %v520
        %v522 = vpop.xlane.xlu0 %521
        %v523 = vsel %vm455, %v505, 0.0
        %524 = vadd.xlane.f32.xlu0 %v523
        %v525 = vpop.xlane.xlu0 %524
        %v526 = vsel %vm451, %v506, 0.0
        %527 = vadd.xlane.f32.xlu0 %v526
        %v528 = vpop.xlane.xlu0 %527
        %v529 = vsel %vm455, %v507, 0.0
        %530 = vadd.xlane.f32.xlu0 %v529
        %v531 = vpop.xlane.xlu0 %530
        %v532 = vmul.f32 %v510, %v483
        %v533 = vmul.f32 %v513, %v483
        %v534 = vmul.f32 %v516, %v483
        %v535 = vmul.f32 %v519, %v483
        %v536 = vmul.f32 %v522, %v483
        %v537 = vmul.f32 %v525, %v483
        %v538 = vmul.f32 %v528, %v483
        %v539 = vmul.f32 %v531, %v483
        %v540 = vadd.f32 %v532, 1e-05
        %v541 = vadd.f32 %v533, 1e-05
        %v542 = vadd.f32 %v534, 1e-05
        %v543 = vadd.f32 %v535, 1e-05
        %v544 = vadd.f32 %v536, 1e-05
        %v545 = vadd.f32 %v537, 1e-05
        %v546 = vadd.f32 %v538, 1e-05
        %v547 = vadd.f32 %v539, 1e-05
        %v548 = vrsqrt.pop %v540
        %v549 = vmul.f32 %v548, %v540
        %v550 = vmul.f32 %v549, %v548
        %v551 = vmul.f32 0.5, %v550
        %v552 = vsub.f32 1.5, %v551
        %v553 = vmul.f32 %v548, %v552
        %vm554 = vweird.f32 %v540
        %vm555 = vweird.f32 %v548
        %vm556 = vmor %vm554, %vm555
        %v557 = vsel %vm556, %v548, %v553
        %v558 = vrsqrt.pop %v541
        %v559 = vmul.f32 %v558, %v541
        %v560 = vmul.f32 %v559, %v558
        %v561 = vmul.f32 0.5, %v560
        %v562 = vsub.f32 1.5, %v561
        %v563 = vmul.f32 %v558, %v562
        %vm564 = vweird.f32 %v541
        %vm565 = vweird.f32 %v558
        %vm566 = vmor %vm564, %vm565
        %v567 = vsel %vm566, %v558, %v563
        %v568 = vrsqrt.pop %v542
        %v569 = vmul.f32 %v568, %v542
        %v570 = vmul.f32 %v569, %v568
        %v571 = vmul.f32 0.5, %v570
        %v572 = vsub.f32 1.5, %v571
        %v573 = vmul.f32 %v568, %v572
        %vm574 = vweird.f32 %v542
        %vm575 = vweird.f32 %v568
        %vm576 = vmor %vm574, %vm575
        %v577 = vsel %vm576, %v568, %v573
        %v578 = vrsqrt.pop %v543
        %v579 = vmul.f32 %v578, %v543
        %v580 = vmul.f32 %v579, %v578
        %v581 = vmul.f32 0.5, %v580
        %v582 = vsub.f32 1.5, %v581
        %v583 = vmul.f32 %v578, %v582
        %vm584 = vweird.f32 %v543
        %vm585 = vweird.f32 %v578
        %vm586 = vmor %vm584, %vm585
        %v587 = vsel %vm586, %v578, %v583
        %v588 = vrsqrt.pop %v544
        %v589 = vmul.f32 %v588, %v544
        %v590 = vmul.f32 %v589, %v588
        %v591 = vmul.f32 0.5, %v590
        %v592 = vsub.f32 1.5, %v591
        %v593 = vmul.f32 %v588, %v592
        %vm594 = vweird.f32 %v544
        %vm595 = vweird.f32 %v588
        %vm596 = vmor %vm594, %vm595
        %v597 = vsel %vm596, %v588, %v593
        %v598 = vrsqrt.pop %v545
        %v599 = vmul.f32 %v598, %v545
        %v600 = vmul.f32 %v599, %v598
        %v601 = vmul.f32 0.5, %v600
        %v602 = vsub.f32 1.5, %v601
        %v603 = vmul.f32 %v598, %v602
        %vm604 = vweird.f32 %v545
        %vm605 = vweird.f32 %v598
        %vm606 = vmor %vm604, %vm605
        %v607 = vsel %vm606, %v598, %v603
        %v608 = vrsqrt.pop %v546
        %v609 = vmul.f32 %v608, %v546
        %v610 = vmul.f32 %v609, %v608
        %v611 = vmul.f32 0.5, %v610
        %v612 = vsub.f32 1.5, %v611
        %v613 = vmul.f32 %v608, %v612
        %vm614 = vweird.f32 %v546
        %vm615 = vweird.f32 %v608
        %vm616 = vmor %vm614, %vm615
        %v617 = vsel %vm616, %v608, %v613
        %v618 = vrsqrt.pop %v547
        %v619 = vmul.f32 %v618, %v547
        %v620 = vmul.f32 %v619, %v618
        %v621 = vmul.f32 0.5, %v620
        %v622 = vsub.f32 1.5, %v621
        %v623 = vmul.f32 %v618, %v622
        %vm624 = vweird.f32 %v547
        %vm625 = vweird.f32 %v618
        %vm626 = vmor %vm624, %vm625
        %v627 = vsel %vm626, %v618, %v623
        %v628 = vmul.f32 %v492, %v557
        %v629 = vmul.f32 %v493, %v567
        %v630 = vmul.f32 %v494, %v577
        %v631 = vmul.f32 %v495, %v587
        %v632 = vmul.f32 %v496, %v597
        %v633 = vmul.f32 %v497, %v607
        %v634 = vmul.f32 %v498, %v617
        %v635 = vmul.f32 %v499, %v627
        %v637 = vperm.slane %v432, 0
        %v639 = vmul.f32 %v628, %v637
        %v640 = vmul.f32 %v629, %v637
        %v641 = vmul.f32 %v630, %v637
        %v642 = vmul.f32 %v631, %v637
        %v643 = vmul.f32 %v632, %v637
        %v644 = vmul.f32 %v633, %v637
        %v645 = vmul.f32 %v634, %v637
        %v646 = vmul.f32 %v635, %v637
        %v648 = vperm.slane %v433, 0
        %v650 = vadd.f32 %v639, %v648
        %v651 = vadd.f32 %v640, %v648
        %v652 = vadd.f32 %v641, %v648
        %v653 = vadd.f32 %v642, %v648
        %v654 = vadd.f32 %v643, %v648
        %v655 = vadd.f32 %v644, %v648
        %v656 = vadd.f32 %v645, %v648
        %v657 = vadd.f32 %v646, %v648
        %v658 = vpack.c.bf16 %v650, %v650
        %v659 = vpack.c.bf16 %v651, %v651
        %v660 = vpack.c.bf16 %v652, %v652
        %v661 = vpack.c.bf16 %v653, %v653
        %v662 = vpack.c.bf16 %v654, %v654
        %v663 = vpack.c.bf16 %v655, %v655
        %v664 = vpack.c.bf16 %v656, %v656
        %v665 = vpack.c.bf16 %v657, %v657
        %v674 = vrot.slane %v658, 3
        %v675 = vrot.slane %v659, 3
        %v676 = vrot.slane %v660, 3
        %v677 = vrot.slane %v661, 3
        %v678 = vrot.slane %v662, 3
        %v679 = vrot.slane %v663, 3
        %v680 = vrot.slane %v664, 3
        %v681 = vrot.slane %v665, 3
        %v684 = vsel %vm427, %v658, %v674
        %vm686 = vcmask 1041409
        %v687 = vsel %vm686, %v658, %v674
        %v689 = vrot.slane %v687, 1
        %vm690 = vcmask 1042434
        %v691 = vsel %vm690, %v658, %v674
        %v693 = vrot.slane %v691, 2
        %vm694 = vcmask 1043459
        %v695 = vsel %vm694, %v658, %v674
        %v697 = vrot.slane %v695, 3
        %v700 = vsel %vm427, %v659, %v675
        %v704 = vsel %vm427, %v660, %v676
        %v706 = vsel %vm686, %v660, %v676
        %v708 = vrot.slane %v706, 1
        %v709 = vsel %vm690, %v660, %v676
        %v711 = vrot.slane %v709, 2
        %v712 = vsel %vm694, %v660, %v676
        %v714 = vrot.slane %v712, 3
        %v717 = vsel %vm427, %v661, %v677
        %v721 = vsel %vm427, %v662, %v678
        %v723 = vsel %vm686, %v662, %v678
        %v725 = vrot.slane %v723, 1
        %v726 = vsel %vm690, %v662, %v678
        %v728 = vrot.slane %v726, 2
        %v729 = vsel %vm694, %v662, %v678
        %v731 = vrot.slane %v729, 3
        %v734 = vsel %vm427, %v663, %v679
        %v738 = vsel %vm427, %v664, %v680
        %v740 = vsel %vm686, %v664, %v680
        %v742 = vrot.slane %v740, 1
        %v743 = vsel %vm690, %v664, %v680
        %v745 = vrot.slane %v743, 2
        %v746 = vsel %vm694, %v664, %v680
        %v748 = vrot.slane %v746, 3
        %v751 = vsel %vm427, %v665, %v681
        %v753 = vunpack.i.l.s16 %v684
        %v754 = vunpack.i.h.s16 %v684
        %v755 = vunpack.i.l.s16 %v689
        %v756 = vunpack.i.h.s16 %v689
        %v757 = vunpack.i.l.s16 %v693
        %v758 = vunpack.i.h.s16 %v693
        %v759 = vunpack.i.l.s16 %v697
        %v760 = vunpack.i.h.s16 %v697
        %v761 = vunpack.i.l.s16 %v700
        %v762 = vunpack.i.l.s16 %v704
        %v763 = vunpack.i.h.s16 %v704
        %v764 = vunpack.i.l.s16 %v708
        %v765 = vunpack.i.h.s16 %v708
        %v766 = vunpack.i.l.s16 %v711
        %v767 = vunpack.i.h.s16 %v711
        %v768 = vunpack.i.l.s16 %v714
        %v769 = vunpack.i.h.s16 %v714
        %v770 = vunpack.i.l.s16 %v717
        %v771 = vunpack.i.l.s16 %v721
        %v772 = vunpack.i.h.s16 %v721
        %v773 = vunpack.i.l.s16 %v725
        %v774 = vunpack.i.h.s16 %v725
        %v775 = vunpack.i.l.s16 %v728
        %v776 = vunpack.i.h.s16 %v728
        %v777 = vunpack.i.l.s16 %v731
        %v778 = vunpack.i.h.s16 %v731
        %v779 = vunpack.i.l.s16 %v734
        %v780 = vunpack.i.l.s16 %v738
        %v781 = vunpack.i.h.s16 %v738
        %v782 = vunpack.i.l.s16 %v742
        %v783 = vunpack.i.h.s16 %v742
        %v784 = vunpack.i.l.s16 %v745
        %v785 = vunpack.i.h.s16 %v745
        %v786 = vunpack.i.l.s16 %v748
        %v787 = vunpack.i.h.s16 %v748
        %v788 = vunpack.i.l.s16 %v751
        %v789 = vpack.i.b16 %v754, %v753
        %v790 = vpack.i.b16 %v756, %v755
        %v791 = vpack.i.b16 %v758, %v757
        %v792 = vpack.i.b16 %v760, %v759
        %v793 = vpack.i.b16 %v762, %v761
        %v794 = vpack.i.b16 %v764, %v763
        %v795 = vpack.i.b16 %v766, %v765
        %v796 = vpack.i.b16 %v768, %v767
        %v797 = vpack.i.b16 %v770, %v769
        %v798 = vpack.i.b16 %v772, %v771
        %v799 = vpack.i.b16 %v774, %v773
        %v800 = vpack.i.b16 %v776, %v775
        %v801 = vpack.i.b16 %v778, %v777
        %v802 = vpack.i.b16 %v780, %v779
        %v803 = vpack.i.b16 %v782, %v781
        %v804 = vpack.i.b16 %v784, %v783
        %v805 = vpack.i.b16 %v786, %v785
        %v806 = vpack.i.b16 %v788, %v787
        %808 = vst [vmem:[#allocation1] ss:$9 sm:$0xff] %v789
        %s810 = scalar_lea.vmem [#allocation1], 1
        %811 = vst [vmem:[%s810] ss:$9 sm:$0xff] %v790
        %s813 = scalar_lea.vmem [#allocation1], 2
        %814 = vst [vmem:[%s813] ss:$9 sm:$0xff] %v791
        %s816 = scalar_lea.vmem [#allocation1], 3
        %817 = vst [vmem:[%s816] ss:$9 sm:$0xff] %v792
        %s819 = scalar_lea.vmem [#allocation1], 4
        %820 = vst [vmem:[%s819] ss:$9 sm:$0xff] %v793
        %s822 = scalar_lea.vmem [#allocation1], 5
        %823 = vst [vmem:[%s822] ss:$9 sm:$0xff] %v794
        %s825 = scalar_lea.vmem [#allocation1], 6
        %826 = vst [vmem:[%s825] ss:$9 sm:$0xff] %v795
        %s828 = scalar_lea.vmem [#allocation1], 7
        %829 = vst [vmem:[%s828] ss:$9 sm:$0xff] %v796
        %v830 = vld [vmem:[#allocation1] sm:$0xff]
        %832 = vst [vmem:[#allocation1] ss:$9 sm:$0xff] %v797
        %834 = vst [vmem:[%s810] ss:$9 sm:$0xff] %v798
        %836 = vst [vmem:[%s813] ss:$9 sm:$0xff] %v799
        %838 = vst [vmem:[%s816] ss:$9 sm:$0xff] %v800
        %840 = vst [vmem:[%s819] ss:$9 sm:$0xff] %v801
        %842 = vst [vmem:[%s822] ss:$9 sm:$0xff] %v802
        %844 = vst [vmem:[%s825] ss:$9 sm:$0xff] %v803
        %846 = vst [vmem:[%s828] ss:$9 sm:$0xff] %v804
        %v847 = vld [vmem:[#allocation1] sm:$0xff]
        %849 = vst [vmem:[#allocation1] ss:$9 sm:$0xff] %v805
        %851 = vst [vmem:[%s810] ss:$9 sm:$0xff] %v806
        %v852 = vld [vmem:[#allocation1] sm:$0xff]
        %v861 = vunpack.c.l.b16 %v434
        %v862 = vunpack.c.h.b16 %v434
        %v863 = vunpack.c.l.b16 %v435
        %v864 = vunpack.c.h.b16 %v435
        %v865 = vunpack.c.l.b16 %v436
        %v866 = vunpack.c.h.b16 %v436
        %v867 = vunpack.c.l.b16 %v437
        %v868 = vunpack.c.h.b16 %v437
        %v869 = vunpack.c.l.b16 %v438
        %v870 = vunpack.c.h.b16 %v438
        %v871 = vunpack.c.l.b16 %v439
        %v872 = vunpack.c.h.b16 %v439
        %v873 = vunpack.c.l.b16 %v440
        %v874 = vunpack.c.h.b16 %v440
        %v875 = vunpack.c.l.b16 %v441
        %v876 = vunpack.c.h.b16 %v441
        %v877 = vpack.c.b16 %v863, %v861
        %v878 = vpack.c.b16 %v864, %v862
        %v879 = vpack.c.b16 %v867, %v865
        %v880 = vpack.c.b16 %v868, %v866
        %v881 = vpack.c.b16 %v871, %v869
        %v882 = vpack.c.b16 %v872, %v870
        %v883 = vpack.c.b16 %v875, %v873
        %v884 = vpack.c.b16 %v876, %v874
        %v893 = vsel %vm451, %v830, 0
        %v895 = vsel %vm451, %v847, 0
        %v897 = vsel %vm451, %v852, 0
        %899 = vmatpush.bf16.msra.mxu0 0
        %900 = vmatpush.bf16.msra.mxu0 0
        %901 = vmatpush.bf16.msra.mxu0 0
        %902 = vmatpush.bf16.msra.mxu0 0
        %903 = vmatpush.bf16.msra.mxu0 %v883
        %904 = vmatpush.bf16.msra.mxu0 %v881
        %905 = vmatpush.bf16.msra.mxu0 %v879
        %906 = vmatpush.bf16.msra.mxu0 %v877
        %907 = vmatmul.bf16.gmra.mxu0 %v893
        %v908 = vpop.f32.mrf.mxu0
        %v909 = vadd.f32 0.0, %v908
        %v910 = vpop.f32.mrf.mxu0
        %v911 = vadd.f32 0.0, %v910
        %912 = vmatmul.bf16.gmra.mxu0 %v895
        %v913 = vpop.f32.mrf.mxu0
        %v914 = vadd.f32 0.0, %v913
        %v915 = vpop.f32.mrf.mxu0
        %v916 = vadd.f32 0.0, %v915
        %917 = vmatmul.bf16.gmra.mxu0 %v897
        %v918 = vpop.f32.mrf.mxu0
        %v919 = vadd.f32 0.0, %v918
        %v920 = vpop.f32.mrf.mxu0
        %921 = vdwg.mxu0
        %922 = vmatpush.bf16.msra.mxu0 0
        %923 = vmatpush.bf16.msra.mxu0 0
        %924 = vmatpush.bf16.msra.mxu0 0
        %925 = vmatpush.bf16.msra.mxu0 0
        %926 = vmatpush.bf16.msra.mxu0 %v884
        %927 = vmatpush.bf16.msra.mxu0 %v882
        %928 = vmatpush.bf16.msra.mxu0 %v880
        %929 = vmatpush.bf16.msra.mxu0 %v878
        %930 = vmatmul.bf16.gmra.mxu0 %v893
        %v931 = vpop.f32.mrf.mxu0
        %v932 = vadd.f32 0.0, %v931
        %v933 = vpop.f32.mrf.mxu0
        %v934 = vadd.f32 0.0, %v933
        %935 = vmatmul.bf16.gmra.mxu0 %v895
        %v936 = vpop.f32.mrf.mxu0
        %v937 = vadd.f32 0.0, %v936
        %v938 = vpop.f32.mrf.mxu0
        %v939 = vadd.f32 0.0, %v938
        %940 = vmatmul.bf16.gmra.mxu0 %v897
        %v941 = vpop.f32.mrf.mxu0
        %v942 = vadd.f32 0.0, %v941
        %v943 = vpop.f32.mrf.mxu0
        %944 = vdwg.mxu0
        %v945 = vpack.c.bf16 %v932, %v909
        %v946 = vpack.c.bf16 %v934, %v911
        %v947 = vpack.c.bf16 %v937, %v914
        %v948 = vpack.c.bf16 %v939, %v916
        %v949 = vpack.c.bf16 %v942, %v919
        %955 = vrot.lane.b32.xlu0 %v945, 112
        %v956 = vpop.permute.xlu0 %955
        %957 = vrot.lane.b32.xlu0 %v946, 112
        %v958 = vpop.permute.xlu0 %957
        %959 = vrot.lane.b32.xlu0 %v947, 112
        %v960 = vpop.permute.xlu0 %959
        %961 = vrot.lane.b32.xlu0 %v948, 112
        %v962 = vpop.permute.xlu0 %961
        %963 = vrot.lane.b32.xlu0 %v949, 112
        %v964 = vpop.permute.xlu0 %963
        %965 = vrot.lane.b32.xlu0 %v945, 96
        %v966 = vpop.permute.xlu0 %965
        %967 = vrot.lane.b32.xlu0 %v946, 96
        %v968 = vpop.permute.xlu0 %967
        %969 = vrot.lane.b32.xlu0 %v947, 96
        %v970 = vpop.permute.xlu0 %969
        %971 = vrot.lane.b32.xlu0 %v948, 96
        %v972 = vpop.permute.xlu0 %971
        %973 = vrot.lane.b32.xlu0 %v949, 96
        %v974 = vpop.permute.xlu0 %973
        %975 = vrot.lane.b32.xlu0 %v945, 80
        %v976 = vpop.permute.xlu0 %975
        %977 = vrot.lane.b32.xlu0 %v946, 80
        %v978 = vpop.permute.xlu0 %977
        %979 = vrot.lane.b32.xlu0 %v947, 80
        %v980 = vpop.permute.xlu0 %979
        %981 = vrot.lane.b32.xlu0 %v948, 80
        %v982 = vpop.permute.xlu0 %981
        %983 = vrot.lane.b32.xlu0 %v949, 80
        %v984 = vpop.permute.xlu0 %983
        %v986 = vunpack.c.l.s4 1983009808
        %v987 = vunpack.c.0.s8 %v986
        %v988 = vperm.slane %v945, %v987
        %v991 = vunpack.c.l.s4 1983009808
        %v992 = vunpack.c.0.s8 %v991
        %v993 = vperm.slane %v966, %v992
        %v994 = vrot.slane %v993, 4
        %vm995 = vcmask 1047556
        %v996 = vsel %vm995, %v994, %v988
        %v997 = vrot.slane %v988, 4
        %v998 = vsel %vm995, %v993, %v997
        %v1000 = vunpack.c.l.s4 1934713408
        %v1001 = vunpack.c.0.s8 %v1000
        %v1002 = vperm.slane %v996, %v1001
        %v1004 = vunpack.c.l.s4 1934713408
        %v1005 = vunpack.c.0.s8 %v1004
        %v1006 = vperm.slane %v998, %v1005
        %v1007 = vrot.slane %v1002, 4
        %v1008 = vsel %vm995, 0, %v1007
        %v1009 = vrot.slane %v1006, 4
        %v1010 = vsel %vm995, 0, %v1009
        %v1013 = vunpack.c.l.s4 1983009808
        %v1014 = vunpack.c.0.s8 %v1013
        %v1015 = vperm.slane %v956, %v1014
        %v1018 = vunpack.c.l.s4 1983009808
        %v1019 = vunpack.c.0.s8 %v1018
        %v1020 = vperm.slane %v976, %v1019
        %v1021 = vrot.slane %v1020, 4
        %v1022 = vsel %vm995, %v1021, %v1015
        %v1023 = vrot.slane %v1015, 4
        %v1024 = vsel %vm995, %v1020, %v1023
        %v1026 = vunpack.c.l.s4 1934713408
        %v1027 = vunpack.c.0.s8 %v1026
        %v1028 = vperm.slane %v1022, %v1027
        %v1030 = vunpack.c.l.s4 1934713408
        %v1031 = vunpack.c.0.s8 %v1030
        %v1032 = vperm.slane %v1024, %v1031
        %v1033 = vrot.slane %v1028, 4
        %v1034 = vsel %vm995, 0, %v1033
        %v1035 = vrot.slane %v1032, 4
        %v1036 = vsel %vm995, 0, %v1035
        %v1038 = vunpack.c.l.s4 1983009808
        %v1039 = vunpack.c.0.s8 %v1038
        %v1040 = vperm.slane %v946, %v1039
        %v1043 = vunpack.c.l.s4 1983009808
        %v1044 = vunpack.c.0.s8 %v1043
        %v1045 = vperm.slane %v968, %v1044
        %v1046 = vrot.slane %v1045, 4
        %v1047 = vsel %vm995, %v1046, %v1040
        %v1048 = vrot.slane %v1040, 4
        %v1049 = vsel %vm995, %v1045, %v1048
        %v1051 = vunpack.c.l.s4 1934713408
        %v1052 = vunpack.c.0.s8 %v1051
        %v1053 = vperm.slane %v1047, %v1052
        %v1055 = vunpack.c.l.s4 1934713408
        %v1056 = vunpack.c.0.s8 %v1055
        %v1057 = vperm.slane %v1049, %v1056
        %v1058 = vrot.slane %v1053, 4
        %v1059 = vsel %vm995, 0, %v1058
        %v1060 = vrot.slane %v1057, 4
        %v1061 = vsel %vm995, 0, %v1060
        %v1064 = vunpack.c.l.s4 1983009808
        %v1065 = vunpack.c.0.s8 %v1064
        %v1066 = vperm.slane %v958, %v1065
        %v1069 = vunpack.c.l.s4 1983009808
        %v1070 = vunpack.c.0.s8 %v1069
        %v1071 = vperm.slane %v978, %v1070
        %v1072 = vrot.slane %v1071, 4
        %v1073 = vsel %vm995, %v1072, %v1066
        %v1074 = vrot.slane %v1066, 4
        %v1075 = vsel %vm995, %v1071, %v1074
        %v1077 = vunpack.c.l.s4 1934713408
        %v1078 = vunpack.c.0.s8 %v1077
        %v1079 = vperm.slane %v1073, %v1078
        %v1081 = vunpack.c.l.s4 1934713408
        %v1082 = vunpack.c.0.s8 %v1081
        %v1083 = vperm.slane %v1075, %v1082
        %v1084 = vrot.slane %v1079, 4
        %v1085 = vsel %vm995, 0, %v1084
        %v1086 = vrot.slane %v1083, 4
        %v1087 = vsel %vm995, 0, %v1086
        %v1089 = vunpack.c.l.s4 1983009808
        %v1090 = vunpack.c.0.s8 %v1089
        %v1091 = vperm.slane %v947, %v1090
        %v1094 = vunpack.c.l.s4 1983009808
        %v1095 = vunpack.c.0.s8 %v1094
        %v1096 = vperm.slane %v970, %v1095
        %v1097 = vrot.slane %v1096, 4
        %v1098 = vsel %vm995, %v1097, %v1091
        %v1099 = vrot.slane %v1091, 4
        %v1100 = vsel %vm995, %v1096, %v1099
        %v1102 = vunpack.c.l.s4 1934713408
        %v1103 = vunpack.c.0.s8 %v1102
        %v1104 = vperm.slane %v1098, %v1103
        %v1106 = vunpack.c.l.s4 1934713408
        %v1107 = vunpack.c.0.s8 %v1106
        %v1108 = vperm.slane %v1100, %v1107
        %v1109 = vrot.slane %v1104, 4
        %v1110 = vsel %vm995, 0, %v1109
        %v1111 = vrot.slane %v1108, 4
        %v1112 = vsel %vm995, 0, %v1111
        %v1115 = vunpack.c.l.s4 1983009808
        %v1116 = vunpack.c.0.s8 %v1115
        %v1117 = vperm.slane %v960, %v1116
        %v1120 = vunpack.c.l.s4 1983009808
        %v1121 = vunpack.c.0.s8 %v1120
        %v1122 = vperm.slane %v980, %v1121
        %v1123 = vrot.slane %v1122, 4
        %v1124 = vsel %vm995, %v1123, %v1117
        %v1125 = vrot.slane %v1117, 4
        %v1126 = vsel %vm995, %v1122, %v1125
        %v1128 = vunpack.c.l.s4 1934713408
        %v1129 = vunpack.c.0.s8 %v1128
        %v1130 = vperm.slane %v1124, %v1129
        %v1132 = vunpack.c.l.s4 1934713408
        %v1133 = vunpack.c.0.s8 %v1132
        %v1134 = vperm.slane %v1126, %v1133
        %v1135 = vrot.slane %v1130, 4
        %v1136 = vsel %vm995, 0, %v1135
        %v1137 = vrot.slane %v1134, 4
        %v1138 = vsel %vm995, 0, %v1137
        %v1140 = vunpack.c.l.s4 1983009808
        %v1141 = vunpack.c.0.s8 %v1140
        %v1142 = vperm.slane %v948, %v1141
        %v1145 = vunpack.c.l.s4 1983009808
        %v1146 = vunpack.c.0.s8 %v1145
        %v1147 = vperm.slane %v972, %v1146
        %v1148 = vrot.slane %v1147, 4
        %v1149 = vsel %vm995, %v1148, %v1142
        %v1150 = vrot.slane %v1142, 4
        %v1151 = vsel %vm995, %v1147, %v1150
        %v1153 = vunpack.c.l.s4 1934713408
        %v1154 = vunpack.c.0.s8 %v1153
        %v1155 = vperm.slane %v1149, %v1154
        %v1157 = vunpack.c.l.s4 1934713408
        %v1158 = vunpack.c.0.s8 %v1157
        %v1159 = vperm.slane %v1151, %v1158
        %v1160 = vrot.slane %v1155, 4
        %v1161 = vsel %vm995, 0, %v1160
        %v1162 = vrot.slane %v1159, 4
        %v1163 = vsel %vm995, 0, %v1162
        %v1166 = vunpack.c.l.s4 1983009808
        %v1167 = vunpack.c.0.s8 %v1166
        %v1168 = vperm.slane %v962, %v1167
        %v1171 = vunpack.c.l.s4 1983009808
        %v1172 = vunpack.c.0.s8 %v1171
        %v1173 = vperm.slane %v982, %v1172
        %v1174 = vrot.slane %v1173, 4
        %v1175 = vsel %vm995, %v1174, %v1168
        %v1176 = vrot.slane %v1168, 4
        %v1177 = vsel %vm995, %v1173, %v1176
        %v1179 = vunpack.c.l.s4 1934713408
        %v1180 = vunpack.c.0.s8 %v1179
        %v1181 = vperm.slane %v1175, %v1180
        %v1183 = vunpack.c.l.s4 1934713408
        %v1184 = vunpack.c.0.s8 %v1183
        %v1185 = vperm.slane %v1177, %v1184
        %v1186 = vrot.slane %v1181, 4
        %v1187 = vsel %vm995, 0, %v1186
        %v1188 = vrot.slane %v1185, 4
        %v1189 = vsel %vm995, 0, %v1188
        %v1191 = vrot.slane %v974, 4
        %v1192 = vsel %vm995, %v1191, %v949
        %v1194 = vunpack.c.l.s4 1934713408
        %v1195 = vunpack.c.0.s8 %v1194
        %v1196 = vperm.slane %v1192, %v1195
        %v1197 = vrot.slane %v1196, 4
        %v1198 = vsel %vm995, 0, %v1197
        %v1201 = vrot.slane %v984, 4
        %v1202 = vsel %vm995, %v1201, %v964
        %v1204 = vunpack.c.l.s4 1934713408
        %v1205 = vunpack.c.0.s8 %v1204
        %v1206 = vperm.slane %v1202, %v1205
        %v1207 = vrot.slane %v1206, 4
        %v1208 = vsel %vm995, 0, %v1207
        %v1211 = vpack.i.b16 %v1028, %v1002
        %v1213 = vshrl.u32 %v1002, 16
        %v1214 = vshrl.u32 %v1028, 16
        %v1215 = vpack.i.b16 %v1214, %v1213
        %v1219 = vpack.i.b16 %v1034, %v1008
        %v1221 = vshrl.u32 %v1008, 16
        %v1222 = vshrl.u32 %v1034, 16
        %v1223 = vpack.i.b16 %v1222, %v1221
        %v1227 = vpack.i.b16 %v1032, %v1006
        %v1229 = vshrl.u32 %v1006, 16
        %v1230 = vshrl.u32 %v1032, 16
        %v1231 = vpack.i.b16 %v1230, %v1229
        %v1235 = vpack.i.b16 %v1036, %v1010
        %v1237 = vshrl.u32 %v1010, 16
        %v1238 = vshrl.u32 %v1036, 16
        %v1239 = vpack.i.b16 %v1238, %v1237
        %v1243 = vpack.i.b16 %v1079, %v1053
        %v1244 = vshrl.u32 %v1053, 16
        %v1245 = vshrl.u32 %v1079, 16
        %v1246 = vpack.i.b16 %v1245, %v1244
        %v1250 = vpack.i.b16 %v1085, %v1059
        %v1252 = vshrl.u32 %v1059, 16
        %v1253 = vshrl.u32 %v1085, 16
        %v1254 = vpack.i.b16 %v1253, %v1252
        %v1258 = vpack.i.b16 %v1083, %v1057
        %v1260 = vshrl.u32 %v1057, 16
        %v1261 = vshrl.u32 %v1083, 16
        %v1262 = vpack.i.b16 %v1261, %v1260
        %v1266 = vpack.i.b16 %v1087, %v1061
        %v1268 = vshrl.u32 %v1061, 16
        %v1269 = vshrl.u32 %v1087, 16
        %v1270 = vpack.i.b16 %v1269, %v1268
        %v1274 = vpack.i.b16 %v1130, %v1104
        %v1276 = vshrl.u32 %v1104, 16
        %v1277 = vshrl.u32 %v1130, 16
        %v1278 = vpack.i.b16 %v1277, %v1276
        %v1281 = vpack.i.b16 %v1136, %v1110
        %v1283 = vshrl.u32 %v1110, 16
        %v1284 = vshrl.u32 %v1136, 16
        %v1285 = vpack.i.b16 %v1284, %v1283
        %v1289 = vpack.i.b16 %v1134, %v1108
        %v1291 = vshrl.u32 %v1108, 16
        %v1292 = vshrl.u32 %v1134, 16
        %v1293 = vpack.i.b16 %v1292, %v1291
        %v1297 = vpack.i.b16 %v1138, %v1112
        %v1299 = vshrl.u32 %v1112, 16
        %v1300 = vshrl.u32 %v1138, 16
        %v1301 = vpack.i.b16 %v1300, %v1299
        %v1305 = vpack.i.b16 %v1181, %v1155
        %v1307 = vshrl.u32 %v1155, 16
        %v1308 = vshrl.u32 %v1181, 16
        %v1309 = vpack.i.b16 %v1308, %v1307
        %v1313 = vpack.i.b16 %v1187, %v1161
        %v1314 = vshrl.u32 %v1161, 16
        %v1315 = vshrl.u32 %v1187, 16
        %v1316 = vpack.i.b16 %v1315, %v1314
        %v1320 = vpack.i.b16 %v1185, %v1159
        %v1322 = vshrl.u32 %v1159, 16
        %v1323 = vshrl.u32 %v1185, 16
        %v1324 = vpack.i.b16 %v1323, %v1322
        %v1328 = vpack.i.b16 %v1189, %v1163
        %v1330 = vshrl.u32 %v1163, 16
        %v1331 = vshrl.u32 %v1189, 16
        %v1332 = vpack.i.b16 %v1331, %v1330
        %v1336 = vpack.i.b16 %v1206, %v1196
        %v1338 = vshrl.u32 %v1196, 16
        %v1339 = vshrl.u32 %v1206, 16
        %v1340 = vpack.i.b16 %v1339, %v1338
        %v1344 = vpack.i.b16 %v1208, %v1198
        %v1346 = vshrl.u32 %v1198, 16
        %v1347 = vshrl.u32 %v1208, 16
        %v1348 = vpack.i.b16 %v1347, %v1346
        %v1349 = vrot.slane %v1227, 4
        %v1350 = vsel %vm995, %v1349, %v1211
        %v1352 = vunpack.c.l.s4 1983009808
        %v1353 = vunpack.c.0.s8 %v1352
        %v1354 = vperm.slane %v1350, %v1353
        %v1355 = vrot.slane %v1235, 4
        %v1356 = vsel %vm995, %v1355, %v1219
        %v1358 = vunpack.c.l.s4 1983009808
        %v1359 = vunpack.c.0.s8 %v1358
        %v1360 = vperm.slane %v1356, %v1359
        %v1361 = vrot.slane %v1360, 4
        %v1362 = vsel %vm995, %v1361, %v1354
        %v1364 = vunpack.c.l.s4 1934713408
        %v1365 = vunpack.c.0.s8 %v1364
        %v1366 = vperm.slane %v1362, %v1365
        %v1367 = vrot.slane %v1366, 4
        %v1368 = vsel %vm995, 0, %v1367
        %v1369 = vrot.slane %v1231, 4
        %v1370 = vsel %vm995, %v1369, %v1215
        %v1372 = vunpack.c.l.s4 1983009808
        %v1373 = vunpack.c.0.s8 %v1372
        %v1374 = vperm.slane %v1370, %v1373
        %v1375 = vrot.slane %v1239, 4
        %v1376 = vsel %vm995, %v1375, %v1223
        %v1378 = vunpack.c.l.s4 1983009808
        %v1379 = vunpack.c.0.s8 %v1378
        %v1380 = vperm.slane %v1376, %v1379
        %v1381 = vrot.slane %v1380, 4
        %v1382 = vsel %vm995, %v1381, %v1374
        %v1384 = vunpack.c.l.s4 1934713408
        %v1385 = vunpack.c.0.s8 %v1384
        %v1386 = vperm.slane %v1382, %v1385
        %v1387 = vrot.slane %v1386, 4
        %v1388 = vsel %vm995, 0, %v1387
        %v1391 = vunpack.c.l.s4 1934713408
        %v1392 = vunpack.c.0.s8 %v1391
        %v1393 = vperm.slane %v1243, %v1392
        %v1394 = vrot.slane %v1393, 4
        %v1395 = vsel %vm995, 0, %v1394
        %v1396 = vrot.slane %v1262, 4
        %v1397 = vsel %vm995, %v1396, %v1246
        %v1399 = vunpack.c.l.s4 1983009808
        %v1400 = vunpack.c.0.s8 %v1399
        %v1401 = vperm.slane %v1397, %v1400
        %v1402 = vrot.slane %v1270, 4
        %v1403 = vsel %vm995, %v1402, %v1254
        %v1405 = vunpack.c.l.s4 1983009808
        %v1406 = vunpack.c.0.s8 %v1405
        %v1407 = vperm.slane %v1403, %v1406
        %v1408 = vrot.slane %v1407, 4
        %v1409 = vsel %vm995, %v1408, %v1401
        %v1411 = vunpack.c.l.s4 1934713408
        %v1412 = vunpack.c.0.s8 %v1411
        %v1413 = vperm.slane %v1409, %v1412
        %v1414 = vrot.slane %v1413, 4
        %v1415 = vsel %vm995, 0, %v1414
        %v1416 = vrot.slane %v1266, 4
        %v1417 = vsel %vm995, %v1416, %v1250
        %v1419 = vunpack.c.l.s4 1983009808
        %v1420 = vunpack.c.0.s8 %v1419
        %v1421 = vperm.slane %v1417, %v1420
        %v1422 = vrot.slane %v1274, 4
        %v1423 = vsel %vm995, %v1422, %v1258
        %v1425 = vunpack.c.l.s4 1983009808
        %v1426 = vunpack.c.0.s8 %v1425
        %v1427 = vperm.slane %v1423, %v1426
        %v1428 = vrot.slane %v1427, 4
        %v1429 = vsel %vm995, %v1428, %v1421
        %v1431 = vunpack.c.l.s4 1934713408
        %v1432 = vunpack.c.0.s8 %v1431
        %v1433 = vperm.slane %v1429, %v1432
        %v1434 = vrot.slane %v1433, 4
        %v1435 = vsel %vm995, 0, %v1434
        %v1438 = vunpack.c.l.s4 1934713408
        %v1439 = vunpack.c.0.s8 %v1438
        %v1440 = vperm.slane %v1278, %v1439
        %v1441 = vrot.slane %v1440, 4
        %v1442 = vsel %vm995, 0, %v1441
        %v1443 = vrot.slane %v1297, 4
        %v1444 = vsel %vm995, %v1443, %v1281
        %v1446 = vunpack.c.l.s4 1983009808
        %v1447 = vunpack.c.0.s8 %v1446
        %v1448 = vperm.slane %v1444, %v1447
        %v1449 = vrot.slane %v1305, 4
        %v1450 = vsel %vm995, %v1449, %v1289
        %v1452 = vunpack.c.l.s4 1983009808
        %v1453 = vunpack.c.0.s8 %v1452
        %v1454 = vperm.slane %v1450, %v1453
        %v1455 = vrot.slane %v1454, 4
        %v1456 = vsel %vm995, %v1455, %v1448
        %v1458 = vunpack.c.l.s4 1934713408
        %v1459 = vunpack.c.0.s8 %v1458
        %v1460 = vperm.slane %v1456, %v1459
        %v1461 = vrot.slane %v1460, 4
        %v1462 = vsel %vm995, 0, %v1461
        %v1463 = vrot.slane %v1301, 4
        %v1464 = vsel %vm995, %v1463, %v1285
        %v1466 = vunpack.c.l.s4 1983009808
        %v1467 = vunpack.c.0.s8 %v1466
        %v1468 = vperm.slane %v1464, %v1467
        %v1469 = vrot.slane %v1309, 4
        %v1470 = vsel %vm995, %v1469, %v1293
        %v1472 = vunpack.c.l.s4 1983009808
        %v1473 = vunpack.c.0.s8 %v1472
        %v1474 = vperm.slane %v1470, %v1473
        %v1475 = vrot.slane %v1474, 4
        %v1476 = vsel %vm995, %v1475, %v1468
        %v1478 = vunpack.c.l.s4 1934713408
        %v1479 = vunpack.c.0.s8 %v1478
        %v1480 = vperm.slane %v1476, %v1479
        %v1481 = vrot.slane %v1480, 4
        %v1482 = vsel %vm995, 0, %v1481
        %v1485 = vunpack.c.l.s4 1934713408
        %v1486 = vunpack.c.0.s8 %v1485
        %v1487 = vperm.slane %v1313, %v1486
        %v1488 = vrot.slane %v1487, 4
        %v1489 = vsel %vm995, 0, %v1488
        %v1490 = vrot.slane %v1332, 4
        %v1491 = vsel %vm995, %v1490, %v1316
        %v1493 = vunpack.c.l.s4 1983009808
        %v1494 = vunpack.c.0.s8 %v1493
        %v1495 = vperm.slane %v1491, %v1494
        %v1496 = vrot.slane %v1340, 4
        %v1497 = vsel %vm995, %v1496, %v1324
        %v1499 = vunpack.c.l.s4 1983009808
        %v1500 = vunpack.c.0.s8 %v1499
        %v1501 = vperm.slane %v1497, %v1500
        %v1502 = vrot.slane %v1501, 4
        %v1503 = vsel %vm995, %v1502, %v1495
        %v1505 = vunpack.c.l.s4 1934713408
        %v1506 = vunpack.c.0.s8 %v1505
        %v1507 = vperm.slane %v1503, %v1506
        %v1508 = vrot.slane %v1507, 4
        %v1509 = vsel %vm995, 0, %v1508
        %v1510 = vrot.slane %v1336, 4
        %v1511 = vsel %vm995, %v1510, %v1320
        %v1513 = vunpack.c.l.s4 1983009808
        %v1514 = vunpack.c.0.s8 %v1513
        %v1515 = vperm.slane %v1511, %v1514
        %v1516 = vrot.slane %v1344, 4
        %v1517 = vsel %vm995, %v1516, %v1328
        %v1519 = vunpack.c.l.s4 1983009808
        %v1520 = vunpack.c.0.s8 %v1519
        %v1521 = vperm.slane %v1517, %v1520
        %v1522 = vrot.slane %v1521, 4
        %v1523 = vsel %vm995, %v1522, %v1515
        %v1525 = vunpack.c.l.s4 1934713408
        %v1526 = vunpack.c.0.s8 %v1525
        %v1527 = vperm.slane %v1523, %v1526
        %v1528 = vrot.slane %v1527, 4
        %v1529 = vsel %vm995, 0, %v1528
        %v1532 = vunpack.c.l.s4 1934713408
        %v1533 = vunpack.c.0.s8 %v1532
        %v1534 = vperm.slane %v1348, %v1533
        %v1535 = vrot.slane %v1534, 4
        %v1536 = vsel %vm995, 0, %v1535
        %v1539 = vpack.i.b16 %v1386, %v1366
        %v1540 = vshrl.u32 %v1366, 16
        %v1541 = vshrl.u32 %v1386, 16
        %v1542 = vpack.i.b16 %v1541, %v1540
        %v1545 = vpack.i.b16 %v1388, %v1368
        %v1546 = vshrl.u32 %v1368, 16
        %v1547 = vshrl.u32 %v1388, 16
        %v1548 = vpack.i.b16 %v1547, %v1546
        %v1551 = vpack.i.b16 0, %v1393
        %v1552 = vshrl.u32 %v1393, 16
        %v1553 = vshrl.u32 0, 16
        %v1554 = vpack.i.b16 %v1553, %v1552
        %v1556 = vpack.i.b16 0, %v1395
        %v1557 = vshrl.u32 %v1395, 16
        %v1558 = vpack.i.b16 %v1553, %v1557
        %v1561 = vpack.i.b16 %v1433, %v1413
        %v1562 = vshrl.u32 %v1413, 16
        %v1563 = vshrl.u32 %v1433, 16
        %v1564 = vpack.i.b16 %v1563, %v1562
        %v1567 = vpack.i.b16 %v1435, %v1415
        %v1568 = vshrl.u32 %v1415, 16
        %v1569 = vshrl.u32 %v1435, 16
        %v1570 = vpack.i.b16 %v1569, %v1568
        %v1572 = vpack.i.b16 0, %v1440
        %v1573 = vshrl.u32 %v1440, 16
        %v1574 = vpack.i.b16 %v1553, %v1573
        %v1576 = vpack.i.b16 0, %v1442
        %v1577 = vshrl.u32 %v1442, 16
        %v1578 = vpack.i.b16 %v1553, %v1577
        %v1581 = vpack.i.b16 %v1480, %v1460
        %v1582 = vshrl.u32 %v1460, 16
        %v1583 = vshrl.u32 %v1480, 16
        %v1584 = vpack.i.b16 %v1583, %v1582
        %v1587 = vpack.i.b16 %v1482, %v1462
        %v1588 = vshrl.u32 %v1462, 16
        %v1589 = vshrl.u32 %v1482, 16
        %v1590 = vpack.i.b16 %v1589, %v1588
        %v1592 = vpack.i.b16 0, %v1487
        %v1593 = vshrl.u32 %v1487, 16
        %v1594 = vpack.i.b16 %v1553, %v1593
        %v1596 = vpack.i.b16 0, %v1489
        %v1597 = vshrl.u32 %v1489, 16
        %v1598 = vpack.i.b16 %v1553, %v1597
        %v1601 = vpack.i.b16 %v1527, %v1507
        %v1602 = vshrl.u32 %v1507, 16
        %v1603 = vshrl.u32 %v1527, 16
        %v1604 = vpack.i.b16 %v1603, %v1602
        %v1607 = vpack.i.b16 %v1529, %v1509
        %v1608 = vshrl.u32 %v1509, 16
        %v1609 = vshrl.u32 %v1529, 16
        %v1610 = vpack.i.b16 %v1609, %v1608
        %v1612 = vpack.i.b16 0, %v1534
        %v1613 = vshrl.u32 %v1534, 16
        %v1614 = vpack.i.b16 %v1553, %v1613
        %v1616 = vpack.i.b16 0, %v1536
        %v1617 = vshrl.u32 %v1536, 16
        %v1618 = vpack.i.b16 %v1553, %v1617
        %1619 = vrot.lane.b32.xlu0 %v945, 64
        %v1620 = vpop.permute.xlu0 %1619
        %1621 = vrot.lane.b32.xlu0 %v946, 64
        %v1622 = vpop.permute.xlu0 %1621
        %1623 = vrot.lane.b32.xlu0 %v947, 64
        %v1624 = vpop.permute.xlu0 %1623
        %1625 = vrot.lane.b32.xlu0 %v948, 64
        %v1626 = vpop.permute.xlu0 %1625
        %1627 = vrot.lane.b32.xlu0 %v949, 64
        %v1628 = vpop.permute.xlu0 %1627
        %1629 = vrot.lane.b32.xlu0 %v956, 64
        %v1630 = vpop.permute.xlu0 %1629
        %1631 = vrot.lane.b32.xlu0 %v958, 64
        %v1632 = vpop.permute.xlu0 %1631
        %1633 = vrot.lane.b32.xlu0 %v960, 64
        %v1634 = vpop.permute.xlu0 %1633
        %1635 = vrot.lane.b32.xlu0 %v962, 64
        %v1636 = vpop.permute.xlu0 %1635
        %1637 = vrot.lane.b32.xlu0 %v964, 64
        %v1638 = vpop.permute.xlu0 %1637
        %1639 = vrot.lane.b32.xlu0 %v966, 64
        %v1640 = vpop.permute.xlu0 %1639
        %1641 = vrot.lane.b32.xlu0 %v968, 64
        %v1642 = vpop.permute.xlu0 %1641
        %1643 = vrot.lane.b32.xlu0 %v970, 64
        %v1644 = vpop.permute.xlu0 %1643
        %1645 = vrot.lane.b32.xlu0 %v972, 64
        %v1646 = vpop.permute.xlu0 %1645
        %1647 = vrot.lane.b32.xlu0 %v974, 64
        %v1648 = vpop.permute.xlu0 %1647
        %1649 = vrot.lane.b32.xlu0 %v976, 64
        %v1650 = vpop.permute.xlu0 %1649
        %1651 = vrot.lane.b32.xlu0 %v978, 64
        %v1652 = vpop.permute.xlu0 %1651
        %1653 = vrot.lane.b32.xlu0 %v980, 64
        %v1654 = vpop.permute.xlu0 %1653
        %1655 = vrot.lane.b32.xlu0 %v982, 64
        %v1656 = vpop.permute.xlu0 %1655
        %1657 = vrot.lane.b32.xlu0 %v984, 64
        %v1658 = vpop.permute.xlu0 %1657
        %v1661 = vunpack.c.l.s4 1983009808
        %v1662 = vunpack.c.0.s8 %v1661
        %v1663 = vperm.slane %v1620, %v1662
        %v1666 = vunpack.c.l.s4 1983009808
        %v1667 = vunpack.c.0.s8 %v1666
        %v1668 = vperm.slane %v1640, %v1667
        %v1669 = vrot.slane %v1668, 4
        %v1670 = vsel %vm995, %v1669, %v1663
        %v1671 = vrot.slane %v1663, 4
        %v1672 = vsel %vm995, %v1668, %v1671
        %v1674 = vunpack.c.l.s4 1934713408
        %v1675 = vunpack.c.0.s8 %v1674
        %v1676 = vperm.slane %v1670, %v1675
        %v1678 = vunpack.c.l.s4 1934713408
        %v1679 = vunpack.c.0.s8 %v1678
        %v1680 = vperm.slane %v1672, %v1679
        %v1681 = vrot.slane %v1676, 4
        %v1682 = vsel %vm995, 0, %v1681
        %v1683 = vrot.slane %v1680, 4
        %v1684 = vsel %vm995, 0, %v1683
        %v1687 = vunpack.c.l.s4 1983009808
        %v1688 = vunpack.c.0.s8 %v1687
        %v1689 = vperm.slane %v1630, %v1688
        %v1692 = vunpack.c.l.s4 1983009808
        %v1693 = vunpack.c.0.s8 %v1692
        %v1694 = vperm.slane %v1650, %v1693
        %v1695 = vrot.slane %v1694, 4
        %v1696 = vsel %vm995, %v1695, %v1689
        %v1697 = vrot.slane %v1689, 4
        %v1698 = vsel %vm995, %v1694, %v1697
        %v1700 = vunpack.c.l.s4 1934713408
        %v1701 = vunpack.c.0.s8 %v1700
        %v1702 = vperm.slane %v1696, %v1701
        %v1704 = vunpack.c.l.s4 1934713408
        %v1705 = vunpack.c.0.s8 %v1704
        %v1706 = vperm.slane %v1698, %v1705
        %v1707 = vrot.slane %v1702, 4
        %v1708 = vsel %vm995, 0, %v1707
        %v1709 = vrot.slane %v1706, 4
        %v1710 = vsel %vm995, 0, %v1709
        %v1713 = vunpack.c.l.s4 1983009808
        %v1714 = vunpack.c.0.s8 %v1713
        %v1715 = vperm.slane %v1622, %v1714
        %v1718 = vunpack.c.l.s4 1983009808
        %v1719 = vunpack.c.0.s8 %v1718
        %v1720 = vperm.slane %v1642, %v1719
        %v1721 = vrot.slane %v1720, 4
        %v1722 = vsel %vm995, %v1721, %v1715
        %v1723 = vrot.slane %v1715, 4
        %v1724 = vsel %vm995, %v1720, %v1723
        %v1726 = vunpack.c.l.s4 1934713408
        %v1727 = vunpack.c.0.s8 %v1726
        %v1728 = vperm.slane %v1722, %v1727
        %v1730 = vunpack.c.l.s4 1934713408
        %v1731 = vunpack.c.0.s8 %v1730
        %v1732 = vperm.slane %v1724, %v1731
        %v1733 = vrot.slane %v1728, 4
        %v1734 = vsel %vm995, 0, %v1733
        %v1735 = vrot.slane %v1732, 4
        %v1736 = vsel %vm995, 0, %v1735
        %v1739 = vunpack.c.l.s4 1983009808
        %v1740 = vunpack.c.0.s8 %v1739
        %v1741 = vperm.slane %v1632, %v1740
        %v1744 = vunpack.c.l.s4 1983009808
        %v1745 = vunpack.c.0.s8 %v1744
        %v1746 = vperm.slane %v1652, %v1745
        %v1747 = vrot.slane %v1746, 4
        %v1748 = vsel %vm995, %v1747, %v1741
        %v1749 = vrot.slane %v1741, 4
        %v1750 = vsel %vm995, %v1746, %v1749
        %v1752 = vunpack.c.l.s4 1934713408
        %v1753 = vunpack.c.0.s8 %v1752
        %v1754 = vperm.slane %v1748, %v1753
        %v1756 = vunpack.c.l.s4 1934713408
        %v1757 = vunpack.c.0.s8 %v1756
        %v1758 = vperm.slane %v1750, %v1757
        %v1759 = vrot.slane %v1754, 4
        %v1760 = vsel %vm995, 0, %v1759
        %v1761 = vrot.slane %v1758, 4
        %v1762 = vsel %vm995, 0, %v1761
        %v1765 = vunpack.c.l.s4 1983009808
        %v1766 = vunpack.c.0.s8 %v1765
        %v1767 = vperm.slane %v1624, %v1766
        %v1770 = vunpack.c.l.s4 1983009808
        %v1771 = vunpack.c.0.s8 %v1770
        %v1772 = vperm.slane %v1644, %v1771
        %v1773 = vrot.slane %v1772, 4
        %v1774 = vsel %vm995, %v1773, %v1767
        %v1775 = vrot.slane %v1767, 4
        %v1776 = vsel %vm995, %v1772, %v1775
        %v1778 = vunpack.c.l.s4 1934713408
        %v1779 = vunpack.c.0.s8 %v1778
        %v1780 = vperm.slane %v1774, %v1779
        %v1782 = vunpack.c.l.s4 1934713408
        %v1783 = vunpack.c.0.s8 %v1782
        %v1784 = vperm.slane %v1776, %v1783
        %v1785 = vrot.slane %v1780, 4
        %v1786 = vsel %vm995, 0, %v1785
        %v1787 = vrot.slane %v1784, 4
        %v1788 = vsel %vm995, 0, %v1787
        %v1791 = vunpack.c.l.s4 1983009808
        %v1792 = vunpack.c.0.s8 %v1791
        %v1793 = vperm.slane %v1634, %v1792
        %v1796 = vunpack.c.l.s4 1983009808
        %v1797 = vunpack.c.0.s8 %v1796
        %v1798 = vperm.slane %v1654, %v1797
        %v1799 = vrot.slane %v1798, 4
        %v1800 = vsel %vm995, %v1799, %v1793
        %v1801 = vrot.slane %v1793, 4
        %v1802 = vsel %vm995, %v1798, %v1801
        %v1804 = vunpack.c.l.s4 1934713408
        %v1805 = vunpack.c.0.s8 %v1804
        %v1806 = vperm.slane %v1800, %v1805
        %v1808 = vunpack.c.l.s4 1934713408
        %v1809 = vunpack.c.0.s8 %v1808
        %v1810 = vperm.slane %v1802, %v1809
        %v1811 = vrot.slane %v1806, 4
        %v1812 = vsel %vm995, 0, %v1811
        %v1813 = vrot.slane %v1810, 4
        %v1814 = vsel %vm995, 0, %v1813
        %v1817 = vunpack.c.l.s4 1983009808
        %v1818 = vunpack.c.0.s8 %v1817
        %v1819 = vperm.slane %v1626, %v1818
        %v1822 = vunpack.c.l.s4 1983009808
        %v1823 = vunpack.c.0.s8 %v1822
        %v1824 = vperm.slane %v1646, %v1823
        %v1825 = vrot.slane %v1824, 4
        %v1826 = vsel %vm995, %v1825, %v1819
        %v1827 = vrot.slane %v1819, 4
        %v1828 = vsel %vm995, %v1824, %v1827
        %v1830 = vunpack.c.l.s4 1934713408
        %v1831 = vunpack.c.0.s8 %v1830
        %v1832 = vperm.slane %v1826, %v1831
        %v1834 = vunpack.c.l.s4 1934713408
        %v1835 = vunpack.c.0.s8 %v1834
        %v1836 = vperm.slane %v1828, %v1835
        %v1837 = vrot.slane %v1832, 4
        %v1838 = vsel %vm995, 0, %v1837
        %v1839 = vrot.slane %v1836, 4
        %v1840 = vsel %vm995, 0, %v1839
        %v1843 = vunpack.c.l.s4 1983009808
        %v1844 = vunpack.c.0.s8 %v1843
        %v1845 = vperm.slane %v1636, %v1844
        %v1848 = vunpack.c.l.s4 1983009808
        %v1849 = vunpack.c.0.s8 %v1848
        %v1850 = vperm.slane %v1656, %v1849
        %v1851 = vrot.slane %v1850, 4
        %v1852 = vsel %vm995, %v1851, %v1845
        %v1853 = vrot.slane %v1845, 4
        %v1854 = vsel %vm995, %v1850, %v1853
        %v1856 = vunpack.c.l.s4 1934713408
        %v1857 = vunpack.c.0.s8 %v1856
        %v1858 = vperm.slane %v1852, %v1857
        %v1860 = vunpack.c.l.s4 1934713408
        %v1861 = vunpack.c.0.s8 %v1860
        %v1862 = vperm.slane %v1854, %v1861
        %v1863 = vrot.slane %v1858, 4
        %v1864 = vsel %vm995, 0, %v1863
        %v1865 = vrot.slane %v1862, 4
        %v1866 = vsel %vm995, 0, %v1865
        %v1869 = vrot.slane %v1648, 4
        %v1870 = vsel %vm995, %v1869, %v1628
        %v1872 = vunpack.c.l.s4 1934713408
        %v1873 = vunpack.c.0.s8 %v1872
        %v1874 = vperm.slane %v1870, %v1873
        %v1875 = vrot.slane %v1874, 4
        %v1876 = vsel %vm995, 0, %v1875
        %v1879 = vrot.slane %v1658, 4
        %v1880 = vsel %vm995, %v1879, %v1638
        %v1882 = vunpack.c.l.s4 1934713408
        %v1883 = vunpack.c.0.s8 %v1882
        %v1884 = vperm.slane %v1880, %v1883
        %v1885 = vrot.slane %v1884, 4
        %v1886 = vsel %vm995, 0, %v1885
        %v1889 = vpack.i.b16 %v1702, %v1676
        %v1891 = vshrl.u32 %v1676, 16
        %v1892 = vshrl.u32 %v1702, 16
        %v1893 = vpack.i.b16 %v1892, %v1891
        %v1897 = vpack.i.b16 %v1708, %v1682
        %v1899 = vshrl.u32 %v1682, 16
        %v1900 = vshrl.u32 %v1708, 16
        %v1901 = vpack.i.b16 %v1900, %v1899
        %v1905 = vpack.i.b16 %v1706, %v1680
        %v1907 = vshrl.u32 %v1680, 16
        %v1908 = vshrl.u32 %v1706, 16
        %v1909 = vpack.i.b16 %v1908, %v1907
        %v1913 = vpack.i.b16 %v1710, %v1684
        %v1915 = vshrl.u32 %v1684, 16
        %v1916 = vshrl.u32 %v1710, 16
        %v1917 = vpack.i.b16 %v1916, %v1915
        %v1921 = vpack.i.b16 %v1754, %v1728
        %v1922 = vshrl.u32 %v1728, 16
        %v1923 = vshrl.u32 %v1754, 16
        %v1924 = vpack.i.b16 %v1923, %v1922
        %v1928 = vpack.i.b16 %v1760, %v1734
        %v1930 = vshrl.u32 %v1734, 16
        %v1931 = vshrl.u32 %v1760, 16
        %v1932 = vpack.i.b16 %v1931, %v1930
        %v1936 = vpack.i.b16 %v1758, %v1732
        %v1938 = vshrl.u32 %v1732, 16
        %v1939 = vshrl.u32 %v1758, 16
        %v1940 = vpack.i.b16 %v1939, %v1938
        %v1944 = vpack.i.b16 %v1762, %v1736
        %v1946 = vshrl.u32 %v1736, 16
        %v1947 = vshrl.u32 %v1762, 16
        %v1948 = vpack.i.b16 %v1947, %v1946
        %v1952 = vpack.i.b16 %v1806, %v1780
        %v1954 = vshrl.u32 %v1780, 16
        %v1955 = vshrl.u32 %v1806, 16
        %v1956 = vpack.i.b16 %v1955, %v1954
        %v1959 = vpack.i.b16 %v1812, %v1786
        %v1961 = vshrl.u32 %v1786, 16
        %v1962 = vshrl.u32 %v1812, 16
        %v1963 = vpack.i.b16 %v1962, %v1961
        %v1967 = vpack.i.b16 %v1810, %v1784
        %v1969 = vshrl.u32 %v1784, 16
        %v1970 = vshrl.u32 %v1810, 16
        %v1971 = vpack.i.b16 %v1970, %v1969
        %v1975 = vpack.i.b16 %v1814, %v1788
        %v1977 = vshrl.u32 %v1788, 16
        %v1978 = vshrl.u32 %v1814, 16
        %v1979 = vpack.i.b16 %v1978, %v1977
        %v1983 = vpack.i.b16 %v1858, %v1832
        %v1985 = vshrl.u32 %v1832, 16
        %v1986 = vshrl.u32 %v1858, 16
        %v1987 = vpack.i.b16 %v1986, %v1985
        %v1991 = vpack.i.b16 %v1864, %v1838
        %v1992 = vshrl.u32 %v1838, 16
        %v1993 = vshrl.u32 %v1864, 16
        %v1994 = vpack.i.b16 %v1993, %v1992
        %v1998 = vpack.i.b16 %v1862, %v1836
        %v2000 = vshrl.u32 %v1836, 16
        %v2001 = vshrl.u32 %v1862, 16
        %v2002 = vpack.i.b16 %v2001, %v2000
        %v2006 = vpack.i.b16 %v1866, %v1840
        %v2008 = vshrl.u32 %v1840, 16
        %v2009 = vshrl.u32 %v1866, 16
        %v2010 = vpack.i.b16 %v2009, %v2008
        %v2014 = vpack.i.b16 %v1884, %v1874
        %v2016 = vshrl.u32 %v1874, 16
        %v2017 = vshrl.u32 %v1884, 16
        %v2018 = vpack.i.b16 %v2017, %v2016
        %v2022 = vpack.i.b16 %v1886, %v1876
        %v2024 = vshrl.u32 %v1876, 16
        %v2025 = vshrl.u32 %v1886, 16
        %v2026 = vpack.i.b16 %v2025, %v2024
        %v2027 = vrot.slane %v1905, 4
        %v2028 = vsel %vm995, %v2027, %v1889
        %v2030 = vunpack.c.l.s4 1983009808
        %v2031 = vunpack.c.0.s8 %v2030
        %v2032 = vperm.slane %v2028, %v2031
        %v2033 = vrot.slane %v1913, 4
        %v2034 = vsel %vm995, %v2033, %v1897
        %v2036 = vunpack.c.l.s4 1983009808
        %v2037 = vunpack.c.0.s8 %v2036
        %v2038 = vperm.slane %v2034, %v2037
        %v2039 = vrot.slane %v2038, 4
        %v2040 = vsel %vm995, %v2039, %v2032
        %v2042 = vunpack.c.l.s4 1934713408
        %v2043 = vunpack.c.0.s8 %v2042
        %v2044 = vperm.slane %v2040, %v2043
        %v2045 = vrot.slane %v2044, 4
        %v2046 = vsel %vm995, 0, %v2045
        %v2047 = vrot.slane %v1909, 4
        %v2048 = vsel %vm995, %v2047, %v1893
        %v2050 = vunpack.c.l.s4 1983009808
        %v2051 = vunpack.c.0.s8 %v2050
        %v2052 = vperm.slane %v2048, %v2051
        %v2053 = vrot.slane %v1917, 4
        %v2054 = vsel %vm995, %v2053, %v1901
        %v2056 = vunpack.c.l.s4 1983009808
        %v2057 = vunpack.c.0.s8 %v2056
        %v2058 = vperm.slane %v2054, %v2057
        %v2059 = vrot.slane %v2058, 4
        %v2060 = vsel %vm995, %v2059, %v2052
        %v2062 = vunpack.c.l.s4 1934713408
        %v2063 = vunpack.c.0.s8 %v2062
        %v2064 = vperm.slane %v2060, %v2063
        %v2065 = vrot.slane %v2064, 4
        %v2066 = vsel %vm995, 0, %v2065
        %v2069 = vunpack.c.l.s4 1934713408
        %v2070 = vunpack.c.0.s8 %v2069
        %v2071 = vperm.slane %v1921, %v2070
        %v2072 = vrot.slane %v2071, 4
        %v2073 = vsel %vm995, 0, %v2072
        %v2074 = vrot.slane %v1940, 4
        %v2075 = vsel %vm995, %v2074, %v1924
        %v2077 = vunpack.c.l.s4 1983009808
        %v2078 = vunpack.c.0.s8 %v2077
        %v2079 = vperm.slane %v2075, %v2078
        %v2080 = vrot.slane %v1948, 4
        %v2081 = vsel %vm995, %v2080, %v1932
        %v2083 = vunpack.c.l.s4 1983009808
        %v2084 = vunpack.c.0.s8 %v2083
        %v2085 = vperm.slane %v2081, %v2084
        %v2086 = vrot.slane %v2085, 4
        %v2087 = vsel %vm995, %v2086, %v2079
        %v2089 = vunpack.c.l.s4 1934713408
        %v2090 = vunpack.c.0.s8 %v2089
        %v2091 = vperm.slane %v2087, %v2090
        %v2092 = vrot.slane %v2091, 4
        %v2093 = vsel %vm995, 0, %v2092
        %v2094 = vrot.slane %v1944, 4
        %v2095 = vsel %vm995, %v2094, %v1928
        %v2097 = vunpack.c.l.s4 1983009808
        %v2098 = vunpack.c.0.s8 %v2097
        %v2099 = vperm.slane %v2095, %v2098
        %v2100 = vrot.slane %v1952, 4
        %v2101 = vsel %vm995, %v2100, %v1936
        %v2103 = vunpack.c.l.s4 1983009808
        %v2104 = vunpack.c.0.s8 %v2103
        %v2105 = vperm.slane %v2101, %v2104
        %v2106 = vrot.slane %v2105, 4
        %v2107 = vsel %vm995, %v2106, %v2099
        %v2109 = vunpack.c.l.s4 1934713408
        %v2110 = vunpack.c.0.s8 %v2109
        %v2111 = vperm.slane %v2107, %v2110
        %v2112 = vrot.slane %v2111, 4
        %v2113 = vsel %vm995, 0, %v2112
        %v2116 = vunpack.c.l.s4 1934713408
        %v2117 = vunpack.c.0.s8 %v2116
        %v2118 = vperm.slane %v1956, %v2117
        %v2119 = vrot.slane %v2118, 4
        %v2120 = vsel %vm995, 0, %v2119
        %v2121 = vrot.slane %v1975, 4
        %v2122 = vsel %vm995, %v2121, %v1959
        %v2124 = vunpack.c.l.s4 1983009808
        %v2125 = vunpack.c.0.s8 %v2124
        %v2126 = vperm.slane %v2122, %v2125
        %v2127 = vrot.slane %v1983, 4
        %v2128 = vsel %vm995, %v2127, %v1967
        %v2130 = vunpack.c.l.s4 1983009808
        %v2131 = vunpack.c.0.s8 %v2130
        %v2132 = vperm.slane %v2128, %v2131
        %v2133 = vrot.slane %v2132, 4
        %v2134 = vsel %vm995, %v2133, %v2126
        %v2136 = vunpack.c.l.s4 1934713408
        %v2137 = vunpack.c.0.s8 %v2136
        %v2138 = vperm.slane %v2134, %v2137
        %v2139 = vrot.slane %v2138, 4
        %v2140 = vsel %vm995, 0, %v2139
        %v2141 = vrot.slane %v1979, 4
        %v2142 = vsel %vm995, %v2141, %v1963
        %v2144 = vunpack.c.l.s4 1983009808
        %v2145 = vunpack.c.0.s8 %v2144
        %v2146 = vperm.slane %v2142, %v2145
        %v2147 = vrot.slane %v1987, 4
        %v2148 = vsel %vm995, %v2147, %v1971
        %v2150 = vunpack.c.l.s4 1983009808
        %v2151 = vunpack.c.0.s8 %v2150
        %v2152 = vperm.slane %v2148, %v2151
        %v2153 = vrot.slane %v2152, 4
        %v2154 = vsel %vm995, %v2153, %v2146
        %v2156 = vunpack.c.l.s4 1934713408
        %v2157 = vunpack.c.0.s8 %v2156
        %v2158 = vperm.slane %v2154, %v2157
        %v2159 = vrot.slane %v2158, 4
        %v2160 = vsel %vm995, 0, %v2159
        %v2163 = vunpack.c.l.s4 1934713408
        %v2164 = vunpack.c.0.s8 %v2163
        %v2165 = vperm.slane %v1991, %v2164
        %v2166 = vrot.slane %v2165, 4
        %v2167 = vsel %vm995, 0, %v2166
        %v2168 = vrot.slane %v2010, 4
        %v2169 = vsel %vm995, %v2168, %v1994
        %v2171 = vunpack.c.l.s4 1983009808
        %v2172 = vunpack.c.0.s8 %v2171
        %v2173 = vperm.slane %v2169, %v2172
        %v2174 = vrot.slane %v2018, 4
        %v2175 = vsel %vm995, %v2174, %v2002
        %v2177 = vunpack.c.l.s4 1983009808
        %v2178 = vunpack.c.0.s8 %v2177
        %v2179 = vperm.slane %v2175, %v2178
        %v2180 = vrot.slane %v2179, 4
        %v2181 = vsel %vm995, %v2180, %v2173
        %v2183 = vunpack.c.l.s4 1934713408
        %v2184 = vunpack.c.0.s8 %v2183
        %v2185 = vperm.slane %v2181, %v2184
        %v2186 = vrot.slane %v2185, 4
        %v2187 = vsel %vm995, 0, %v2186
        %v2188 = vrot.slane %v2014, 4
        %v2189 = vsel %vm995, %v2188, %v1998
        %v2191 = vunpack.c.l.s4 1983009808
        %v2192 = vunpack.c.0.s8 %v2191
        %v2193 = vperm.slane %v2189, %v2192
        %v2194 = vrot.slane %v2022, 4
        %v2195 = vsel %vm995, %v2194, %v2006
        %v2197 = vunpack.c.l.s4 1983009808
        %v2198 = vunpack.c.0.s8 %v2197
        %v2199 = vperm.slane %v2195, %v2198
        %v2200 = vrot.slane %v2199, 4
        %v2201 = vsel %vm995, %v2200, %v2193
        %v2203 = vunpack.c.l.s4 1934713408
        %v2204 = vunpack.c.0.s8 %v2203
        %v2205 = vperm.slane %v2201, %v2204
        %v2206 = vrot.slane %v2205, 4
        %v2207 = vsel %vm995, 0, %v2206
        %v2210 = vunpack.c.l.s4 1934713408
        %v2211 = vunpack.c.0.s8 %v2210
        %v2212 = vperm.slane %v2026, %v2211
        %v2213 = vrot.slane %v2212, 4
        %v2214 = vsel %vm995, 0, %v2213
        %v2217 = vpack.i.b16 %v2064, %v2044
        %v2218 = vshrl.u32 %v2044, 16
        %v2219 = vshrl.u32 %v2064, 16
        %v2220 = vpack.i.b16 %v2219, %v2218
        %v2223 = vpack.i.b16 %v2066, %v2046
        %v2224 = vshrl.u32 %v2046, 16
        %v2225 = vshrl.u32 %v2066, 16
        %v2226 = vpack.i.b16 %v2225, %v2224
        %v2228 = vpack.i.b16 0, %v2071
        %v2229 = vshrl.u32 %v2071, 16
        %v2230 = vpack.i.b16 %v1553, %v2229
        %v2232 = vpack.i.b16 0, %v2073
        %v2233 = vshrl.u32 %v2073, 16
        %v2234 = vpack.i.b16 %v1553, %v2233
        %v2237 = vpack.i.b16 %v2111, %v2091
        %v2238 = vshrl.u32 %v2091, 16
        %v2239 = vshrl.u32 %v2111, 16
        %v2240 = vpack.i.b16 %v2239, %v2238
        %v2243 = vpack.i.b16 %v2113, %v2093
        %v2244 = vshrl.u32 %v2093, 16
        %v2245 = vshrl.u32 %v2113, 16
        %v2246 = vpack.i.b16 %v2245, %v2244
        %v2248 = vpack.i.b16 0, %v2118
        %v2249 = vshrl.u32 %v2118, 16
        %v2250 = vpack.i.b16 %v1553, %v2249
        %v2252 = vpack.i.b16 0, %v2120
        %v2253 = vshrl.u32 %v2120, 16
        %v2254 = vpack.i.b16 %v1553, %v2253
        %v2257 = vpack.i.b16 %v2158, %v2138
        %v2258 = vshrl.u32 %v2138, 16
        %v2259 = vshrl.u32 %v2158, 16
        %v2260 = vpack.i.b16 %v2259, %v2258
        %v2263 = vpack.i.b16 %v2160, %v2140
        %v2264 = vshrl.u32 %v2140, 16
        %v2265 = vshrl.u32 %v2160, 16
        %v2266 = vpack.i.b16 %v2265, %v2264
        %v2268 = vpack.i.b16 0, %v2165
        %v2269 = vshrl.u32 %v2165, 16
        %v2270 = vpack.i.b16 %v1553, %v2269
        %v2272 = vpack.i.b16 0, %v2167
        %v2273 = vshrl.u32 %v2167, 16
        %v2274 = vpack.i.b16 %v1553, %v2273
        %v2277 = vpack.i.b16 %v2205, %v2185
        %v2278 = vshrl.u32 %v2185, 16
        %v2279 = vshrl.u32 %v2205, 16
        %v2280 = vpack.i.b16 %v2279, %v2278
        %v2283 = vpack.i.b16 %v2207, %v2187
        %v2284 = vshrl.u32 %v2187, 16
        %v2285 = vshrl.u32 %v2207, 16
        %v2286 = vpack.i.b16 %v2285, %v2284
        %v2288 = vpack.i.b16 0, %v2212
        %v2289 = vshrl.u32 %v2212, 16
        %v2290 = vpack.i.b16 %v1553, %v2289
        %v2292 = vpack.i.b16 0, %v2214
        %v2293 = vshrl.u32 %v2214, 16
        %v2294 = vpack.i.b16 %v1553, %v2293
        %v2295 = vrot.slane %v945, 4
        %v2296 = vrot.slane %v946, 4
        %v2297 = vrot.slane %v947, 4
        %v2298 = vrot.slane %v948, 4
        %v2299 = vrot.slane %v949, 4
        %v2300 = vrot.slane %v956, 4
        %v2301 = vrot.slane %v958, 4
        %v2302 = vrot.slane %v960, 4
        %v2303 = vrot.slane %v962, 4
        %v2304 = vrot.slane %v964, 4
        %v2305 = vrot.slane %v966, 4
        %v2306 = vrot.slane %v968, 4
        %v2307 = vrot.slane %v970, 4
        %v2308 = vrot.slane %v972, 4
        %v2309 = vrot.slane %v974, 4
        %v2310 = vrot.slane %v976, 4
        %v2311 = vrot.slane %v978, 4
        %v2312 = vrot.slane %v980, 4
        %v2313 = vrot.slane %v982, 4
        %v2314 = vrot.slane %v984, 4
        %v2317 = vunpack.c.l.s4 1983009808
        %v2318 = vunpack.c.0.s8 %v2317
        %v2319 = vperm.slane %v2295, %v2318
        %v2322 = vunpack.c.l.s4 1983009808
        %v2323 = vunpack.c.0.s8 %v2322
        %v2324 = vperm.slane %v2305, %v2323
        %v2325 = vrot.slane %v2324, 4
        %v2326 = vsel %vm995, %v2325, %v2319
        %v2327 = vrot.slane %v2319, 4
        %v2328 = vsel %vm995, %v2324, %v2327
        %v2330 = vunpack.c.l.s4 1934713408
        %v2331 = vunpack.c.0.s8 %v2330
        %v2332 = vperm.slane %v2326, %v2331
        %v2334 = vunpack.c.l.s4 1934713408
        %v2335 = vunpack.c.0.s8 %v2334
        %v2336 = vperm.slane %v2328, %v2335
        %v2337 = vrot.slane %v2332, 4
        %v2338 = vsel %vm995, 0, %v2337
        %v2339 = vrot.slane %v2336, 4
        %v2340 = vsel %vm995, 0, %v2339
        %v2343 = vunpack.c.l.s4 1983009808
        %v2344 = vunpack.c.0.s8 %v2343
        %v2345 = vperm.slane %v2300, %v2344
        %v2348 = vunpack.c.l.s4 1983009808
        %v2349 = vunpack.c.0.s8 %v2348
        %v2350 = vperm.slane %v2310, %v2349
        %v2351 = vrot.slane %v2350, 4
        %v2352 = vsel %vm995, %v2351, %v2345
        %v2353 = vrot.slane %v2345, 4
        %v2354 = vsel %vm995, %v2350, %v2353
        %v2356 = vunpack.c.l.s4 1934713408
        %v2357 = vunpack.c.0.s8 %v2356
        %v2358 = vperm.slane %v2352, %v2357
        %v2360 = vunpack.c.l.s4 1934713408
        %v2361 = vunpack.c.0.s8 %v2360
        %v2362 = vperm.slane %v2354, %v2361
        %v2363 = vrot.slane %v2358, 4
        %v2364 = vsel %vm995, 0, %v2363
        %v2365 = vrot.slane %v2362, 4
        %v2366 = vsel %vm995, 0, %v2365
        %v2369 = vunpack.c.l.s4 1983009808
        %v2370 = vunpack.c.0.s8 %v2369
        %v2371 = vperm.slane %v2296, %v2370
        %v2374 = vunpack.c.l.s4 1983009808
        %v2375 = vunpack.c.0.s8 %v2374
        %v2376 = vperm.slane %v2306, %v2375
        %v2377 = vrot.slane %v2376, 4
        %v2378 = vsel %vm995, %v2377, %v2371
        %v2379 = vrot.slane %v2371, 4
        %v2380 = vsel %vm995, %v2376, %v2379
        %v2382 = vunpack.c.l.s4 1934713408
        %v2383 = vunpack.c.0.s8 %v2382
        %v2384 = vperm.slane %v2378, %v2383
        %v2386 = vunpack.c.l.s4 1934713408
        %v2387 = vunpack.c.0.s8 %v2386
        %v2388 = vperm.slane %v2380, %v2387
        %v2389 = vrot.slane %v2384, 4
        %v2390 = vsel %vm995, 0, %v2389
        %v2391 = vrot.slane %v2388, 4
        %v2392 = vsel %vm995, 0, %v2391
        %v2395 = vunpack.c.l.s4 1983009808
        %v2396 = vunpack.c.0.s8 %v2395
        %v2397 = vperm.slane %v2301, %v2396
        %v2400 = vunpack.c.l.s4 1983009808
        %v2401 = vunpack.c.0.s8 %v2400
        %v2402 = vperm.slane %v2311, %v2401
        %v2403 = vrot.slane %v2402, 4
        %v2404 = vsel %vm995, %v2403, %v2397
        %v2405 = vrot.slane %v2397, 4
        %v2406 = vsel %vm995, %v2402, %v2405
        %v2408 = vunpack.c.l.s4 1934713408
        %v2409 = vunpack.c.0.s8 %v2408
        %v2410 = vperm.slane %v2404, %v2409
        %v2412 = vunpack.c.l.s4 1934713408
        %v2413 = vunpack.c.0.s8 %v2412
        %v2414 = vperm.slane %v2406, %v2413
        %v2415 = vrot.slane %v2410, 4
        %v2416 = vsel %vm995, 0, %v2415
        %v2417 = vrot.slane %v2414, 4
        %v2418 = vsel %vm995, 0, %v2417
        %v2421 = vunpack.c.l.s4 1983009808
        %v2422 = vunpack.c.0.s8 %v2421
        %v2423 = vperm.slane %v2297, %v2422
        %v2426 = vunpack.c.l.s4 1983009808
        %v2427 = vunpack.c.0.s8 %v2426
        %v2428 = vperm.slane %v2307, %v2427
        %v2429 = vrot.slane %v2428, 4
        %v2430 = vsel %vm995, %v2429, %v2423
        %v2431 = vrot.slane %v2423, 4
        %v2432 = vsel %vm995, %v2428, %v2431
        %v2434 = vunpack.c.l.s4 1934713408
        %v2435 = vunpack.c.0.s8 %v2434
        %v2436 = vperm.slane %v2430, %v2435
        %v2438 = vunpack.c.l.s4 1934713408
        %v2439 = vunpack.c.0.s8 %v2438
        %v2440 = vperm.slane %v2432, %v2439
        %v2441 = vrot.slane %v2436, 4
        %v2442 = vsel %vm995, 0, %v2441
        %v2443 = vrot.slane %v2440, 4
        %v2444 = vsel %vm995, 0, %v2443
        %v2447 = vunpack.c.l.s4 1983009808
        %v2448 = vunpack.c.0.s8 %v2447
        %v2449 = vperm.slane %v2302, %v2448
        %v2452 = vunpack.c.l.s4 1983009808
        %v2453 = vunpack.c.0.s8 %v2452
        %v2454 = vperm.slane %v2312, %v2453
        %v2455 = vrot.slane %v2454, 4
        %v2456 = vsel %vm995, %v2455, %v2449
        %v2457 = vrot.slane %v2449, 4
        %v2458 = vsel %vm995, %v2454, %v2457
        %v2460 = vunpack.c.l.s4 1934713408
        %v2461 = vunpack.c.0.s8 %v2460
        %v2462 = vperm.slane %v2456, %v2461
        %v2464 = vunpack.c.l.s4 1934713408
        %v2465 = vunpack.c.0.s8 %v2464
        %v2466 = vperm.slane %v2458, %v2465
        %v2467 = vrot.slane %v2462, 4
        %v2468 = vsel %vm995, 0, %v2467
        %v2469 = vrot.slane %v2466, 4
        %v2470 = vsel %vm995, 0, %v2469
        %v2473 = vunpack.c.l.s4 1983009808
        %v2474 = vunpack.c.0.s8 %v2473
        %v2475 = vperm.slane %v2298, %v2474
        %v2478 = vunpack.c.l.s4 1983009808
        %v2479 = vunpack.c.0.s8 %v2478
        %v2480 = vperm.slane %v2308, %v2479
        %v2481 = vrot.slane %v2480, 4
        %v2482 = vsel %vm995, %v2481, %v2475
        %v2483 = vrot.slane %v2475, 4
        %v2484 = vsel %vm995, %v2480, %v2483
        %v2486 = vunpack.c.l.s4 1934713408
        %v2487 = vunpack.c.0.s8 %v2486
        %v2488 = vperm.slane %v2482, %v2487
        %v2490 = vunpack.c.l.s4 1934713408
        %v2491 = vunpack.c.0.s8 %v2490
        %v2492 = vperm.slane %v2484, %v2491
        %v2493 = vrot.slane %v2488, 4
        %v2494 = vsel %vm995, 0, %v2493
        %v2495 = vrot.slane %v2492, 4
        %v2496 = vsel %vm995, 0, %v2495
        %v2499 = vunpack.c.l.s4 1983009808
        %v2500 = vunpack.c.0.s8 %v2499
        %v2501 = vperm.slane %v2303, %v2500
        %v2504 = vunpack.c.l.s4 1983009808
        %v2505 = vunpack.c.0.s8 %v2504
        %v2506 = vperm.slane %v2313, %v2505
        %v2507 = vrot.slane %v2506, 4
        %v2508 = vsel %vm995, %v2507, %v2501
        %v2509 = vrot.slane %v2501, 4
        %v2510 = vsel %vm995, %v2506, %v2509
        %v2512 = vunpack.c.l.s4 1934713408
        %v2513 = vunpack.c.0.s8 %v2512
        %v2514 = vperm.slane %v2508, %v2513
        %v2516 = vunpack.c.l.s4 1934713408
        %v2517 = vunpack.c.0.s8 %v2516
        %v2518 = vperm.slane %v2510, %v2517
        %v2519 = vrot.slane %v2514, 4
        %v2520 = vsel %vm995, 0, %v2519
        %v2521 = vrot.slane %v2518, 4
        %v2522 = vsel %vm995, 0, %v2521
        %v2525 = vrot.slane %v2309, 4
        %v2526 = vsel %vm995, %v2525, %v2299
        %v2528 = vunpack.c.l.s4 1934713408
        %v2529 = vunpack.c.0.s8 %v2528
        %v2530 = vperm.slane %v2526, %v2529
        %v2531 = vrot.slane %v2530, 4
        %v2532 = vsel %vm995, 0, %v2531
        %v2535 = vrot.slane %v2314, 4
        %v2536 = vsel %vm995, %v2535, %v2304
        %v2538 = vunpack.c.l.s4 1934713408
        %v2539 = vunpack.c.0.s8 %v2538
        %v2540 = vperm.slane %v2536, %v2539
        %v2541 = vrot.slane %v2540, 4
        %v2542 = vsel %vm995, 0, %v2541
        %v2545 = vpack.i.b16 %v2358, %v2332
        %v2547 = vshrl.u32 %v2332, 16
        %v2548 = vshrl.u32 %v2358, 16
        %v2549 = vpack.i.b16 %v2548, %v2547
        %v2553 = vpack.i.b16 %v2364, %v2338
        %v2555 = vshrl.u32 %v2338, 16
        %v2556 = vshrl.u32 %v2364, 16
        %v2557 = vpack.i.b16 %v2556, %v2555
        %v2561 = vpack.i.b16 %v2362, %v2336
        %v2563 = vshrl.u32 %v2336, 16
        %v2564 = vshrl.u32 %v2362, 16
        %v2565 = vpack.i.b16 %v2564, %v2563
        %v2569 = vpack.i.b16 %v2366, %v2340
        %v2571 = vshrl.u32 %v2340, 16
        %v2572 = vshrl.u32 %v2366, 16
        %v2573 = vpack.i.b16 %v2572, %v2571
        %v2577 = vpack.i.b16 %v2410, %v2384
        %v2578 = vshrl.u32 %v2384, 16
        %v2579 = vshrl.u32 %v2410, 16
        %v2580 = vpack.i.b16 %v2579, %v2578
        %v2584 = vpack.i.b16 %v2416, %v2390
        %v2586 = vshrl.u32 %v2390, 16
        %v2587 = vshrl.u32 %v2416, 16
        %v2588 = vpack.i.b16 %v2587, %v2586
        %v2592 = vpack.i.b16 %v2414, %v2388
        %v2594 = vshrl.u32 %v2388, 16
        %v2595 = vshrl.u32 %v2414, 16
        %v2596 = vpack.i.b16 %v2595, %v2594
        %v2600 = vpack.i.b16 %v2418, %v2392
        %v2602 = vshrl.u32 %v2392, 16
        %v2603 = vshrl.u32 %v2418, 16
        %v2604 = vpack.i.b16 %v2603, %v2602
        %v2608 = vpack.i.b16 %v2462, %v2436
        %v2610 = vshrl.u32 %v2436, 16
        %v2611 = vshrl.u32 %v2462, 16
        %v2612 = vpack.i.b16 %v2611, %v2610
        %v2615 = vpack.i.b16 %v2468, %v2442
        %v2617 = vshrl.u32 %v2442, 16
        %v2618 = vshrl.u32 %v2468, 16
        %v2619 = vpack.i.b16 %v2618, %v2617
        %v2623 = vpack.i.b16 %v2466, %v2440
        %v2625 = vshrl.u32 %v2440, 16
        %v2626 = vshrl.u32 %v2466, 16
        %v2627 = vpack.i.b16 %v2626, %v2625
        %v2631 = vpack.i.b16 %v2470, %v2444
        %v2633 = vshrl.u32 %v2444, 16
        %v2634 = vshrl.u32 %v2470, 16
        %v2635 = vpack.i.b16 %v2634, %v2633
        %v2639 = vpack.i.b16 %v2514, %v2488
        %v2641 = vshrl.u32 %v2488, 16
        %v2642 = vshrl.u32 %v2514, 16
        %v2643 = vpack.i.b16 %v2642, %v2641
        %v2647 = vpack.i.b16 %v2520, %v2494
        %v2648 = vshrl.u32 %v2494, 16
        %v2649 = vshrl.u32 %v2520, 16
        %v2650 = vpack.i.b16 %v2649, %v2648
        %v2654 = vpack.i.b16 %v2518, %v2492
        %v2656 = vshrl.u32 %v2492, 16
        %v2657 = vshrl.u32 %v2518, 16
        %v2658 = vpack.i.b16 %v2657, %v2656
        %v2662 = vpack.i.b16 %v2522, %v2496
        %v2664 = vshrl.u32 %v2496, 16
        %v2665 = vshrl.u32 %v2522, 16
        %v2666 = vpack.i.b16 %v2665, %v2664
        %v2670 = vpack.i.b16 %v2540, %v2530
        %v2672 = vshrl.u32 %v2530, 16
        %v2673 = vshrl.u32 %v2540, 16
        %v2674 = vpack.i.b16 %v2673, %v2672
        %v2678 = vpack.i.b16 %v2542, %v2532
        %v2680 = vshrl.u32 %v2532, 16
        %v2681 = vshrl.u32 %v2542, 16
        %v2682 = vpack.i.b16 %v2681, %v2680
        %v2683 = vrot.slane %v2561, 4
        %v2684 = vsel %vm995, %v2683, %v2545
        %v2686 = vunpack.c.l.s4 1983009808
        %v2687 = vunpack.c.0.s8 %v2686
        %v2688 = vperm.slane %v2684, %v2687
        %v2689 = vrot.slane %v2569, 4
        %v2690 = vsel %vm995, %v2689, %v2553
        %v2692 = vunpack.c.l.s4 1983009808
        %v2693 = vunpack.c.0.s8 %v2692
        %v2694 = vperm.slane %v2690, %v2693
        %v2695 = vrot.slane %v2694, 4
        %v2696 = vsel %vm995, %v2695, %v2688
        %v2698 = vunpack.c.l.s4 1934713408
        %v2699 = vunpack.c.0.s8 %v2698
        %v2700 = vperm.slane %v2696, %v2699
        %v2701 = vrot.slane %v2700, 4
        %v2702 = vsel %vm995, 0, %v2701
        %v2703 = vrot.slane %v2565, 4
        %v2704 = vsel %vm995, %v2703, %v2549
        %v2706 = vunpack.c.l.s4 1983009808
        %v2707 = vunpack.c.0.s8 %v2706
        %v2708 = vperm.slane %v2704, %v2707
        %v2709 = vrot.slane %v2573, 4
        %v2710 = vsel %vm995, %v2709, %v2557
        %v2712 = vunpack.c.l.s4 1983009808
        %v2713 = vunpack.c.0.s8 %v2712
        %v2714 = vperm.slane %v2710, %v2713
        %v2715 = vrot.slane %v2714, 4
        %v2716 = vsel %vm995, %v2715, %v2708
        %v2718 = vunpack.c.l.s4 1934713408
        %v2719 = vunpack.c.0.s8 %v2718
        %v2720 = vperm.slane %v2716, %v2719
        %v2721 = vrot.slane %v2720, 4
        %v2722 = vsel %vm995, 0, %v2721
        %v2725 = vunpack.c.l.s4 1934713408
        %v2726 = vunpack.c.0.s8 %v2725
        %v2727 = vperm.slane %v2577, %v2726
        %v2728 = vrot.slane %v2727, 4
        %v2729 = vsel %vm995, 0, %v2728
        %v2730 = vrot.slane %v2596, 4
        %v2731 = vsel %vm995, %v2730, %v2580
        %v2733 = vunpack.c.l.s4 1983009808
        %v2734 = vunpack.c.0.s8 %v2733
        %v2735 = vperm.slane %v2731, %v2734
        %v2736 = vrot.slane %v2604, 4
        %v2737 = vsel %vm995, %v2736, %v2588
        %v2739 = vunpack.c.l.s4 1983009808
        %v2740 = vunpack.c.0.s8 %v2739
        %v2741 = vperm.slane %v2737, %v2740
        %v2742 = vrot.slane %v2741, 4
        %v2743 = vsel %vm995, %v2742, %v2735
        %v2745 = vunpack.c.l.s4 1934713408
        %v2746 = vunpack.c.0.s8 %v2745
        %v2747 = vperm.slane %v2743, %v2746
        %v2748 = vrot.slane %v2747, 4
        %v2749 = vsel %vm995, 0, %v2748
        %v2750 = vrot.slane %v2600, 4
        %v2751 = vsel %vm995, %v2750, %v2584
        %v2753 = vunpack.c.l.s4 1983009808
        %v2754 = vunpack.c.0.s8 %v2753
        %v2755 = vperm.slane %v2751, %v2754
        %v2756 = vrot.slane %v2608, 4
        %v2757 = vsel %vm995, %v2756, %v2592
        %v2759 = vunpack.c.l.s4 1983009808
        %v2760 = vunpack.c.0.s8 %v2759
        %v2761 = vperm.slane %v2757, %v2760
        %v2762 = vrot.slane %v2761, 4
        %v2763 = vsel %vm995, %v2762, %v2755
        %v2765 = vunpack.c.l.s4 1934713408
        %v2766 = vunpack.c.0.s8 %v2765
        %v2767 = vperm.slane %v2763, %v2766
        %v2768 = vrot.slane %v2767, 4
        %v2769 = vsel %vm995, 0, %v2768
        %v2772 = vunpack.c.l.s4 1934713408
        %v2773 = vunpack.c.0.s8 %v2772
        %v2774 = vperm.slane %v2612, %v2773
        %v2775 = vrot.slane %v2774, 4
        %v2776 = vsel %vm995, 0, %v2775
        %v2777 = vrot.slane %v2631, 4
        %v2778 = vsel %vm995, %v2777, %v2615
        %v2780 = vunpack.c.l.s4 1983009808
        %v2781 = vunpack.c.0.s8 %v2780
        %v2782 = vperm.slane %v2778, %v2781
        %v2783 = vrot.slane %v2639, 4
        %v2784 = vsel %vm995, %v2783, %v2623
        %v2786 = vunpack.c.l.s4 1983009808
        %v2787 = vunpack.c.0.s8 %v2786
        %v2788 = vperm.slane %v2784, %v2787
        %v2789 = vrot.slane %v2788, 4
        %v2790 = vsel %vm995, %v2789, %v2782
        %v2792 = vunpack.c.l.s4 1934713408
        %v2793 = vunpack.c.0.s8 %v2792
        %v2794 = vperm.slane %v2790, %v2793
        %v2795 = vrot.slane %v2794, 4
        %v2796 = vsel %vm995, 0, %v2795
        %v2797 = vrot.slane %v2635, 4
        %v2798 = vsel %vm995, %v2797, %v2619
        %v2800 = vunpack.c.l.s4 1983009808
        %v2801 = vunpack.c.0.s8 %v2800
        %v2802 = vperm.slane %v2798, %v2801
        %v2803 = vrot.slane %v2643, 4
        %v2804 = vsel %vm995, %v2803, %v2627
        %v2806 = vunpack.c.l.s4 1983009808
        %v2807 = vunpack.c.0.s8 %v2806
        %v2808 = vperm.slane %v2804, %v2807
        %v2809 = vrot.slane %v2808, 4
        %v2810 = vsel %vm995, %v2809, %v2802
        %v2812 = vunpack.c.l.s4 1934713408
        %v2813 = vunpack.c.0.s8 %v2812
        %v2814 = vperm.slane %v2810, %v2813
        %v2815 = vrot.slane %v2814, 4
        %v2816 = vsel %vm995, 0, %v2815
        %v2819 = vunpack.c.l.s4 1934713408
        %v2820 = vunpack.c.0.s8 %v2819
        %v2821 = vperm.slane %v2647, %v2820
        %v2822 = vrot.slane %v2821, 4
        %v2823 = vsel %vm995, 0, %v2822
        %v2824 = vrot.slane %v2666, 4
        %v2825 = vsel %vm995, %v2824, %v2650
        %v2827 = vunpack.c.l.s4 1983009808
        %v2828 = vunpack.c.0.s8 %v2827
        %v2829 = vperm.slane %v2825, %v2828
        %v2830 = vrot.slane %v2674, 4
        %v2831 = vsel %vm995, %v2830, %v2658
        %v2833 = vunpack.c.l.s4 1983009808
        %v2834 = vunpack.c.0.s8 %v2833
        %v2835 = vperm.slane %v2831, %v2834
        %v2836 = vrot.slane %v2835, 4
        %v2837 = vsel %vm995, %v2836, %v2829
        %v2839 = vunpack.c.l.s4 1934713408
        %v2840 = vunpack.c.0.s8 %v2839
        %v2841 = vperm.slane %v2837, %v2840
        %v2842 = vrot.slane %v2841, 4
        %v2843 = vsel %vm995, 0, %v2842
        %v2844 = vrot.slane %v2670, 4
        %v2845 = vsel %vm995, %v2844, %v2654
        %v2847 = vunpack.c.l.s4 1983009808
        %v2848 = vunpack.c.0.s8 %v2847
        %v2849 = vperm.slane %v2845, %v2848
        %v2850 = vrot.slane %v2678, 4
        %v2851 = vsel %vm995, %v2850, %v2662
        %v2853 = vunpack.c.l.s4 1983009808
        %v2854 = vunpack.c.0.s8 %v2853
        %v2855 = vperm.slane %v2851, %v2854
        %v2856 = vrot.slane %v2855, 4
        %v2857 = vsel %vm995, %v2856, %v2849
        %v2859 = vunpack.c.l.s4 1934713408
        %v2860 = vunpack.c.0.s8 %v2859
        %v2861 = vperm.slane %v2857, %v2860
        %v2862 = vrot.slane %v2861, 4
        %v2863 = vsel %vm995, 0, %v2862
        %v2866 = vunpack.c.l.s4 1934713408
        %v2867 = vunpack.c.0.s8 %v2866
        %v2868 = vperm.slane %v2682, %v2867
        %v2869 = vrot.slane %v2868, 4
        %v2870 = vsel %vm995, 0, %v2869
        %v2873 = vpack.i.b16 %v2720, %v2700
        %v2874 = vshrl.u32 %v2700, 16
        %v2875 = vshrl.u32 %v2720, 16
        %v2876 = vpack.i.b16 %v2875, %v2874
        %v2879 = vpack.i.b16 %v2722, %v2702
        %v2880 = vshrl.u32 %v2702, 16
        %v2881 = vshrl.u32 %v2722, 16
        %v2882 = vpack.i.b16 %v2881, %v2880
        %v2884 = vpack.i.b16 0, %v2727
        %v2885 = vshrl.u32 %v2727, 16
        %v2886 = vpack.i.b16 %v1553, %v2885
        %v2888 = vpack.i.b16 0, %v2729
        %v2889 = vshrl.u32 %v2729, 16
        %v2890 = vpack.i.b16 %v1553, %v2889
        %v2893 = vpack.i.b16 %v2767, %v2747
        %v2894 = vshrl.u32 %v2747, 16
        %v2895 = vshrl.u32 %v2767, 16
        %v2896 = vpack.i.b16 %v2895, %v2894
        %v2899 = vpack.i.b16 %v2769, %v2749
        %v2900 = vshrl.u32 %v2749, 16
        %v2901 = vshrl.u32 %v2769, 16
        %v2902 = vpack.i.b16 %v2901, %v2900
        %v2904 = vpack.i.b16 0, %v2774
        %v2905 = vshrl.u32 %v2774, 16
        %v2906 = vpack.i.b16 %v1553, %v2905
        %v2908 = vpack.i.b16 0, %v2776
        %v2909 = vshrl.u32 %v2776, 16
        %v2910 = vpack.i.b16 %v1553, %v2909
        %v2913 = vpack.i.b16 %v2814, %v2794
        %v2914 = vshrl.u32 %v2794, 16
        %v2915 = vshrl.u32 %v2814, 16
        %v2916 = vpack.i.b16 %v2915, %v2914
        %v2919 = vpack.i.b16 %v2816, %v2796
        %v2920 = vshrl.u32 %v2796, 16
        %v2921 = vshrl.u32 %v2816, 16
        %v2922 = vpack.i.b16 %v2921, %v2920
        %v2924 = vpack.i.b16 0, %v2821
        %v2925 = vshrl.u32 %v2821, 16
        %v2926 = vpack.i.b16 %v1553, %v2925
        %v2928 = vpack.i.b16 0, %v2823
        %v2929 = vshrl.u32 %v2823, 16
        %v2930 = vpack.i.b16 %v1553, %v2929
        %v2933 = vpack.i.b16 %v2861, %v2841
        %v2934 = vshrl.u32 %v2841, 16
        %v2935 = vshrl.u32 %v2861, 16
        %v2936 = vpack.i.b16 %v2935, %v2934
        %v2939 = vpack.i.b16 %v2863, %v2843
        %v2940 = vshrl.u32 %v2843, 16
        %v2941 = vshrl.u32 %v2863, 16
        %v2942 = vpack.i.b16 %v2941, %v2940
        %v2944 = vpack.i.b16 0, %v2868
        %v2945 = vshrl.u32 %v2868, 16
        %v2946 = vpack.i.b16 %v1553, %v2945
        %v2948 = vpack.i.b16 0, %v2870
        %v2949 = vshrl.u32 %v2870, 16
        %v2950 = vpack.i.b16 %v1553, %v2949
        %v2951 = vunpack.c.l.b16 %v1539
        %v2952 = vunpack.c.l.b16 %v1551
        %v2953 = vpack.c.b16 %v2952, %v2951
        %v2954 = vunpack.c.l.b16 %v2217
        %v2955 = vunpack.c.l.b16 %v2228
        %v2956 = vpack.c.b16 %v2955, %v2954
        %vm2957 = vcmask 130048
        %v2959 = vsel %vm2957, %v2953, 0
        %v2962 = vsel %vm2957, %v2956, 0
        %2964 = vmatpush.bf16.xpose.msra.mxu0 0
        %2965 = vmatpush.bf16.xpose.msra.mxu0 0
        %2966 = vmatpush.bf16.xpose.msra.mxu0 0
        %2967 = vmatpush.bf16.xpose.msra.mxu0 0
        %2968 = vmatpush.bf16.xpose.msra.mxu0 0
        %2969 = vmatpush.bf16.xpose.msra.mxu0 0
        %2970 = vmatpush.bf16.xpose.msra.mxu0 0
        %2971 = vmatpush.bf16.xpose.msra.mxu0 %v2962
        %2972 = vmatmul.bf16.gmra.mxu0 %v2959
        %v2973 = vpop.f32.mrf.mxu0
        %v2974 = vadd.f32 0.0, %v2973
        %v2975 = vpop.f32.mrf.mxu0
        %v2976 = vadd.f32 0.0, %v2975
        %2977 = vdwg.mxu0
        %v2978 = vunpack.c.l.b16 %v1542
        %v2979 = vunpack.c.l.b16 %v1554
        %v2980 = vpack.c.b16 %v2979, %v2978
        %v2981 = vunpack.c.l.b16 %v2220
        %v2982 = vunpack.c.l.b16 %v2230
        %v2983 = vpack.c.b16 %v2982, %v2981
        %v2985 = vsel %vm2957, %v2980, 0
        %v2988 = vsel %vm2957, %v2983, 0
        %2990 = vmatpush.bf16.xpose.msra.mxu0 0
        %2991 = vmatpush.bf16.xpose.msra.mxu0 0
        %2992 = vmatpush.bf16.xpose.msra.mxu0 0
        %2993 = vmatpush.bf16.xpose.msra.mxu0 0
        %2994 = vmatpush.bf16.xpose.msra.mxu0 0
        %2995 = vmatpush.bf16.xpose.msra.mxu0 0
        %2996 = vmatpush.bf16.xpose.msra.mxu0 0
        %2997 = vmatpush.bf16.xpose.msra.mxu0 %v2988
        %2998 = vmatmul.bf16.gmra.mxu0 %v2985
        %v2999 = vpop.f32.mrf.mxu0
        %v3000 = vadd.f32 0.0, %v2999
        %v3001 = vpop.f32.mrf.mxu0
        %v3002 = vadd.f32 0.0, %v3001
        %3003 = vdwg.mxu0
        %v3004 = vunpack.c.l.b16 %v1545
        %v3005 = vunpack.c.l.b16 %v1556
        %v3006 = vpack.c.b16 %v3005, %v3004
        %v3007 = vunpack.c.l.b16 %v2223
        %v3008 = vunpack.c.l.b16 %v2232
        %v3009 = vpack.c.b16 %v3008, %v3007
        %v3011 = vsel %vm2957, %v3006, 0
        %v3014 = vsel %vm2957, %v3009, 0
        %3016 = vmatpush.bf16.xpose.msra.mxu0 0
        %3017 = vmatpush.bf16.xpose.msra.mxu0 0
        %3018 = vmatpush.bf16.xpose.msra.mxu0 0
        %3019 = vmatpush.bf16.xpose.msra.mxu0 0
        %3020 = vmatpush.bf16.xpose.msra.mxu0 0
        %3021 = vmatpush.bf16.xpose.msra.mxu0 0
        %3022 = vmatpush.bf16.xpose.msra.mxu0 0
        %3023 = vmatpush.bf16.xpose.msra.mxu0 %v3014
        %3024 = vmatmul.bf16.gmra.mxu0 %v3011
        %v3025 = vpop.f32.mrf.mxu0
        %v3026 = vadd.f32 0.0, %v3025
        %v3027 = vpop.f32.mrf.mxu0
        %v3028 = vadd.f32 0.0, %v3027
        %3029 = vdwg.mxu0
        %v3030 = vunpack.c.l.b16 %v1548
        %v3031 = vunpack.c.l.b16 %v1558
        %v3032 = vpack.c.b16 %v3031, %v3030
        %v3033 = vunpack.c.l.b16 %v2226
        %v3034 = vunpack.c.l.b16 %v2234
        %v3035 = vpack.c.b16 %v3034, %v3033
        %v3037 = vsel %vm2957, %v3032, 0
        %v3040 = vsel %vm2957, %v3035, 0
        %3042 = vmatpush.bf16.xpose.msra.mxu0 0
        %3043 = vmatpush.bf16.xpose.msra.mxu0 0
        %3044 = vmatpush.bf16.xpose.msra.mxu0 0
        %3045 = vmatpush.bf16.xpose.msra.mxu0 0
        %3046 = vmatpush.bf16.xpose.msra.mxu0 0
        %3047 = vmatpush.bf16.xpose.msra.mxu0 0
        %3048 = vmatpush.bf16.xpose.msra.mxu0 0
        %3049 = vmatpush.bf16.xpose.msra.mxu0 %v3040
        %3050 = vmatmul.bf16.gmra.mxu0 %v3037
        %v3051 = vpop.f32.mrf.mxu0
        %v3052 = vadd.f32 0.0, %v3051
        %v3053 = vpop.f32.mrf.mxu0
        %v3054 = vadd.f32 0.0, %v3053
        %3055 = vdwg.mxu0
        %v3056 = vunpack.c.l.b16 %v1561
        %v3057 = vunpack.c.l.b16 %v1572
        %v3058 = vpack.c.b16 %v3057, %v3056
        %v3059 = vunpack.c.l.b16 %v2237
        %v3060 = vunpack.c.l.b16 %v2248
        %v3061 = vpack.c.b16 %v3060, %v3059
        %v3063 = vsel %vm2957, %v3058, 0
        %v3066 = vsel %vm2957, %v3061, 0
        %3068 = vmatpush.bf16.xpose.msra.mxu0 0
        %3069 = vmatpush.bf16.xpose.msra.mxu0 0
        %3070 = vmatpush.bf16.xpose.msra.mxu0 0
        %3071 = vmatpush.bf16.xpose.msra.mxu0 0
        %3072 = vmatpush.bf16.xpose.msra.mxu0 0
        %3073 = vmatpush.bf16.xpose.msra.mxu0 0
        %3074 = vmatpush.bf16.xpose.msra.mxu0 0
        %3075 = vmatpush.bf16.xpose.msra.mxu0 %v3066
        %3076 = vmatmul.bf16.gmra.mxu0 %v3063
        %v3077 = vpop.f32.mrf.mxu0
        %v3078 = vadd.f32 0.0, %v3077
        %v3079 = vpop.f32.mrf.mxu0
        %v3080 = vadd.f32 0.0, %v3079
        %3081 = vdwg.mxu0
        %v3082 = vunpack.c.l.b16 %v1564
        %v3083 = vunpack.c.l.b16 %v1574
        %v3084 = vpack.c.b16 %v3083, %v3082
        %v3085 = vunpack.c.l.b16 %v2240
        %v3086 = vunpack.c.l.b16 %v2250
        %v3087 = vpack.c.b16 %v3086, %v3085
        %v3089 = vsel %vm2957, %v3084, 0
        %v3092 = vsel %vm2957, %v3087, 0
        %3094 = vmatpush.bf16.xpose.msra.mxu0 0
        %3095 = vmatpush.bf16.xpose.msra.mxu0 0
        %3096 = vmatpush.bf16.xpose.msra.mxu0 0
        %3097 = vmatpush.bf16.xpose.msra.mxu0 0
        %3098 = vmatpush.bf16.xpose.msra.mxu0 0
        %3099 = vmatpush.bf16.xpose.msra.mxu0 0
        %3100 = vmatpush.bf16.xpose.msra.mxu0 0
        %3101 = vmatpush.bf16.xpose.msra.mxu0 %v3092
        %3102 = vmatmul.bf16.gmra.mxu0 %v3089
        %v3103 = vpop.f32.mrf.mxu0
        %v3104 = vadd.f32 0.0, %v3103
        %v3105 = vpop.f32.mrf.mxu0
        %v3106 = vadd.f32 0.0, %v3105
        %3107 = vdwg.mxu0
        %v3108 = vunpack.c.l.b16 %v1567
        %v3109 = vunpack.c.l.b16 %v1576
        %v3110 = vpack.c.b16 %v3109, %v3108
        %v3111 = vunpack.c.l.b16 %v2243
        %v3112 = vunpack.c.l.b16 %v2252
        %v3113 = vpack.c.b16 %v3112, %v3111
        %v3115 = vsel %vm2957, %v3110, 0
        %v3118 = vsel %vm2957, %v3113, 0
        %3120 = vmatpush.bf16.xpose.msra.mxu0 0
        %3121 = vmatpush.bf16.xpose.msra.mxu0 0
        %3122 = vmatpush.bf16.xpose.msra.mxu0 0
        %3123 = vmatpush.bf16.xpose.msra.mxu0 0
        %3124 = vmatpush.bf16.xpose.msra.mxu0 0
        %3125 = vmatpush.bf16.xpose.msra.mxu0 0
        %3126 = vmatpush.bf16.xpose.msra.mxu0 0
        %3127 = vmatpush.bf16.xpose.msra.mxu0 %v3118
        %3128 = vmatmul.bf16.gmra.mxu0 %v3115
        %v3129 = vpop.f32.mrf.mxu0
        %v3130 = vadd.f32 0.0, %v3129
        %v3131 = vpop.f32.mrf.mxu0
        %v3132 = vadd.f32 0.0, %v3131
        %3133 = vdwg.mxu0
        %v3134 = vunpack.c.l.b16 %v1570
        %v3135 = vunpack.c.l.b16 %v1578
        %v3136 = vpack.c.b16 %v3135, %v3134
        %v3137 = vunpack.c.l.b16 %v2246
        %v3138 = vunpack.c.l.b16 %v2254
        %v3139 = vpack.c.b16 %v3138, %v3137
        %v3141 = vsel %vm2957, %v3136, 0
        %v3144 = vsel %vm2957, %v3139, 0
        %3146 = vmatpush.bf16.xpose.msra.mxu0 0
        %3147 = vmatpush.bf16.xpose.msra.mxu0 0
        %3148 = vmatpush.bf16.xpose.msra.mxu0 0
        %3149 = vmatpush.bf16.xpose.msra.mxu0 0
        %3150 = vmatpush.bf16.xpose.msra.mxu0 0
        %3151 = vmatpush.bf16.xpose.msra.mxu0 0
        %3152 = vmatpush.bf16.xpose.msra.mxu0 0
        %3153 = vmatpush.bf16.xpose.msra.mxu0 %v3144
        %3154 = vmatmul.bf16.gmra.mxu0 %v3141
        %v3155 = vpop.f32.mrf.mxu0
        %v3156 = vadd.f32 0.0, %v3155
        %v3157 = vpop.f32.mrf.mxu0
        %v3158 = vadd.f32 0.0, %v3157
        %3159 = vdwg.mxu0
        %v3160 = vunpack.c.l.b16 %v1581
        %v3161 = vunpack.c.l.b16 %v1592
        %v3162 = vpack.c.b16 %v3161, %v3160
        %v3163 = vunpack.c.l.b16 %v2257
        %v3164 = vunpack.c.l.b16 %v2268
        %v3165 = vpack.c.b16 %v3164, %v3163
        %v3167 = vsel %vm2957, %v3162, 0
        %v3170 = vsel %vm2957, %v3165, 0
        %3172 = vmatpush.bf16.xpose.msra.mxu0 0
        %3173 = vmatpush.bf16.xpose.msra.mxu0 0
        %3174 = vmatpush.bf16.xpose.msra.mxu0 0
        %3175 = vmatpush.bf16.xpose.msra.mxu0 0
        %3176 = vmatpush.bf16.xpose.msra.mxu0 0
        %3177 = vmatpush.bf16.xpose.msra.mxu0 0
        %3178 = vmatpush.bf16.xpose.msra.mxu0 0
        %3179 = vmatpush.bf16.xpose.msra.mxu0 %v3170
        %3180 = vmatmul.bf16.gmra.mxu0 %v3167
        %v3181 = vpop.f32.mrf.mxu0
        %v3182 = vadd.f32 0.0, %v3181
        %v3183 = vpop.f32.mrf.mxu0
        %v3184 = vadd.f32 0.0, %v3183
        %3185 = vdwg.mxu0
        %v3186 = vunpack.c.l.b16 %v1584
        %v3187 = vunpack.c.l.b16 %v1594
        %v3188 = vpack.c.b16 %v3187, %v3186
        %v3189 = vunpack.c.l.b16 %v2260
        %v3190 = vunpack.c.l.b16 %v2270
        %v3191 = vpack.c.b16 %v3190, %v3189
        %v3193 = vsel %vm2957, %v3188, 0
        %v3196 = vsel %vm2957, %v3191, 0
        %3198 = vmatpush.bf16.xpose.msra.mxu0 0
        %3199 = vmatpush.bf16.xpose.msra.mxu0 0
        %3200 = vmatpush.bf16.xpose.msra.mxu0 0
        %3201 = vmatpush.bf16.xpose.msra.mxu0 0
        %3202 = vmatpush.bf16.xpose.msra.mxu0 0
        %3203 = vmatpush.bf16.xpose.msra.mxu0 0
        %3204 = vmatpush.bf16.xpose.msra.mxu0 0
        %3205 = vmatpush.bf16.xpose.msra.mxu0 %v3196
        %3206 = vmatmul.bf16.gmra.mxu0 %v3193
        %v3207 = vpop.f32.mrf.mxu0
        %v3208 = vadd.f32 0.0, %v3207
        %v3209 = vpop.f32.mrf.mxu0
        %v3210 = vadd.f32 0.0, %v3209
        %3211 = vdwg.mxu0
        %v3212 = vunpack.c.l.b16 %v1587
        %v3213 = vunpack.c.l.b16 %v1596
        %v3214 = vpack.c.b16 %v3213, %v3212
        %v3215 = vunpack.c.l.b16 %v2263
        %v3216 = vunpack.c.l.b16 %v2272
        %v3217 = vpack.c.b16 %v3216, %v3215
        %v3219 = vsel %vm2957, %v3214, 0
        %v3222 = vsel %vm2957, %v3217, 0
        %3224 = vmatpush.bf16.xpose.msra.mxu0 0
        %3225 = vmatpush.bf16.xpose.msra.mxu0 0
        %3226 = vmatpush.bf16.xpose.msra.mxu0 0
        %3227 = vmatpush.bf16.xpose.msra.mxu0 0
        %3228 = vmatpush.bf16.xpose.msra.mxu0 0
        %3229 = vmatpush.bf16.xpose.msra.mxu0 0
        %3230 = vmatpush.bf16.xpose.msra.mxu0 0
        %3231 = vmatpush.bf16.xpose.msra.mxu0 %v3222
        %3232 = vmatmul.bf16.gmra.mxu0 %v3219
        %v3233 = vpop.f32.mrf.mxu0
        %v3234 = vadd.f32 0.0, %v3233
        %v3235 = vpop.f32.mrf.mxu0
        %v3236 = vadd.f32 0.0, %v3235
        %3237 = vdwg.mxu0
        %v3238 = vunpack.c.l.b16 %v1590
        %v3239 = vunpack.c.l.b16 %v1598
        %v3240 = vpack.c.b16 %v3239, %v3238
        %v3241 = vunpack.c.l.b16 %v2266
        %v3242 = vunpack.c.l.b16 %v2274
        %v3243 = vpack.c.b16 %v3242, %v3241
        %v3245 = vsel %vm2957, %v3240, 0
        %v3248 = vsel %vm2957, %v3243, 0
        %3250 = vmatpush.bf16.xpose.msra.mxu0 0
        %3251 = vmatpush.bf16.xpose.msra.mxu0 0
        %3252 = vmatpush.bf16.xpose.msra.mxu0 0
        %3253 = vmatpush.bf16.xpose.msra.mxu0 0
        %3254 = vmatpush.bf16.xpose.msra.mxu0 0
        %3255 = vmatpush.bf16.xpose.msra.mxu0 0
        %3256 = vmatpush.bf16.xpose.msra.mxu0 0
        %3257 = vmatpush.bf16.xpose.msra.mxu0 %v3248
        %3258 = vmatmul.bf16.gmra.mxu0 %v3245
        %v3259 = vpop.f32.mrf.mxu0
        %v3260 = vadd.f32 0.0, %v3259
        %v3261 = vpop.f32.mrf.mxu0
        %v3262 = vadd.f32 0.0, %v3261
        %3263 = vdwg.mxu0
        %v3264 = vunpack.c.l.b16 %v1601
        %v3265 = vunpack.c.l.b16 %v1612
        %v3266 = vpack.c.b16 %v3265, %v3264
        %v3267 = vunpack.c.l.b16 %v2277
        %v3268 = vunpack.c.l.b16 %v2288
        %v3269 = vpack.c.b16 %v3268, %v3267
        %v3271 = vsel %vm2957, %v3266, 0
        %v3274 = vsel %vm2957, %v3269, 0
        %3276 = vmatpush.bf16.xpose.msra.mxu0 0
        %3277 = vmatpush.bf16.xpose.msra.mxu0 0
        %3278 = vmatpush.bf16.xpose.msra.mxu0 0
        %3279 = vmatpush.bf16.xpose.msra.mxu0 0
        %3280 = vmatpush.bf16.xpose.msra.mxu0 0
        %3281 = vmatpush.bf16.xpose.msra.mxu0 0
        %3282 = vmatpush.bf16.xpose.msra.mxu0 0
        %3283 = vmatpush.bf16.xpose.msra.mxu0 %v3274
        %3284 = vmatmul.bf16.gmra.mxu0 %v3271
        %v3285 = vpop.f32.mrf.mxu0
        %v3286 = vadd.f32 0.0, %v3285
        %v3287 = vpop.f32.mrf.mxu0
        %v3288 = vadd.f32 0.0, %v3287
        %3289 = vdwg.mxu0
        %v3290 = vunpack.c.l.b16 %v1604
        %v3291 = vunpack.c.l.b16 %v1614
        %v3292 = vpack.c.b16 %v3291, %v3290
        %v3293 = vunpack.c.l.b16 %v2280
        %v3294 = vunpack.c.l.b16 %v2290
        %v3295 = vpack.c.b16 %v3294, %v3293
        %v3297 = vsel %vm2957, %v3292, 0
        %v3300 = vsel %vm2957, %v3295, 0
        %3302 = vmatpush.bf16.xpose.msra.mxu0 0
        %3303 = vmatpush.bf16.xpose.msra.mxu0 0
        %3304 = vmatpush.bf16.xpose.msra.mxu0 0
        %3305 = vmatpush.bf16.xpose.msra.mxu0 0
        %3306 = vmatpush.bf16.xpose.msra.mxu0 0
        %3307 = vmatpush.bf16.xpose.msra.mxu0 0
        %3308 = vmatpush.bf16.xpose.msra.mxu0 0
        %3309 = vmatpush.bf16.xpose.msra.mxu0 %v3300
        %3310 = vmatmul.bf16.gmra.mxu0 %v3297
        %v3311 = vpop.f32.mrf.mxu0
        %v3312 = vadd.f32 0.0, %v3311
        %v3313 = vpop.f32.mrf.mxu0
        %v3314 = vadd.f32 0.0, %v3313
        %3315 = vdwg.mxu0
        %v3316 = vunpack.c.l.b16 %v1607
        %v3317 = vunpack.c.l.b16 %v1616
        %v3318 = vpack.c.b16 %v3317, %v3316
        %v3319 = vunpack.c.l.b16 %v2283
        %v3320 = vunpack.c.l.b16 %v2292
        %v3321 = vpack.c.b16 %v3320, %v3319
        %v3323 = vsel %vm2957, %v3318, 0
        %v3326 = vsel %vm2957, %v3321, 0
        %3328 = vmatpush.bf16.xpose.msra.mxu0 0
        %3329 = vmatpush.bf16.xpose.msra.mxu0 0
        %3330 = vmatpush.bf16.xpose.msra.mxu0 0
        %3331 = vmatpush.bf16.xpose.msra.mxu0 0
        %3332 = vmatpush.bf16.xpose.msra.mxu0 0
        %3333 = vmatpush.bf16.xpose.msra.mxu0 0
        %3334 = vmatpush.bf16.xpose.msra.mxu0 0
        %3335 = vmatpush.bf16.xpose.msra.mxu0 %v3326
        %3336 = vmatmul.bf16.gmra.mxu0 %v3323
        %v3337 = vpop.f32.mrf.mxu0
        %v3338 = vadd.f32 0.0, %v3337
        %v3339 = vpop.f32.mrf.mxu0
        %v3340 = vadd.f32 0.0, %v3339
        %3341 = vdwg.mxu0
        %v3342 = vunpack.c.l.b16 %v1610
        %v3343 = vunpack.c.l.b16 %v1618
        %v3344 = vpack.c.b16 %v3343, %v3342
        %v3345 = vunpack.c.l.b16 %v2286
        %v3346 = vunpack.c.l.b16 %v2294
        %v3347 = vpack.c.b16 %v3346, %v3345
        %v3349 = vsel %vm2957, %v3344, 0
        %v3352 = vsel %vm2957, %v3347, 0
        %3354 = vmatpush.bf16.xpose.msra.mxu0 0
        %3355 = vmatpush.bf16.xpose.msra.mxu0 0
        %3356 = vmatpush.bf16.xpose.msra.mxu0 0
        %3357 = vmatpush.bf16.xpose.msra.mxu0 0
        %3358 = vmatpush.bf16.xpose.msra.mxu0 0
        %3359 = vmatpush.bf16.xpose.msra.mxu0 0
        %3360 = vmatpush.bf16.xpose.msra.mxu0 0
        %3361 = vmatpush.bf16.xpose.msra.mxu0 %v3352
        %3362 = vmatmul.bf16.gmra.mxu0 %v3349
        %v3363 = vpop.f32.mrf.mxu0
        %v3364 = vadd.f32 0.0, %v3363
        %v3365 = vpop.f32.mrf.mxu0
        %v3366 = vadd.f32 0.0, %v3365
        %3367 = vdwg.mxu0
        %vm3368 = vcmask 72704
        %v3369 = vsel %vm3368, %v2974, -inf
        %3370 = vmax.xlane.f32.xlu0 %v3369
        %v3371 = vpop.xlane.xlu0 %3370
        %vm3372 = vcmask 65536
        %v3373 = vsel %vm3372, %v2976, -inf
        %3374 = vmax.xlane.f32.xlu0 %v3373
        %v3375 = vpop.xlane.xlu0 %3374
        %v3376 = vsel %vm3368, %v3000, -inf
        %3377 = vmax.xlane.f32.xlu0 %v3376
        %v3378 = vpop.xlane.xlu0 %3377
        %v3379 = vsel %vm3372, %v3002, -inf
        %3380 = vmax.xlane.f32.xlu0 %v3379
        %v3381 = vpop.xlane.xlu0 %3380
        %v3382 = vsel %vm3368, %v3026, -inf
        %3383 = vmax.xlane.f32.xlu0 %v3382
        %v3384 = vpop.xlane.xlu0 %3383
        %v3385 = vsel %vm3372, %v3028, -inf
        %3386 = vmax.xlane.f32.xlu0 %v3385
        %v3387 = vpop.xlane.xlu0 %3386
        %v3388 = vsel %vm3368, %v3052, -inf
        %3389 = vmax.xlane.f32.xlu0 %v3388
        %v3390 = vpop.xlane.xlu0 %3389
        %v3391 = vsel %vm3372, %v3054, -inf
        %3392 = vmax.xlane.f32.xlu0 %v3391
        %v3393 = vpop.xlane.xlu0 %3392
        %v3394 = vsel %vm3368, %v3078, -inf
        %3395 = vmax.xlane.f32.xlu0 %v3394
        %v3396 = vpop.xlane.xlu0 %3395
        %v3397 = vsel %vm3372, %v3080, -inf
        %3398 = vmax.xlane.f32.xlu0 %v3397
        %v3399 = vpop.xlane.xlu0 %3398
        %v3400 = vsel %vm3368, %v3104, -inf
        %3401 = vmax.xlane.f32.xlu0 %v3400
        %v3402 = vpop.xlane.xlu0 %3401
        %v3403 = vsel %vm3372, %v3106, -inf
        %3404 = vmax.xlane.f32.xlu0 %v3403
        %v3405 = vpop.xlane.xlu0 %3404
        %v3406 = vsel %vm3368, %v3130, -inf
        %3407 = vmax.xlane.f32.xlu0 %v3406
        %v3408 = vpop.xlane.xlu0 %3407
        %v3409 = vsel %vm3372, %v3132, -inf
        %3410 = vmax.xlane.f32.xlu0 %v3409
        %v3411 = vpop.xlane.xlu0 %3410
        %v3412 = vsel %vm3368, %v3156, -inf
        %3413 = vmax.xlane.f32.xlu0 %v3412
        %v3414 = vpop.xlane.xlu0 %3413
        %v3415 = vsel %vm3372, %v3158, -inf
        %3416 = vmax.xlane.f32.xlu0 %v3415
        %v3417 = vpop.xlane.xlu0 %3416
        %v3418 = vsel %vm3368, %v3182, -inf
        %3419 = vmax.xlane.f32.xlu0 %v3418
        %v3420 = vpop.xlane.xlu0 %3419
        %v3421 = vsel %vm3372, %v3184, -inf
        %3422 = vmax.xlane.f32.xlu0 %v3421
        %v3423 = vpop.xlane.xlu0 %3422
        %v3424 = vsel %vm3368, %v3208, -inf
        %3425 = vmax.xlane.f32.xlu0 %v3424
        %v3426 = vpop.xlane.xlu0 %3425
        %v3427 = vsel %vm3372, %v3210, -inf
        %3428 = vmax.xlane.f32.xlu0 %v3427
        %v3429 = vpop.xlane.xlu0 %3428
        %v3430 = vsel %vm3368, %v3234, -inf
        %3431 = vmax.xlane.f32.xlu0 %v3430
        %v3432 = vpop.xlane.xlu0 %3431
        %v3433 = vsel %vm3372, %v3236, -inf
        %3434 = vmax.xlane.f32.xlu0 %v3433
        %v3435 = vpop.xlane.xlu0 %3434
        %v3436 = vsel %vm3368, %v3260, -inf
        %3437 = vmax.xlane.f32.xlu0 %v3436
        %v3438 = vpop.xlane.xlu0 %3437
        %v3439 = vsel %vm3372, %v3262, -inf
        %3440 = vmax.xlane.f32.xlu0 %v3439
        %v3441 = vpop.xlane.xlu0 %3440
        %v3442 = vsel %vm3368, %v3286, -inf
        %3443 = vmax.xlane.f32.xlu0 %v3442
        %v3444 = vpop.xlane.xlu0 %3443
        %v3445 = vsel %vm3372, %v3288, -inf
        %3446 = vmax.xlane.f32.xlu0 %v3445
        %v3447 = vpop.xlane.xlu0 %3446
        %v3448 = vsel %vm3368, %v3312, -inf
        %3449 = vmax.xlane.f32.xlu0 %v3448
        %v3450 = vpop.xlane.xlu0 %3449
        %v3451 = vsel %vm3372, %v3314, -inf
        %3452 = vmax.xlane.f32.xlu0 %v3451
        %v3453 = vpop.xlane.xlu0 %3452
        %v3454 = vsel %vm3368, %v3338, -inf
        %3455 = vmax.xlane.f32.xlu0 %v3454
        %v3456 = vpop.xlane.xlu0 %3455
        %v3457 = vsel %vm3372, %v3340, -inf
        %3458 = vmax.xlane.f32.xlu0 %v3457
        %v3459 = vpop.xlane.xlu0 %3458
        %v3460 = vsel %vm3368, %v3364, -inf
        %3461 = vmax.xlane.f32.xlu0 %v3460
        %v3462 = vpop.xlane.xlu0 %3461
        %v3463 = vsel %vm3372, %v3366, -inf
        %3464 = vmax.xlane.f32.xlu0 %v3463
        %v3465 = vpop.xlane.xlu0 %3464
        %v3466 = vsub.f32 %v2974, %v3371
        %v3467 = vsub.f32 %v2976, %v3375
        %v3468 = vsub.f32 %v3000, %v3378
        %v3469 = vsub.f32 %v3002, %v3381
        %v3470 = vsub.f32 %v3026, %v3384
        %v3471 = vsub.f32 %v3028, %v3387
        %v3472 = vsub.f32 %v3052, %v3390
        %v3473 = vsub.f32 %v3054, %v3393
        %v3474 = vsub.f32 %v3078, %v3396
        %v3475 = vsub.f32 %v3080, %v3399
        %v3476 = vsub.f32 %v3104, %v3402
        %v3477 = vsub.f32 %v3106, %v3405
        %v3478 = vsub.f32 %v3130, %v3408
        %v3479 = vsub.f32 %v3132, %v3411
        %v3480 = vsub.f32 %v3156, %v3414
        %v3481 = vsub.f32 %v3158, %v3417
        %v3482 = vsub.f32 %v3182, %v3420
        %v3483 = vsub.f32 %v3184, %v3423
        %v3484 = vsub.f32 %v3208, %v3426
        %v3485 = vsub.f32 %v3210, %v3429
        %v3486 = vsub.f32 %v3234, %v3432
        %v3487 = vsub.f32 %v3236, %v3435
        %v3488 = vsub.f32 %v3260, %v3438
        %v3489 = vsub.f32 %v3262, %v3441
        %v3490 = vsub.f32 %v3286, %v3444
        %v3491 = vsub.f32 %v3288, %v3447
        %v3492 = vsub.f32 %v3312, %v3450
        %v3493 = vsub.f32 %v3314, %v3453
        %v3494 = vsub.f32 %v3338, %v3456
        %v3495 = vsub.f32 %v3340, %v3459
        %v3496 = vsub.f32 %v3364, %v3462
        %v3497 = vsub.f32 %v3366, %v3465
        %v3498 = vmul.f32 %v3466, 1.442695
        %v3499 = vpow.pop %v3498
        %v3500 = vmul.f32 %v3467, 1.442695
        %v3501 = vpow.pop %v3500
        %v3502 = vmul.f32 %v3468, 1.442695
        %v3503 = vpow.pop %v3502
        %v3504 = vmul.f32 %v3469, 1.442695
        %v3505 = vpow.pop %v3504
        %v3506 = vmul.f32 %v3470, 1.442695
        %v3507 = vpow.pop %v3506
        %v3508 = vmul.f32 %v3471, 1.442695
        %v3509 = vpow.pop %v3508
        %v3510 = vmul.f32 %v3472, 1.442695
        %v3511 = vpow.pop %v3510
        %v3512 = vmul.f32 %v3473, 1.442695
        %v3513 = vpow.pop %v3512
        %v3514 = vmul.f32 %v3474, 1.442695
        %v3515 = vpow.pop %v3514
        %v3516 = vmul.f32 %v3475, 1.442695
        %v3517 = vpow.pop %v3516
        %v3518 = vmul.f32 %v3476, 1.442695
        %v3519 = vpow.pop %v3518
        %v3520 = vmul.f32 %v3477, 1.442695
        %v3521 = vpow.pop %v3520
        %v3522 = vmul.f32 %v3478, 1.442695
        %v3523 = vpow.pop %v3522
        %v3524 = vmul.f32 %v3479, 1.442695
        %v3525 = vpow.pop %v3524
        %v3526 = vmul.f32 %v3480, 1.442695
        %v3527 = vpow.pop %v3526
        %v3528 = vmul.f32 %v3481, 1.442695
        %v3529 = vpow.pop %v3528
        %v3530 = vmul.f32 %v3482, 1.442695
        %v3531 = vpow.pop %v3530
        %v3532 = vmul.f32 %v3483, 1.442695
        %v3533 = vpow.pop %v3532
        %v3534 = vmul.f32 %v3484, 1.442695
        %v3535 = vpow.pop %v3534
        %v3536 = vmul.f32 %v3485, 1.442695
        %v3537 = vpow.pop %v3536
        %v3538 = vmul.f32 %v3486, 1.442695
        %v3539 = vpow.pop %v3538
        %v3540 = vmul.f32 %v3487, 1.442695
        %v3541 = vpow.pop %v3540
        %v3542 = vmul.f32 %v3488, 1.442695
        %v3543 = vpow.pop %v3542
        %v3544 = vmul.f32 %v3489, 1.442695
        %v3545 = vpow.pop %v3544
        %v3546 = vmul.f32 %v3490, 1.442695
        %v3547 = vpow.pop %v3546
        %v3548 = vmul.f32 %v3491, 1.442695
        %v3549 = vpow.pop %v3548
        %v3550 = vmul.f32 %v3492, 1.442695
        %v3551 = vpow.pop %v3550
        %v3552 = vmul.f32 %v3493, 1.442695
        %v3553 = vpow.pop %v3552
        %v3554 = vmul.f32 %v3494, 1.442695
        %v3555 = vpow.pop %v3554
        %v3556 = vmul.f32 %v3495, 1.442695
        %v3557 = vpow.pop %v3556
        %v3558 = vmul.f32 %v3496, 1.442695
        %v3559 = vpow.pop %v3558
        %v3560 = vmul.f32 %v3497, 1.442695
        %v3561 = vpow.pop %v3560
        %v3562 = vsel %vm3368, %v3499, 0.0
        %3563 = vadd.xlane.f32.xlu0 %v3562
        %v3564 = vpop.xlane.xlu0 %3563
        %v3565 = vsel %vm3372, %v3501, 0.0
        %3566 = vadd.xlane.f32.xlu0 %v3565
        %v3567 = vpop.xlane.xlu0 %3566
        %v3568 = vsel %vm3368, %v3503, 0.0
        %3569 = vadd.xlane.f32.xlu0 %v3568
        %v3570 = vpop.xlane.xlu0 %3569
        %v3571 = vsel %vm3372, %v3505, 0.0
        %3572 = vadd.xlane.f32.xlu0 %v3571
        %v3573 = vpop.xlane.xlu0 %3572
        %v3574 = vsel %vm3368, %v3507, 0.0
        %3575 = vadd.xlane.f32.xlu0 %v3574
        %v3576 = vpop.xlane.xlu0 %3575
        %v3577 = vsel %vm3372, %v3509, 0.0
        %3578 = vadd.xlane.f32.xlu0 %v3577
        %v3579 = vpop.xlane.xlu0 %3578
        %v3580 = vsel %vm3368, %v3511, 0.0
        %3581 = vadd.xlane.f32.xlu0 %v3580
        %v3582 = vpop.xlane.xlu0 %3581
        %v3583 = vsel %vm3372, %v3513, 0.0
        %3584 = vadd.xlane.f32.xlu0 %v3583
        %v3585 = vpop.xlane.xlu0 %3584
        %v3586 = vsel %vm3368, %v3515, 0.0
        %3587 = vadd.xlane.f32.xlu0 %v3586
        %v3588 = vpop.xlane.xlu0 %3587
        %v3589 = vsel %vm3372, %v3517, 0.0
        %3590 = vadd.xlane.f32.xlu0 %v3589
        %v3591 = vpop.xlane.xlu0 %3590
        %v3592 = vsel %vm3368, %v3519, 0.0
        %3593 = vadd.xlane.f32.xlu0 %v3592
        %v3594 = vpop.xlane.xlu0 %3593
        %v3595 = vsel %vm3372, %v3521, 0.0
        %3596 = vadd.xlane.f32.xlu0 %v3595
        %v3597 = vpop.xlane.xlu0 %3596
        %v3598 = vsel %vm3368, %v3523, 0.0
        %3599 = vadd.xlane.f32.xlu0 %v3598
        %v3600 = vpop.xlane.xlu0 %3599
        %v3601 = vsel %vm3372, %v3525, 0.0
        %3602 = vadd.xlane.f32.xlu0 %v3601
        %v3603 = vpop.xlane.xlu0 %3602
        %v3604 = vsel %vm3368, %v3527, 0.0
        %3605 = vadd.xlane.f32.xlu0 %v3604
        %v3606 = vpop.xlane.xlu0 %3605
        %v3607 = vsel %vm3372, %v3529, 0.0
        %3608 = vadd.xlane.f32.xlu0 %v3607
        %v3609 = vpop.xlane.xlu0 %3608
        %v3610 = vsel %vm3368, %v3531, 0.0
        %3611 = vadd.xlane.f32.xlu0 %v3610
        %v3612 = vpop.xlane.xlu0 %3611
        %v3613 = vsel %vm3372, %v3533, 0.0
        %3614 = vadd.xlane.f32.xlu0 %v3613
        %v3615 = vpop.xlane.xlu0 %3614
        %v3616 = vsel %vm3368, %v3535, 0.0
        %3617 = vadd.xlane.f32.xlu0 %v3616
        %v3618 = vpop.xlane.xlu0 %3617
        %v3619 = vsel %vm3372, %v3537, 0.0
        %3620 = vadd.xlane.f32.xlu0 %v3619
        %v3621 = vpop.xlane.xlu0 %3620
        %v3622 = vsel %vm3368, %v3539, 0.0
        %3623 = vadd.xlane.f32.xlu0 %v3622
        %v3624 = vpop.xlane.xlu0 %3623
        %v3625 = vsel %vm3372, %v3541, 0.0
        %3626 = vadd.xlane.f32.xlu0 %v3625
        %v3627 = vpop.xlane.xlu0 %3626
        %v3628 = vsel %vm3368, %v3543, 0.0
        %3629 = vadd.xlane.f32.xlu0 %v3628
        %v3630 = vpop.xlane.xlu0 %3629
        %v3631 = vsel %vm3372, %v3545, 0.0
        %3632 = vadd.xlane.f32.xlu0 %v3631
        %v3633 = vpop.xlane.xlu0 %3632
        %v3634 = vsel %vm3368, %v3547, 0.0
        %3635 = vadd.xlane.f32.xlu0 %v3634
        %v3636 = vpop.xlane.xlu0 %3635
        %v3637 = vsel %vm3372, %v3549, 0.0
        %3638 = vadd.xlane.f32.xlu0 %v3637
        %v3639 = vpop.xlane.xlu0 %3638
        %v3640 = vsel %vm3368, %v3551, 0.0
        %3641 = vadd.xlane.f32.xlu0 %v3640
        %v3642 = vpop.xlane.xlu0 %3641
        %v3643 = vsel %vm3372, %v3553, 0.0
        %3644 = vadd.xlane.f32.xlu0 %v3643
        %v3645 = vpop.xlane.xlu0 %3644
        %v3646 = vsel %vm3368, %v3555, 0.0
        %3647 = vadd.xlane.f32.xlu0 %v3646
        %v3648 = vpop.xlane.xlu0 %3647
        %v3649 = vsel %vm3372, %v3557, 0.0
        %3650 = vadd.xlane.f32.xlu0 %v3649
        %v3651 = vpop.xlane.xlu0 %3650
        %v3652 = vsel %vm3368, %v3559, 0.0
        %3653 = vadd.xlane.f32.xlu0 %v3652
        %v3654 = vpop.xlane.xlu0 %3653
        %v3655 = vsel %vm3372, %v3561, 0.0
        %3656 = vadd.xlane.f32.xlu0 %v3655
        %v3657 = vpop.xlane.xlu0 %3656
        %v3658 = vrcp.pop %v3564
        %v3659 = vrcp.pop %v3567
        %v3660 = vrcp.pop %v3570
        %v3661 = vrcp.pop %v3573
        %v3662 = vrcp.pop %v3576
        %v3663 = vrcp.pop %v3579
        %v3664 = vrcp.pop %v3582
        %v3665 = vrcp.pop %v3585
        %v3666 = vrcp.pop %v3588
        %v3667 = vrcp.pop %v3591
        %v3668 = vrcp.pop %v3594
        %v3669 = vrcp.pop %v3597
        %v3670 = vrcp.pop %v3600
        %v3671 = vrcp.pop %v3603
        %v3672 = vrcp.pop %v3606
        %v3673 = vrcp.pop %v3609
        %v3674 = vrcp.pop %v3612
        %v3675 = vrcp.pop %v3615
        %v3676 = vrcp.pop %v3618
        %v3677 = vrcp.pop %v3621
        %v3678 = vrcp.pop %v3624
        %v3679 = vrcp.pop %v3627
        %v3680 = vrcp.pop %v3630
        %v3681 = vrcp.pop %v3633
        %v3682 = vrcp.pop %v3636
        %v3683 = vrcp.pop %v3639
        %v3684 = vrcp.pop %v3642
        %v3685 = vrcp.pop %v3645
        %v3686 = vrcp.pop %v3648
        %v3687 = vrcp.pop %v3651
        %v3688 = vrcp.pop %v3654
        %v3689 = vrcp.pop %v3657
        %v3690 = vmul.f32 %v3499, %v3658
        %v3691 = vmul.f32 %v3501, %v3659
        %v3692 = vmul.f32 %v3503, %v3660
        %v3693 = vmul.f32 %v3505, %v3661
        %v3694 = vmul.f32 %v3507, %v3662
        %v3695 = vmul.f32 %v3509, %v3663
        %v3696 = vmul.f32 %v3511, %v3664
        %v3697 = vmul.f32 %v3513, %v3665
        %v3698 = vmul.f32 %v3515, %v3666
        %v3699 = vmul.f32 %v3517, %v3667
        %v3700 = vmul.f32 %v3519, %v3668
        %v3701 = vmul.f32 %v3521, %v3669
        %v3702 = vmul.f32 %v3523, %v3670
        %v3703 = vmul.f32 %v3525, %v3671
        %v3704 = vmul.f32 %v3527, %v3672
        %v3705 = vmul.f32 %v3529, %v3673
        %v3706 = vmul.f32 %v3531, %v3674
        %v3707 = vmul.f32 %v3533, %v3675
        %v3708 = vmul.f32 %v3535, %v3676
        %v3709 = vmul.f32 %v3537, %v3677
        %v3710 = vmul.f32 %v3539, %v3678
        %v3711 = vmul.f32 %v3541, %v3679
        %v3712 = vmul.f32 %v3543, %v3680
        %v3713 = vmul.f32 %v3545, %v3681
        %v3714 = vmul.f32 %v3547, %v3682
        %v3715 = vmul.f32 %v3549, %v3683
        %v3716 = vmul.f32 %v3551, %v3684
        %v3717 = vmul.f32 %v3553, %v3685
        %v3718 = vmul.f32 %v3555, %v3686
        %v3719 = vmul.f32 %v3557, %v3687
        %v3720 = vmul.f32 %v3559, %v3688
        %v3721 = vmul.f32 %v3561, %v3689
        %v3722 = vpack.c.bf16 %v3690, %v3690
        %v3723 = vpack.c.bf16 %v3691, %v3691
        %v3724 = vpack.c.bf16 %v3692, %v3692
        %v3725 = vpack.c.bf16 %v3693, %v3693
        %v3726 = vpack.c.bf16 %v3694, %v3694
        %v3727 = vpack.c.bf16 %v3695, %v3695
        %v3728 = vpack.c.bf16 %v3696, %v3696
        %v3729 = vpack.c.bf16 %v3697, %v3697
        %v3730 = vpack.c.bf16 %v3698, %v3698
        %v3731 = vpack.c.bf16 %v3699, %v3699
        %v3732 = vpack.c.bf16 %v3700, %v3700
        %v3733 = vpack.c.bf16 %v3701, %v3701
        %v3734 = vpack.c.bf16 %v3702, %v3702
        %v3735 = vpack.c.bf16 %v3703, %v3703
        %v3736 = vpack.c.bf16 %v3704, %v3704
        %v3737 = vpack.c.bf16 %v3705, %v3705
        %v3738 = vpack.c.bf16 %v3706, %v3706
        %v3739 = vpack.c.bf16 %v3707, %v3707
        %v3740 = vpack.c.bf16 %v3708, %v3708
        %v3741 = vpack.c.bf16 %v3709, %v3709
        %v3742 = vpack.c.bf16 %v3710, %v3710
        %v3743 = vpack.c.bf16 %v3711, %v3711
        %v3744 = vpack.c.bf16 %v3712, %v3712
        %v3745 = vpack.c.bf16 %v3713, %v3713
        %v3746 = vpack.c.bf16 %v3714, %v3714
        %v3747 = vpack.c.bf16 %v3715, %v3715
        %v3748 = vpack.c.bf16 %v3716, %v3716
        %v3749 = vpack.c.bf16 %v3717, %v3717
        %v3750 = vpack.c.bf16 %v3718, %v3718
        %v3751 = vpack.c.bf16 %v3719, %v3719
        %v3752 = vpack.c.bf16 %v3720, %v3720
        %v3753 = vpack.c.bf16 %v3721, %v3721
        %v3756 = vunpack.c.l.b16 %v3722
        %v3757 = vunpack.c.l.b16 %v3723
        %v3758 = vpack.c.b16 %v3757, %v3756
        %v3759 = vunpack.c.l.b16 %v2873
        %v3760 = vunpack.c.l.b16 %v2884
        %v3761 = vpack.c.b16 %v3760, %v3759
        %v3763 = vsel %vm3368, %v3758, 0
        %vm3765 = vcmask 1043456
        %vm3766 = vcmask 1044480
        %v3767 = vsel %vm3765, 4294967295, 65535
        %v3768 = vsel %vm3766, %v3767, 0
        %v3770 = vand.u32 %v3761, %v3768
        %3772 = vmatpush.bf16.msra.mxu0 0
        %3773 = vmatpush.bf16.msra.mxu0 0
        %3774 = vmatpush.bf16.msra.mxu0 0
        %3775 = vmatpush.bf16.msra.mxu0 0
        %3776 = vmatpush.bf16.msra.mxu0 0
        %3777 = vmatpush.bf16.msra.mxu0 0
        %3778 = vmatpush.bf16.msra.mxu0 0
        %3779 = vmatpush.bf16.msra.mxu0 %v3770
        %3780 = vmatmul.bf16.gmra.mxu0 %v3763
        %v3781 = vpop.f32.mrf.mxu0
        %v3782 = vadd.f32 0.0, %v3781
        %v3783 = vpop.f32.mrf.mxu0
        %v3784 = vadd.f32 0.0, %v3783
        %3785 = vdwg.mxu0
        %v3788 = vunpack.c.l.b16 %v3724
        %v3789 = vunpack.c.l.b16 %v3725
        %v3790 = vpack.c.b16 %v3789, %v3788
        %v3791 = vunpack.c.l.b16 %v2876
        %v3792 = vunpack.c.l.b16 %v2886
        %v3793 = vpack.c.b16 %v3792, %v3791
        %v3795 = vsel %vm3368, %v3790, 0
        %v3798 = vand.u32 %v3793, %v3768
        %3800 = vmatpush.bf16.msra.mxu0 0
        %3801 = vmatpush.bf16.msra.mxu0 0
        %3802 = vmatpush.bf16.msra.mxu0 0
        %3803 = vmatpush.bf16.msra.mxu0 0
        %3804 = vmatpush.bf16.msra.mxu0 0
        %3805 = vmatpush.bf16.msra.mxu0 0
        %3806 = vmatpush.bf16.msra.mxu0 0
        %3807 = vmatpush.bf16.msra.mxu0 %v3798
        %3808 = vmatmul.bf16.gmra.mxu0 %v3795
        %v3809 = vpop.f32.mrf.mxu0
        %v3810 = vadd.f32 0.0, %v3809
        %v3811 = vpop.f32.mrf.mxu0
        %v3812 = vadd.f32 0.0, %v3811
        %3813 = vdwg.mxu0
        %v3816 = vunpack.c.l.b16 %v3726
        %v3817 = vunpack.c.l.b16 %v3727
        %v3818 = vpack.c.b16 %v3817, %v3816
        %v3819 = vunpack.c.l.b16 %v2879
        %v3820 = vunpack.c.l.b16 %v2888
        %v3821 = vpack.c.b16 %v3820, %v3819
        %v3823 = vsel %vm3368, %v3818, 0
        %v3826 = vand.u32 %v3821, %v3768
        %3828 = vmatpush.bf16.msra.mxu0 0
        %3829 = vmatpush.bf16.msra.mxu0 0
        %3830 = vmatpush.bf16.msra.mxu0 0
        %3831 = vmatpush.bf16.msra.mxu0 0
        %3832 = vmatpush.bf16.msra.mxu0 0
        %3833 = vmatpush.bf16.msra.mxu0 0
        %3834 = vmatpush.bf16.msra.mxu0 0
        %3835 = vmatpush.bf16.msra.mxu0 %v3826
        %3836 = vmatmul.bf16.gmra.mxu0 %v3823
        %v3837 = vpop.f32.mrf.mxu0
        %v3838 = vadd.f32 0.0, %v3837
        %v3839 = vpop.f32.mrf.mxu0
        %v3840 = vadd.f32 0.0, %v3839
        %3841 = vdwg.mxu0
        %v3844 = vunpack.c.l.b16 %v3728
        %v3845 = vunpack.c.l.b16 %v3729
        %v3846 = vpack.c.b16 %v3845, %v3844
        %v3847 = vunpack.c.l.b16 %v2882
        %v3848 = vunpack.c.l.b16 %v2890
        %v3849 = vpack.c.b16 %v3848, %v3847
        %v3851 = vsel %vm3368, %v3846, 0
        %v3854 = vand.u32 %v3849, %v3768
        %3856 = vmatpush.bf16.msra.mxu0 0
        %3857 = vmatpush.bf16.msra.mxu0 0
        %3858 = vmatpush.bf16.msra.mxu0 0
        %3859 = vmatpush.bf16.msra.mxu0 0
        %3860 = vmatpush.bf16.msra.mxu0 0
        %3861 = vmatpush.bf16.msra.mxu0 0
        %3862 = vmatpush.bf16.msra.mxu0 0
        %3863 = vmatpush.bf16.msra.mxu0 %v3854
        %3864 = vmatmul.bf16.gmra.mxu0 %v3851
        %v3865 = vpop.f32.mrf.mxu0
        %v3866 = vadd.f32 0.0, %v3865
        %v3867 = vpop.f32.mrf.mxu0
        %v3868 = vadd.f32 0.0, %v3867
        %3869 = vdwg.mxu0
        %v3872 = vunpack.c.l.b16 %v3730
        %v3873 = vunpack.c.l.b16 %v3731
        %v3874 = vpack.c.b16 %v3873, %v3872
        %v3875 = vunpack.c.l.b16 %v2893
        %v3876 = vunpack.c.l.b16 %v2904
        %v3877 = vpack.c.b16 %v3876, %v3875
        %v3879 = vsel %vm3368, %v3874, 0
        %v3882 = vand.u32 %v3877, %v3768
        %3884 = vmatpush.bf16.msra.mxu0 0
        %3885 = vmatpush.bf16.msra.mxu0 0
        %3886 = vmatpush.bf16.msra.mxu0 0
        %3887 = vmatpush.bf16.msra.mxu0 0
        %3888 = vmatpush.bf16.msra.mxu0 0
        %3889 = vmatpush.bf16.msra.mxu0 0
        %3890 = vmatpush.bf16.msra.mxu0 0
        %3891 = vmatpush.bf16.msra.mxu0 %v3882
        %3892 = vmatmul.bf16.gmra.mxu0 %v3879
        %v3893 = vpop.f32.mrf.mxu0
        %v3894 = vadd.f32 0.0, %v3893
        %v3895 = vpop.f32.mrf.mxu0
        %v3896 = vadd.f32 0.0, %v3895
        %3897 = vdwg.mxu0
        %v3900 = vunpack.c.l.b16 %v3732
        %v3901 = vunpack.c.l.b16 %v3733
        %v3902 = vpack.c.b16 %v3901, %v3900
        %v3903 = vunpack.c.l.b16 %v2896
        %v3904 = vunpack.c.l.b16 %v2906
        %v3905 = vpack.c.b16 %v3904, %v3903
        %v3907 = vsel %vm3368, %v3902, 0
        %v3910 = vand.u32 %v3905, %v3768
        %3912 = vmatpush.bf16.msra.mxu0 0
        %3913 = vmatpush.bf16.msra.mxu0 0
        %3914 = vmatpush.bf16.msra.mxu0 0
        %3915 = vmatpush.bf16.msra.mxu0 0
        %3916 = vmatpush.bf16.msra.mxu0 0
        %3917 = vmatpush.bf16.msra.mxu0 0
        %3918 = vmatpush.bf16.msra.mxu0 0
        %3919 = vmatpush.bf16.msra.mxu0 %v3910
        %3920 = vmatmul.bf16.gmra.mxu0 %v3907
        %v3921 = vpop.f32.mrf.mxu0
        %v3922 = vadd.f32 0.0, %v3921
        %v3923 = vpop.f32.mrf.mxu0
        %v3924 = vadd.f32 0.0, %v3923
        %3925 = vdwg.mxu0
        %v3928 = vunpack.c.l.b16 %v3734
        %v3929 = vunpack.c.l.b16 %v3735
        %v3930 = vpack.c.b16 %v3929, %v3928
        %v3931 = vunpack.c.l.b16 %v2899
        %v3932 = vunpack.c.l.b16 %v2908
        %v3933 = vpack.c.b16 %v3932, %v3931
        %v3935 = vsel %vm3368, %v3930, 0
        %v3938 = vand.u32 %v3933, %v3768
        %3940 = vmatpush.bf16.msra.mxu0 0
        %3941 = vmatpush.bf16.msra.mxu0 0
        %3942 = vmatpush.bf16.msra.mxu0 0
        %3943 = vmatpush.bf16.msra.mxu0 0
        %3944 = vmatpush.bf16.msra.mxu0 0
        %3945 = vmatpush.bf16.msra.mxu0 0
        %3946 = vmatpush.bf16.msra.mxu0 0
        %3947 = vmatpush.bf16.msra.mxu0 %v3938
        %3948 = vmatmul.bf16.gmra.mxu0 %v3935
        %v3949 = vpop.f32.mrf.mxu0
        %v3950 = vadd.f32 0.0, %v3949
        %v3951 = vpop.f32.mrf.mxu0
        %v3952 = vadd.f32 0.0, %v3951
        %3953 = vdwg.mxu0
        %v3956 = vunpack.c.l.b16 %v3736
        %v3957 = vunpack.c.l.b16 %v3737
        %v3958 = vpack.c.b16 %v3957, %v3956
        %v3959 = vunpack.c.l.b16 %v2902
        %v3960 = vunpack.c.l.b16 %v2910
        %v3961 = vpack.c.b16 %v3960, %v3959
        %v3963 = vsel %vm3368, %v3958, 0
        %v3966 = vand.u32 %v3961, %v3768
        %3968 = vmatpush.bf16.msra.mxu0 0
        %3969 = vmatpush.bf16.msra.mxu0 0
        %3970 = vmatpush.bf16.msra.mxu0 0
        %3971 = vmatpush.bf16.msra.mxu0 0
        %3972 = vmatpush.bf16.msra.mxu0 0
        %3973 = vmatpush.bf16.msra.mxu0 0
        %3974 = vmatpush.bf16.msra.mxu0 0
        %3975 = vmatpush.bf16.msra.mxu0 %v3966
        %3976 = vmatmul.bf16.gmra.mxu0 %v3963
        %v3977 = vpop.f32.mrf.mxu0
        %v3978 = vadd.f32 0.0, %v3977
        %v3979 = vpop.f32.mrf.mxu0
        %v3980 = vadd.f32 0.0, %v3979
        %3981 = vdwg.mxu0
        %v3984 = vunpack.c.l.b16 %v3738
        %v3985 = vunpack.c.l.b16 %v3739
        %v3986 = vpack.c.b16 %v3985, %v3984
        %v3987 = vunpack.c.l.b16 %v2913
        %v3988 = vunpack.c.l.b16 %v2924
        %v3989 = vpack.c.b16 %v3988, %v3987
        %v3991 = vsel %vm3368, %v3986, 0
        %v3994 = vand.u32 %v3989, %v3768
        %3996 = vmatpush.bf16.msra.mxu0 0
        %3997 = vmatpush.bf16.msra.mxu0 0
        %3998 = vmatpush.bf16.msra.mxu0 0
        %3999 = vmatpush.bf16.msra.mxu0 0
        %4000 = vmatpush.bf16.msra.mxu0 0
        %4001 = vmatpush.bf16.msra.mxu0 0
        %4002 = vmatpush.bf16.msra.mxu0 0
        %4003 = vmatpush.bf16.msra.mxu0 %v3994
        %4004 = vmatmul.bf16.gmra.mxu0 %v3991
        %v4005 = vpop.f32.mrf.mxu0
        %v4006 = vadd.f32 0.0, %v4005
        %v4007 = vpop.f32.mrf.mxu0
        %v4008 = vadd.f32 0.0, %v4007
        %4009 = vdwg.mxu0
        %v4012 = vunpack.c.l.b16 %v3740
        %v4013 = vunpack.c.l.b16 %v3741
        %v4014 = vpack.c.b16 %v4013, %v4012
        %v4015 = vunpack.c.l.b16 %v2916
        %v4016 = vunpack.c.l.b16 %v2926
        %v4017 = vpack.c.b16 %v4016, %v4015
        %v4019 = vsel %vm3368, %v4014, 0
        %v4022 = vand.u32 %v4017, %v3768
        %4024 = vmatpush.bf16.msra.mxu0 0
        %4025 = vmatpush.bf16.msra.mxu0 0
        %4026 = vmatpush.bf16.msra.mxu0 0
        %4027 = vmatpush.bf16.msra.mxu0 0
        %4028 = vmatpush.bf16.msra.mxu0 0
        %4029 = vmatpush.bf16.msra.mxu0 0
        %4030 = vmatpush.bf16.msra.mxu0 0
        %4031 = vmatpush.bf16.msra.mxu0 %v4022
        %4032 = vmatmul.bf16.gmra.mxu0 %v4019
        %v4033 = vpop.f32.mrf.mxu0
        %v4034 = vadd.f32 0.0, %v4033
        %v4035 = vpop.f32.mrf.mxu0
        %v4036 = vadd.f32 0.0, %v4035
        %4037 = vdwg.mxu0
        %v4040 = vunpack.c.l.b16 %v3742
        %v4041 = vunpack.c.l.b16 %v3743
        %v4042 = vpack.c.b16 %v4041, %v4040
        %v4043 = vunpack.c.l.b16 %v2919
        %v4044 = vunpack.c.l.b16 %v2928
        %v4045 = vpack.c.b16 %v4044, %v4043
        %v4047 = vsel %vm3368, %v4042, 0
        %v4050 = vand.u32 %v4045, %v3768
        %4052 = vmatpush.bf16.msra.mxu0 0
        %4053 = vmatpush.bf16.msra.mxu0 0
        %4054 = vmatpush.bf16.msra.mxu0 0
        %4055 = vmatpush.bf16.msra.mxu0 0
        %4056 = vmatpush.bf16.msra.mxu0 0
        %4057 = vmatpush.bf16.msra.mxu0 0
        %4058 = vmatpush.bf16.msra.mxu0 0
        %4059 = vmatpush.bf16.msra.mxu0 %v4050
        %4060 = vmatmul.bf16.gmra.mxu0 %v4047
        %v4061 = vpop.f32.mrf.mxu0
        %v4062 = vadd.f32 0.0, %v4061
        %v4063 = vpop.f32.mrf.mxu0
        %v4064 = vadd.f32 0.0, %v4063
        %4065 = vdwg.mxu0
        %v4068 = vunpack.c.l.b16 %v3744
        %v4069 = vunpack.c.l.b16 %v3745
        %v4070 = vpack.c.b16 %v4069, %v4068
        %v4071 = vunpack.c.l.b16 %v2922
        %v4072 = vunpack.c.l.b16 %v2930
        %v4073 = vpack.c.b16 %v4072, %v4071
        %v4075 = vsel %vm3368, %v4070, 0
        %v4078 = vand.u32 %v4073, %v3768
        %4080 = vmatpush.bf16.msra.mxu0 0
        %4081 = vmatpush.bf16.msra.mxu0 0
        %4082 = vmatpush.bf16.msra.mxu0 0
        %4083 = vmatpush.bf16.msra.mxu0 0
        %4084 = vmatpush.bf16.msra.mxu0 0
        %4085 = vmatpush.bf16.msra.mxu0 0
        %4086 = vmatpush.bf16.msra.mxu0 0
        %4087 = vmatpush.bf16.msra.mxu0 %v4078
        %4088 = vmatmul.bf16.gmra.mxu0 %v4075
        %v4089 = vpop.f32.mrf.mxu0
        %v4090 = vadd.f32 0.0, %v4089
        %v4091 = vpop.f32.mrf.mxu0
        %v4092 = vadd.f32 0.0, %v4091
        %4093 = vdwg.mxu0
        %v4096 = vunpack.c.l.b16 %v3746
        %v4097 = vunpack.c.l.b16 %v3747
        %v4098 = vpack.c.b16 %v4097, %v4096
        %v4099 = vunpack.c.l.b16 %v2933
        %v4100 = vunpack.c.l.b16 %v2944
        %v4101 = vpack.c.b16 %v4100, %v4099
        %v4103 = vsel %vm3368, %v4098, 0
        %v4106 = vand.u32 %v4101, %v3768
        %4108 = vmatpush.bf16.msra.mxu0 0
        %4109 = vmatpush.bf16.msra.mxu0 0
        %4110 = vmatpush.bf16.msra.mxu0 0
        %4111 = vmatpush.bf16.msra.mxu0 0
        %4112 = vmatpush.bf16.msra.mxu0 0
        %4113 = vmatpush.bf16.msra.mxu0 0
        %4114 = vmatpush.bf16.msra.mxu0 0
        %4115 = vmatpush.bf16.msra.mxu0 %v4106
        %4116 = vmatmul.bf16.gmra.mxu0 %v4103
        %v4117 = vpop.f32.mrf.mxu0
        %v4118 = vadd.f32 0.0, %v4117
        %v4119 = vpop.f32.mrf.mxu0
        %v4120 = vadd.f32 0.0, %v4119
        %4121 = vdwg.mxu0
        %v4124 = vunpack.c.l.b16 %v3748
        %v4125 = vunpack.c.l.b16 %v3749
        %v4126 = vpack.c.b16 %v4125, %v4124
        %v4127 = vunpack.c.l.b16 %v2936
        %v4128 = vunpack.c.l.b16 %v2946
        %v4129 = vpack.c.b16 %v4128, %v4127
        %v4131 = vsel %vm3368, %v4126, 0
        %v4134 = vand.u32 %v4129, %v3768
        %4136 = vmatpush.bf16.msra.mxu0 0
        %4137 = vmatpush.bf16.msra.mxu0 0
        %4138 = vmatpush.bf16.msra.mxu0 0
        %4139 = vmatpush.bf16.msra.mxu0 0
        %4140 = vmatpush.bf16.msra.mxu0 0
        %4141 = vmatpush.bf16.msra.mxu0 0
        %4142 = vmatpush.bf16.msra.mxu0 0
        %4143 = vmatpush.bf16.msra.mxu0 %v4134
        %4144 = vmatmul.bf16.gmra.mxu0 %v4131
        %v4145 = vpop.f32.mrf.mxu0
        %v4146 = vadd.f32 0.0, %v4145
        %v4147 = vpop.f32.mrf.mxu0
        %v4148 = vadd.f32 0.0, %v4147
        %4149 = vdwg.mxu0
        %v4152 = vunpack.c.l.b16 %v3750
        %v4153 = vunpack.c.l.b16 %v3751
        %v4154 = vpack.c.b16 %v4153, %v4152
        %v4155 = vunpack.c.l.b16 %v2939
        %v4156 = vunpack.c.l.b16 %v2948
        %v4157 = vpack.c.b16 %v4156, %v4155
        %v4159 = vsel %vm3368, %v4154, 0
        %v4162 = vand.u32 %v4157, %v3768
        %4164 = vmatpush.bf16.msra.mxu0 0
        %4165 = vmatpush.bf16.msra.mxu0 0
        %4166 = vmatpush.bf16.msra.mxu0 0
        %4167 = vmatpush.bf16.msra.mxu0 0
        %4168 = vmatpush.bf16.msra.mxu0 0
        %4169 = vmatpush.bf16.msra.mxu0 0
        %4170 = vmatpush.bf16.msra.mxu0 0
        %4171 = vmatpush.bf16.msra.mxu0 %v4162
        %4172 = vmatmul.bf16.gmra.mxu0 %v4159
        %v4173 = vpop.f32.mrf.mxu0
        %v4174 = vadd.f32 0.0, %v4173
        %v4175 = vpop.f32.mrf.mxu0
        %v4176 = vadd.f32 0.0, %v4175
        %4177 = vdwg.mxu0
        %v4180 = vunpack.c.l.b16 %v3752
        %v4181 = vunpack.c.l.b16 %v3753
        %v4182 = vpack.c.b16 %v4181, %v4180
        %v4183 = vunpack.c.l.b16 %v2942
        %v4184 = vunpack.c.l.b16 %v2950
        %v4185 = vpack.c.b16 %v4184, %v4183
        %v4187 = vsel %vm3368, %v4182, 0
        %v4190 = vand.u32 %v4185, %v3768
        %4192 = vmatpush.bf16.msra.mxu0 0
        %4193 = vmatpush.bf16.msra.mxu0 0
        %4194 = vmatpush.bf16.msra.mxu0 0
        %4195 = vmatpush.bf16.msra.mxu0 0
        %4196 = vmatpush.bf16.msra.mxu0 0
        %4197 = vmatpush.bf16.msra.mxu0 0
        %4198 = vmatpush.bf16.msra.mxu0 0
        %4199 = vmatpush.bf16.msra.mxu0 %v4190
        %4200 = vmatmul.bf16.gmra.mxu0 %v4187
        %v4201 = vpop.f32.mrf.mxu0
        %v4202 = vadd.f32 0.0, %v4201
        %v4203 = vpop.f32.mrf.mxu0
        %v4204 = vadd.f32 0.0, %v4203
        %4205 = vdwg.mxu0
        %v4206 = vrot.slane %v3838, 4
        %v4207 = vsel %vm358, %v4206, %v3782
        %v4208 = vrot.slane %v3782, 4
        %v4209 = vsel %vm358, %v3838, %v4208
        %v4211 = vunpack.c.l.s4 1983009808
        %v4212 = vunpack.c.0.s8 %v4211
        %v4213 = vperm.slane %v4207, %v4212
        %v4215 = vunpack.c.l.s4 1983009808
        %v4216 = vunpack.c.0.s8 %v4215
        %v4217 = vperm.slane %v4209, %v4216
        %v4218 = vrot.slane %v3866, 4
        %v4219 = vsel %vm358, %v4218, %v3810
        %v4220 = vrot.slane %v3810, 4
        %v4221 = vsel %vm358, %v3866, %v4220
        %v4223 = vunpack.c.l.s4 1983009808
        %v4224 = vunpack.c.0.s8 %v4223
        %v4225 = vperm.slane %v4219, %v4224
        %v4227 = vunpack.c.l.s4 1983009808
        %v4228 = vunpack.c.0.s8 %v4227
        %v4229 = vperm.slane %v4221, %v4228
        %v4230 = vrot.slane %v4225, 4
        %v4231 = vsel %vm358, %v4230, %v4213
        %v4232 = vrot.slane %v4213, 4
        %v4233 = vsel %vm358, %v4225, %v4232
        %v4235 = vunpack.c.l.s4 1934713408
        %v4236 = vunpack.c.0.s8 %v4235
        %v4237 = vperm.slane %v4231, %v4236
        %v4239 = vunpack.c.l.s4 1934713408
        %v4240 = vunpack.c.0.s8 %v4239
        %v4241 = vperm.slane %v4233, %v4240
        %v4242 = vrot.slane %v4229, 4
        %v4243 = vsel %vm358, %v4242, %v4217
        %v4244 = vrot.slane %v4217, 4
        %v4245 = vsel %vm358, %v4229, %v4244
        %v4247 = vunpack.c.l.s4 1934713408
        %v4248 = vunpack.c.0.s8 %v4247
        %v4249 = vperm.slane %v4243, %v4248
        %v4251 = vunpack.c.l.s4 1934713408
        %v4252 = vunpack.c.0.s8 %v4251
        %v4253 = vperm.slane %v4245, %v4252
        %v4254 = vrot.slane %v4237, 4
        %v4255 = vsel %vm358, 0.0, %v4254
        %v4256 = vrot.slane %v4241, 4
        %v4257 = vsel %vm358, 0.0, %v4256
        %v4258 = vrot.slane %v4249, 4
        %v4259 = vsel %vm358, 0.0, %v4258
        %v4260 = vrot.slane %v4253, 4
        %v4261 = vsel %vm358, 0.0, %v4260
        %v4262 = vrot.slane %v3840, 4
        %v4263 = vsel %vm358, %v4262, %v3784
        %v4265 = vunpack.c.l.s4 1983009808
        %v4266 = vunpack.c.0.s8 %v4265
        %v4267 = vperm.slane %v4263, %v4266
        %v4268 = vrot.slane %v3868, 4
        %v4269 = vsel %vm358, %v4268, %v3812
        %v4271 = vunpack.c.l.s4 1983009808
        %v4272 = vunpack.c.0.s8 %v4271
        %v4273 = vperm.slane %v4269, %v4272
        %v4274 = vrot.slane %v4273, 4
        %v4275 = vsel %vm358, %v4274, %v4267
        %v4277 = vunpack.c.l.s4 1934713408
        %v4278 = vunpack.c.0.s8 %v4277
        %v4279 = vperm.slane %v4275, %v4278
        %v4280 = vrot.slane %v3950, 4
        %v4281 = vsel %vm358, %v4280, %v3894
        %v4282 = vrot.slane %v3894, 4
        %v4283 = vsel %vm358, %v3950, %v4282
        %v4285 = vunpack.c.l.s4 1983009808
        %v4286 = vunpack.c.0.s8 %v4285
        %v4287 = vperm.slane %v4281, %v4286
        %v4289 = vunpack.c.l.s4 1983009808
        %v4290 = vunpack.c.0.s8 %v4289
        %v4291 = vperm.slane %v4283, %v4290
        %v4292 = vrot.slane %v3978, 4
        %v4293 = vsel %vm358, %v4292, %v3922
        %v4294 = vrot.slane %v3922, 4
        %v4295 = vsel %vm358, %v3978, %v4294
        %v4297 = vunpack.c.l.s4 1983009808
        %v4298 = vunpack.c.0.s8 %v4297
        %v4299 = vperm.slane %v4293, %v4298
        %v4301 = vunpack.c.l.s4 1983009808
        %v4302 = vunpack.c.0.s8 %v4301
        %v4303 = vperm.slane %v4295, %v4302
        %v4304 = vrot.slane %v4299, 4
        %v4305 = vsel %vm358, %v4304, %v4287
        %v4306 = vrot.slane %v4287, 4
        %v4307 = vsel %vm358, %v4299, %v4306
        %v4309 = vunpack.c.l.s4 1934713408
        %v4310 = vunpack.c.0.s8 %v4309
        %v4311 = vperm.slane %v4305, %v4310
        %v4313 = vunpack.c.l.s4 1934713408
        %v4314 = vunpack.c.0.s8 %v4313
        %v4315 = vperm.slane %v4307, %v4314
        %v4316 = vrot.slane %v4303, 4
        %v4317 = vsel %vm358, %v4316, %v4291
        %v4318 = vrot.slane %v4291, 4
        %v4319 = vsel %vm358, %v4303, %v4318
        %v4321 = vunpack.c.l.s4 1934713408
        %v4322 = vunpack.c.0.s8 %v4321
        %v4323 = vperm.slane %v4317, %v4322
        %v4325 = vunpack.c.l.s4 1934713408
        %v4326 = vunpack.c.0.s8 %v4325
        %v4327 = vperm.slane %v4319, %v4326
        %v4328 = vrot.slane %v4311, 4
        %v4329 = vsel %vm358, 0.0, %v4328
        %v4330 = vrot.slane %v4315, 4
        %v4331 = vsel %vm358, 0.0, %v4330
        %v4332 = vrot.slane %v4323, 4
        %v4333 = vsel %vm358, 0.0, %v4332
        %v4334 = vrot.slane %v4327, 4
        %v4335 = vsel %vm358, 0.0, %v4334
        %v4336 = vrot.slane %v3952, 4
        %v4337 = vsel %vm358, %v4336, %v3896
        %v4339 = vunpack.c.l.s4 1983009808
        %v4340 = vunpack.c.0.s8 %v4339
        %v4341 = vperm.slane %v4337, %v4340
        %v4342 = vrot.slane %v3980, 4
        %v4343 = vsel %vm358, %v4342, %v3924
        %v4345 = vunpack.c.l.s4 1983009808
        %v4346 = vunpack.c.0.s8 %v4345
        %v4347 = vperm.slane %v4343, %v4346
        %v4348 = vrot.slane %v4347, 4
        %v4349 = vsel %vm358, %v4348, %v4341
        %v4351 = vunpack.c.l.s4 1934713408
        %v4352 = vunpack.c.0.s8 %v4351
        %v4353 = vperm.slane %v4349, %v4352
        %v4354 = vrot.slane %v4062, 4
        %v4355 = vsel %vm358, %v4354, %v4006
        %v4356 = vrot.slane %v4006, 4
        %v4357 = vsel %vm358, %v4062, %v4356
        %v4359 = vunpack.c.l.s4 1983009808
        %v4360 = vunpack.c.0.s8 %v4359
        %v4361 = vperm.slane %v4355, %v4360
        %v4363 = vunpack.c.l.s4 1983009808
        %v4364 = vunpack.c.0.s8 %v4363
        %v4365 = vperm.slane %v4357, %v4364
        %v4366 = vrot.slane %v4090, 4
        %v4367 = vsel %vm358, %v4366, %v4034
        %v4368 = vrot.slane %v4034, 4
        %v4369 = vsel %vm358, %v4090, %v4368
        %v4371 = vunpack.c.l.s4 1983009808
        %v4372 = vunpack.c.0.s8 %v4371
        %v4373 = vperm.slane %v4367, %v4372
        %v4375 = vunpack.c.l.s4 1983009808
        %v4376 = vunpack.c.0.s8 %v4375
        %v4377 = vperm.slane %v4369, %v4376
        %v4378 = vrot.slane %v4373, 4
        %v4379 = vsel %vm358, %v4378, %v4361
        %v4380 = vrot.slane %v4361, 4
        %v4381 = vsel %vm358, %v4373, %v4380
        %v4383 = vunpack.c.l.s4 1934713408
        %v4384 = vunpack.c.0.s8 %v4383
        %v4385 = vperm.slane %v4379, %v4384
        %v4387 = vunpack.c.l.s4 1934713408
        %v4388 = vunpack.c.0.s8 %v4387
        %v4389 = vperm.slane %v4381, %v4388
        %v4390 = vrot.slane %v4377, 4
        %v4391 = vsel %vm358, %v4390, %v4365
        %v4392 = vrot.slane %v4365, 4
        %v4393 = vsel %vm358, %v4377, %v4392
        %v4395 = vunpack.c.l.s4 1934713408
        %v4396 = vunpack.c.0.s8 %v4395
        %v4397 = vperm.slane %v4391, %v4396
        %v4399 = vunpack.c.l.s4 1934713408
        %v4400 = vunpack.c.0.s8 %v4399
        %v4401 = vperm.slane %v4393, %v4400
        %v4402 = vrot.slane %v4385, 4
        %v4403 = vsel %vm358, 0.0, %v4402
        %v4404 = vrot.slane %v4389, 4
        %v4405 = vsel %vm358, 0.0, %v4404
        %v4406 = vrot.slane %v4397, 4
        %v4407 = vsel %vm358, 0.0, %v4406
        %v4408 = vrot.slane %v4401, 4
        %v4409 = vsel %vm358, 0.0, %v4408
        %v4410 = vrot.slane %v4064, 4
        %v4411 = vsel %vm358, %v4410, %v4008
        %v4413 = vunpack.c.l.s4 1983009808
        %v4414 = vunpack.c.0.s8 %v4413
        %v4415 = vperm.slane %v4411, %v4414
        %v4416 = vrot.slane %v4092, 4
        %v4417 = vsel %vm358, %v4416, %v4036
        %v4419 = vunpack.c.l.s4 1983009808
        %v4420 = vunpack.c.0.s8 %v4419
        %v4421 = vperm.slane %v4417, %v4420
        %v4422 = vrot.slane %v4421, 4
        %v4423 = vsel %vm358, %v4422, %v4415
        %v4425 = vunpack.c.l.s4 1934713408
        %v4426 = vunpack.c.0.s8 %v4425
        %v4427 = vperm.slane %v4423, %v4426
        %v4428 = vrot.slane %v4174, 4
        %v4429 = vsel %vm358, %v4428, %v4118
        %v4430 = vrot.slane %v4118, 4
        %v4431 = vsel %vm358, %v4174, %v4430
        %v4433 = vunpack.c.l.s4 1983009808
        %v4434 = vunpack.c.0.s8 %v4433
        %v4435 = vperm.slane %v4429, %v4434
        %v4437 = vunpack.c.l.s4 1983009808
        %v4438 = vunpack.c.0.s8 %v4437
        %v4439 = vperm.slane %v4431, %v4438
        %v4440 = vrot.slane %v4202, 4
        %v4441 = vsel %vm358, %v4440, %v4146
        %v4442 = vrot.slane %v4146, 4
        %v4443 = vsel %vm358, %v4202, %v4442
        %v4445 = vunpack.c.l.s4 1983009808
        %v4446 = vunpack.c.0.s8 %v4445
        %v4447 = vperm.slane %v4441, %v4446
        %v4449 = vunpack.c.l.s4 1983009808
        %v4450 = vunpack.c.0.s8 %v4449
        %v4451 = vperm.slane %v4443, %v4450
        %v4452 = vrot.slane %v4447, 4
        %v4453 = vsel %vm358, %v4452, %v4435
        %v4454 = vrot.slane %v4435, 4
        %v4455 = vsel %vm358, %v4447, %v4454
        %v4457 = vunpack.c.l.s4 1934713408
        %v4458 = vunpack.c.0.s8 %v4457
        %v4459 = vperm.slane %v4453, %v4458
        %v4461 = vunpack.c.l.s4 1934713408
        %v4462 = vunpack.c.0.s8 %v4461
        %v4463 = vperm.slane %v4455, %v4462
        %v4464 = vrot.slane %v4451, 4
        %v4465 = vsel %vm358, %v4464, %v4439
        %v4466 = vrot.slane %v4439, 4
        %v4467 = vsel %vm358, %v4451, %v4466
        %v4469 = vunpack.c.l.s4 1934713408
        %v4470 = vunpack.c.0.s8 %v4469
        %v4471 = vperm.slane %v4465, %v4470
        %v4473 = vunpack.c.l.s4 1934713408
        %v4474 = vunpack.c.0.s8 %v4473
        %v4475 = vperm.slane %v4467, %v4474
        %v4476 = vrot.slane %v4459, 4
        %v4477 = vsel %vm358, 0.0, %v4476
        %v4478 = vrot.slane %v4463, 4
        %v4479 = vsel %vm358, 0.0, %v4478
        %v4480 = vrot.slane %v4471, 4
        %v4481 = vsel %vm358, 0.0, %v4480
        %v4482 = vrot.slane %v4475, 4
        %v4483 = vsel %vm358, 0.0, %v4482
        %v4484 = vrot.slane %v4176, 4
        %v4485 = vsel %vm358, %v4484, %v4120
        %v4487 = vunpack.c.l.s4 1983009808
        %v4488 = vunpack.c.0.s8 %v4487
        %v4489 = vperm.slane %v4485, %v4488
        %v4490 = vrot.slane %v4204, 4
        %v4491 = vsel %vm358, %v4490, %v4148
        %v4493 = vunpack.c.l.s4 1983009808
        %v4494 = vunpack.c.0.s8 %v4493
        %v4495 = vperm.slane %v4491, %v4494
        %v4496 = vrot.slane %v4495, 4
        %v4497 = vsel %vm358, %v4496, %v4489
        %v4499 = vunpack.c.l.s4 1934713408
        %v4500 = vunpack.c.0.s8 %v4499
        %v4501 = vperm.slane %v4497, %v4500
        %v4502 = vsel %vm358, %v4256, %v4237
        %v4504 = vunpack.c.l.s4 1983009808
        %v4505 = vunpack.c.0.s8 %v4504
        %v4506 = vperm.slane %v4502, %v4505
        %v4507 = vrot.slane %v4257, 4
        %v4508 = vsel %vm358, %v4507, %v4255
        %v4510 = vunpack.c.l.s4 1983009808
        %v4511 = vunpack.c.0.s8 %v4510
        %v4512 = vperm.slane %v4508, %v4511
        %v4513 = vsel %vm358, %v4260, %v4249
        %v4515 = vunpack.c.l.s4 1983009808
        %v4516 = vunpack.c.0.s8 %v4515
        %v4517 = vperm.slane %v4513, %v4516
        %v4518 = vrot.slane %v4261, 4
        %v4519 = vsel %vm358, %v4518, %v4259
        %v4521 = vunpack.c.l.s4 1983009808
        %v4522 = vunpack.c.0.s8 %v4521
        %v4523 = vperm.slane %v4519, %v4522
        %v4524 = vrot.slane %v4512, 4
        %v4525 = vsel %vm358, %v4524, %v4506
        %v4526 = vrot.slane %v4506, 4
        %v4527 = vsel %vm358, %v4512, %v4526
        %v4529 = vunpack.c.l.s4 1934713408
        %v4530 = vunpack.c.0.s8 %v4529
        %v4531 = vperm.slane %v4525, %v4530
        %v4533 = vunpack.c.l.s4 1934713408
        %v4534 = vunpack.c.0.s8 %v4533
        %v4535 = vperm.slane %v4527, %v4534
        %v4536 = vrot.slane %v4523, 4
        %v4537 = vsel %vm358, %v4536, %v4517
        %v4538 = vrot.slane %v4517, 4
        %v4539 = vsel %vm358, %v4523, %v4538
        %v4541 = vunpack.c.l.s4 1934713408
        %v4542 = vunpack.c.0.s8 %v4541
        %v4543 = vperm.slane %v4537, %v4542
        %v4545 = vunpack.c.l.s4 1934713408
        %v4546 = vunpack.c.0.s8 %v4545
        %v4547 = vperm.slane %v4539, %v4546
        %v4548 = vrot.slane %v4543, 4
        %v4549 = vsel %vm358, %v4548, %v4531
        %v4550 = vrot.slane %v4531, 4
        %v4551 = vsel %vm358, %v4543, %v4550
        %v4552 = vrot.slane %v4547, 4
        %v4553 = vsel %vm358, %v4552, %v4535
        %v4554 = vrot.slane %v4535, 4
        %v4555 = vsel %vm358, %v4547, %v4554
        %v4556 = vrot.slane %v4329, 4
        %v4557 = vsel %vm358, %v4556, %v4279
        %v4559 = vunpack.c.l.s4 1983009808
        %v4560 = vunpack.c.0.s8 %v4559
        %v4561 = vperm.slane %v4557, %v4560
        %v4562 = vsel %vm358, %v4330, %v4311
        %v4564 = vunpack.c.l.s4 1983009808
        %v4565 = vunpack.c.0.s8 %v4564
        %v4566 = vperm.slane %v4562, %v4565
        %v4567 = vrot.slane %v4333, 4
        %v4568 = vsel %vm358, %v4567, %v4331
        %v4570 = vunpack.c.l.s4 1983009808
        %v4571 = vunpack.c.0.s8 %v4570
        %v4572 = vperm.slane %v4568, %v4571
        %v4573 = vsel %vm358, %v4334, %v4323
        %v4575 = vunpack.c.l.s4 1983009808
        %v4576 = vunpack.c.0.s8 %v4575
        %v4577 = vperm.slane %v4573, %v4576
        %v4578 = vrot.slane %v4566, 4
        %v4579 = vsel %vm358, %v4578, %v4561
        %v4580 = vrot.slane %v4561, 4
        %v4581 = vsel %vm358, %v4566, %v4580
        %v4583 = vunpack.c.l.s4 1934713408
        %v4584 = vunpack.c.0.s8 %v4583
        %v4585 = vperm.slane %v4579, %v4584
        %v4587 = vunpack.c.l.s4 1934713408
        %v4588 = vunpack.c.0.s8 %v4587
        %v4589 = vperm.slane %v4581, %v4588
        %v4590 = vrot.slane %v4577, 4
        %v4591 = vsel %vm358, %v4590, %v4572
        %v4592 = vrot.slane %v4572, 4
        %v4593 = vsel %vm358, %v4577, %v4592
        %v4595 = vunpack.c.l.s4 1934713408
        %v4596 = vunpack.c.0.s8 %v4595
        %v4597 = vperm.slane %v4591, %v4596
        %v4599 = vunpack.c.l.s4 1934713408
        %v4600 = vunpack.c.0.s8 %v4599
        %v4601 = vperm.slane %v4593, %v4600
        %v4602 = vrot.slane %v4597, 4
        %v4603 = vsel %vm358, %v4602, %v4585
        %v4604 = vrot.slane %v4585, 4
        %v4605 = vsel %vm358, %v4597, %v4604
        %v4606 = vrot.slane %v4601, 4
        %v4607 = vsel %vm358, %v4606, %v4589
        %v4608 = vrot.slane %v4589, 4
        %v4609 = vsel %vm358, %v4601, %v4608
        %v4610 = vsel %vm358, %v4402, %v4335
        %v4612 = vunpack.c.l.s4 1983009808
        %v4613 = vunpack.c.0.s8 %v4612
        %v4614 = vperm.slane %v4610, %v4613
        %v4615 = vrot.slane %v4403, 4
        %v4616 = vsel %vm358, %v4615, %v4353
        %v4618 = vunpack.c.l.s4 1983009808
        %v4619 = vunpack.c.0.s8 %v4618
        %v4620 = vperm.slane %v4616, %v4619
        %v4621 = vsel %vm358, %v4406, %v4389
        %v4623 = vunpack.c.l.s4 1983009808
        %v4624 = vunpack.c.0.s8 %v4623
        %v4625 = vperm.slane %v4621, %v4624
        %v4626 = vrot.slane %v4407, 4
        %v4627 = vsel %vm358, %v4626, %v4405
        %v4629 = vunpack.c.l.s4 1983009808
        %v4630 = vunpack.c.0.s8 %v4629
        %v4631 = vperm.slane %v4627, %v4630
        %v4632 = vrot.slane %v4620, 4
        %v4633 = vsel %vm358, %v4632, %v4614
        %v4634 = vrot.slane %v4614, 4
        %v4635 = vsel %vm358, %v4620, %v4634
        %v4637 = vunpack.c.l.s4 1934713408
        %v4638 = vunpack.c.0.s8 %v4637
        %v4639 = vperm.slane %v4633, %v4638
        %v4641 = vunpack.c.l.s4 1934713408
        %v4642 = vunpack.c.0.s8 %v4641
        %v4643 = vperm.slane %v4635, %v4642
        %v4644 = vrot.slane %v4631, 4
        %v4645 = vsel %vm358, %v4644, %v4625
        %v4646 = vrot.slane %v4625, 4
        %v4647 = vsel %vm358, %v4631, %v4646
        %v4649 = vunpack.c.l.s4 1934713408
        %v4650 = vunpack.c.0.s8 %v4649
        %v4651 = vperm.slane %v4645, %v4650
        %v4653 = vunpack.c.l.s4 1934713408
        %v4654 = vunpack.c.0.s8 %v4653
        %v4655 = vperm.slane %v4647, %v4654
        %v4656 = vrot.slane %v4651, 4
        %v4657 = vsel %vm358, %v4656, %v4639
        %v4658 = vrot.slane %v4639, 4
        %v4659 = vsel %vm358, %v4651, %v4658
        %v4660 = vrot.slane %v4655, 4
        %v4661 = vsel %vm358, %v4660, %v4643
        %v4662 = vrot.slane %v4643, 4
        %v4663 = vsel %vm358, %v4655, %v4662
        %v4664 = vrot.slane %v4427, 4
        %v4665 = vsel %vm358, %v4664, %v4401
        %v4667 = vunpack.c.l.s4 1983009808
        %v4668 = vunpack.c.0.s8 %v4667
        %v4669 = vperm.slane %v4665, %v4668
        %v4670 = vsel %vm358, %v4476, %v4409
        %v4672 = vunpack.c.l.s4 1983009808
        %v4673 = vunpack.c.0.s8 %v4672
        %v4674 = vperm.slane %v4670, %v4673
        %v4675 = vrot.slane %v4479, 4
        %v4676 = vsel %vm358, %v4675, %v4477
        %v4678 = vunpack.c.l.s4 1983009808
        %v4679 = vunpack.c.0.s8 %v4678
        %v4680 = vperm.slane %v4676, %v4679
        %v4681 = vsel %vm358, %v4480, %v4463
        %v4683 = vunpack.c.l.s4 1983009808
        %v4684 = vunpack.c.0.s8 %v4683
        %v4685 = vperm.slane %v4681, %v4684
        %v4686 = vrot.slane %v4674, 4
        %v4687 = vsel %vm358, %v4686, %v4669
        %v4688 = vrot.slane %v4669, 4
        %v4689 = vsel %vm358, %v4674, %v4688
        %v4691 = vunpack.c.l.s4 1934713408
        %v4692 = vunpack.c.0.s8 %v4691
        %v4693 = vperm.slane %v4687, %v4692
        %v4695 = vunpack.c.l.s4 1934713408
        %v4696 = vunpack.c.0.s8 %v4695
        %v4697 = vperm.slane %v4689, %v4696
        %v4698 = vrot.slane %v4685, 4
        %v4699 = vsel %vm358, %v4698, %v4680
        %v4700 = vrot.slane %v4680, 4
        %v4701 = vsel %vm358, %v4685, %v4700
        %v4703 = vunpack.c.l.s4 1934713408
        %v4704 = vunpack.c.0.s8 %v4703
        %v4705 = vperm.slane %v4699, %v4704
        %v4707 = vunpack.c.l.s4 1934713408
        %v4708 = vunpack.c.0.s8 %v4707
        %v4709 = vperm.slane %v4701, %v4708
        %v4710 = vrot.slane %v4705, 4
        %v4711 = vsel %vm358, %v4710, %v4693
        %v4712 = vrot.slane %v4693, 4
        %v4713 = vsel %vm358, %v4705, %v4712
        %v4714 = vrot.slane %v4709, 4
        %v4715 = vsel %vm358, %v4714, %v4697
        %v4716 = vrot.slane %v4697, 4
        %v4717 = vsel %vm358, %v4709, %v4716
        %v4718 = vrot.slane %v4483, 4
        %v4719 = vsel %vm358, %v4718, %v4481
        %v4721 = vunpack.c.l.s4 1983009808
        %v4722 = vunpack.c.0.s8 %v4721
        %v4723 = vperm.slane %v4719, %v4722
        %v4724 = vrot.slane %v4501, 4
        %v4725 = vsel %vm358, %v4724, %v4475
        %v4727 = vunpack.c.l.s4 1983009808
        %v4728 = vunpack.c.0.s8 %v4727
        %v4729 = vperm.slane %v4725, %v4728
        %v4730 = vrot.slane %v4729, 4
        %v4731 = vsel %vm358, %v4730, %v4723
        %v4732 = vrot.slane %v4723, 4
        %v4733 = vsel %vm358, %v4729, %v4732
        %v4735 = vunpack.c.l.s4 1934713408
        %v4736 = vunpack.c.0.s8 %v4735
        %v4737 = vperm.slane %v4731, %v4736
        %v4739 = vunpack.c.l.s4 1934713408
        %v4740 = vunpack.c.0.s8 %v4739
        %v4741 = vperm.slane %v4733, %v4740
        %v4742 = vrot.slane %v4737, 4
        %v4743 = vsel %vm358, 0.0, %v4742
        %v4744 = vrot.slane %v4741, 4
        %v4745 = vsel %vm358, 0.0, %v4744
        %4751 = vrot.lane.b32.xlu0 %v4551, 16
        %v4752 = vpop.permute.xlu0 %4751
        %4753 = vrot.lane.b32.xlu0 %v4605, 16
        %v4754 = vpop.permute.xlu0 %4753
        %4755 = vrot.lane.b32.xlu0 %v4659, 16
        %v4756 = vpop.permute.xlu0 %4755
        %4757 = vrot.lane.b32.xlu0 %v4713, 16
        %v4758 = vpop.permute.xlu0 %4757
        %4759 = vrot.lane.b32.xlu0 %v4743, 16
        %v4760 = vpop.permute.xlu0 %4759
        %4771 = vrot.lane.b32.xlu0 %v4553, 32
        %v4772 = vpop.permute.xlu0 %4771
        %4773 = vrot.lane.b32.xlu0 %v4607, 32
        %v4774 = vpop.permute.xlu0 %4773
        %4775 = vrot.lane.b32.xlu0 %v4661, 32
        %v4776 = vpop.permute.xlu0 %4775
        %4777 = vrot.lane.b32.xlu0 %v4715, 32
        %v4778 = vpop.permute.xlu0 %4777
        %4779 = vrot.lane.b32.xlu0 %v4741, 32
        %v4780 = vpop.permute.xlu0 %4779
        %4791 = vrot.lane.b32.xlu0 %v4555, 48
        %v4792 = vpop.permute.xlu0 %4791
        %4793 = vrot.lane.b32.xlu0 %v4609, 48
        %v4794 = vpop.permute.xlu0 %4793
        %4795 = vrot.lane.b32.xlu0 %v4663, 48
        %v4796 = vpop.permute.xlu0 %4795
        %4797 = vrot.lane.b32.xlu0 %v4717, 48
        %v4798 = vpop.permute.xlu0 %4797
        %4799 = vrot.lane.b32.xlu0 %v4745, 48
        %v4800 = vpop.permute.xlu0 %4799
        %v4806 = vsel %vm2957, %v4549, %v4752
        %v4807 = vsel %vm2957, %v4603, %v4754
        %v4808 = vsel %vm2957, %v4657, %v4756
        %v4809 = vsel %vm2957, %v4711, %v4758
        %v4810 = vsel %vm2957, %v4737, %v4760
        %vm4811 = vcmask 261120
        %v4812 = vsel %vm4811, %v4806, %v4772
        %v4813 = vsel %vm4811, %v4807, %v4774
        %v4814 = vsel %vm4811, %v4808, %v4776
        %v4815 = vsel %vm4811, %v4809, %v4778
        %v4816 = vsel %vm4811, %v4810, %v4780
        %vm4817 = vcmask 392192
        %v4818 = vsel %vm4817, %v4812, %v4792
        %v4819 = vsel %vm4817, %v4813, %v4794
        %v4820 = vsel %vm4817, %v4814, %v4796
        %v4821 = vsel %vm4817, %v4815, %v4798
        %v4822 = vsel %vm4817, %v4816, %v4800
        %v4823 = vpack.c.bf16 %v4819, %v4818
        %v4824 = vpack.c.bf16 %v4821, %v4820
        %v4825 = vpack.c.bf16 %v4822, %v4822
        %v4827 = vperm.slane %v450, 0
        %v4837 = vunpack.c.l.b16 %v442
        %v4838 = vunpack.c.l.b16 %v443
        %v4839 = vunpack.c.l.b16 %v444
        %v4840 = vunpack.c.l.b16 %v445
        %v4841 = vunpack.c.l.b16 %v446
        %v4842 = vunpack.c.l.b16 %v447
        %v4843 = vunpack.c.l.b16 %v448
        %v4844 = vunpack.c.l.b16 %v449
        %v4845 = vpack.c.b16 %v4838, %v4837
        %v4846 = vpack.c.b16 %v4840, %v4839
        %v4847 = vpack.c.b16 %v4842, %v4841
        %v4848 = vpack.c.b16 %v4844, %v4843
        %v4854 = vsel %vm451, %v4823, 0
        %v4857 = vsel %vm451, %v4824, 0
        %v4860 = vsel %vm451, %v4825, 0
        %4862 = vmatpush.bf16.msra.mxu0 0
        %4863 = vmatpush.bf16.msra.mxu0 0
        %4864 = vmatpush.bf16.msra.mxu0 0
        %4865 = vmatpush.bf16.msra.mxu0 0
        %4866 = vmatpush.bf16.msra.mxu0 %v4848
        %4867 = vmatpush.bf16.msra.mxu0 %v4847
        %4868 = vmatpush.bf16.msra.mxu0 %v4846
        %4869 = vmatpush.bf16.msra.mxu0 %v4845
        %4870 = vmatmul.bf16.gmra.mxu0 %v4854
        %v4871 = vpop.f32.mrf.mxu0
        %v4872 = vadd.f32 %v4827, %v4871
        %v4873 = vpop.f32.mrf.mxu0
        %v4874 = vadd.f32 %v4827, %v4873
        %4875 = vmatmul.bf16.gmra.mxu0 %v4857
        %v4876 = vpop.f32.mrf.mxu0
        %v4877 = vadd.f32 %v4827, %v4876
        %v4878 = vpop.f32.mrf.mxu0
        %v4879 = vadd.f32 %v4827, %v4878
        %4880 = vmatmul.bf16.gmra.mxu0 %v4860
        %v4881 = vpop.f32.mrf.mxu0
        %v4882 = vadd.f32 %v4827, %v4881
        %v4883 = vpop.f32.mrf.mxu0
        %4884 = vdwg.mxu0
        %v4890 = vrot.slane %v4872, 1
        %v4891 = vrot.slane %v4872, 2
        %v4892 = vrot.slane %v4872, 3
        %v4893 = vrot.slane %v4872, 4
        %v4894 = vrot.slane %v4872, 5
        %v4895 = vrot.slane %v4872, 6
        %v4896 = vrot.slane %v4872, 7
        %v4897 = vrot.slane %v4874, 1
        %v4898 = vrot.slane %v4874, 2
        %v4899 = vrot.slane %v4874, 3
        %v4900 = vrot.slane %v4874, 4
        %v4901 = vrot.slane %v4874, 5
        %v4902 = vrot.slane %v4874, 6
        %v4903 = vrot.slane %v4874, 7
        %v4904 = vrot.slane %v4877, 1
        %v4905 = vrot.slane %v4877, 2
        %v4906 = vrot.slane %v4877, 3
        %v4907 = vrot.slane %v4877, 4
        %v4908 = vrot.slane %v4877, 5
        %v4909 = vrot.slane %v4877, 6
        %v4910 = vrot.slane %v4877, 7
        %v4911 = vrot.slane %v4879, 1
        %v4912 = vrot.slane %v4879, 2
        %v4913 = vrot.slane %v4879, 3
        %v4914 = vrot.slane %v4879, 4
        %v4915 = vrot.slane %v4879, 5
        %v4916 = vrot.slane %v4879, 6
        %v4917 = vrot.slane %v4879, 7
        %v4918 = vrot.slane %v4882, 1
        %v4919 = vrot.slane %v4882, 2
        %v4920 = vrot.slane %v4882, 3
        %4921 = vst [vmem:[#allocation1] ss:$9 sm:$0xff] %v4872
        %s4922 = scalar_lea.vmem [#allocation1], 1
        %4923 = vst [vmem:[%s4922] ss:$9 sm:$0xff] %v4897
        %s4924 = scalar_lea.vmem [#allocation1], 2
        %4925 = vst [vmem:[%s4924] ss:$9 sm:$0xff] %v4905
        %s4926 = scalar_lea.vmem [#allocation1], 3
        %4927 = vst [vmem:[%s4926] ss:$9 sm:$0xff] %v4913
        %v4928 = vld [vmem:[#allocation1] sm:$0xff]
        %vm4930 = vcmask 519168
        %4931 = vst.msk [vmem:[%s347] sm:$0xf] %vm4930, %v4928
        %4932 = vst [vmem:[#allocation1] ss:$9 sm:$0xff] %v4890
        %s4933 = scalar_lea.vmem [#allocation1], 1
        %4934 = vst [vmem:[%s4933] ss:$9 sm:$0xff] %v4898
        %s4935 = scalar_lea.vmem [#allocation1], 2
        %4936 = vst [vmem:[%s4935] ss:$9 sm:$0xff] %v4906
        %s4937 = scalar_lea.vmem [#allocation1], 3
        %4938 = vst [vmem:[%s4937] ss:$9 sm:$0xff] %v4914
        %v4939 = vld [vmem:[#allocation1] sm:$0xff]
        %4940 = vst [vmem:[#allocation1] ss:$9 sm:$0xff] %v4891
        %4941 = vst [vmem:[%s4933] ss:$9 sm:$0xff] %v4899
        %4942 = vst [vmem:[%s4935] ss:$9 sm:$0xff] %v4907
        %4943 = vst [vmem:[%s4937] ss:$9 sm:$0xff] %v4915
        %v4944 = vld [vmem:[#allocation1] sm:$0xff]
        %4945 = vst [vmem:[#allocation1] ss:$9 sm:$0xff] %v4892
        %4946 = vst [vmem:[%s4933] ss:$9 sm:$0xff] %v4900
        %4947 = vst [vmem:[%s4935] ss:$9 sm:$0xff] %v4908
        %4948 = vst [vmem:[%s4937] ss:$9 sm:$0xff] %v4916
        %v4949 = vld [vmem:[#allocation1] sm:$0xff]
        %4950 = vst [vmem:[#allocation1] ss:$9 sm:$0xff] %v4893
        %4951 = vst [vmem:[%s4933] ss:$9 sm:$0xff] %v4901
        %4952 = vst [vmem:[%s4935] ss:$9 sm:$0xff] %v4909
        %4953 = vst [vmem:[%s4937] ss:$9 sm:$0xff] %v4917
        %v4954 = vld [vmem:[#allocation1] sm:$0xff]
        %4955 = vst [vmem:[#allocation1] ss:$9 sm:$0xff] %v4894
        %4956 = vst [vmem:[%s4933] ss:$9 sm:$0xff] %v4902
        %4957 = vst [vmem:[%s4935] ss:$9 sm:$0xff] %v4910
        %4958 = vst [vmem:[%s4937] ss:$9 sm:$0xff] %v4882
        %v4959 = vld [vmem:[#allocation1] sm:$0xff]
        %4960 = vst [vmem:[#allocation1] ss:$9 sm:$0xff] %v4895
        %4961 = vst [vmem:[%s4933] ss:$9 sm:$0xff] %v4903
        %4962 = vst [vmem:[%s4935] ss:$9 sm:$0xff] %v4879
        %4963 = vst [vmem:[%s4937] ss:$9 sm:$0xff] %v4918
        %v4964 = vld [vmem:[#allocation1] sm:$0xff]
        %4965 = vst [vmem:[#allocation1] ss:$9 sm:$0xff] %v4896
        %4966 = vst [vmem:[%s4933] ss:$9 sm:$0xff] %v4877
        %4967 = vst [vmem:[%s4935] ss:$9 sm:$0xff] %v4911
        %4968 = vst [vmem:[%s4937] ss:$9 sm:$0xff] %v4919
        %v4969 = vld [vmem:[#allocation1] sm:$0xff]
        %4970 = vst [vmem:[#allocation1] ss:$9 sm:$0xff] %v4874
        %4971 = vst [vmem:[%s4933] ss:$9 sm:$0xff] %v4904
        %4972 = vst [vmem:[%s4935] ss:$9 sm:$0xff] %v4912
        %4973 = vst [vmem:[%s4937] ss:$9 sm:$0xff] %v4920
        %v4974 = vld [vmem:[#allocation1] sm:$0xff]
        %4983 = vst.msk [vmem:[%s343] sm:$0xf] %vm4930, %v4939
        %4984 = vst.msk [vmem:[%s343 + $0x4] sm:$0xf] %vm4930, %v4944
        %4985 = vst.msk [vmem:[%s343 + $0x8] sm:$0xf] %vm4930, %v4949
        %4986 = vst.msk [vmem:[%s343 + $0xc] sm:$0xf] %vm4930, %v4954
        %4987 = vst.msk [vmem:[%s343 + $0x10] sm:$0xf] %vm4930, %v4959
        %4988 = vst.msk [vmem:[%s343 + $0x14] sm:$0xf] %vm4930, %v4964
        %4989 = vst.msk [vmem:[%s343 + $0x18] sm:$0xf] %vm4930, %v4969
        %4990 = vst.msk [vmem:[%s343 + $0x1c] sm:$0xf] %vm4930, %v4974
        %p4991 = scmp.lt.s32.totalorder %s21, 1
        %s4992 = scalar_select %p4991, %s21, 1
        %s4993 = smul.addr %s4992, 8
        %s4994 = smul.addr %s4993, 4
        %s4995 = scalar_lea.vmem %s7, %s4994
        %p4996 = scmp.lt.s32.totalorder %s21, 1
        %s4997 = scalar_select %p4996, %s21, 1
        %s4998 = smul.addr %s4997, 4
        %s4999 = scalar_lea.vmem %s8, %s4998
        // Predicated region
        $region53: #{block_forward.5} parent=47 // pred_check
          %p5000 = pneg %p196
        $region54: #{block_forward.5} parent=47 // pred_check_branch
          %5002 = sbr.rel (%p5000) target = $region56
        $region55: #{block_forward.5} parent=47 // pred_region
          _
        $region56: #{block_forward.5} parent=47 // pred_fallthru
          _
        // Predicated region
        $region57: #{block_forward.5} parent=47 // pred_check
          %p5003 = pneg %p222
        $region58: #{block_forward.5} parent=47 // pred_check_branch
          %5005 = sbr.rel (%p5003) target = $region60
        $region59: #{block_forward.5} parent=47 // pred_region
          _
        $region60: #{block_forward.5} parent=47 // pred_fallthru
          _
      $region48: #{block_forward.5} parent=5 // pred_fallthru
        _
      %p5006 = scmp.le.s32.totalorder 2, %s16
      // Predicated region
      $region61: #{block_forward.5} parent=5 // pred_check
        %p5007 = pneg %p5006
      $region62: #{block_forward.5} parent=5 // pred_check_branch
        %5009 = sbr.rel (%p5007) target = $region64
      $region63: #{block_forward.5} parent=5 // pred_region
        %s5010 = ssub.s32 %s16, 2
        // Predicated region
        $region65: #{block_forward.5} parent=63 // pred_check
          %p5011 = pneg %p202
        $region66: #{block_forward.5} parent=63 // pred_check_branch
          %5013 = sbr.rel (%p5011) target = $region68
        $region67: #{block_forward.5} parent=63 // pred_region
          %p5014 = scmp.lt.s32.totalorder %s22, 1
          %s5015 = scalar_select %p5014, %s22, 1
          %s5016 = smul.addr %s5015, 8
          %s5017 = smul.addr %s5016, 4
          %s5018 = scalar_lea.vmem %s7, %s5017
        $region68: #{block_forward.5} parent=63 // pred_fallthru
          _
        // Predicated region
        $region69: #{block_forward.5} parent=63 // pred_check
          %p5019 = pneg %p228
        $region70: #{block_forward.5} parent=63 // pred_check_branch
          %5021 = sbr.rel (%p5019) target = $region72
        $region71: #{block_forward.5} parent=63 // pred_region
          %p5022 = scmp.lt.s32.totalorder %s22, 1
          %s5023 = scalar_select %p5022, %s22, 1
          %s5024 = smul.addr %s5023, 4
          %s5025 = scalar_lea.vmem %s8, %s5024
        $region72: #{block_forward.5} parent=63 // pred_fallthru
          _
      $region64: #{block_forward.5} parent=5 // pred_fallthru
        _
    $region6: #{block_forward.5} parent=1 // loop_footer
      %s20 = sadd.s32 1, %s16
    $region7: #{block_forward.5} parent=1 // loop_footer_branch
      %15 = sbr.rel target = $region3
    $region8: #{block_forward.5} parent=1 // loop_exit
      _
    %5026 = vsyncpa [#allocation3], 1
    %s5027 = scalar_lea.sflag [#allocation3], 1
    %5028 = vsyncpa %s5027, 1

// kernel: block_forward.4
$region0: #{block_forward.4}
  #allocation0 [shape = 'u32[]', space=smem, size = 0x4, offset = 0x4, fixed_abs, tag = 'smem constant byte address 0x4 - core index']
  #allocation1 [shape = 'u32[72,128]{1,0:T(1,128)}', space=vmem, size = 0x9000, scoped, tag = 'internal scratch']
  %s0 = inlined_call_operand.vmem [shape: f32[16,4,64], index: 0, kind: input, shape index: {}]
  %s1 = inlined_call_operand.vmem [shape: f32[1,64], index: 1, kind: input, shape index: {}]
  %s2 = inlined_call_operand.vmem [shape: f32[1,64], index: 2, kind: input, shape index: {}]
  %s3 = inlined_call_operand.vmem [shape: bf16[64,192], index: 3, kind: input, shape index: {}]
  %s4 = inlined_call_operand.hbm [shape: bf16[64,64], index: 4, kind: input, shape index: {}]
  %s5 = inlined_call_operand.vmem [shape: f32[1,64], index: 5, kind: input, shape index: {}]
  %s6 = inlined_call_operand.hbm [shape: bf16[64,64], index: 6, kind: input, shape index: {}]
  %s7 = inlined_call_operand.vmem [shape: f32[1,64], index: 7, kind: input, shape index: {}]
  %s8 = inlined_call_operand.vmem [shape: f32[16,4,64], index: 8, kind: output, shape index: {}]
  %s9 = sld [smem:[#allocation0]]
  $region73: #{block_forward.4} parent=0
    _
  %s11 = ssub.s32 1, %s9
  %s12 = scalar_select 0, %s11, %s9
  $region1: #{block_forward.4} parent=0
    #allocation2 [shape = 'u8[16384]{0}', space=vmem, size = 0x4000, scoped, tag = 'input window, operand 4, single buffered']
    #allocation3 [shape = 's32[2]{0}', space=sflag, size = 0x8, scoped, tag = 'scoped memory for block_forward.4']
    #allocation4 [shape = 'u8[16384]{0}', space=vmem, size = 0x4000, scoped, tag = 'input window, operand 6, single buffered']
    #allocation5 [shape = 's32[1]{0}', space=sflag, size = 0x4, scoped, tag = 'scoped memory for block_forward.4']
    %13 = vsyncpa [#allocation3], 0
    %14 = vsyncpa [#allocation5], 0
    loop: start=0, step=1, limit=4
    $region2: #{block_forward.4} parent=1 // loop_pre_header
      _
    $region3: #{block_forward.4} parent=1 // loop_header
      %s16 = sphi 0, %s20
      %p17 = scmp.ge.s32.totalorder %s16, 4
      %s26 = sphi 0, %s28
      %s29 = sphi 0, %s26
      %s30 = sphi 0, %s29
      %s46 = sphi 0, %s30
      %s50 = sphi 0, %s50
      %s52 = sphi 0, %s50
      %s53 = sphi 0, %s52
      %s67 = sphi 0, %s53
      %s71 = sphi 0, %s71
      %s73 = sphi 0, %s71
      %s74 = sphi 0, %s73
      %s88 = sphi 0, %s74
      %s92 = sphi 0, %s92
      %s94 = sphi 0, %s92
      %s95 = sphi 0, %s94
      %s109 = sphi 0, %s95
      %s113 = sphi 0, %s113
      %s115 = sphi 0, %s113
      %s116 = sphi 0, %s115
      %s130 = sphi 0, %s116
      %s134 = sphi 0, %s134
      %s136 = sphi 0, %s134
      %s137 = sphi 0, %s136
      %s151 = sphi 0, %s137
      %s155 = sphi 0, %s155
      %s157 = sphi 0, %s155
      %s158 = sphi 0, %s157
      %s172 = sphi 0, %s158
      %s176 = sphi 0, %s176
      %s178 = sphi 0, %s176
      %s179 = sphi 0, %s178
      %s193 = sphi 0, %s179
      %s199 = sphi 0, %s201
      %s202 = sphi 0, %s199
      %s203 = sphi 0, %s202
      %s219 = sphi 0, %s203
    $region4: #{block_forward.4} parent=1 // loop_header_branch
      %19 = sbr.rel (%p17) target = $region8
    $region5: #{block_forward.4} parent=1 // loop_body
      %s21 = ssub.s32 %s16, 1
      %s22 = ssub.s32 %s16, 2
      %s23 = sadd.s32 %s16, 1
      %s24 = ssub.s32 %s16, %s23
      %p25 = scmp.eq.s32.totalorder %s24, 0
      %s27 = sadd.s32 %s26, 1
      %s28 = scalar_select %p25, %s26, %s27
      %p31 = pneg %p25
      %p32 = scmp.eq.s32.totalorder %s16, 1
      %p33 = por %p31, %p32
      %p34 = scmp.ne.s32.totalorder %s26, %s29
      %p35 = scmp.eq.s32.totalorder %s16, 0
      %p36 = por %p34, %p35
      %p37 = scmp.ne.s32.totalorder %s26, %s29
      %p38 = scmp.eq.s32.totalorder %s21, 1
      %p39 = por %p37, %p38
      %p40 = scmp.ne.s32.totalorder %s29, %s30
      %p41 = scmp.eq.s32.totalorder %s21, 0
      %p42 = por %p40, %p41
      %p43 = scmp.ne.s32.totalorder %s29, %s30
      %p44 = scmp.eq.s32.totalorder %s22, 1
      %p45 = por %p43, %p44
      %p47 = scmp.ne.s32.totalorder %s30, %s46
      %p48 = scmp.eq.s32.totalorder %s22, 0
      %p49 = por %p47, %p48
      %s51 = sadd.s32 %s50, 1
      %p54 = scmp.eq.s32.totalorder %s16, 1
      %p55 = scmp.ne.s32.totalorder %s50, %s52
      %p56 = scmp.eq.s32.totalorder %s16, 0
      %p57 = por %p55, %p56
      %p58 = scmp.ne.s32.totalorder %s50, %s52
      %p59 = scmp.eq.s32.totalorder %s21, 1
      %p60 = por %p58, %p59
      %p61 = scmp.ne.s32.totalorder %s52, %s53
      %p62 = scmp.eq.s32.totalorder %s21, 0
      %p63 = por %p61, %p62
      %p64 = scmp.ne.s32.totalorder %s52, %s53
      %p65 = scmp.eq.s32.totalorder %s22, 1
      %p66 = por %p64, %p65
      %p68 = scmp.ne.s32.totalorder %s53, %s67
      %p69 = scmp.eq.s32.totalorder %s22, 0
      %p70 = por %p68, %p69
      %s72 = sadd.s32 %s71, 1
      %p75 = scmp.eq.s32.totalorder %s16, 1
      %p76 = scmp.ne.s32.totalorder %s71, %s73
      %p77 = scmp.eq.s32.totalorder %s16, 0
      %p78 = por %p76, %p77
      %p79 = scmp.ne.s32.totalorder %s71, %s73
      %p80 = scmp.eq.s32.totalorder %s21, 1
      %p81 = por %p79, %p80
      %p82 = scmp.ne.s32.totalorder %s73, %s74
      %p83 = scmp.eq.s32.totalorder %s21, 0
      %p84 = por %p82, %p83
      %p85 = scmp.ne.s32.totalorder %s73, %s74
      %p86 = scmp.eq.s32.totalorder %s22, 1
      %p87 = por %p85, %p86
      %p89 = scmp.ne.s32.totalorder %s74, %s88
      %p90 = scmp.eq.s32.totalorder %s22, 0
      %p91 = por %p89, %p90
      %s93 = sadd.s32 %s92, 1
      %p96 = scmp.eq.s32.totalorder %s16, 1
      %p97 = scmp.ne.s32.totalorder %s92, %s94
      %p98 = scmp.eq.s32.totalorder %s16, 0
      %p99 = por %p97, %p98
      %p100 = scmp.ne.s32.totalorder %s92, %s94
      %p101 = scmp.eq.s32.totalorder %s21, 1
      %p102 = por %p100, %p101
      %p103 = scmp.ne.s32.totalorder %s94, %s95
      %p104 = scmp.eq.s32.totalorder %s21, 0
      %p105 = por %p103, %p104
      %p106 = scmp.ne.s32.totalorder %s94, %s95
      %p107 = scmp.eq.s32.totalorder %s22, 1
      %p108 = por %p106, %p107
      %p110 = scmp.ne.s32.totalorder %s95, %s109
      %p111 = scmp.eq.s32.totalorder %s22, 0
      %p112 = por %p110, %p111
      %s114 = sadd.s32 %s113, 1
      %p117 = scmp.eq.s32.totalorder %s16, 1
      %p118 = scmp.ne.s32.totalorder %s113, %s115
      %p119 = scmp.eq.s32.totalorder %s16, 0
      %p120 = por %p118, %p119
      %p121 = scmp.ne.s32.totalorder %s113, %s115
      %p122 = scmp.eq.s32.totalorder %s21, 1
      %p123 = por %p121, %p122
      %p124 = scmp.ne.s32.totalorder %s115, %s116
      %p125 = scmp.eq.s32.totalorder %s21, 0
      %p126 = por %p124, %p125
      %p127 = scmp.ne.s32.totalorder %s115, %s116
      %p128 = scmp.eq.s32.totalorder %s22, 1
      %p129 = por %p127, %p128
      %p131 = scmp.ne.s32.totalorder %s116, %s130
      %p132 = scmp.eq.s32.totalorder %s22, 0
      %p133 = por %p131, %p132
      %s135 = sadd.s32 %s134, 1
      %p138 = scmp.eq.s32.totalorder %s16, 1
      %p139 = scmp.ne.s32.totalorder %s134, %s136
      %p140 = scmp.eq.s32.totalorder %s16, 0
      %p141 = por %p139, %p140
      %p142 = scmp.ne.s32.totalorder %s134, %s136
      %p143 = scmp.eq.s32.totalorder %s21, 1
      %p144 = por %p142, %p143
      %p145 = scmp.ne.s32.totalorder %s136, %s137
      %p146 = scmp.eq.s32.totalorder %s21, 0
      %p147 = por %p145, %p146
      %p148 = scmp.ne.s32.totalorder %s136, %s137
      %p149 = scmp.eq.s32.totalorder %s22, 1
      %p150 = por %p148, %p149
      %p152 = scmp.ne.s32.totalorder %s137, %s151
      %p153 = scmp.eq.s32.totalorder %s22, 0
      %p154 = por %p152, %p153
      %s156 = sadd.s32 %s155, 1
      %p159 = scmp.eq.s32.totalorder %s16, 1
      %p160 = scmp.ne.s32.totalorder %s155, %s157
      %p161 = scmp.eq.s32.totalorder %s16, 0
      %p162 = por %p160, %p161
      %p163 = scmp.ne.s32.totalorder %s155, %s157
      %p164 = scmp.eq.s32.totalorder %s21, 1
      %p165 = por %p163, %p164
      %p166 = scmp.ne.s32.totalorder %s157, %s158
      %p167 = scmp.eq.s32.totalorder %s21, 0
      %p168 = por %p166, %p167
      %p169 = scmp.ne.s32.totalorder %s157, %s158
      %p170 = scmp.eq.s32.totalorder %s22, 1
      %p171 = por %p169, %p170
      %p173 = scmp.ne.s32.totalorder %s158, %s172
      %p174 = scmp.eq.s32.totalorder %s22, 0
      %p175 = por %p173, %p174
      %s177 = sadd.s32 %s176, 1
      %p180 = scmp.eq.s32.totalorder %s16, 1
      %p181 = scmp.ne.s32.totalorder %s176, %s178
      %p182 = scmp.eq.s32.totalorder %s16, 0
      %p183 = por %p181, %p182
      %p184 = scmp.ne.s32.totalorder %s176, %s178
      %p185 = scmp.eq.s32.totalorder %s21, 1
      %p186 = por %p184, %p185
      %p187 = scmp.ne.s32.totalorder %s178, %s179
      %p188 = scmp.eq.s32.totalorder %s21, 0
      %p189 = por %p187, %p188
      %p190 = scmp.ne.s32.totalorder %s178, %s179
      %p191 = scmp.eq.s32.totalorder %s22, 1
      %p192 = por %p190, %p191
      %p194 = scmp.ne.s32.totalorder %s179, %s193
      %p195 = scmp.eq.s32.totalorder %s22, 0
      %p196 = por %p194, %p195
      %s197 = ssub.s32 %s16, %s23
      %p198 = scmp.eq.s32.totalorder %s197, 0
      %s200 = sadd.s32 %s199, 1
      %s201 = scalar_select %p198, %s199, %s200
      %p204 = pneg %p198
      %p205 = scmp.eq.s32.totalorder %s16, 1
      %p206 = por %p204, %p205
      %p207 = scmp.ne.s32.totalorder %s199, %s202
      %p208 = scmp.eq.s32.totalorder %s16, 0
      %p209 = por %p207, %p208
      %p210 = scmp.ne.s32.totalorder %s199, %s202
      %p211 = scmp.eq.s32.totalorder %s21, 1
      %p212 = por %p210, %p211
      %p213 = scmp.ne.s32.totalorder %s202, %s203
      %p214 = scmp.eq.s32.totalorder %s21, 0
      %p215 = por %p213, %p214
      %p216 = scmp.ne.s32.totalorder %s202, %s203
      %p217 = scmp.eq.s32.totalorder %s22, 1
      %p218 = por %p216, %p217
      %p220 = scmp.ne.s32.totalorder %s203, %s219
      %p221 = scmp.eq.s32.totalorder %s22, 0
      %p222 = por %p220, %p221
      %p223 = scmp.le.s32.totalorder 1, %s16
      %p224 = scmp.lt.s32.totalorder %s16, 3
      %p225 = pnand %p223, %p224
      %p226 = pneg %p225
      // Predicated region
      $region9: #{block_forward.4} parent=5 // pred_check
        _
      $region10: #{block_forward.4} parent=5 // pred_check_branch
        %228 = sbr.rel (%p225) target = $region12
      $region11: #{block_forward.4} parent=5 // pred_region
        %s229 = ssub.s32 %s16, 1
        // Predicated region
        $region13: #{block_forward.4} parent=11 // pred_check
          %p230 = pneg %p63
        $region14: #{block_forward.4} parent=11 // pred_check_branch
          %232 = sbr.rel (%p230) target = $region16
        $region15: #{block_forward.4} parent=11 // pred_region
          _
        $region16: #{block_forward.4} parent=11 // pred_fallthru
          _
        // Predicated region
        $region17: #{block_forward.4} parent=11 // pred_check
          %p233 = pneg %p84
        $region18: #{block_forward.4} parent=11 // pred_check_branch
          %235 = sbr.rel (%p233) target = $region20
        $region19: #{block_forward.4} parent=11 // pred_region
          _
        $region20: #{block_forward.4} parent=11 // pred_fallthru
          _
        // Predicated region
        $region21: #{block_forward.4} parent=11 // pred_check
          %p236 = pneg %p105
        $region22: #{block_forward.4} parent=11 // pred_check_branch
          %238 = sbr.rel (%p236) target = $region24
        $region23: #{block_forward.4} parent=11 // pred_region
          _
        $region24: #{block_forward.4} parent=11 // pred_fallthru
          _
        // Predicated region
        $region25: #{block_forward.4} parent=11 // pred_check
          %p239 = pneg %p126
        $region26: #{block_forward.4} parent=11 // pred_check_branch
          %241 = sbr.rel (%p239) target = $region28
        $region27: #{block_forward.4} parent=11 // pred_region
          %243 = vsyncadd [#allocation3], 0
          %s244 = sshll.u32 %s4, 4
          %s245 = int_to_ptr.hbm [resolvable:$true] %s244
          %s246 = sshll.u32 [#allocation2], 4
          %s247 = int_to_ptr.vmem [resolvable:$true] %s246
          %252 = dma.hbm_to_vmem [thread:$0]  %s245, 512, %s247, [#allocation3], 64, 64, 4
        $region28: #{block_forward.4} parent=11 // pred_fallthru
          _
        // Predicated region
        $region29: #{block_forward.4} parent=11 // pred_check
          %p253 = pneg %p147
        $region30: #{block_forward.4} parent=11 // pred_check_branch
          %255 = sbr.rel (%p253) target = $region32
        $region31: #{block_forward.4} parent=11 // pred_region
          _
        $region32: #{block_forward.4} parent=11 // pred_fallthru
          _
        // Predicated region
        $region33: #{block_forward.4} parent=11 // pred_check
          %p256 = pneg %p168
        $region34: #{block_forward.4} parent=11 // pred_check_branch
          %258 = sbr.rel (%p256) target = $region36
        $region35: #{block_forward.4} parent=11 // pred_region
          %260 = vsyncadd [#allocation5], 0
          %s261 = sshll.u32 %s6, 4
          %s262 = int_to_ptr.hbm [resolvable:$true] %s261
          %s263 = sshll.u32 [#allocation4], 4
          %s264 = int_to_ptr.vmem [resolvable:$true] %s263
          %269 = dma.hbm_to_vmem [thread:$0]  %s262, 512, %s264, [#allocation5], 64, 64, 4
        $region36: #{block_forward.4} parent=11 // pred_fallthru
          _
        // Predicated region
        $region37: #{block_forward.4} parent=11 // pred_check
          %p270 = pneg %p189
        $region38: #{block_forward.4} parent=11 // pred_check_branch
          %272 = sbr.rel (%p270) target = $region40
        $region39: #{block_forward.4} parent=11 // pred_region
          _
        $region40: #{block_forward.4} parent=11 // pred_fallthru
          _
      $region12: #{block_forward.4} parent=5 // pred_fallthru
        _
      %p273 = scmp.lt.s32.totalorder %s16, 2
      // Predicated region
      $region41: #{block_forward.4} parent=5 // pred_check
        %p274 = pneg %p273
      $region42: #{block_forward.4} parent=5 // pred_check_branch
        %276 = sbr.rel (%p274) target = $region44
      $region43: #{block_forward.4} parent=5 // pred_region
        // Predicated region
        $region45: #{block_forward.4} parent=43 // pred_check
          %p277 = pneg %p36
        $region46: #{block_forward.4} parent=43 // pred_check_branch
          %279 = sbr.rel (%p277) target = $region48
        $region47: #{block_forward.4} parent=43 // pred_region
          %s280 = smul.u32 8, %s16
          %p281 = scmp.lt.s32.totalorder %s280, 15
          %s282 = scalar_select %p281, %s280, 15
          %s283 = smul.addr %s282, 4
          %s284 = scalar_lea.vmem %s0, %s283
          %s285 = smul.u32 8, %s16
        $region48: #{block_forward.4} parent=43 // pred_fallthru
          _
      $region44: #{block_forward.4} parent=5 // pred_fallthru
        _
      %p286 = scmp.le.s32.totalorder 1, %s16
      %p287 = scmp.lt.s32.totalorder %s16, 3
      %p288 = pnand %p286, %p287
      %p289 = pneg %p288
      // Predicated region
      $region49: #{block_forward.4} parent=5 // pred_check
        _
      $region50: #{block_forward.4} parent=5 // pred_check_branch
        %291 = sbr.rel (%p288) target = $region52
      $region51: #{block_forward.4} parent=5 // pred_region
        %s292 = ssub.s32 %s16, 1
        // Predicated region
        $region53: #{block_forward.4} parent=51 // pred_check
          %p293 = pneg %p126
        $region54: #{block_forward.4} parent=51 // pred_check_branch
          %295 = sbr.rel (%p293) target = $region56
        $region55: #{block_forward.4} parent=51 // pred_region
          %297 = dma.done [#allocation3], 512
        $region56: #{block_forward.4} parent=51 // pred_fallthru
          _
        // Predicated region
        $region57: #{block_forward.4} parent=51 // pred_check
          %p298 = pneg %p168
        $region58: #{block_forward.4} parent=51 // pred_check_branch
          %300 = sbr.rel (%p298) target = $region60
        $region59: #{block_forward.4} parent=51 // pred_region
          %302 = dma.done [#allocation5], 512
        $region60: #{block_forward.4} parent=51 // pred_fallthru
          _
        %s303 = smul.u32 8, %s21
        %p304 = scmp.lt.s32.totalorder %s303, 15
        %s305 = scalar_select %p304, %s303, 15
        %s306 = smul.addr %s305, 4
        %s307 = scalar_lea.vmem %s0, %s306
        %p308 = pneg %p42
        %p309 = pneg %p39
        %p310 = pneg %p63
        %p311 = pneg %p60
        %p312 = pneg %p84
        %p313 = pneg %p81
        %p314 = pneg %p105
        %p315 = pneg %p102
        %p316 = pneg %p126
        %p317 = pneg %p123
        %p318 = pneg %p147
        %p319 = pneg %p144
        %p320 = pneg %p168
        %p321 = pneg %p165
        %p322 = pneg %p189
        %p323 = pneg %p186
        %p324 = pneg %p215
        %p325 = pneg %p212
        %s326 = smul.u32 8, %s21
        %p327 = scmp.lt.s32.totalorder %s326, 15
        %s328 = scalar_select %p327, %s326, 15
        %s329 = smul.addr %s328, 4
        %s330 = scalar_lea.vmem %s8, %s329
        %s331 = smul.u32 8, %s21
        %p332 = scmp.lt.s32.totalorder %s331, 15
        %s333 = scalar_select %p332, %s331, 15
        %s334 = smul.addr %s333, 4
        %s335 = scalar_lea.vmem %s0, %s334
        %s336 = smul.u32 8, %s21
        %s337 = smul.u32 8, %s21
        %p338 = scmp.lt.s32.totalorder %s337, 15
        %s339 = scalar_select %p338, %s337, 15
        %s340 = smul.addr %s339, 4
        %s341 = scalar_lea.vmem %s8, %s340
        %s342 = smul.u32 8, %s21
        %v344 = vld [vmem:[%s335] sm:$0xf]
        %v345 = vld [vmem:[%s335 + $0x4] sm:$0xf]
        %v346 = vld [vmem:[%s335 + $0x8] sm:$0xf]
        %v347 = vld [vmem:[%s335 + $0xc] sm:$0xf]
        %v348 = vld [vmem:[%s335 + $0x10] sm:$0xf]
        %v349 = vld [vmem:[%s335 + $0x14] sm:$0xf]
        %v350 = vld [vmem:[%s335 + $0x18] sm:$0xf]
        %v351 = vld [vmem:[%s335 + $0x1c] sm:$0xf]
        %v352 = vld [vmem:[%s1] sm:$0x1]
        %v353 = vld [vmem:[%s2] sm:$0x1]
        %v354 = vld [vmem:[%s3] sm:$0xff]
        %v355 = vld [vmem:[%s3 + $0x8] sm:$0xff]
        %v356 = vld [vmem:[%s3 + $0x10] sm:$0xff]
        %v357 = vld [vmem:[%s3 + $0x18] sm:$0xff]
        %v358 = vld [vmem:[%s3 + $0x20] sm:$0xff]
        %v359 = vld [vmem:[%s3 + $0x28] sm:$0xff]
        %v360 = vld [vmem:[%s3 + $0x30] sm:$0xff]
        %v361 = vld [vmem:[%s3 + $0x38] sm:$0xff]
        %v362 = vld [vmem:[#allocation2] sm:$0xf]
        %v363 = vld [vmem:[#allocation2 + $0x4] sm:$0xf]
        %v364 = vld [vmem:[#allocation2 + $0x8] sm:$0xf]
        %v365 = vld [vmem:[#allocation2 + $0xc] sm:$0xf]
        %v366 = vld [vmem:[#allocation2 + $0x10] sm:$0xf]
        %v367 = vld [vmem:[#allocation2 + $0x14] sm:$0xf]
        %v368 = vld [vmem:[#allocation2 + $0x18] sm:$0xf]
        %v369 = vld [vmem:[#allocation2 + $0x1c] sm:$0xf]
        %v370 = vld [vmem:[%s5] sm:$0x1]
        %vm371 = vcmask 519168
        %v372 = vsel %vm371, %v344, 0.0
        %373 = vadd.xlane.f32.xlu0 %v372
        %v374 = vpop.xlane.xlu0 %373
        %v375 = vsel %vm371, %v345, 0.0
        %376 = vadd.xlane.f32.xlu0 %v375
        %v377 = vpop.xlane.xlu0 %376
        %v378 = vsel %vm371, %v346, 0.0
        %379 = vadd.xlane.f32.xlu0 %v378
        %v380 = vpop.xlane.xlu0 %379
        %v381 = vsel %vm371, %v347, 0.0
        %382 = vadd.xlane.f32.xlu0 %v381
        %v383 = vpop.xlane.xlu0 %382
        %v384 = vsel %vm371, %v348, 0.0
        %385 = vadd.xlane.f32.xlu0 %v384
        %v386 = vpop.xlane.xlu0 %385
        %v387 = vsel %vm371, %v349, 0.0
        %388 = vadd.xlane.f32.xlu0 %v387
        %v389 = vpop.xlane.xlu0 %388
        %v390 = vsel %vm371, %v350, 0.0
        %391 = vadd.xlane.f32.xlu0 %v390
        %v392 = vpop.xlane.xlu0 %391
        %v393 = vsel %vm371, %v351, 0.0
        %394 = vadd.xlane.f32.xlu0 %v393
        %v395 = vpop.xlane.xlu0 %394
        %v396 = vrcp.pop 64.0
        %v397 = vmul.f32 64.0, %v396
        %v398 = vsub.f32 1.0, %v397
        %v399 = vmul.f32 %v396, %v398
        %v400 = vadd.f32 %v396, %v399
        %vm401 = vweird.f32 %v396
        %v402 = vsel %vm401, %v396, %v400
        %v403 = vmul.f32 %v374, %v402
        %v404 = vmul.f32 %v377, %v402
        %v405 = vmul.f32 %v380, %v402
        %v406 = vmul.f32 %v383, %v402
        %v407 = vmul.f32 %v386, %v402
        %v408 = vmul.f32 %v389, %v402
        %v409 = vmul.f32 %v392, %v402
        %v410 = vmul.f32 %v395, %v402
        %v411 = vsub.f32 %v344, %v403
        %v412 = vsub.f32 %v345, %v404
        %v413 = vsub.f32 %v346, %v405
        %v414 = vsub.f32 %v347, %v406
        %v415 = vsub.f32 %v348, %v407
        %v416 = vsub.f32 %v349, %v408
        %v417 = vsub.f32 %v350, %v409
        %v418 = vsub.f32 %v351, %v410
        %v419 = vmul.f32 %v411, %v411
        %v420 = vmul.f32 %v412, %v412
        %v421 = vmul.f32 %v413, %v413
        %v422 = vmul.f32 %v414, %v414
        %v423 = vmul.f32 %v415, %v415
        %v424 = vmul.f32 %v416, %v416
        %v425 = vmul.f32 %v417, %v417
        %v426 = vmul.f32 %v418, %v418
        %v427 = vsel %vm371, %v419, 0.0
        %428 = vadd.xlane.f32.xlu0 %v427
        %v429 = vpop.xlane.xlu0 %428
        %v430 = vsel %vm371, %v420, 0.0
        %431 = vadd.xlane.f32.xlu0 %v430
        %v432 = vpop.xlane.xlu0 %431
        %v433 = vsel %vm371, %v421, 0.0
        %434 = vadd.xlane.f32.xlu0 %v433
        %v435 = vpop.xlane.xlu0 %434
        %v436 = vsel %vm371, %v422, 0.0
        %437 = vadd.xlane.f32.xlu0 %v436
        %v438 = vpop.xlane.xlu0 %437
        %v439 = vsel %vm371, %v423, 0.0
        %440 = vadd.xlane.f32.xlu0 %v439
        %v441 = vpop.xlane.xlu0 %440
        %v442 = vsel %vm371, %v424, 0.0
        %443 = vadd.xlane.f32.xlu0 %v442
        %v444 = vpop.xlane.xlu0 %443
        %v445 = vsel %vm371, %v425, 0.0
        %446 = vadd.xlane.f32.xlu0 %v445
        %v447 = vpop.xlane.xlu0 %446
        %v448 = vsel %vm371, %v426, 0.0
        %449 = vadd.xlane.f32.xlu0 %v448
        %v450 = vpop.xlane.xlu0 %449
        %v451 = vmul.f32 %v429, %v402
        %v452 = vmul.f32 %v432, %v402
        %v453 = vmul.f32 %v435, %v402
        %v454 = vmul.f32 %v438, %v402
        %v455 = vmul.f32 %v441, %v402
        %v456 = vmul.f32 %v444, %v402
        %v457 = vmul.f32 %v447, %v402
        %v458 = vmul.f32 %v450, %v402
        %v459 = vadd.f32 %v451, 1e-05
        %v460 = vadd.f32 %v452, 1e-05
        %v461 = vadd.f32 %v453, 1e-05
        %v462 = vadd.f32 %v454, 1e-05
        %v463 = vadd.f32 %v455, 1e-05
        %v464 = vadd.f32 %v456, 1e-05
        %v465 = vadd.f32 %v457, 1e-05
        %v466 = vadd.f32 %v458, 1e-05
        %v467 = vrsqrt.pop %v459
        %v468 = vmul.f32 %v467, %v459
        %v469 = vmul.f32 %v468, %v467
        %v470 = vmul.f32 0.5, %v469
        %v471 = vsub.f32 1.5, %v470
        %v472 = vmul.f32 %v467, %v471
        %vm473 = vweird.f32 %v459
        %vm474 = vweird.f32 %v467
        %vm475 = vmor %vm473, %vm474
        %v476 = vsel %vm475, %v467, %v472
        %v477 = vrsqrt.pop %v460
        %v478 = vmul.f32 %v477, %v460
        %v479 = vmul.f32 %v478, %v477
        %v480 = vmul.f32 0.5, %v479
        %v481 = vsub.f32 1.5, %v480
        %v482 = vmul.f32 %v477, %v481
        %vm483 = vweird.f32 %v460
        %vm484 = vweird.f32 %v477
        %vm485 = vmor %vm483, %vm484
        %v486 = vsel %vm485, %v477, %v482
        %v487 = vrsqrt.pop %v461
        %v488 = vmul.f32 %v487, %v461
        %v489 = vmul.f32 %v488, %v487
        %v490 = vmul.f32 0.5, %v489
        %v491 = vsub.f32 1.5, %v490
        %v492 = vmul.f32 %v487, %v491
        %vm493 = vweird.f32 %v461
        %vm494 = vweird.f32 %v487
        %vm495 = vmor %vm493, %vm494
        %v496 = vsel %vm495, %v487, %v492
        %v497 = vrsqrt.pop %v462
        %v498 = vmul.f32 %v497, %v462
        %v499 = vmul.f32 %v498, %v497
        %v500 = vmul.f32 0.5, %v499
        %v501 = vsub.f32 1.5, %v500
        %v502 = vmul.f32 %v497, %v501
        %vm503 = vweird.f32 %v462
        %vm504 = vweird.f32 %v497
        %vm505 = vmor %vm503, %vm504
        %v506 = vsel %vm505, %v497, %v502
        %v507 = vrsqrt.pop %v463
        %v508 = vmul.f32 %v507, %v463
        %v509 = vmul.f32 %v508, %v507
        %v510 = vmul.f32 0.5, %v509
        %v511 = vsub.f32 1.5, %v510
        %v512 = vmul.f32 %v507, %v511
        %vm513 = vweird.f32 %v463
        %vm514 = vweird.f32 %v507
        %vm515 = vmor %vm513, %vm514
        %v516 = vsel %vm515, %v507, %v512
        %v517 = vrsqrt.pop %v464
        %v518 = vmul.f32 %v517, %v464
        %v519 = vmul.f32 %v518, %v517
        %v520 = vmul.f32 0.5, %v519
        %v521 = vsub.f32 1.5, %v520
        %v522 = vmul.f32 %v517, %v521
        %vm523 = vweird.f32 %v464
        %vm524 = vweird.f32 %v517
        %vm525 = vmor %vm523, %vm524
        %v526 = vsel %vm525, %v517, %v522
        %v527 = vrsqrt.pop %v465
        %v528 = vmul.f32 %v527, %v465
        %v529 = vmul.f32 %v528, %v527
        %v530 = vmul.f32 0.5, %v529
        %v531 = vsub.f32 1.5, %v530
        %v532 = vmul.f32 %v527, %v531
        %vm533 = vweird.f32 %v465
        %vm534 = vweird.f32 %v527
        %vm535 = vmor %vm533, %vm534
        %v536 = vsel %vm535, %v527, %v532
        %v537 = vrsqrt.pop %v466
        %v538 = vmul.f32 %v537, %v466
        %v539 = vmul.f32 %v538, %v537
        %v540 = vmul.f32 0.5, %v539
        %v541 = vsub.f32 1.5, %v540
        %v542 = vmul.f32 %v537, %v541
        %vm543 = vweird.f32 %v466
        %vm544 = vweird.f32 %v537
        %vm545 = vmor %vm543, %vm544
        %v546 = vsel %vm545, %v537, %v542
        %v547 = vmul.f32 %v411, %v476
        %v548 = vmul.f32 %v412, %v486
        %v549 = vmul.f32 %v413, %v496
        %v550 = vmul.f32 %v414, %v506
        %v551 = vmul.f32 %v415, %v516
        %v552 = vmul.f32 %v416, %v526
        %v553 = vmul.f32 %v417, %v536
        %v554 = vmul.f32 %v418, %v546
        %v556 = vperm.slane %v352, 0
        %v558 = vmul.f32 %v547, %v556
        %v559 = vmul.f32 %v548, %v556
        %v560 = vmul.f32 %v549, %v556
        %v561 = vmul.f32 %v550, %v556
        %v562 = vmul.f32 %v551, %v556
        %v563 = vmul.f32 %v552, %v556
        %v564 = vmul.f32 %v553, %v556
        %v565 = vmul.f32 %v554, %v556
        %v567 = vperm.slane %v353, 0
        %v569 = vadd.f32 %v558, %v567
        %v570 = vadd.f32 %v559, %v567
        %v571 = vadd.f32 %v560, %v567
        %v572 = vadd.f32 %v561, %v567
        %v573 = vadd.f32 %v562, %v567
        %v574 = vadd.f32 %v563, %v567
        %v575 = vadd.f32 %v564, %v567
        %v576 = vadd.f32 %v565, %v567
        %v577 = vpack.c.bf16 %v569, %v569
        %v578 = vpack.c.bf16 %v570, %v570
        %v579 = vpack.c.bf16 %v571, %v571
        %v580 = vpack.c.bf16 %v572, %v572
        %v581 = vpack.c.bf16 %v573, %v573
        %v582 = vpack.c.bf16 %v574, %v574
        %v583 = vpack.c.bf16 %v575, %v575
        %v584 = vpack.c.bf16 %v576, %v576
        %586 = vst [vmem:[#allocation1] ss:$4 sm:$0xff] %v577
        %s588 = scalar_lea.vmem [#allocation1], 1
        %589 = vst [vmem:[%s588] ss:$4 sm:$0xff] %v578
        %s591 = scalar_lea.vmem [#allocation1], 2
        %592 = vst [vmem:[%s591] ss:$4 sm:$0xff] %v579
        %s594 = scalar_lea.vmem [#allocation1], 3
        %595 = vst [vmem:[%s594] ss:$4 sm:$0xff] %v580
        %s597 = scalar_lea.vmem [#allocation1], 32
        %598 = vst [vmem:[%s597] ss:$4 sm:$0xff] %v581
        %s600 = scalar_lea.vmem [#allocation1], 33
        %601 = vst [vmem:[%s600] ss:$4 sm:$0xff] %v582
        %s603 = scalar_lea.vmem [#allocation1], 34
        %604 = vst [vmem:[%s603] ss:$4 sm:$0xff] %v583
        %s606 = scalar_lea.vmem [#allocation1], 35
        %607 = vst [vmem:[%s606] ss:$4 sm:$0xff] %v584
        %v608 = vld.sshfl [vmem:[#allocation1] sm:$0xff pattern:$0x73625140]
        %v609 = vld.sshfl [vmem:[#allocation1 + $0x20] sm:$0xff pattern:$0x73625140]
        %v618 = vunpack.c.l.b16 %v354
        %v619 = vunpack.c.h.b16 %v354
        %v620 = vunpack.c.l.b16 %v355
        %v621 = vunpack.c.h.b16 %v355
        %v622 = vunpack.c.l.b16 %v356
        %v623 = vunpack.c.h.b16 %v356
        %v624 = vunpack.c.l.b16 %v357
        %v625 = vunpack.c.h.b16 %v357
        %v626 = vunpack.c.l.b16 %v358
        %v627 = vunpack.c.h.b16 %v358
        %v628 = vunpack.c.l.b16 %v359
        %v629 = vunpack.c.h.b16 %v359
        %v630 = vunpack.c.l.b16 %v360
        %v631 = vunpack.c.h.b16 %v360
        %v632 = vunpack.c.l.b16 %v361
        %v633 = vunpack.c.h.b16 %v361
        %v634 = vpack.c.b16 %v620, %v618
        %v635 = vpack.c.b16 %v621, %v619
        %v636 = vpack.c.b16 %v624, %v622
        %v637 = vpack.c.b16 %v625, %v623
        %v638 = vpack.c.b16 %v628, %v626
        %v639 = vpack.c.b16 %v629, %v627
        %v640 = vpack.c.b16 %v632, %v630
        %v641 = vpack.c.b16 %v633, %v631
        %vm650 = vcmask 523264
        %v651 = vsel %vm650, %v608, 0
        %v653 = vsel %vm650, %v609, 0
        %655 = vmatpush.bf16.msra.mxu0 0
        %656 = vmatpush.bf16.msra.mxu0 0
        %657 = vmatpush.bf16.msra.mxu0 0
        %658 = vmatpush.bf16.msra.mxu0 0
        %659 = vmatpush.bf16.msra.mxu0 %v640
        %660 = vmatpush.bf16.msra.mxu0 %v638
        %661 = vmatpush.bf16.msra.mxu0 %v636
        %662 = vmatpush.bf16.msra.mxu0 %v634
        %663 = vmatmul.bf16.gmra.mxu0 %v651
        %v664 = vpop.f32.mrf.mxu0
        %v665 = vadd.f32 0.0, %v664
        %v666 = vpop.f32.mrf.mxu0
        %v667 = vadd.f32 0.0, %v666
        %668 = vmatmul.bf16.gmra.mxu0 %v653
        %v669 = vpop.f32.mrf.mxu0
        %v670 = vadd.f32 0.0, %v669
        %v671 = vpop.f32.mrf.mxu0
        %v672 = vadd.f32 0.0, %v671
        %673 = vdwg.mxu0
        %674 = vmatpush.bf16.msra.mxu0 0
        %675 = vmatpush.bf16.msra.mxu0 0
        %676 = vmatpush.bf16.msra.mxu0 0
        %677 = vmatpush.bf16.msra.mxu0 0
        %678 = vmatpush.bf16.msra.mxu0 %v641
        %679 = vmatpush.bf16.msra.mxu0 %v639
        %680 = vmatpush.bf16.msra.mxu0 %v637
        %681 = vmatpush.bf16.msra.mxu0 %v635
        %682 = vmatmul.bf16.gmra.mxu0 %v651
        %v683 = vpop.f32.mrf.mxu0
        %v684 = vadd.f32 0.0, %v683
        %v685 = vpop.f32.mrf.mxu0
        %v686 = vadd.f32 0.0, %v685
        %687 = vmatmul.bf16.gmra.mxu0 %v653
        %v688 = vpop.f32.mrf.mxu0
        %v689 = vadd.f32 0.0, %v688
        %v690 = vpop.f32.mrf.mxu0
        %v691 = vadd.f32 0.0, %v690
        %692 = vdwg.mxu0
        %v693 = vpack.c.bf16 %v684, %v665
        %v694 = vpack.c.bf16 %v686, %v667
        %v695 = vpack.c.bf16 %v689, %v670
        %v696 = vpack.c.bf16 %v691, %v672
        %701 = vrot.lane.b32.xlu0 %v693, 112
        %v702 = vpop.permute.xlu0 %701
        %703 = vrot.lane.b32.xlu0 %v694, 112
        %v704 = vpop.permute.xlu0 %703
        %705 = vrot.lane.b32.xlu0 %v695, 112
        %v706 = vpop.permute.xlu0 %705
        %707 = vrot.lane.b32.xlu0 %v696, 112
        %v708 = vpop.permute.xlu0 %707
        %709 = vrot.lane.b32.xlu0 %v693, 96
        %v710 = vpop.permute.xlu0 %709
        %711 = vrot.lane.b32.xlu0 %v694, 96
        %v712 = vpop.permute.xlu0 %711
        %713 = vrot.lane.b32.xlu0 %v695, 96
        %v714 = vpop.permute.xlu0 %713
        %715 = vrot.lane.b32.xlu0 %v696, 96
        %v716 = vpop.permute.xlu0 %715
        %717 = vrot.lane.b32.xlu0 %v693, 80
        %v718 = vpop.permute.xlu0 %717
        %719 = vrot.lane.b32.xlu0 %v694, 80
        %v720 = vpop.permute.xlu0 %719
        %721 = vrot.lane.b32.xlu0 %v695, 80
        %v722 = vpop.permute.xlu0 %721
        %723 = vrot.lane.b32.xlu0 %v696, 80
        %v724 = vpop.permute.xlu0 %723
        %v727 = vpack.i.b16 %v702, %v693
        %v728 = vshrl.u32 %v693, 16
        %v729 = vshrl.u32 %v702, 16
        %v730 = vpack.i.b16 %v729, %v728
        %v733 = vpack.i.b16 %v718, %v710
        %v734 = vshrl.u32 %v710, 16
        %v735 = vshrl.u32 %v718, 16
        %v736 = vpack.i.b16 %v735, %v734
        %v739 = vpack.i.b16 %v704, %v694
        %v740 = vshrl.u32 %v694, 16
        %v741 = vshrl.u32 %v704, 16
        %v742 = vpack.i.b16 %v741, %v740
        %v745 = vpack.i.b16 %v720, %v712
        %v746 = vshrl.u32 %v712, 16
        %v747 = vshrl.u32 %v720, 16
        %v748 = vpack.i.b16 %v747, %v746
        %v751 = vpack.i.b16 %v706, %v695
        %v752 = vshrl.u32 %v695, 16
        %v753 = vshrl.u32 %v706, 16
        %v754 = vpack.i.b16 %v753, %v752
        %v757 = vpack.i.b16 %v722, %v714
        %v758 = vshrl.u32 %v714, 16
        %v759 = vshrl.u32 %v722, 16
        %v760 = vpack.i.b16 %v759, %v758
        %v763 = vpack.i.b16 %v708, %v696
        %v764 = vshrl.u32 %v696, 16
        %v765 = vshrl.u32 %v708, 16
        %v766 = vpack.i.b16 %v765, %v764
        %v769 = vpack.i.b16 %v724, %v716
        %v770 = vshrl.u32 %v716, 16
        %v771 = vshrl.u32 %v724, 16
        %v772 = vpack.i.b16 %v771, %v770
        %v775 = vunpack.c.l.s4 1983009808
        %v776 = vunpack.c.0.s8 %v775
        %v777 = vperm.slane %v727, %v776
        %v780 = vunpack.c.l.s4 1983009808
        %v781 = vunpack.c.0.s8 %v780
        %v782 = vperm.slane %v733, %v781
        %v783 = vrot.slane %v782, 4
        %vm784 = vcmask 1047556
        %v785 = vsel %vm784, %v783, %v777
        %v786 = vrot.slane %v777, 4
        %v787 = vsel %vm784, %v782, %v786
        %v789 = vunpack.c.l.s4 1934713408
        %v790 = vunpack.c.0.s8 %v789
        %v791 = vperm.slane %v785, %v790
        %v793 = vunpack.c.l.s4 1934713408
        %v794 = vunpack.c.0.s8 %v793
        %v795 = vperm.slane %v787, %v794
        %v798 = vunpack.c.l.s4 1983009808
        %v799 = vunpack.c.0.s8 %v798
        %v800 = vperm.slane %v730, %v799
        %v803 = vunpack.c.l.s4 1983009808
        %v804 = vunpack.c.0.s8 %v803
        %v805 = vperm.slane %v736, %v804
        %v806 = vrot.slane %v805, 4
        %v807 = vsel %vm784, %v806, %v800
        %v808 = vrot.slane %v800, 4
        %v809 = vsel %vm784, %v805, %v808
        %v811 = vunpack.c.l.s4 1934713408
        %v812 = vunpack.c.0.s8 %v811
        %v813 = vperm.slane %v807, %v812
        %v815 = vunpack.c.l.s4 1934713408
        %v816 = vunpack.c.0.s8 %v815
        %v817 = vperm.slane %v809, %v816
        %v820 = vunpack.c.l.s4 1983009808
        %v821 = vunpack.c.0.s8 %v820
        %v822 = vperm.slane %v739, %v821
        %v825 = vunpack.c.l.s4 1983009808
        %v826 = vunpack.c.0.s8 %v825
        %v827 = vperm.slane %v745, %v826
        %v828 = vrot.slane %v827, 4
        %v829 = vsel %vm784, %v828, %v822
        %v830 = vrot.slane %v822, 4
        %v831 = vsel %vm784, %v827, %v830
        %v833 = vunpack.c.l.s4 1934713408
        %v834 = vunpack.c.0.s8 %v833
        %v835 = vperm.slane %v829, %v834
        %v837 = vunpack.c.l.s4 1934713408
        %v838 = vunpack.c.0.s8 %v837
        %v839 = vperm.slane %v831, %v838
        %v842 = vunpack.c.l.s4 1983009808
        %v843 = vunpack.c.0.s8 %v842
        %v844 = vperm.slane %v742, %v843
        %v847 = vunpack.c.l.s4 1983009808
        %v848 = vunpack.c.0.s8 %v847
        %v849 = vperm.slane %v748, %v848
        %v850 = vrot.slane %v849, 4
        %v851 = vsel %vm784, %v850, %v844
        %v852 = vrot.slane %v844, 4
        %v853 = vsel %vm784, %v849, %v852
        %v855 = vunpack.c.l.s4 1934713408
        %v856 = vunpack.c.0.s8 %v855
        %v857 = vperm.slane %v851, %v856
        %v859 = vunpack.c.l.s4 1934713408
        %v860 = vunpack.c.0.s8 %v859
        %v861 = vperm.slane %v853, %v860
        %v864 = vunpack.c.l.s4 1983009808
        %v865 = vunpack.c.0.s8 %v864
        %v866 = vperm.slane %v751, %v865
        %v869 = vunpack.c.l.s4 1983009808
        %v870 = vunpack.c.0.s8 %v869
        %v871 = vperm.slane %v757, %v870
        %v872 = vrot.slane %v871, 4
        %v873 = vsel %vm784, %v872, %v866
        %v874 = vrot.slane %v866, 4
        %v875 = vsel %vm784, %v871, %v874
        %v877 = vunpack.c.l.s4 1934713408
        %v878 = vunpack.c.0.s8 %v877
        %v879 = vperm.slane %v873, %v878
        %v881 = vunpack.c.l.s4 1934713408
        %v882 = vunpack.c.0.s8 %v881
        %v883 = vperm.slane %v875, %v882
        %v886 = vunpack.c.l.s4 1983009808
        %v887 = vunpack.c.0.s8 %v886
        %v888 = vperm.slane %v754, %v887
        %v891 = vunpack.c.l.s4 1983009808
        %v892 = vunpack.c.0.s8 %v891
        %v893 = vperm.slane %v760, %v892
        %v894 = vrot.slane %v893, 4
        %v895 = vsel %vm784, %v894, %v888
        %v896 = vrot.slane %v888, 4
        %v897 = vsel %vm784, %v893, %v896
        %v899 = vunpack.c.l.s4 1934713408
        %v900 = vunpack.c.0.s8 %v899
        %v901 = vperm.slane %v895, %v900
        %v903 = vunpack.c.l.s4 1934713408
        %v904 = vunpack.c.0.s8 %v903
        %v905 = vperm.slane %v897, %v904
        %v908 = vunpack.c.l.s4 1983009808
        %v909 = vunpack.c.0.s8 %v908
        %v910 = vperm.slane %v763, %v909
        %v913 = vunpack.c.l.s4 1983009808
        %v914 = vunpack.c.0.s8 %v913
        %v915 = vperm.slane %v769, %v914
        %v916 = vrot.slane %v915, 4
        %v917 = vsel %vm784, %v916, %v910
        %v918 = vrot.slane %v910, 4
        %v919 = vsel %vm784, %v915, %v918
        %v921 = vunpack.c.l.s4 1934713408
        %v922 = vunpack.c.0.s8 %v921
        %v923 = vperm.slane %v917, %v922
        %v925 = vunpack.c.l.s4 1934713408
        %v926 = vunpack.c.0.s8 %v925
        %v927 = vperm.slane %v919, %v926
        %v930 = vunpack.c.l.s4 1983009808
        %v931 = vunpack.c.0.s8 %v930
        %v932 = vperm.slane %v766, %v931
        %v935 = vunpack.c.l.s4 1983009808
        %v936 = vunpack.c.0.s8 %v935
        %v937 = vperm.slane %v772, %v936
        %v938 = vrot.slane %v937, 4
        %v939 = vsel %vm784, %v938, %v932
        %v940 = vrot.slane %v932, 4
        %v941 = vsel %vm784, %v937, %v940
        %v943 = vunpack.c.l.s4 1934713408
        %v944 = vunpack.c.0.s8 %v943
        %v945 = vperm.slane %v939, %v944
        %v947 = vunpack.c.l.s4 1934713408
        %v948 = vunpack.c.0.s8 %v947
        %v949 = vperm.slane %v941, %v948
        %v950 = vrot.slane %v791, 4
        %v951 = vsel %vm784, 0, %v950
        %v952 = vrot.slane %v951, 4
        %v953 = vsel %vm784, %v952, %v791
        %v955 = vunpack.c.l.s4 1934713408
        %v956 = vunpack.c.0.s8 %v955
        %v957 = vperm.slane %v953, %v956
        %v958 = vrot.slane %v957, 4
        %v959 = vsel %vm784, 0, %v958
        %v960 = vrot.slane %v813, 4
        %v961 = vsel %vm784, 0, %v960
        %v962 = vrot.slane %v961, 4
        %v963 = vsel %vm784, %v962, %v813
        %v965 = vunpack.c.l.s4 1934713408
        %v966 = vunpack.c.0.s8 %v965
        %v967 = vperm.slane %v963, %v966
        %v968 = vrot.slane %v967, 4
        %v969 = vsel %vm784, 0, %v968
        %v970 = vrot.slane %v795, 4
        %v971 = vsel %vm784, 0, %v970
        %v972 = vrot.slane %v971, 4
        %v973 = vsel %vm784, %v972, %v795
        %v975 = vunpack.c.l.s4 1934713408
        %v976 = vunpack.c.0.s8 %v975
        %v977 = vperm.slane %v973, %v976
        %v978 = vrot.slane %v977, 4
        %v979 = vsel %vm784, 0, %v978
        %v980 = vrot.slane %v817, 4
        %v981 = vsel %vm784, 0, %v980
        %v982 = vrot.slane %v981, 4
        %v983 = vsel %vm784, %v982, %v817
        %v985 = vunpack.c.l.s4 1934713408
        %v986 = vunpack.c.0.s8 %v985
        %v987 = vperm.slane %v983, %v986
        %v988 = vrot.slane %v987, 4
        %v989 = vsel %vm784, 0, %v988
        %v990 = vrot.slane %v835, 4
        %v991 = vsel %vm784, 0, %v990
        %v992 = vrot.slane %v991, 4
        %v993 = vsel %vm784, %v992, %v835
        %v995 = vunpack.c.l.s4 1934713408
        %v996 = vunpack.c.0.s8 %v995
        %v997 = vperm.slane %v993, %v996
        %v998 = vrot.slane %v997, 4
        %v999 = vsel %vm784, 0, %v998
        %v1000 = vrot.slane %v857, 4
        %v1001 = vsel %vm784, 0, %v1000
        %v1002 = vrot.slane %v1001, 4
        %v1003 = vsel %vm784, %v1002, %v857
        %v1005 = vunpack.c.l.s4 1934713408
        %v1006 = vunpack.c.0.s8 %v1005
        %v1007 = vperm.slane %v1003, %v1006
        %v1008 = vrot.slane %v1007, 4
        %v1009 = vsel %vm784, 0, %v1008
        %v1010 = vrot.slane %v839, 4
        %v1011 = vsel %vm784, 0, %v1010
        %v1012 = vrot.slane %v1011, 4
        %v1013 = vsel %vm784, %v1012, %v839
        %v1015 = vunpack.c.l.s4 1934713408
        %v1016 = vunpack.c.0.s8 %v1015
        %v1017 = vperm.slane %v1013, %v1016
        %v1018 = vrot.slane %v1017, 4
        %v1019 = vsel %vm784, 0, %v1018
        %v1020 = vrot.slane %v861, 4
        %v1021 = vsel %vm784, 0, %v1020
        %v1022 = vrot.slane %v1021, 4
        %v1023 = vsel %vm784, %v1022, %v861
        %v1025 = vunpack.c.l.s4 1934713408
        %v1026 = vunpack.c.0.s8 %v1025
        %v1027 = vperm.slane %v1023, %v1026
        %v1028 = vrot.slane %v1027, 4
        %v1029 = vsel %vm784, 0, %v1028
        %v1030 = vrot.slane %v879, 4
        %v1031 = vsel %vm784, 0, %v1030
        %v1032 = vrot.slane %v1031, 4
        %v1033 = vsel %vm784, %v1032, %v879
        %v1035 = vunpack.c.l.s4 1934713408
        %v1036 = vunpack.c.0.s8 %v1035
        %v1037 = vperm.slane %v1033, %v1036
        %v1038 = vrot.slane %v1037, 4
        %v1039 = vsel %vm784, 0, %v1038
        %v1040 = vrot.slane %v901, 4
        %v1041 = vsel %vm784, 0, %v1040
        %v1042 = vrot.slane %v1041, 4
        %v1043 = vsel %vm784, %v1042, %v901
        %v1045 = vunpack.c.l.s4 1934713408
        %v1046 = vunpack.c.0.s8 %v1045
        %v1047 = vperm.slane %v1043, %v1046
        %v1048 = vrot.slane %v1047, 4
        %v1049 = vsel %vm784, 0, %v1048
        %v1050 = vrot.slane %v883, 4
        %v1051 = vsel %vm784, 0, %v1050
        %v1052 = vrot.slane %v1051, 4
        %v1053 = vsel %vm784, %v1052, %v883
        %v1055 = vunpack.c.l.s4 1934713408
        %v1056 = vunpack.c.0.s8 %v1055
        %v1057 = vperm.slane %v1053, %v1056
        %v1058 = vrot.slane %v1057, 4
        %v1059 = vsel %vm784, 0, %v1058
        %v1060 = vrot.slane %v905, 4
        %v1061 = vsel %vm784, 0, %v1060
        %v1062 = vrot.slane %v1061, 4
        %v1063 = vsel %vm784, %v1062, %v905
        %v1065 = vunpack.c.l.s4 1934713408
        %v1066 = vunpack.c.0.s8 %v1065
        %v1067 = vperm.slane %v1063, %v1066
        %v1068 = vrot.slane %v1067, 4
        %v1069 = vsel %vm784, 0, %v1068
        %v1070 = vrot.slane %v923, 4
        %v1071 = vsel %vm784, 0, %v1070
        %v1072 = vrot.slane %v1071, 4
        %v1073 = vsel %vm784, %v1072, %v923
        %v1075 = vunpack.c.l.s4 1934713408
        %v1076 = vunpack.c.0.s8 %v1075
        %v1077 = vperm.slane %v1073, %v1076
        %v1078 = vrot.slane %v1077, 4
        %v1079 = vsel %vm784, 0, %v1078
        %v1080 = vrot.slane %v945, 4
        %v1081 = vsel %vm784, 0, %v1080
        %v1082 = vrot.slane %v1081, 4
        %v1083 = vsel %vm784, %v1082, %v945
        %v1085 = vunpack.c.l.s4 1934713408
        %v1086 = vunpack.c.0.s8 %v1085
        %v1087 = vperm.slane %v1083, %v1086
        %v1088 = vrot.slane %v1087, 4
        %v1089 = vsel %vm784, 0, %v1088
        %v1090 = vrot.slane %v927, 4
        %v1091 = vsel %vm784, 0, %v1090
        %v1092 = vrot.slane %v1091, 4
        %v1093 = vsel %vm784, %v1092, %v927
        %v1095 = vunpack.c.l.s4 1934713408
        %v1096 = vunpack.c.0.s8 %v1095
        %v1097 = vperm.slane %v1093, %v1096
        %v1098 = vrot.slane %v1097, 4
        %v1099 = vsel %vm784, 0, %v1098
        %v1100 = vrot.slane %v949, 4
        %v1101 = vsel %vm784, 0, %v1100
        %v1102 = vrot.slane %v1101, 4
        %v1103 = vsel %vm784, %v1102, %v949
        %v1105 = vunpack.c.l.s4 1934713408
        %v1106 = vunpack.c.0.s8 %v1105
        %v1107 = vperm.slane %v1103, %v1106
        %v1108 = vrot.slane %v1107, 4
        %v1109 = vsel %vm784, 0, %v1108
        %v1112 = vpack.i.b16 %v967, %v957
        %v1113 = vshrl.u32 %v957, 16
        %v1114 = vshrl.u32 %v967, 16
        %v1115 = vpack.i.b16 %v1114, %v1113
        %v1118 = vpack.i.b16 %v969, %v959
        %v1119 = vshrl.u32 %v959, 16
        %v1120 = vshrl.u32 %v969, 16
        %v1121 = vpack.i.b16 %v1120, %v1119
        %v1124 = vpack.i.b16 %v987, %v977
        %v1125 = vshrl.u32 %v977, 16
        %v1126 = vshrl.u32 %v987, 16
        %v1127 = vpack.i.b16 %v1126, %v1125
        %v1130 = vpack.i.b16 %v989, %v979
        %v1131 = vshrl.u32 %v979, 16
        %v1132 = vshrl.u32 %v989, 16
        %v1133 = vpack.i.b16 %v1132, %v1131
        %v1136 = vpack.i.b16 %v1007, %v997
        %v1137 = vshrl.u32 %v997, 16
        %v1138 = vshrl.u32 %v1007, 16
        %v1139 = vpack.i.b16 %v1138, %v1137
        %v1142 = vpack.i.b16 %v1009, %v999
        %v1143 = vshrl.u32 %v999, 16
        %v1144 = vshrl.u32 %v1009, 16
        %v1145 = vpack.i.b16 %v1144, %v1143
        %v1148 = vpack.i.b16 %v1027, %v1017
        %v1149 = vshrl.u32 %v1017, 16
        %v1150 = vshrl.u32 %v1027, 16
        %v1151 = vpack.i.b16 %v1150, %v1149
        %v1154 = vpack.i.b16 %v1029, %v1019
        %v1155 = vshrl.u32 %v1019, 16
        %v1156 = vshrl.u32 %v1029, 16
        %v1157 = vpack.i.b16 %v1156, %v1155
        %v1160 = vpack.i.b16 %v1047, %v1037
        %v1161 = vshrl.u32 %v1037, 16
        %v1162 = vshrl.u32 %v1047, 16
        %v1163 = vpack.i.b16 %v1162, %v1161
        %v1166 = vpack.i.b16 %v1049, %v1039
        %v1167 = vshrl.u32 %v1039, 16
        %v1168 = vshrl.u32 %v1049, 16
        %v1169 = vpack.i.b16 %v1168, %v1167
        %v1172 = vpack.i.b16 %v1067, %v1057
        %v1173 = vshrl.u32 %v1057, 16
        %v1174 = vshrl.u32 %v1067, 16
        %v1175 = vpack.i.b16 %v1174, %v1173
        %v1178 = vpack.i.b16 %v1069, %v1059
        %v1179 = vshrl.u32 %v1059, 16
        %v1180 = vshrl.u32 %v1069, 16
        %v1181 = vpack.i.b16 %v1180, %v1179
        %v1184 = vpack.i.b16 %v1087, %v1077
        %v1185 = vshrl.u32 %v1077, 16
        %v1186 = vshrl.u32 %v1087, 16
        %v1187 = vpack.i.b16 %v1186, %v1185
        %v1190 = vpack.i.b16 %v1089, %v1079
        %v1191 = vshrl.u32 %v1079, 16
        %v1192 = vshrl.u32 %v1089, 16
        %v1193 = vpack.i.b16 %v1192, %v1191
        %v1196 = vpack.i.b16 %v1107, %v1097
        %v1197 = vshrl.u32 %v1097, 16
        %v1198 = vshrl.u32 %v1107, 16
        %v1199 = vpack.i.b16 %v1198, %v1197
        %v1202 = vpack.i.b16 %v1109, %v1099
        %v1203 = vshrl.u32 %v1099, 16
        %v1204 = vshrl.u32 %v1109, 16
        %v1205 = vpack.i.b16 %v1204, %v1203
        %1206 = vrot.lane.b32.xlu0 %v693, 64
        %v1207 = vpop.permute.xlu0 %1206
        %1208 = vrot.lane.b32.xlu0 %v694, 64
        %v1209 = vpop.permute.xlu0 %1208
        %1210 = vrot.lane.b32.xlu0 %v695, 64
        %v1211 = vpop.permute.xlu0 %1210
        %1212 = vrot.lane.b32.xlu0 %v696, 64
        %v1213 = vpop.permute.xlu0 %1212
        %1214 = vrot.lane.b32.xlu0 %v702, 64
        %v1215 = vpop.permute.xlu0 %1214
        %1216 = vrot.lane.b32.xlu0 %v704, 64
        %v1217 = vpop.permute.xlu0 %1216
        %1218 = vrot.lane.b32.xlu0 %v706, 64
        %v1219 = vpop.permute.xlu0 %1218
        %1220 = vrot.lane.b32.xlu0 %v708, 64
        %v1221 = vpop.permute.xlu0 %1220
        %1222 = vrot.lane.b32.xlu0 %v710, 64
        %v1223 = vpop.permute.xlu0 %1222
        %1224 = vrot.lane.b32.xlu0 %v712, 64
        %v1225 = vpop.permute.xlu0 %1224
        %1226 = vrot.lane.b32.xlu0 %v714, 64
        %v1227 = vpop.permute.xlu0 %1226
        %1228 = vrot.lane.b32.xlu0 %v716, 64
        %v1229 = vpop.permute.xlu0 %1228
        %1230 = vrot.lane.b32.xlu0 %v718, 64
        %v1231 = vpop.permute.xlu0 %1230
        %1232 = vrot.lane.b32.xlu0 %v720, 64
        %v1233 = vpop.permute.xlu0 %1232
        %1234 = vrot.lane.b32.xlu0 %v722, 64
        %v1235 = vpop.permute.xlu0 %1234
        %1236 = vrot.lane.b32.xlu0 %v724, 64
        %v1237 = vpop.permute.xlu0 %1236
        %v1240 = vpack.i.b16 %v1215, %v1207
        %v1241 = vshrl.u32 %v1207, 16
        %v1242 = vshrl.u32 %v1215, 16
        %v1243 = vpack.i.b16 %v1242, %v1241
        %v1246 = vpack.i.b16 %v1231, %v1223
        %v1247 = vshrl.u32 %v1223, 16
        %v1248 = vshrl.u32 %v1231, 16
        %v1249 = vpack.i.b16 %v1248, %v1247
        %v1252 = vpack.i.b16 %v1217, %v1209
        %v1253 = vshrl.u32 %v1209, 16
        %v1254 = vshrl.u32 %v1217, 16
        %v1255 = vpack.i.b16 %v1254, %v1253
        %v1258 = vpack.i.b16 %v1233, %v1225
        %v1259 = vshrl.u32 %v1225, 16
        %v1260 = vshrl.u32 %v1233, 16
        %v1261 = vpack.i.b16 %v1260, %v1259
        %v1264 = vpack.i.b16 %v1219, %v1211
        %v1265 = vshrl.u32 %v1211, 16
        %v1266 = vshrl.u32 %v1219, 16
        %v1267 = vpack.i.b16 %v1266, %v1265
        %v1270 = vpack.i.b16 %v1235, %v1227
        %v1271 = vshrl.u32 %v1227, 16
        %v1272 = vshrl.u32 %v1235, 16
        %v1273 = vpack.i.b16 %v1272, %v1271
        %v1276 = vpack.i.b16 %v1221, %v1213
        %v1277 = vshrl.u32 %v1213, 16
        %v1278 = vshrl.u32 %v1221, 16
        %v1279 = vpack.i.b16 %v1278, %v1277
        %v1282 = vpack.i.b16 %v1237, %v1229
        %v1283 = vshrl.u32 %v1229, 16
        %v1284 = vshrl.u32 %v1237, 16
        %v1285 = vpack.i.b16 %v1284, %v1283
        %v1288 = vunpack.c.l.s4 1983009808
        %v1289 = vunpack.c.0.s8 %v1288
        %v1290 = vperm.slane %v1240, %v1289
        %v1293 = vunpack.c.l.s4 1983009808
        %v1294 = vunpack.c.0.s8 %v1293
        %v1295 = vperm.slane %v1246, %v1294
        %v1296 = vrot.slane %v1295, 4
        %v1297 = vsel %vm784, %v1296, %v1290
        %v1298 = vrot.slane %v1290, 4
        %v1299 = vsel %vm784, %v1295, %v1298
        %v1301 = vunpack.c.l.s4 1934713408
        %v1302 = vunpack.c.0.s8 %v1301
        %v1303 = vperm.slane %v1297, %v1302
        %v1305 = vunpack.c.l.s4 1934713408
        %v1306 = vunpack.c.0.s8 %v1305
        %v1307 = vperm.slane %v1299, %v1306
        %v1310 = vunpack.c.l.s4 1983009808
        %v1311 = vunpack.c.0.s8 %v1310
        %v1312 = vperm.slane %v1243, %v1311
        %v1315 = vunpack.c.l.s4 1983009808
        %v1316 = vunpack.c.0.s8 %v1315
        %v1317 = vperm.slane %v1249, %v1316
        %v1318 = vrot.slane %v1317, 4
        %v1319 = vsel %vm784, %v1318, %v1312
        %v1320 = vrot.slane %v1312, 4
        %v1321 = vsel %vm784, %v1317, %v1320
        %v1323 = vunpack.c.l.s4 1934713408
        %v1324 = vunpack.c.0.s8 %v1323
        %v1325 = vperm.slane %v1319, %v1324
        %v1327 = vunpack.c.l.s4 1934713408
        %v1328 = vunpack.c.0.s8 %v1327
        %v1329 = vperm.slane %v1321, %v1328
        %v1332 = vunpack.c.l.s4 1983009808
        %v1333 = vunpack.c.0.s8 %v1332
        %v1334 = vperm.slane %v1252, %v1333
        %v1337 = vunpack.c.l.s4 1983009808
        %v1338 = vunpack.c.0.s8 %v1337
        %v1339 = vperm.slane %v1258, %v1338
        %v1340 = vrot.slane %v1339, 4
        %v1341 = vsel %vm784, %v1340, %v1334
        %v1342 = vrot.slane %v1334, 4
        %v1343 = vsel %vm784, %v1339, %v1342
        %v1345 = vunpack.c.l.s4 1934713408
        %v1346 = vunpack.c.0.s8 %v1345
        %v1347 = vperm.slane %v1341, %v1346
        %v1349 = vunpack.c.l.s4 1934713408
        %v1350 = vunpack.c.0.s8 %v1349
        %v1351 = vperm.slane %v1343, %v1350
        %v1354 = vunpack.c.l.s4 1983009808
        %v1355 = vunpack.c.0.s8 %v1354
        %v1356 = vperm.slane %v1255, %v1355
        %v1359 = vunpack.c.l.s4 1983009808
        %v1360 = vunpack.c.0.s8 %v1359
        %v1361 = vperm.slane %v1261, %v1360
        %v1362 = vrot.slane %v1361, 4
        %v1363 = vsel %vm784, %v1362, %v1356
        %v1364 = vrot.slane %v1356, 4
        %v1365 = vsel %vm784, %v1361, %v1364
        %v1367 = vunpack.c.l.s4 1934713408
        %v1368 = vunpack.c.0.s8 %v1367
        %v1369 = vperm.slane %v1363, %v1368
        %v1371 = vunpack.c.l.s4 1934713408
        %v1372 = vunpack.c.0.s8 %v1371
        %v1373 = vperm.slane %v1365, %v1372
        %v1376 = vunpack.c.l.s4 1983009808
        %v1377 = vunpack.c.0.s8 %v1376
        %v1378 = vperm.slane %v1264, %v1377
        %v1381 = vunpack.c.l.s4 1983009808
        %v1382 = vunpack.c.0.s8 %v1381
        %v1383 = vperm.slane %v1270, %v1382
        %v1384 = vrot.slane %v1383, 4
        %v1385 = vsel %vm784, %v1384, %v1378
        %v1386 = vrot.slane %v1378, 4
        %v1387 = vsel %vm784, %v1383, %v1386
        %v1389 = vunpack.c.l.s4 1934713408
        %v1390 = vunpack.c.0.s8 %v1389
        %v1391 = vperm.slane %v1385, %v1390
        %v1393 = vunpack.c.l.s4 1934713408
        %v1394 = vunpack.c.0.s8 %v1393
        %v1395 = vperm.slane %v1387, %v1394
        %v1398 = vunpack.c.l.s4 1983009808
        %v1399 = vunpack.c.0.s8 %v1398
        %v1400 = vperm.slane %v1267, %v1399
        %v1403 = vunpack.c.l.s4 1983009808
        %v1404 = vunpack.c.0.s8 %v1403
        %v1405 = vperm.slane %v1273, %v1404
        %v1406 = vrot.slane %v1405, 4
        %v1407 = vsel %vm784, %v1406, %v1400
        %v1408 = vrot.slane %v1400, 4
        %v1409 = vsel %vm784, %v1405, %v1408
        %v1411 = vunpack.c.l.s4 1934713408
        %v1412 = vunpack.c.0.s8 %v1411
        %v1413 = vperm.slane %v1407, %v1412
        %v1415 = vunpack.c.l.s4 1934713408
        %v1416 = vunpack.c.0.s8 %v1415
        %v1417 = vperm.slane %v1409, %v1416
        %v1420 = vunpack.c.l.s4 1983009808
        %v1421 = vunpack.c.0.s8 %v1420
        %v1422 = vperm.slane %v1276, %v1421
        %v1425 = vunpack.c.l.s4 1983009808
        %v1426 = vunpack.c.0.s8 %v1425
        %v1427 = vperm.slane %v1282, %v1426
        %v1428 = vrot.slane %v1427, 4
        %v1429 = vsel %vm784, %v1428, %v1422
        %v1430 = vrot.slane %v1422, 4
        %v1431 = vsel %vm784, %v1427, %v1430
        %v1433 = vunpack.c.l.s4 1934713408
        %v1434 = vunpack.c.0.s8 %v1433
        %v1435 = vperm.slane %v1429, %v1434
        %v1437 = vunpack.c.l.s4 1934713408
        %v1438 = vunpack.c.0.s8 %v1437
        %v1439 = vperm.slane %v1431, %v1438
        %v1442 = vunpack.c.l.s4 1983009808
        %v1443 = vunpack.c.0.s8 %v1442
        %v1444 = vperm.slane %v1279, %v1443
        %v1447 = vunpack.c.l.s4 1983009808
        %v1448 = vunpack.c.0.s8 %v1447
        %v1449 = vperm.slane %v1285, %v1448
        %v1450 = vrot.slane %v1449, 4
        %v1451 = vsel %vm784, %v1450, %v1444
        %v1452 = vrot.slane %v1444, 4
        %v1453 = vsel %vm784, %v1449, %v1452
        %v1455 = vunpack.c.l.s4 1934713408
        %v1456 = vunpack.c.0.s8 %v1455
        %v1457 = vperm.slane %v1451, %v1456
        %v1459 = vunpack.c.l.s4 1934713408
        %v1460 = vunpack.c.0.s8 %v1459
        %v1461 = vperm.slane %v1453, %v1460
        %v1462 = vrot.slane %v1303, 4
        %v1463 = vsel %vm784, 0, %v1462
        %v1464 = vrot.slane %v1463, 4
        %v1465 = vsel %vm784, %v1464, %v1303
        %v1467 = vunpack.c.l.s4 1934713408
        %v1468 = vunpack.c.0.s8 %v1467
        %v1469 = vperm.slane %v1465, %v1468
        %v1470 = vrot.slane %v1469, 4
        %v1471 = vsel %vm784, 0, %v1470
        %v1472 = vrot.slane %v1325, 4
        %v1473 = vsel %vm784, 0, %v1472
        %v1474 = vrot.slane %v1473, 4
        %v1475 = vsel %vm784, %v1474, %v1325
        %v1477 = vunpack.c.l.s4 1934713408
        %v1478 = vunpack.c.0.s8 %v1477
        %v1479 = vperm.slane %v1475, %v1478
        %v1480 = vrot.slane %v1479, 4
        %v1481 = vsel %vm784, 0, %v1480
        %v1482 = vrot.slane %v1307, 4
        %v1483 = vsel %vm784, 0, %v1482
        %v1484 = vrot.slane %v1483, 4
        %v1485 = vsel %vm784, %v1484, %v1307
        %v1487 = vunpack.c.l.s4 1934713408
        %v1488 = vunpack.c.0.s8 %v1487
        %v1489 = vperm.slane %v1485, %v1488
        %v1490 = vrot.slane %v1489, 4
        %v1491 = vsel %vm784, 0, %v1490
        %v1492 = vrot.slane %v1329, 4
        %v1493 = vsel %vm784, 0, %v1492
        %v1494 = vrot.slane %v1493, 4
        %v1495 = vsel %vm784, %v1494, %v1329
        %v1497 = vunpack.c.l.s4 1934713408
        %v1498 = vunpack.c.0.s8 %v1497
        %v1499 = vperm.slane %v1495, %v1498
        %v1500 = vrot.slane %v1499, 4
        %v1501 = vsel %vm784, 0, %v1500
        %v1502 = vrot.slane %v1347, 4
        %v1503 = vsel %vm784, 0, %v1502
        %v1504 = vrot.slane %v1503, 4
        %v1505 = vsel %vm784, %v1504, %v1347
        %v1507 = vunpack.c.l.s4 1934713408
        %v1508 = vunpack.c.0.s8 %v1507
        %v1509 = vperm.slane %v1505, %v1508
        %v1510 = vrot.slane %v1509, 4
        %v1511 = vsel %vm784, 0, %v1510
        %v1512 = vrot.slane %v1369, 4
        %v1513 = vsel %vm784, 0, %v1512
        %v1514 = vrot.slane %v1513, 4
        %v1515 = vsel %vm784, %v1514, %v1369
        %v1517 = vunpack.c.l.s4 1934713408
        %v1518 = vunpack.c.0.s8 %v1517
        %v1519 = vperm.slane %v1515, %v1518
        %v1520 = vrot.slane %v1519, 4
        %v1521 = vsel %vm784, 0, %v1520
        %v1522 = vrot.slane %v1351, 4
        %v1523 = vsel %vm784, 0, %v1522
        %v1524 = vrot.slane %v1523, 4
        %v1525 = vsel %vm784, %v1524, %v1351
        %v1527 = vunpack.c.l.s4 1934713408
        %v1528 = vunpack.c.0.s8 %v1527
        %v1529 = vperm.slane %v1525, %v1528
        %v1530 = vrot.slane %v1529, 4
        %v1531 = vsel %vm784, 0, %v1530
        %v1532 = vrot.slane %v1373, 4
        %v1533 = vsel %vm784, 0, %v1532
        %v1534 = vrot.slane %v1533, 4
        %v1535 = vsel %vm784, %v1534, %v1373
        %v1537 = vunpack.c.l.s4 1934713408
        %v1538 = vunpack.c.0.s8 %v1537
        %v1539 = vperm.slane %v1535, %v1538
        %v1540 = vrot.slane %v1539, 4
        %v1541 = vsel %vm784, 0, %v1540
        %v1542 = vrot.slane %v1391, 4
        %v1543 = vsel %vm784, 0, %v1542
        %v1544 = vrot.slane %v1543, 4
        %v1545 = vsel %vm784, %v1544, %v1391
        %v1547 = vunpack.c.l.s4 1934713408
        %v1548 = vunpack.c.0.s8 %v1547
        %v1549 = vperm.slane %v1545, %v1548
        %v1550 = vrot.slane %v1549, 4
        %v1551 = vsel %vm784, 0, %v1550
        %v1552 = vrot.slane %v1413, 4
        %v1553 = vsel %vm784, 0, %v1552
        %v1554 = vrot.slane %v1553, 4
        %v1555 = vsel %vm784, %v1554, %v1413
        %v1557 = vunpack.c.l.s4 1934713408
        %v1558 = vunpack.c.0.s8 %v1557
        %v1559 = vperm.slane %v1555, %v1558
        %v1560 = vrot.slane %v1559, 4
        %v1561 = vsel %vm784, 0, %v1560
        %v1562 = vrot.slane %v1395, 4
        %v1563 = vsel %vm784, 0, %v1562
        %v1564 = vrot.slane %v1563, 4
        %v1565 = vsel %vm784, %v1564, %v1395
        %v1567 = vunpack.c.l.s4 1934713408
        %v1568 = vunpack.c.0.s8 %v1567
        %v1569 = vperm.slane %v1565, %v1568
        %v1570 = vrot.slane %v1569, 4
        %v1571 = vsel %vm784, 0, %v1570
        %v1572 = vrot.slane %v1417, 4
        %v1573 = vsel %vm784, 0, %v1572
        %v1574 = vrot.slane %v1573, 4
        %v1575 = vsel %vm784, %v1574, %v1417
        %v1577 = vunpack.c.l.s4 1934713408
        %v1578 = vunpack.c.0.s8 %v1577
        %v1579 = vperm.slane %v1575, %v1578
        %v1580 = vrot.slane %v1579, 4
        %v1581 = vsel %vm784, 0, %v1580
        %v1582 = vrot.slane %v1435, 4
        %v1583 = vsel %vm784, 0, %v1582
        %v1584 = vrot.slane %v1583, 4
        %v1585 = vsel %vm784, %v1584, %v1435
        %v1587 = vunpack.c.l.s4 1934713408
        %v1588 = vunpack.c.0.s8 %v1587
        %v1589 = vperm.slane %v1585, %v1588
        %v1590 = vrot.slane %v1589, 4
        %v1591 = vsel %vm784, 0, %v1590
        %v1592 = vrot.slane %v1457, 4
        %v1593 = vsel %vm784, 0, %v1592
        %v1594 = vrot.slane %v1593, 4
        %v1595 = vsel %vm784, %v1594, %v1457
        %v1597 = vunpack.c.l.s4 1934713408
        %v1598 = vunpack.c.0.s8 %v1597
        %v1599 = vperm.slane %v1595, %v1598
        %v1600 = vrot.slane %v1599, 4
        %v1601 = vsel %vm784, 0, %v1600
        %v1602 = vrot.slane %v1439, 4
        %v1603 = vsel %vm784, 0, %v1602
        %v1604 = vrot.slane %v1603, 4
        %v1605 = vsel %vm784, %v1604, %v1439
        %v1607 = vunpack.c.l.s4 1934713408
        %v1608 = vunpack.c.0.s8 %v1607
        %v1609 = vperm.slane %v1605, %v1608
        %v1610 = vrot.slane %v1609, 4
        %v1611 = vsel %vm784, 0, %v1610
        %v1612 = vrot.slane %v1461, 4
        %v1613 = vsel %vm784, 0, %v1612
        %v1614 = vrot.slane %v1613, 4
        %v1615 = vsel %vm784, %v1614, %v1461
        %v1617 = vunpack.c.l.s4 1934713408
        %v1618 = vunpack.c.0.s8 %v1617
        %v1619 = vperm.slane %v1615, %v1618
        %v1620 = vrot.slane %v1619, 4
        %v1621 = vsel %vm784, 0, %v1620
        %v1624 = vpack.i.b16 %v1479, %v1469
        %v1625 = vshrl.u32 %v1469, 16
        %v1626 = vshrl.u32 %v1479, 16
        %v1627 = vpack.i.b16 %v1626, %v1625
        %v1630 = vpack.i.b16 %v1481, %v1471
        %v1631 = vshrl.u32 %v1471, 16
        %v1632 = vshrl.u32 %v1481, 16
        %v1633 = vpack.i.b16 %v1632, %v1631
        %v1636 = vpack.i.b16 %v1499, %v1489
        %v1637 = vshrl.u32 %v1489, 16
        %v1638 = vshrl.u32 %v1499, 16
        %v1639 = vpack.i.b16 %v1638, %v1637
        %v1642 = vpack.i.b16 %v1501, %v1491
        %v1643 = vshrl.u32 %v1491, 16
        %v1644 = vshrl.u32 %v1501, 16
        %v1645 = vpack.i.b16 %v1644, %v1643
        %v1648 = vpack.i.b16 %v1519, %v1509
        %v1649 = vshrl.u32 %v1509, 16
        %v1650 = vshrl.u32 %v1519, 16
        %v1651 = vpack.i.b16 %v1650, %v1649
        %v1654 = vpack.i.b16 %v1521, %v1511
        %v1655 = vshrl.u32 %v1511, 16
        %v1656 = vshrl.u32 %v1521, 16
        %v1657 = vpack.i.b16 %v1656, %v1655
        %v1660 = vpack.i.b16 %v1539, %v1529
        %v1661 = vshrl.u32 %v1529, 16
        %v1662 = vshrl.u32 %v1539, 16
        %v1663 = vpack.i.b16 %v1662, %v1661
        %v1666 = vpack.i.b16 %v1541, %v1531
        %v1667 = vshrl.u32 %v1531, 16
        %v1668 = vshrl.u32 %v1541, 16
        %v1669 = vpack.i.b16 %v1668, %v1667
        %v1672 = vpack.i.b16 %v1559, %v1549
        %v1673 = vshrl.u32 %v1549, 16
        %v1674 = vshrl.u32 %v1559, 16
        %v1675 = vpack.i.b16 %v1674, %v1673
        %v1678 = vpack.i.b16 %v1561, %v1551
        %v1679 = vshrl.u32 %v1551, 16
        %v1680 = vshrl.u32 %v1561, 16
        %v1681 = vpack.i.b16 %v1680, %v1679
        %v1684 = vpack.i.b16 %v1579, %v1569
        %v1685 = vshrl.u32 %v1569, 16
        %v1686 = vshrl.u32 %v1579, 16
        %v1687 = vpack.i.b16 %v1686, %v1685
        %v1690 = vpack.i.b16 %v1581, %v1571
        %v1691 = vshrl.u32 %v1571, 16
        %v1692 = vshrl.u32 %v1581, 16
        %v1693 = vpack.i.b16 %v1692, %v1691
        %v1696 = vpack.i.b16 %v1599, %v1589
        %v1697 = vshrl.u32 %v1589, 16
        %v1698 = vshrl.u32 %v1599, 16
        %v1699 = vpack.i.b16 %v1698, %v1697
        %v1702 = vpack.i.b16 %v1601, %v1591
        %v1703 = vshrl.u32 %v1591, 16
        %v1704 = vshrl.u32 %v1601, 16
        %v1705 = vpack.i.b16 %v1704, %v1703
        %v1708 = vpack.i.b16 %v1619, %v1609
        %v1709 = vshrl.u32 %v1609, 16
        %v1710 = vshrl.u32 %v1619, 16
        %v1711 = vpack.i.b16 %v1710, %v1709
        %v1714 = vpack.i.b16 %v1621, %v1611
        %v1715 = vshrl.u32 %v1611, 16
        %v1716 = vshrl.u32 %v1621, 16
        %v1717 = vpack.i.b16 %v1716, %v1715
        %v1718 = vrot.slane %v693, 4
        %v1719 = vrot.slane %v694, 4
        %v1720 = vrot.slane %v695, 4
        %v1721 = vrot.slane %v696, 4
        %v1722 = vrot.slane %v702, 4
        %v1723 = vrot.slane %v704, 4
        %v1724 = vrot.slane %v706, 4
        %v1725 = vrot.slane %v708, 4
        %v1726 = vrot.slane %v710, 4
        %v1727 = vrot.slane %v712, 4
        %v1728 = vrot.slane %v714, 4
        %v1729 = vrot.slane %v716, 4
        %v1730 = vrot.slane %v718, 4
        %v1731 = vrot.slane %v720, 4
        %v1732 = vrot.slane %v722, 4
        %v1733 = vrot.slane %v724, 4
        %v1736 = vpack.i.b16 %v1722, %v1718
        %v1737 = vshrl.u32 %v1718, 16
        %v1738 = vshrl.u32 %v1722, 16
        %v1739 = vpack.i.b16 %v1738, %v1737
        %v1742 = vpack.i.b16 %v1730, %v1726
        %v1743 = vshrl.u32 %v1726, 16
        %v1744 = vshrl.u32 %v1730, 16
        %v1745 = vpack.i.b16 %v1744, %v1743
        %v1748 = vpack.i.b16 %v1723, %v1719
        %v1749 = vshrl.u32 %v1719, 16
        %v1750 = vshrl.u32 %v1723, 16
        %v1751 = vpack.i.b16 %v1750, %v1749
        %v1754 = vpack.i.b16 %v1731, %v1727
        %v1755 = vshrl.u32 %v1727, 16
        %v1756 = vshrl.u32 %v1731, 16
        %v1757 = vpack.i.b16 %v1756, %v1755
        %v1760 = vpack.i.b16 %v1724, %v1720
        %v1761 = vshrl.u32 %v1720, 16
        %v1762 = vshrl.u32 %v1724, 16
        %v1763 = vpack.i.b16 %v1762, %v1761
        %v1766 = vpack.i.b16 %v1732, %v1728
        %v1767 = vshrl.u32 %v1728, 16
        %v1768 = vshrl.u32 %v1732, 16
        %v1769 = vpack.i.b16 %v1768, %v1767
        %v1772 = vpack.i.b16 %v1725, %v1721
        %v1773 = vshrl.u32 %v1721, 16
        %v1774 = vshrl.u32 %v1725, 16
        %v1775 = vpack.i.b16 %v1774, %v1773
        %v1778 = vpack.i.b16 %v1733, %v1729
        %v1779 = vshrl.u32 %v1729, 16
        %v1780 = vshrl.u32 %v1733, 16
        %v1781 = vpack.i.b16 %v1780, %v1779
        %v1784 = vunpack.c.l.s4 1983009808
        %v1785 = vunpack.c.0.s8 %v1784
        %v1786 = vperm.slane %v1736, %v1785
        %v1789 = vunpack.c.l.s4 1983009808
        %v1790 = vunpack.c.0.s8 %v1789
        %v1791 = vperm.slane %v1742, %v1790
        %v1792 = vrot.slane %v1791, 4
        %v1793 = vsel %vm784, %v1792, %v1786
        %v1794 = vrot.slane %v1786, 4
        %v1795 = vsel %vm784, %v1791, %v1794
        %v1797 = vunpack.c.l.s4 1934713408
        %v1798 = vunpack.c.0.s8 %v1797
        %v1799 = vperm.slane %v1793, %v1798
        %v1801 = vunpack.c.l.s4 1934713408
        %v1802 = vunpack.c.0.s8 %v1801
        %v1803 = vperm.slane %v1795, %v1802
        %v1806 = vunpack.c.l.s4 1983009808
        %v1807 = vunpack.c.0.s8 %v1806
        %v1808 = vperm.slane %v1739, %v1807
        %v1811 = vunpack.c.l.s4 1983009808
        %v1812 = vunpack.c.0.s8 %v1811
        %v1813 = vperm.slane %v1745, %v1812
        %v1814 = vrot.slane %v1813, 4
        %v1815 = vsel %vm784, %v1814, %v1808
        %v1816 = vrot.slane %v1808, 4
        %v1817 = vsel %vm784, %v1813, %v1816
        %v1819 = vunpack.c.l.s4 1934713408
        %v1820 = vunpack.c.0.s8 %v1819
        %v1821 = vperm.slane %v1815, %v1820
        %v1823 = vunpack.c.l.s4 1934713408
        %v1824 = vunpack.c.0.s8 %v1823
        %v1825 = vperm.slane %v1817, %v1824
        %v1828 = vunpack.c.l.s4 1983009808
        %v1829 = vunpack.c.0.s8 %v1828
        %v1830 = vperm.slane %v1748, %v1829
        %v1833 = vunpack.c.l.s4 1983009808
        %v1834 = vunpack.c.0.s8 %v1833
        %v1835 = vperm.slane %v1754, %v1834
        %v1836 = vrot.slane %v1835, 4
        %v1837 = vsel %vm784, %v1836, %v1830
        %v1838 = vrot.slane %v1830, 4
        %v1839 = vsel %vm784, %v1835, %v1838
        %v1841 = vunpack.c.l.s4 1934713408
        %v1842 = vunpack.c.0.s8 %v1841
        %v1843 = vperm.slane %v1837, %v1842
        %v1845 = vunpack.c.l.s4 1934713408
        %v1846 = vunpack.c.0.s8 %v1845
        %v1847 = vperm.slane %v1839, %v1846
        %v1850 = vunpack.c.l.s4 1983009808
        %v1851 = vunpack.c.0.s8 %v1850
        %v1852 = vperm.slane %v1751, %v1851
        %v1855 = vunpack.c.l.s4 1983009808
        %v1856 = vunpack.c.0.s8 %v1855
        %v1857 = vperm.slane %v1757, %v1856
        %v1858 = vrot.slane %v1857, 4
        %v1859 = vsel %vm784, %v1858, %v1852
        %v1860 = vrot.slane %v1852, 4
        %v1861 = vsel %vm784, %v1857, %v1860
        %v1863 = vunpack.c.l.s4 1934713408
        %v1864 = vunpack.c.0.s8 %v1863
        %v1865 = vperm.slane %v1859, %v1864
        %v1867 = vunpack.c.l.s4 1934713408
        %v1868 = vunpack.c.0.s8 %v1867
        %v1869 = vperm.slane %v1861, %v1868
        %v1872 = vunpack.c.l.s4 1983009808
        %v1873 = vunpack.c.0.s8 %v1872
        %v1874 = vperm.slane %v1760, %v1873
        %v1877 = vunpack.c.l.s4 1983009808
        %v1878 = vunpack.c.0.s8 %v1877
        %v1879 = vperm.slane %v1766, %v1878
        %v1880 = vrot.slane %v1879, 4
        %v1881 = vsel %vm784, %v1880, %v1874
        %v1882 = vrot.slane %v1874, 4
        %v1883 = vsel %vm784, %v1879, %v1882
        %v1885 = vunpack.c.l.s4 1934713408
        %v1886 = vunpack.c.0.s8 %v1885
        %v1887 = vperm.slane %v1881, %v1886
        %v1889 = vunpack.c.l.s4 1934713408
        %v1890 = vunpack.c.0.s8 %v1889
        %v1891 = vperm.slane %v1883, %v1890
        %v1894 = vunpack.c.l.s4 1983009808
        %v1895 = vunpack.c.0.s8 %v1894
        %v1896 = vperm.slane %v1763, %v1895
        %v1899 = vunpack.c.l.s4 1983009808
        %v1900 = vunpack.c.0.s8 %v1899
        %v1901 = vperm.slane %v1769, %v1900
        %v1902 = vrot.slane %v1901, 4
        %v1903 = vsel %vm784, %v1902, %v1896
        %v1904 = vrot.slane %v1896, 4
        %v1905 = vsel %vm784, %v1901, %v1904
        %v1907 = vunpack.c.l.s4 1934713408
        %v1908 = vunpack.c.0.s8 %v1907
        %v1909 = vperm.slane %v1903, %v1908
        %v1911 = vunpack.c.l.s4 1934713408
        %v1912 = vunpack.c.0.s8 %v1911
        %v1913 = vperm.slane %v1905, %v1912
        %v1916 = vunpack.c.l.s4 1983009808
        %v1917 = vunpack.c.0.s8 %v1916
        %v1918 = vperm.slane %v1772, %v1917
        %v1921 = vunpack.c.l.s4 1983009808
        %v1922 = vunpack.c.0.s8 %v1921
        %v1923 = vperm.slane %v1778, %v1922
        %v1924 = vrot.slane %v1923, 4
        %v1925 = vsel %vm784, %v1924, %v1918
        %v1926 = vrot.slane %v1918, 4
        %v1927 = vsel %vm784, %v1923, %v1926
        %v1929 = vunpack.c.l.s4 1934713408
        %v1930 = vunpack.c.0.s8 %v1929
        %v1931 = vperm.slane %v1925, %v1930
        %v1933 = vunpack.c.l.s4 1934713408
        %v1934 = vunpack.c.0.s8 %v1933
        %v1935 = vperm.slane %v1927, %v1934
        %v1938 = vunpack.c.l.s4 1983009808
        %v1939 = vunpack.c.0.s8 %v1938
        %v1940 = vperm.slane %v1775, %v1939
        %v1943 = vunpack.c.l.s4 1983009808
        %v1944 = vunpack.c.0.s8 %v1943
        %v1945 = vperm.slane %v1781, %v1944
        %v1946 = vrot.slane %v1945, 4
        %v1947 = vsel %vm784, %v1946, %v1940
        %v1948 = vrot.slane %v1940, 4
        %v1949 = vsel %vm784, %v1945, %v1948
        %v1951 = vunpack.c.l.s4 1934713408
        %v1952 = vunpack.c.0.s8 %v1951
        %v1953 = vperm.slane %v1947, %v1952
        %v1955 = vunpack.c.l.s4 1934713408
        %v1956 = vunpack.c.0.s8 %v1955
        %v1957 = vperm.slane %v1949, %v1956
        %v1958 = vrot.slane %v1799, 4
        %v1959 = vsel %vm784, 0, %v1958
        %v1960 = vrot.slane %v1959, 4
        %v1961 = vsel %vm784, %v1960, %v1799
        %v1963 = vunpack.c.l.s4 1934713408
        %v1964 = vunpack.c.0.s8 %v1963
        %v1965 = vperm.slane %v1961, %v1964
        %v1966 = vrot.slane %v1965, 4
        %v1967 = vsel %vm784, 0, %v1966
        %v1968 = vrot.slane %v1821, 4
        %v1969 = vsel %vm784, 0, %v1968
        %v1970 = vrot.slane %v1969, 4
        %v1971 = vsel %vm784, %v1970, %v1821
        %v1973 = vunpack.c.l.s4 1934713408
        %v1974 = vunpack.c.0.s8 %v1973
        %v1975 = vperm.slane %v1971, %v1974
        %v1976 = vrot.slane %v1975, 4
        %v1977 = vsel %vm784, 0, %v1976
        %v1978 = vrot.slane %v1803, 4
        %v1979 = vsel %vm784, 0, %v1978
        %v1980 = vrot.slane %v1979, 4
        %v1981 = vsel %vm784, %v1980, %v1803
        %v1983 = vunpack.c.l.s4 1934713408
        %v1984 = vunpack.c.0.s8 %v1983
        %v1985 = vperm.slane %v1981, %v1984
        %v1986 = vrot.slane %v1985, 4
        %v1987 = vsel %vm784, 0, %v1986
        %v1988 = vrot.slane %v1825, 4
        %v1989 = vsel %vm784, 0, %v1988
        %v1990 = vrot.slane %v1989, 4
        %v1991 = vsel %vm784, %v1990, %v1825
        %v1993 = vunpack.c.l.s4 1934713408
        %v1994 = vunpack.c.0.s8 %v1993
        %v1995 = vperm.slane %v1991, %v1994
        %v1996 = vrot.slane %v1995, 4
        %v1997 = vsel %vm784, 0, %v1996
        %v1998 = vrot.slane %v1843, 4
        %v1999 = vsel %vm784, 0, %v1998
        %v2000 = vrot.slane %v1999, 4
        %v2001 = vsel %vm784, %v2000, %v1843
        %v2003 = vunpack.c.l.s4 1934713408
        %v2004 = vunpack.c.0.s8 %v2003
        %v2005 = vperm.slane %v2001, %v2004
        %v2006 = vrot.slane %v2005, 4
        %v2007 = vsel %vm784, 0, %v2006
        %v2008 = vrot.slane %v1865, 4
        %v2009 = vsel %vm784, 0, %v2008
        %v2010 = vrot.slane %v2009, 4
        %v2011 = vsel %vm784, %v2010, %v1865
        %v2013 = vunpack.c.l.s4 1934713408
        %v2014 = vunpack.c.0.s8 %v2013
        %v2015 = vperm.slane %v2011, %v2014
        %v2016 = vrot.slane %v2015, 4
        %v2017 = vsel %vm784, 0, %v2016
        %v2018 = vrot.slane %v1847, 4
        %v2019 = vsel %vm784, 0, %v2018
        %v2020 = vrot.slane %v2019, 4
        %v2021 = vsel %vm784, %v2020, %v1847
        %v2023 = vunpack.c.l.s4 1934713408
        %v2024 = vunpack.c.0.s8 %v2023
        %v2025 = vperm.slane %v2021, %v2024
        %v2026 = vrot.slane %v2025, 4
        %v2027 = vsel %vm784, 0, %v2026
        %v2028 = vrot.slane %v1869, 4
        %v2029 = vsel %vm784, 0, %v2028
        %v2030 = vrot.slane %v2029, 4
        %v2031 = vsel %vm784, %v2030, %v1869
        %v2033 = vunpack.c.l.s4 1934713408
        %v2034 = vunpack.c.0.s8 %v2033
        %v2035 = vperm.slane %v2031, %v2034
        %v2036 = vrot.slane %v2035, 4
        %v2037 = vsel %vm784, 0, %v2036
        %v2038 = vrot.slane %v1887, 4
        %v2039 = vsel %vm784, 0, %v2038
        %v2040 = vrot.slane %v2039, 4
        %v2041 = vsel %vm784, %v2040, %v1887
        %v2043 = vunpack.c.l.s4 1934713408
        %v2044 = vunpack.c.0.s8 %v2043
        %v2045 = vperm.slane %v2041, %v2044
        %v2046 = vrot.slane %v2045, 4
        %v2047 = vsel %vm784, 0, %v2046
        %v2048 = vrot.slane %v1909, 4
        %v2049 = vsel %vm784, 0, %v2048
        %v2050 = vrot.slane %v2049, 4
        %v2051 = vsel %vm784, %v2050, %v1909
        %v2053 = vunpack.c.l.s4 1934713408
        %v2054 = vunpack.c.0.s8 %v2053
        %v2055 = vperm.slane %v2051, %v2054
        %v2056 = vrot.slane %v2055, 4
        %v2057 = vsel %vm784, 0, %v2056
        %v2058 = vrot.slane %v1891, 4
        %v2059 = vsel %vm784, 0, %v2058
        %v2060 = vrot.slane %v2059, 4
        %v2061 = vsel %vm784, %v2060, %v1891
        %v2063 = vunpack.c.l.s4 1934713408
        %v2064 = vunpack.c.0.s8 %v2063
        %v2065 = vperm.slane %v2061, %v2064
        %v2066 = vrot.slane %v2065, 4
        %v2067 = vsel %vm784, 0, %v2066
        %v2068 = vrot.slane %v1913, 4
        %v2069 = vsel %vm784, 0, %v2068
        %v2070 = vrot.slane %v2069, 4
        %v2071 = vsel %vm784, %v2070, %v1913
        %v2073 = vunpack.c.l.s4 1934713408
        %v2074 = vunpack.c.0.s8 %v2073
        %v2075 = vperm.slane %v2071, %v2074
        %v2076 = vrot.slane %v2075, 4
        %v2077 = vsel %vm784, 0, %v2076
        %v2078 = vrot.slane %v1931, 4
        %v2079 = vsel %vm784, 0, %v2078
        %v2080 = vrot.slane %v2079, 4
        %v2081 = vsel %vm784, %v2080, %v1931
        %v2083 = vunpack.c.l.s4 1934713408
        %v2084 = vunpack.c.0.s8 %v2083
        %v2085 = vperm.slane %v2081, %v2084
        %v2086 = vrot.slane %v2085, 4
        %v2087 = vsel %vm784, 0, %v2086
        %v2088 = vrot.slane %v1953, 4
        %v2089 = vsel %vm784, 0, %v2088
        %v2090 = vrot.slane %v2089, 4
        %v2091 = vsel %vm784, %v2090, %v1953
        %v2093 = vunpack.c.l.s4 1934713408
        %v2094 = vunpack.c.0.s8 %v2093
        %v2095 = vperm.slane %v2091, %v2094
        %v2096 = vrot.slane %v2095, 4
        %v2097 = vsel %vm784, 0, %v2096
        %v2098 = vrot.slane %v1935, 4
        %v2099 = vsel %vm784, 0, %v2098
        %v2100 = vrot.slane %v2099, 4
        %v2101 = vsel %vm784, %v2100, %v1935
        %v2103 = vunpack.c.l.s4 1934713408
        %v2104 = vunpack.c.0.s8 %v2103
        %v2105 = vperm.slane %v2101, %v2104
        %v2106 = vrot.slane %v2105, 4
        %v2107 = vsel %vm784, 0, %v2106
        %v2108 = vrot.slane %v1957, 4
        %v2109 = vsel %vm784, 0, %v2108
        %v2110 = vrot.slane %v2109, 4
        %v2111 = vsel %vm784, %v2110, %v1957
        %v2113 = vunpack.c.l.s4 1934713408
        %v2114 = vunpack.c.0.s8 %v2113
        %v2115 = vperm.slane %v2111, %v2114
        %v2116 = vrot.slane %v2115, 4
        %v2117 = vsel %vm784, 0, %v2116
        %v2120 = vpack.i.b16 %v1975, %v1965
        %v2121 = vshrl.u32 %v1965, 16
        %v2122 = vshrl.u32 %v1975, 16
        %v2123 = vpack.i.b16 %v2122, %v2121
        %v2126 = vpack.i.b16 %v1977, %v1967
        %v2127 = vshrl.u32 %v1967, 16
        %v2128 = vshrl.u32 %v1977, 16
        %v2129 = vpack.i.b16 %v2128, %v2127
        %v2132 = vpack.i.b16 %v1995, %v1985
        %v2133 = vshrl.u32 %v1985, 16
        %v2134 = vshrl.u32 %v1995, 16
        %v2135 = vpack.i.b16 %v2134, %v2133
        %v2138 = vpack.i.b16 %v1997, %v1987
        %v2139 = vshrl.u32 %v1987, 16
        %v2140 = vshrl.u32 %v1997, 16
        %v2141 = vpack.i.b16 %v2140, %v2139
        %v2144 = vpack.i.b16 %v2015, %v2005
        %v2145 = vshrl.u32 %v2005, 16
        %v2146 = vshrl.u32 %v2015, 16
        %v2147 = vpack.i.b16 %v2146, %v2145
        %v2150 = vpack.i.b16 %v2017, %v2007
        %v2151 = vshrl.u32 %v2007, 16
        %v2152 = vshrl.u32 %v2017, 16
        %v2153 = vpack.i.b16 %v2152, %v2151
        %v2156 = vpack.i.b16 %v2035, %v2025
        %v2157 = vshrl.u32 %v2025, 16
        %v2158 = vshrl.u32 %v2035, 16
        %v2159 = vpack.i.b16 %v2158, %v2157
        %v2162 = vpack.i.b16 %v2037, %v2027
        %v2163 = vshrl.u32 %v2027, 16
        %v2164 = vshrl.u32 %v2037, 16
        %v2165 = vpack.i.b16 %v2164, %v2163
        %v2168 = vpack.i.b16 %v2055, %v2045
        %v2169 = vshrl.u32 %v2045, 16
        %v2170 = vshrl.u32 %v2055, 16
        %v2171 = vpack.i.b16 %v2170, %v2169
        %v2174 = vpack.i.b16 %v2057, %v2047
        %v2175 = vshrl.u32 %v2047, 16
        %v2176 = vshrl.u32 %v2057, 16
        %v2177 = vpack.i.b16 %v2176, %v2175
        %v2180 = vpack.i.b16 %v2075, %v2065
        %v2181 = vshrl.u32 %v2065, 16
        %v2182 = vshrl.u32 %v2075, 16
        %v2183 = vpack.i.b16 %v2182, %v2181
        %v2186 = vpack.i.b16 %v2077, %v2067
        %v2187 = vshrl.u32 %v2067, 16
        %v2188 = vshrl.u32 %v2077, 16
        %v2189 = vpack.i.b16 %v2188, %v2187
        %v2192 = vpack.i.b16 %v2095, %v2085
        %v2193 = vshrl.u32 %v2085, 16
        %v2194 = vshrl.u32 %v2095, 16
        %v2195 = vpack.i.b16 %v2194, %v2193
        %v2198 = vpack.i.b16 %v2097, %v2087
        %v2199 = vshrl.u32 %v2087, 16
        %v2200 = vshrl.u32 %v2097, 16
        %v2201 = vpack.i.b16 %v2200, %v2199
        %v2204 = vpack.i.b16 %v2115, %v2105
        %v2205 = vshrl.u32 %v2105, 16
        %v2206 = vshrl.u32 %v2115, 16
        %v2207 = vpack.i.b16 %v2206, %v2205
        %v2210 = vpack.i.b16 %v2117, %v2107
        %v2211 = vshrl.u32 %v2107, 16
        %v2212 = vshrl.u32 %v2117, 16
        %v2213 = vpack.i.b16 %v2212, %v2211
        %vm2214 = vcmask 130048
        %v2216 = vsel %vm2214, %v1112, 0
        %v2219 = vsel %vm2214, %v1624, 0
        %2221 = vmatpush.bf16.xpose.msra.mxu0 0
        %2222 = vmatpush.bf16.xpose.msra.mxu0 0
        %2223 = vmatpush.bf16.xpose.msra.mxu0 0
        %2224 = vmatpush.bf16.xpose.msra.mxu0 0
        %2225 = vmatpush.bf16.xpose.msra.mxu0 0
        %2226 = vmatpush.bf16.xpose.msra.mxu0 0
        %2227 = vmatpush.bf16.xpose.msra.mxu0 0
        %2228 = vmatpush.bf16.xpose.msra.mxu0 %v2219
        %2229 = vmatmul.bf16.gmra.mxu0 %v2216
        %v2230 = vpop.f32.mrf.mxu0
        %v2231 = vadd.f32 0.0, %v2230
        %v2232 = vpop.f32.mrf.mxu0
        %2233 = vdwg.mxu0
        %v2235 = vsel %vm2214, %v1115, 0
        %v2238 = vsel %vm2214, %v1627, 0
        %2240 = vmatpush.bf16.xpose.msra.mxu0 0
        %2241 = vmatpush.bf16.xpose.msra.mxu0 0
        %2242 = vmatpush.bf16.xpose.msra.mxu0 0
        %2243 = vmatpush.bf16.xpose.msra.mxu0 0
        %2244 = vmatpush.bf16.xpose.msra.mxu0 0
        %2245 = vmatpush.bf16.xpose.msra.mxu0 0
        %2246 = vmatpush.bf16.xpose.msra.mxu0 0
        %2247 = vmatpush.bf16.xpose.msra.mxu0 %v2238
        %2248 = vmatmul.bf16.gmra.mxu0 %v2235
        %v2249 = vpop.f32.mrf.mxu0
        %v2250 = vadd.f32 0.0, %v2249
        %v2251 = vpop.f32.mrf.mxu0
        %2252 = vdwg.mxu0
        %v2254 = vsel %vm2214, %v1118, 0
        %v2257 = vsel %vm2214, %v1630, 0
        %2259 = vmatpush.bf16.xpose.msra.mxu0 0
        %2260 = vmatpush.bf16.xpose.msra.mxu0 0
        %2261 = vmatpush.bf16.xpose.msra.mxu0 0
        %2262 = vmatpush.bf16.xpose.msra.mxu0 0
        %2263 = vmatpush.bf16.xpose.msra.mxu0 0
        %2264 = vmatpush.bf16.xpose.msra.mxu0 0
        %2265 = vmatpush.bf16.xpose.msra.mxu0 0
        %2266 = vmatpush.bf16.xpose.msra.mxu0 %v2257
        %2267 = vmatmul.bf16.gmra.mxu0 %v2254
        %v2268 = vpop.f32.mrf.mxu0
        %v2269 = vadd.f32 0.0, %v2268
        %v2270 = vpop.f32.mrf.mxu0
        %2271 = vdwg.mxu0
        %v2273 = vsel %vm2214, %v1121, 0
        %v2276 = vsel %vm2214, %v1633, 0
        %2278 = vmatpush.bf16.xpose.msra.mxu0 0
        %2279 = vmatpush.bf16.xpose.msra.mxu0 0
        %2280 = vmatpush.bf16.xpose.msra.mxu0 0
        %2281 = vmatpush.bf16.xpose.msra.mxu0 0
        %2282 = vmatpush.bf16.xpose.msra.mxu0 0
        %2283 = vmatpush.bf16.xpose.msra.mxu0 0
        %2284 = vmatpush.bf16.xpose.msra.mxu0 0
        %2285 = vmatpush.bf16.xpose.msra.mxu0 %v2276
        %2286 = vmatmul.bf16.gmra.mxu0 %v2273
        %v2287 = vpop.f32.mrf.mxu0
        %v2288 = vadd.f32 0.0, %v2287
        %v2289 = vpop.f32.mrf.mxu0
        %2290 = vdwg.mxu0
        %v2292 = vsel %vm2214, %v1124, 0
        %v2295 = vsel %vm2214, %v1636, 0
        %2297 = vmatpush.bf16.xpose.msra.mxu0 0
        %2298 = vmatpush.bf16.xpose.msra.mxu0 0
        %2299 = vmatpush.bf16.xpose.msra.mxu0 0
        %2300 = vmatpush.bf16.xpose.msra.mxu0 0
        %2301 = vmatpush.bf16.xpose.msra.mxu0 0
        %2302 = vmatpush.bf16.xpose.msra.mxu0 0
        %2303 = vmatpush.bf16.xpose.msra.mxu0 0
        %2304 = vmatpush.bf16.xpose.msra.mxu0 %v2295
        %2305 = vmatmul.bf16.gmra.mxu0 %v2292
        %v2306 = vpop.f32.mrf.mxu0
        %v2307 = vadd.f32 0.0, %v2306
        %v2308 = vpop.f32.mrf.mxu0
        %2309 = vdwg.mxu0
        %v2311 = vsel %vm2214, %v1127, 0
        %v2314 = vsel %vm2214, %v1639, 0
        %2316 = vmatpush.bf16.xpose.msra.mxu0 0
        %2317 = vmatpush.bf16.xpose.msra.mxu0 0
        %2318 = vmatpush.bf16.xpose.msra.mxu0 0
        %2319 = vmatpush.bf16.xpose.msra.mxu0 0
        %2320 = vmatpush.bf16.xpose.msra.mxu0 0
        %2321 = vmatpush.bf16.xpose.msra.mxu0 0
        %2322 = vmatpush.bf16.xpose.msra.mxu0 0
        %2323 = vmatpush.bf16.xpose.msra.mxu0 %v2314
        %2324 = vmatmul.bf16.gmra.mxu0 %v2311
        %v2325 = vpop.f32.mrf.mxu0
        %v2326 = vadd.f32 0.0, %v2325
        %v2327 = vpop.f32.mrf.mxu0
        %2328 = vdwg.mxu0
        %v2330 = vsel %vm2214, %v1130, 0
        %v2333 = vsel %vm2214, %v1642, 0
        %2335 = vmatpush.bf16.xpose.msra.mxu0 0
        %2336 = vmatpush.bf16.xpose.msra.mxu0 0
        %2337 = vmatpush.bf16.xpose.msra.mxu0 0
        %2338 = vmatpush.bf16.xpose.msra.mxu0 0
        %2339 = vmatpush.bf16.xpose.msra.mxu0 0
        %2340 = vmatpush.bf16.xpose.msra.mxu0 0
        %2341 = vmatpush.bf16.xpose.msra.mxu0 0
        %2342 = vmatpush.bf16.xpose.msra.mxu0 %v2333
        %2343 = vmatmul.bf16.gmra.mxu0 %v2330
        %v2344 = vpop.f32.mrf.mxu0
        %v2345 = vadd.f32 0.0, %v2344
        %v2346 = vpop.f32.mrf.mxu0
        %2347 = vdwg.mxu0
        %v2349 = vsel %vm2214, %v1133, 0
        %v2352 = vsel %vm2214, %v1645, 0
        %2354 = vmatpush.bf16.xpose.msra.mxu0 0
        %2355 = vmatpush.bf16.xpose.msra.mxu0 0
        %2356 = vmatpush.bf16.xpose.msra.mxu0 0
        %2357 = vmatpush.bf16.xpose.msra.mxu0 0
        %2358 = vmatpush.bf16.xpose.msra.mxu0 0
        %2359 = vmatpush.bf16.xpose.msra.mxu0 0
        %2360 = vmatpush.bf16.xpose.msra.mxu0 0
        %2361 = vmatpush.bf16.xpose.msra.mxu0 %v2352
        %2362 = vmatmul.bf16.gmra.mxu0 %v2349
        %v2363 = vpop.f32.mrf.mxu0
        %v2364 = vadd.f32 0.0, %v2363
        %v2365 = vpop.f32.mrf.mxu0
        %2366 = vdwg.mxu0
        %v2368 = vsel %vm2214, %v1136, 0
        %v2371 = vsel %vm2214, %v1648, 0
        %2373 = vmatpush.bf16.xpose.msra.mxu0 0
        %2374 = vmatpush.bf16.xpose.msra.mxu0 0
        %2375 = vmatpush.bf16.xpose.msra.mxu0 0
        %2376 = vmatpush.bf16.xpose.msra.mxu0 0
        %2377 = vmatpush.bf16.xpose.msra.mxu0 0
        %2378 = vmatpush.bf16.xpose.msra.mxu0 0
        %2379 = vmatpush.bf16.xpose.msra.mxu0 0
        %2380 = vmatpush.bf16.xpose.msra.mxu0 %v2371
        %2381 = vmatmul.bf16.gmra.mxu0 %v2368
        %v2382 = vpop.f32.mrf.mxu0
        %v2383 = vadd.f32 0.0, %v2382
        %v2384 = vpop.f32.mrf.mxu0
        %2385 = vdwg.mxu0
        %v2387 = vsel %vm2214, %v1139, 0
        %v2390 = vsel %vm2214, %v1651, 0
        %2392 = vmatpush.bf16.xpose.msra.mxu0 0
        %2393 = vmatpush.bf16.xpose.msra.mxu0 0
        %2394 = vmatpush.bf16.xpose.msra.mxu0 0
        %2395 = vmatpush.bf16.xpose.msra.mxu0 0
        %2396 = vmatpush.bf16.xpose.msra.mxu0 0
        %2397 = vmatpush.bf16.xpose.msra.mxu0 0
        %2398 = vmatpush.bf16.xpose.msra.mxu0 0
        %2399 = vmatpush.bf16.xpose.msra.mxu0 %v2390
        %2400 = vmatmul.bf16.gmra.mxu0 %v2387
        %v2401 = vpop.f32.mrf.mxu0
        %v2402 = vadd.f32 0.0, %v2401
        %v2403 = vpop.f32.mrf.mxu0
        %2404 = vdwg.mxu0
        %v2406 = vsel %vm2214, %v1142, 0
        %v2409 = vsel %vm2214, %v1654, 0
        %2411 = vmatpush.bf16.xpose.msra.mxu0 0
        %2412 = vmatpush.bf16.xpose.msra.mxu0 0
        %2413 = vmatpush.bf16.xpose.msra.mxu0 0
        %2414 = vmatpush.bf16.xpose.msra.mxu0 0
        %2415 = vmatpush.bf16.xpose.msra.mxu0 0
        %2416 = vmatpush.bf16.xpose.msra.mxu0 0
        %2417 = vmatpush.bf16.xpose.msra.mxu0 0
        %2418 = vmatpush.bf16.xpose.msra.mxu0 %v2409
        %2419 = vmatmul.bf16.gmra.mxu0 %v2406
        %v2420 = vpop.f32.mrf.mxu0
        %v2421 = vadd.f32 0.0, %v2420
        %v2422 = vpop.f32.mrf.mxu0
        %2423 = vdwg.mxu0
        %v2425 = vsel %vm2214, %v1145, 0
        %v2428 = vsel %vm2214, %v1657, 0
        %2430 = vmatpush.bf16.xpose.msra.mxu0 0
        %2431 = vmatpush.bf16.xpose.msra.mxu0 0
        %2432 = vmatpush.bf16.xpose.msra.mxu0 0
        %2433 = vmatpush.bf16.xpose.msra.mxu0 0
        %2434 = vmatpush.bf16.xpose.msra.mxu0 0
        %2435 = vmatpush.bf16.xpose.msra.mxu0 0
        %2436 = vmatpush.bf16.xpose.msra.mxu0 0
        %2437 = vmatpush.bf16.xpose.msra.mxu0 %v2428
        %2438 = vmatmul.bf16.gmra.mxu0 %v2425
        %v2439 = vpop.f32.mrf.mxu0
        %v2440 = vadd.f32 0.0, %v2439
        %v2441 = vpop.f32.mrf.mxu0
        %2442 = vdwg.mxu0
        %v2444 = vsel %vm2214, %v1148, 0
        %v2447 = vsel %vm2214, %v1660, 0
        %2449 = vmatpush.bf16.xpose.msra.mxu0 0
        %2450 = vmatpush.bf16.xpose.msra.mxu0 0
        %2451 = vmatpush.bf16.xpose.msra.mxu0 0
        %2452 = vmatpush.bf16.xpose.msra.mxu0 0
        %2453 = vmatpush.bf16.xpose.msra.mxu0 0
        %2454 = vmatpush.bf16.xpose.msra.mxu0 0
        %2455 = vmatpush.bf16.xpose.msra.mxu0 0
        %2456 = vmatpush.bf16.xpose.msra.mxu0 %v2447
        %2457 = vmatmul.bf16.gmra.mxu0 %v2444
        %v2458 = vpop.f32.mrf.mxu0
        %v2459 = vadd.f32 0.0, %v2458
        %v2460 = vpop.f32.mrf.mxu0
        %2461 = vdwg.mxu0
        %v2463 = vsel %vm2214, %v1151, 0
        %v2466 = vsel %vm2214, %v1663, 0
        %2468 = vmatpush.bf16.xpose.msra.mxu0 0
        %2469 = vmatpush.bf16.xpose.msra.mxu0 0
        %2470 = vmatpush.bf16.xpose.msra.mxu0 0
        %2471 = vmatpush.bf16.xpose.msra.mxu0 0
        %2472 = vmatpush.bf16.xpose.msra.mxu0 0
        %2473 = vmatpush.bf16.xpose.msra.mxu0 0
        %2474 = vmatpush.bf16.xpose.msra.mxu0 0
        %2475 = vmatpush.bf16.xpose.msra.mxu0 %v2466
        %2476 = vmatmul.bf16.gmra.mxu0 %v2463
        %v2477 = vpop.f32.mrf.mxu0
        %v2478 = vadd.f32 0.0, %v2477
        %v2479 = vpop.f32.mrf.mxu0
        %2480 = vdwg.mxu0
        %v2482 = vsel %vm2214, %v1154, 0
        %v2485 = vsel %vm2214, %v1666, 0
        %2487 = vmatpush.bf16.xpose.msra.mxu0 0
        %2488 = vmatpush.bf16.xpose.msra.mxu0 0
        %2489 = vmatpush.bf16.xpose.msra.mxu0 0
        %2490 = vmatpush.bf16.xpose.msra.mxu0 0
        %2491 = vmatpush.bf16.xpose.msra.mxu0 0
        %2492 = vmatpush.bf16.xpose.msra.mxu0 0
        %2493 = vmatpush.bf16.xpose.msra.mxu0 0
        %2494 = vmatpush.bf16.xpose.msra.mxu0 %v2485
        %2495 = vmatmul.bf16.gmra.mxu0 %v2482
        %v2496 = vpop.f32.mrf.mxu0
        %v2497 = vadd.f32 0.0, %v2496
        %v2498 = vpop.f32.mrf.mxu0
        %2499 = vdwg.mxu0
        %v2501 = vsel %vm2214, %v1157, 0
        %v2504 = vsel %vm2214, %v1669, 0
        %2506 = vmatpush.bf16.xpose.msra.mxu0 0
        %2507 = vmatpush.bf16.xpose.msra.mxu0 0
        %2508 = vmatpush.bf16.xpose.msra.mxu0 0
        %2509 = vmatpush.bf16.xpose.msra.mxu0 0
        %2510 = vmatpush.bf16.xpose.msra.mxu0 0
        %2511 = vmatpush.bf16.xpose.msra.mxu0 0
        %2512 = vmatpush.bf16.xpose.msra.mxu0 0
        %2513 = vmatpush.bf16.xpose.msra.mxu0 %v2504
        %2514 = vmatmul.bf16.gmra.mxu0 %v2501
        %v2515 = vpop.f32.mrf.mxu0
        %v2516 = vadd.f32 0.0, %v2515
        %v2517 = vpop.f32.mrf.mxu0
        %2518 = vdwg.mxu0
        %v2520 = vsel %vm2214, %v1160, 0
        %v2523 = vsel %vm2214, %v1672, 0
        %2525 = vmatpush.bf16.xpose.msra.mxu0 0
        %2526 = vmatpush.bf16.xpose.msra.mxu0 0
        %2527 = vmatpush.bf16.xpose.msra.mxu0 0
        %2528 = vmatpush.bf16.xpose.msra.mxu0 0
        %2529 = vmatpush.bf16.xpose.msra.mxu0 0
        %2530 = vmatpush.bf16.xpose.msra.mxu0 0
        %2531 = vmatpush.bf16.xpose.msra.mxu0 0
        %2532 = vmatpush.bf16.xpose.msra.mxu0 %v2523
        %2533 = vmatmul.bf16.gmra.mxu0 %v2520
        %v2534 = vpop.f32.mrf.mxu0
        %v2535 = vadd.f32 0.0, %v2534
        %v2536 = vpop.f32.mrf.mxu0
        %2537 = vdwg.mxu0
        %v2539 = vsel %vm2214, %v1163, 0
        %v2542 = vsel %vm2214, %v1675, 0
        %2544 = vmatpush.bf16.xpose.msra.mxu0 0
        %2545 = vmatpush.bf16.xpose.msra.mxu0 0
        %2546 = vmatpush.bf16.xpose.msra.mxu0 0
        %2547 = vmatpush.bf16.xpose.msra.mxu0 0
        %2548 = vmatpush.bf16.xpose.msra.mxu0 0
        %2549 = vmatpush.bf16.xpose.msra.mxu0 0
        %2550 = vmatpush.bf16.xpose.msra.mxu0 0
        %2551 = vmatpush.bf16.xpose.msra.mxu0 %v2542
        %2552 = vmatmul.bf16.gmra.mxu0 %v2539
        %v2553 = vpop.f32.mrf.mxu0
        %v2554 = vadd.f32 0.0, %v2553
        %v2555 = vpop.f32.mrf.mxu0
        %2556 = vdwg.mxu0
        %v2558 = vsel %vm2214, %v1166, 0
        %v2561 = vsel %vm2214, %v1678, 0
        %2563 = vmatpush.bf16.xpose.msra.mxu0 0
        %2564 = vmatpush.bf16.xpose.msra.mxu0 0
        %2565 = vmatpush.bf16.xpose.msra.mxu0 0
        %2566 = vmatpush.bf16.xpose.msra.mxu0 0
        %2567 = vmatpush.bf16.xpose.msra.mxu0 0
        %2568 = vmatpush.bf16.xpose.msra.mxu0 0
        %2569 = vmatpush.bf16.xpose.msra.mxu0 0
        %2570 = vmatpush.bf16.xpose.msra.mxu0 %v2561
        %2571 = vmatmul.bf16.gmra.mxu0 %v2558
        %v2572 = vpop.f32.mrf.mxu0
        %v2573 = vadd.f32 0.0, %v2572
        %v2574 = vpop.f32.mrf.mxu0
        %2575 = vdwg.mxu0
        %v2577 = vsel %vm2214, %v1169, 0
        %v2580 = vsel %vm2214, %v1681, 0
        %2582 = vmatpush.bf16.xpose.msra.mxu0 0
        %2583 = vmatpush.bf16.xpose.msra.mxu0 0
        %2584 = vmatpush.bf16.xpose.msra.mxu0 0
        %2585 = vmatpush.bf16.xpose.msra.mxu0 0
        %2586 = vmatpush.bf16.xpose.msra.mxu0 0
        %2587 = vmatpush.bf16.xpose.msra.mxu0 0
        %2588 = vmatpush.bf16.xpose.msra.mxu0 0
        %2589 = vmatpush.bf16.xpose.msra.mxu0 %v2580
        %2590 = vmatmul.bf16.gmra.mxu0 %v2577
        %v2591 = vpop.f32.mrf.mxu0
        %v2592 = vadd.f32 0.0, %v2591
        %v2593 = vpop.f32.mrf.mxu0
        %2594 = vdwg.mxu0
        %v2596 = vsel %vm2214, %v1172, 0
        %v2599 = vsel %vm2214, %v1684, 0
        %2601 = vmatpush.bf16.xpose.msra.mxu0 0
        %2602 = vmatpush.bf16.xpose.msra.mxu0 0
        %2603 = vmatpush.bf16.xpose.msra.mxu0 0
        %2604 = vmatpush.bf16.xpose.msra.mxu0 0
        %2605 = vmatpush.bf16.xpose.msra.mxu0 0
        %2606 = vmatpush.bf16.xpose.msra.mxu0 0
        %2607 = vmatpush.bf16.xpose.msra.mxu0 0
        %2608 = vmatpush.bf16.xpose.msra.mxu0 %v2599
        %2609 = vmatmul.bf16.gmra.mxu0 %v2596
        %v2610 = vpop.f32.mrf.mxu0
        %v2611 = vadd.f32 0.0, %v2610
        %v2612 = vpop.f32.mrf.mxu0
        %2613 = vdwg.mxu0
        %v2615 = vsel %vm2214, %v1175, 0
        %v2618 = vsel %vm2214, %v1687, 0
        %2620 = vmatpush.bf16.xpose.msra.mxu0 0
        %2621 = vmatpush.bf16.xpose.msra.mxu0 0
        %2622 = vmatpush.bf16.xpose.msra.mxu0 0
        %2623 = vmatpush.bf16.xpose.msra.mxu0 0
        %2624 = vmatpush.bf16.xpose.msra.mxu0 0
        %2625 = vmatpush.bf16.xpose.msra.mxu0 0
        %2626 = vmatpush.bf16.xpose.msra.mxu0 0
        %2627 = vmatpush.bf16.xpose.msra.mxu0 %v2618
        %2628 = vmatmul.bf16.gmra.mxu0 %v2615
        %v2629 = vpop.f32.mrf.mxu0
        %v2630 = vadd.f32 0.0, %v2629
        %v2631 = vpop.f32.mrf.mxu0
        %2632 = vdwg.mxu0
        %v2634 = vsel %vm2214, %v1178, 0
        %v2637 = vsel %vm2214, %v1690, 0
        %2639 = vmatpush.bf16.xpose.msra.mxu0 0
        %2640 = vmatpush.bf16.xpose.msra.mxu0 0
        %2641 = vmatpush.bf16.xpose.msra.mxu0 0
        %2642 = vmatpush.bf16.xpose.msra.mxu0 0
        %2643 = vmatpush.bf16.xpose.msra.mxu0 0
        %2644 = vmatpush.bf16.xpose.msra.mxu0 0
        %2645 = vmatpush.bf16.xpose.msra.mxu0 0
        %2646 = vmatpush.bf16.xpose.msra.mxu0 %v2637
        %2647 = vmatmul.bf16.gmra.mxu0 %v2634
        %v2648 = vpop.f32.mrf.mxu0
        %v2649 = vadd.f32 0.0, %v2648
        %v2650 = vpop.f32.mrf.mxu0
        %2651 = vdwg.mxu0
        %v2653 = vsel %vm2214, %v1181, 0
        %v2656 = vsel %vm2214, %v1693, 0
        %2658 = vmatpush.bf16.xpose.msra.mxu0 0
        %2659 = vmatpush.bf16.xpose.msra.mxu0 0
        %2660 = vmatpush.bf16.xpose.msra.mxu0 0
        %2661 = vmatpush.bf16.xpose.msra.mxu0 0
        %2662 = vmatpush.bf16.xpose.msra.mxu0 0
        %2663 = vmatpush.bf16.xpose.msra.mxu0 0
        %2664 = vmatpush.bf16.xpose.msra.mxu0 0
        %2665 = vmatpush.bf16.xpose.msra.mxu0 %v2656
        %2666 = vmatmul.bf16.gmra.mxu0 %v2653
        %v2667 = vpop.f32.mrf.mxu0
        %v2668 = vadd.f32 0.0, %v2667
        %v2669 = vpop.f32.mrf.mxu0
        %2670 = vdwg.mxu0
        %v2672 = vsel %vm2214, %v1184, 0
        %v2675 = vsel %vm2214, %v1696, 0
        %2677 = vmatpush.bf16.xpose.msra.mxu0 0
        %2678 = vmatpush.bf16.xpose.msra.mxu0 0
        %2679 = vmatpush.bf16.xpose.msra.mxu0 0
        %2680 = vmatpush.bf16.xpose.msra.mxu0 0
        %2681 = vmatpush.bf16.xpose.msra.mxu0 0
        %2682 = vmatpush.bf16.xpose.msra.mxu0 0
        %2683 = vmatpush.bf16.xpose.msra.mxu0 0
        %2684 = vmatpush.bf16.xpose.msra.mxu0 %v2675
        %2685 = vmatmul.bf16.gmra.mxu0 %v2672
        %v2686 = vpop.f32.mrf.mxu0
        %v2687 = vadd.f32 0.0, %v2686
        %v2688 = vpop.f32.mrf.mxu0
        %2689 = vdwg.mxu0
        %v2691 = vsel %vm2214, %v1187, 0
        %v2694 = vsel %vm2214, %v1699, 0
        %2696 = vmatpush.bf16.xpose.msra.mxu0 0
        %2697 = vmatpush.bf16.xpose.msra.mxu0 0
        %2698 = vmatpush.bf16.xpose.msra.mxu0 0
        %2699 = vmatpush.bf16.xpose.msra.mxu0 0
        %2700 = vmatpush.bf16.xpose.msra.mxu0 0
        %2701 = vmatpush.bf16.xpose.msra.mxu0 0
        %2702 = vmatpush.bf16.xpose.msra.mxu0 0
        %2703 = vmatpush.bf16.xpose.msra.mxu0 %v2694
        %2704 = vmatmul.bf16.gmra.mxu0 %v2691
        %v2705 = vpop.f32.mrf.mxu0
        %v2706 = vadd.f32 0.0, %v2705
        %v2707 = vpop.f32.mrf.mxu0
        %2708 = vdwg.mxu0
        %v2710 = vsel %vm2214, %v1190, 0
        %v2713 = vsel %vm2214, %v1702, 0
        %2715 = vmatpush.bf16.xpose.msra.mxu0 0
        %2716 = vmatpush.bf16.xpose.msra.mxu0 0
        %2717 = vmatpush.bf16.xpose.msra.mxu0 0
        %2718 = vmatpush.bf16.xpose.msra.mxu0 0
        %2719 = vmatpush.bf16.xpose.msra.mxu0 0
        %2720 = vmatpush.bf16.xpose.msra.mxu0 0
        %2721 = vmatpush.bf16.xpose.msra.mxu0 0
        %2722 = vmatpush.bf16.xpose.msra.mxu0 %v2713
        %2723 = vmatmul.bf16.gmra.mxu0 %v2710
        %v2724 = vpop.f32.mrf.mxu0
        %v2725 = vadd.f32 0.0, %v2724
        %v2726 = vpop.f32.mrf.mxu0
        %2727 = vdwg.mxu0
        %v2729 = vsel %vm2214, %v1193, 0
        %v2732 = vsel %vm2214, %v1705, 0
        %2734 = vmatpush.bf16.xpose.msra.mxu0 0
        %2735 = vmatpush.bf16.xpose.msra.mxu0 0
        %2736 = vmatpush.bf16.xpose.msra.mxu0 0
        %2737 = vmatpush.bf16.xpose.msra.mxu0 0
        %2738 = vmatpush.bf16.xpose.msra.mxu0 0
        %2739 = vmatpush.bf16.xpose.msra.mxu0 0
        %2740 = vmatpush.bf16.xpose.msra.mxu0 0
        %2741 = vmatpush.bf16.xpose.msra.mxu0 %v2732
        %2742 = vmatmul.bf16.gmra.mxu0 %v2729
        %v2743 = vpop.f32.mrf.mxu0
        %v2744 = vadd.f32 0.0, %v2743
        %v2745 = vpop.f32.mrf.mxu0
        %2746 = vdwg.mxu0
        %v2748 = vsel %vm2214, %v1196, 0
        %v2751 = vsel %vm2214, %v1708, 0
        %2753 = vmatpush.bf16.xpose.msra.mxu0 0
        %2754 = vmatpush.bf16.xpose.msra.mxu0 0
        %2755 = vmatpush.bf16.xpose.msra.mxu0 0
        %2756 = vmatpush.bf16.xpose.msra.mxu0 0
        %2757 = vmatpush.bf16.xpose.msra.mxu0 0
        %2758 = vmatpush.bf16.xpose.msra.mxu0 0
        %2759 = vmatpush.bf16.xpose.msra.mxu0 0
        %2760 = vmatpush.bf16.xpose.msra.mxu0 %v2751
        %2761 = vmatmul.bf16.gmra.mxu0 %v2748
        %v2762 = vpop.f32.mrf.mxu0
        %v2763 = vadd.f32 0.0, %v2762
        %v2764 = vpop.f32.mrf.mxu0
        %2765 = vdwg.mxu0
        %v2767 = vsel %vm2214, %v1199, 0
        %v2770 = vsel %vm2214, %v1711, 0
        %2772 = vmatpush.bf16.xpose.msra.mxu0 0
        %2773 = vmatpush.bf16.xpose.msra.mxu0 0
        %2774 = vmatpush.bf16.xpose.msra.mxu0 0
        %2775 = vmatpush.bf16.xpose.msra.mxu0 0
        %2776 = vmatpush.bf16.xpose.msra.mxu0 0
        %2777 = vmatpush.bf16.xpose.msra.mxu0 0
        %2778 = vmatpush.bf16.xpose.msra.mxu0 0
        %2779 = vmatpush.bf16.xpose.msra.mxu0 %v2770
        %2780 = vmatmul.bf16.gmra.mxu0 %v2767
        %v2781 = vpop.f32.mrf.mxu0
        %v2782 = vadd.f32 0.0, %v2781
        %v2783 = vpop.f32.mrf.mxu0
        %2784 = vdwg.mxu0
        %v2786 = vsel %vm2214, %v1202, 0
        %v2789 = vsel %vm2214, %v1714, 0
        %2791 = vmatpush.bf16.xpose.msra.mxu0 0
        %2792 = vmatpush.bf16.xpose.msra.mxu0 0
        %2793 = vmatpush.bf16.xpose.msra.mxu0 0
        %2794 = vmatpush.bf16.xpose.msra.mxu0 0
        %2795 = vmatpush.bf16.xpose.msra.mxu0 0
        %2796 = vmatpush.bf16.xpose.msra.mxu0 0
        %2797 = vmatpush.bf16.xpose.msra.mxu0 0
        %2798 = vmatpush.bf16.xpose.msra.mxu0 %v2789
        %2799 = vmatmul.bf16.gmra.mxu0 %v2786
        %v2800 = vpop.f32.mrf.mxu0
        %v2801 = vadd.f32 0.0, %v2800
        %v2802 = vpop.f32.mrf.mxu0
        %2803 = vdwg.mxu0
        %v2805 = vsel %vm2214, %v1205, 0
        %v2808 = vsel %vm2214, %v1717, 0
        %2810 = vmatpush.bf16.xpose.msra.mxu0 0
        %2811 = vmatpush.bf16.xpose.msra.mxu0 0
        %2812 = vmatpush.bf16.xpose.msra.mxu0 0
        %2813 = vmatpush.bf16.xpose.msra.mxu0 0
        %2814 = vmatpush.bf16.xpose.msra.mxu0 0
        %2815 = vmatpush.bf16.xpose.msra.mxu0 0
        %2816 = vmatpush.bf16.xpose.msra.mxu0 0
        %2817 = vmatpush.bf16.xpose.msra.mxu0 %v2808
        %2818 = vmatmul.bf16.gmra.mxu0 %v2805
        %v2819 = vpop.f32.mrf.mxu0
        %v2820 = vadd.f32 0.0, %v2819
        %v2821 = vpop.f32.mrf.mxu0
        %2822 = vdwg.mxu0
        %vm2823 = vcmask 27648
        %v2824 = vsel %vm2823, %v2231, -inf
        %2825 = vmax.xlane.f32.xlu0 %v2824
        %v2826 = vpop.xlane.xlu0 %2825
        %v2827 = vsel %vm2823, %v2250, -inf
        %2828 = vmax.xlane.f32.xlu0 %v2827
        %v2829 = vpop.xlane.xlu0 %2828
        %v2830 = vsel %vm2823, %v2269, -inf
        %2831 = vmax.xlane.f32.xlu0 %v2830
        %v2832 = vpop.xlane.xlu0 %2831
        %v2833 = vsel %vm2823, %v2288, -inf
        %2834 = vmax.xlane.f32.xlu0 %v2833
        %v2835 = vpop.xlane.xlu0 %2834
        %v2836 = vsel %vm2823, %v2307, -inf
        %2837 = vmax.xlane.f32.xlu0 %v2836
        %v2838 = vpop.xlane.xlu0 %2837
        %v2839 = vsel %vm2823, %v2326, -inf
        %2840 = vmax.xlane.f32.xlu0 %v2839
        %v2841 = vpop.xlane.xlu0 %2840
        %v2842 = vsel %vm2823, %v2345, -inf
        %2843 = vmax.xlane.f32.xlu0 %v2842
        %v2844 = vpop.xlane.xlu0 %2843
        %v2845 = vsel %vm2823, %v2364, -inf
        %2846 = vmax.xlane.f32.xlu0 %v2845
        %v2847 = vpop.xlane.xlu0 %2846
        %v2848 = vsel %vm2823, %v2383, -inf
        %2849 = vmax.xlane.f32.xlu0 %v2848
        %v2850 = vpop.xlane.xlu0 %2849
        %v2851 = vsel %vm2823, %v2402, -inf
        %2852 = vmax.xlane.f32.xlu0 %v2851
        %v2853 = vpop.xlane.xlu0 %2852
        %v2854 = vsel %vm2823, %v2421, -inf
        %2855 = vmax.xlane.f32.xlu0 %v2854
        %v2856 = vpop.xlane.xlu0 %2855
        %v2857 = vsel %vm2823, %v2440, -inf
        %2858 = vmax.xlane.f32.xlu0 %v2857
        %v2859 = vpop.xlane.xlu0 %2858
        %v2860 = vsel %vm2823, %v2459, -inf
        %2861 = vmax.xlane.f32.xlu0 %v2860
        %v2862 = vpop.xlane.xlu0 %2861
        %v2863 = vsel %vm2823, %v2478, -inf
        %2864 = vmax.xlane.f32.xlu0 %v2863
        %v2865 = vpop.xlane.xlu0 %2864
        %v2866 = vsel %vm2823, %v2497, -inf
        %2867 = vmax.xlane.f32.xlu0 %v2866
        %v2868 = vpop.xlane.xlu0 %2867
        %v2869 = vsel %vm2823, %v2516, -inf
        %2870 = vmax.xlane.f32.xlu0 %v2869
        %v2871 = vpop.xlane.xlu0 %2870
        %v2872 = vsel %vm2823, %v2535, -inf
        %2873 = vmax.xlane.f32.xlu0 %v2872
        %v2874 = vpop.xlane.xlu0 %2873
        %v2875 = vsel %vm2823, %v2554, -inf
        %2876 = vmax.xlane.f32.xlu0 %v2875
        %v2877 = vpop.xlane.xlu0 %2876
        %v2878 = vsel %vm2823, %v2573, -inf
        %2879 = vmax.xlane.f32.xlu0 %v2878
        %v2880 = vpop.xlane.xlu0 %2879
        %v2881 = vsel %vm2823, %v2592, -inf
        %2882 = vmax.xlane.f32.xlu0 %v2881
        %v2883 = vpop.xlane.xlu0 %2882
        %v2884 = vsel %vm2823, %v2611, -inf
        %2885 = vmax.xlane.f32.xlu0 %v2884
        %v2886 = vpop.xlane.xlu0 %2885
        %v2887 = vsel %vm2823, %v2630, -inf
        %2888 = vmax.xlane.f32.xlu0 %v2887
        %v2889 = vpop.xlane.xlu0 %2888
        %v2890 = vsel %vm2823, %v2649, -inf
        %2891 = vmax.xlane.f32.xlu0 %v2890
        %v2892 = vpop.xlane.xlu0 %2891
        %v2893 = vsel %vm2823, %v2668, -inf
        %2894 = vmax.xlane.f32.xlu0 %v2893
        %v2895 = vpop.xlane.xlu0 %2894
        %v2896 = vsel %vm2823, %v2687, -inf
        %2897 = vmax.xlane.f32.xlu0 %v2896
        %v2898 = vpop.xlane.xlu0 %2897
        %v2899 = vsel %vm2823, %v2706, -inf
        %2900 = vmax.xlane.f32.xlu0 %v2899
        %v2901 = vpop.xlane.xlu0 %2900
        %v2902 = vsel %vm2823, %v2725, -inf
        %2903 = vmax.xlane.f32.xlu0 %v2902
        %v2904 = vpop.xlane.xlu0 %2903
        %v2905 = vsel %vm2823, %v2744, -inf
        %2906 = vmax.xlane.f32.xlu0 %v2905
        %v2907 = vpop.xlane.xlu0 %2906
        %v2908 = vsel %vm2823, %v2763, -inf
        %2909 = vmax.xlane.f32.xlu0 %v2908
        %v2910 = vpop.xlane.xlu0 %2909
        %v2911 = vsel %vm2823, %v2782, -inf
        %2912 = vmax.xlane.f32.xlu0 %v2911
        %v2913 = vpop.xlane.xlu0 %2912
        %v2914 = vsel %vm2823, %v2801, -inf
        %2915 = vmax.xlane.f32.xlu0 %v2914
        %v2916 = vpop.xlane.xlu0 %2915
        %v2917 = vsel %vm2823, %v2820, -inf
        %2918 = vmax.xlane.f32.xlu0 %v2917
        %v2919 = vpop.xlane.xlu0 %2918
        %v2920 = vsub.f32 %v2231, %v2826
        %v2921 = vsub.f32 %v2250, %v2829
        %v2922 = vsub.f32 %v2269, %v2832
        %v2923 = vsub.f32 %v2288, %v2835
        %v2924 = vsub.f32 %v2307, %v2838
        %v2925 = vsub.f32 %v2326, %v2841
        %v2926 = vsub.f32 %v2345, %v2844
        %v2927 = vsub.f32 %v2364, %v2847
        %v2928 = vsub.f32 %v2383, %v2850
        %v2929 = vsub.f32 %v2402, %v2853
        %v2930 = vsub.f32 %v2421, %v2856
        %v2931 = vsub.f32 %v2440, %v2859
        %v2932 = vsub.f32 %v2459, %v2862
        %v2933 = vsub.f32 %v2478, %v2865
        %v2934 = vsub.f32 %v2497, %v2868
        %v2935 = vsub.f32 %v2516, %v2871
        %v2936 = vsub.f32 %v2535, %v2874
        %v2937 = vsub.f32 %v2554, %v2877
        %v2938 = vsub.f32 %v2573, %v2880
        %v2939 = vsub.f32 %v2592, %v2883
        %v2940 = vsub.f32 %v2611, %v2886
        %v2941 = vsub.f32 %v2630, %v2889
        %v2942 = vsub.f32 %v2649, %v2892
        %v2943 = vsub.f32 %v2668, %v2895
        %v2944 = vsub.f32 %v2687, %v2898
        %v2945 = vsub.f32 %v2706, %v2901
        %v2946 = vsub.f32 %v2725, %v2904
        %v2947 = vsub.f32 %v2744, %v2907
        %v2948 = vsub.f32 %v2763, %v2910
        %v2949 = vsub.f32 %v2782, %v2913
        %v2950 = vsub.f32 %v2801, %v2916
        %v2951 = vsub.f32 %v2820, %v2919
        %v2952 = vmul.f32 %v2920, 1.442695
        %v2953 = vpow.pop %v2952
        %v2954 = vmul.f32 %v2921, 1.442695
        %v2955 = vpow.pop %v2954
        %v2956 = vmul.f32 %v2922, 1.442695
        %v2957 = vpow.pop %v2956
        %v2958 = vmul.f32 %v2923, 1.442695
        %v2959 = vpow.pop %v2958
        %v2960 = vmul.f32 %v2924, 1.442695
        %v2961 = vpow.pop %v2960
        %v2962 = vmul.f32 %v2925, 1.442695
        %v2963 = vpow.pop %v2962
        %v2964 = vmul.f32 %v2926, 1.442695
        %v2965 = vpow.pop %v2964
        %v2966 = vmul.f32 %v2927, 1.442695
        %v2967 = vpow.pop %v2966
        %v2968 = vmul.f32 %v2928, 1.442695
        %v2969 = vpow.pop %v2968
        %v2970 = vmul.f32 %v2929, 1.442695
        %v2971 = vpow.pop %v2970
        %v2972 = vmul.f32 %v2930, 1.442695
        %v2973 = vpow.pop %v2972
        %v2974 = vmul.f32 %v2931, 1.442695
        %v2975 = vpow.pop %v2974
        %v2976 = vmul.f32 %v2932, 1.442695
        %v2977 = vpow.pop %v2976
        %v2978 = vmul.f32 %v2933, 1.442695
        %v2979 = vpow.pop %v2978
        %v2980 = vmul.f32 %v2934, 1.442695
        %v2981 = vpow.pop %v2980
        %v2982 = vmul.f32 %v2935, 1.442695
        %v2983 = vpow.pop %v2982
        %v2984 = vmul.f32 %v2936, 1.442695
        %v2985 = vpow.pop %v2984
        %v2986 = vmul.f32 %v2937, 1.442695
        %v2987 = vpow.pop %v2986
        %v2988 = vmul.f32 %v2938, 1.442695
        %v2989 = vpow.pop %v2988
        %v2990 = vmul.f32 %v2939, 1.442695
        %v2991 = vpow.pop %v2990
        %v2992 = vmul.f32 %v2940, 1.442695
        %v2993 = vpow.pop %v2992
        %v2994 = vmul.f32 %v2941, 1.442695
        %v2995 = vpow.pop %v2994
        %v2996 = vmul.f32 %v2942, 1.442695
        %v2997 = vpow.pop %v2996
        %v2998 = vmul.f32 %v2943, 1.442695
        %v2999 = vpow.pop %v2998
        %v3000 = vmul.f32 %v2944, 1.442695
        %v3001 = vpow.pop %v3000
        %v3002 = vmul.f32 %v2945, 1.442695
        %v3003 = vpow.pop %v3002
        %v3004 = vmul.f32 %v2946, 1.442695
        %v3005 = vpow.pop %v3004
        %v3006 = vmul.f32 %v2947, 1.442695
        %v3007 = vpow.pop %v3006
        %v3008 = vmul.f32 %v2948, 1.442695
        %v3009 = vpow.pop %v3008
        %v3010 = vmul.f32 %v2949, 1.442695
        %v3011 = vpow.pop %v3010
        %v3012 = vmul.f32 %v2950, 1.442695
        %v3013 = vpow.pop %v3012
        %v3014 = vmul.f32 %v2951, 1.442695
        %v3015 = vpow.pop %v3014
        %v3016 = vsel %vm2823, %v2953, 0.0
        %3017 = vadd.xlane.f32.xlu0 %v3016
        %v3018 = vpop.xlane.xlu0 %3017
        %v3019 = vsel %vm2823, %v2955, 0.0
        %3020 = vadd.xlane.f32.xlu0 %v3019
        %v3021 = vpop.xlane.xlu0 %3020
        %v3022 = vsel %vm2823, %v2957, 0.0
        %3023 = vadd.xlane.f32.xlu0 %v3022
        %v3024 = vpop.xlane.xlu0 %3023
        %v3025 = vsel %vm2823, %v2959, 0.0
        %3026 = vadd.xlane.f32.xlu0 %v3025
        %v3027 = vpop.xlane.xlu0 %3026
        %v3028 = vsel %vm2823, %v2961, 0.0
        %3029 = vadd.xlane.f32.xlu0 %v3028
        %v3030 = vpop.xlane.xlu0 %3029
        %v3031 = vsel %vm2823, %v2963, 0.0
        %3032 = vadd.xlane.f32.xlu0 %v3031
        %v3033 = vpop.xlane.xlu0 %3032
        %v3034 = vsel %vm2823, %v2965, 0.0
        %3035 = vadd.xlane.f32.xlu0 %v3034
        %v3036 = vpop.xlane.xlu0 %3035
        %v3037 = vsel %vm2823, %v2967, 0.0
        %3038 = vadd.xlane.f32.xlu0 %v3037
        %v3039 = vpop.xlane.xlu0 %3038
        %v3040 = vsel %vm2823, %v2969, 0.0
        %3041 = vadd.xlane.f32.xlu0 %v3040
        %v3042 = vpop.xlane.xlu0 %3041
        %v3043 = vsel %vm2823, %v2971, 0.0
        %3044 = vadd.xlane.f32.xlu0 %v3043
        %v3045 = vpop.xlane.xlu0 %3044
        %v3046 = vsel %vm2823, %v2973, 0.0
        %3047 = vadd.xlane.f32.xlu0 %v3046
        %v3048 = vpop.xlane.xlu0 %3047
        %v3049 = vsel %vm2823, %v2975, 0.0
        %3050 = vadd.xlane.f32.xlu0 %v3049
        %v3051 = vpop.xlane.xlu0 %3050
        %v3052 = vsel %vm2823, %v2977, 0.0
        %3053 = vadd.xlane.f32.xlu0 %v3052
        %v3054 = vpop.xlane.xlu0 %3053
        %v3055 = vsel %vm2823, %v2979, 0.0
        %3056 = vadd.xlane.f32.xlu0 %v3055
        %v3057 = vpop.xlane.xlu0 %3056
        %v3058 = vsel %vm2823, %v2981, 0.0
        %3059 = vadd.xlane.f32.xlu0 %v3058
        %v3060 = vpop.xlane.xlu0 %3059
        %v3061 = vsel %vm2823, %v2983, 0.0
        %3062 = vadd.xlane.f32.xlu0 %v3061
        %v3063 = vpop.xlane.xlu0 %3062
        %v3064 = vsel %vm2823, %v2985, 0.0
        %3065 = vadd.xlane.f32.xlu0 %v3064
        %v3066 = vpop.xlane.xlu0 %3065
        %v3067 = vsel %vm2823, %v2987, 0.0
        %3068 = vadd.xlane.f32.xlu0 %v3067
        %v3069 = vpop.xlane.xlu0 %3068
        %v3070 = vsel %vm2823, %v2989, 0.0
        %3071 = vadd.xlane.f32.xlu0 %v3070
        %v3072 = vpop.xlane.xlu0 %3071
        %v3073 = vsel %vm2823, %v2991, 0.0
        %3074 = vadd.xlane.f32.xlu0 %v3073
        %v3075 = vpop.xlane.xlu0 %3074
        %v3076 = vsel %vm2823, %v2993, 0.0
        %3077 = vadd.xlane.f32.xlu0 %v3076
        %v3078 = vpop.xlane.xlu0 %3077
        %v3079 = vsel %vm2823, %v2995, 0.0
        %3080 = vadd.xlane.f32.xlu0 %v3079
        %v3081 = vpop.xlane.xlu0 %3080
        %v3082 = vsel %vm2823, %v2997, 0.0
        %3083 = vadd.xlane.f32.xlu0 %v3082
        %v3084 = vpop.xlane.xlu0 %3083
        %v3085 = vsel %vm2823, %v2999, 0.0
        %3086 = vadd.xlane.f32.xlu0 %v3085
        %v3087 = vpop.xlane.xlu0 %3086
        %v3088 = vsel %vm2823, %v3001, 0.0
        %3089 = vadd.xlane.f32.xlu0 %v3088
        %v3090 = vpop.xlane.xlu0 %3089
        %v3091 = vsel %vm2823, %v3003, 0.0
        %3092 = vadd.xlane.f32.xlu0 %v3091
        %v3093 = vpop.xlane.xlu0 %3092
        %v3094 = vsel %vm2823, %v3005, 0.0
        %3095 = vadd.xlane.f32.xlu0 %v3094
        %v3096 = vpop.xlane.xlu0 %3095
        %v3097 = vsel %vm2823, %v3007, 0.0
        %3098 = vadd.xlane.f32.xlu0 %v3097
        %v3099 = vpop.xlane.xlu0 %3098
        %v3100 = vsel %vm2823, %v3009, 0.0
        %3101 = vadd.xlane.f32.xlu0 %v3100
        %v3102 = vpop.xlane.xlu0 %3101
        %v3103 = vsel %vm2823, %v3011, 0.0
        %3104 = vadd.xlane.f32.xlu0 %v3103
        %v3105 = vpop.xlane.xlu0 %3104
        %v3106 = vsel %vm2823, %v3013, 0.0
        %3107 = vadd.xlane.f32.xlu0 %v3106
        %v3108 = vpop.xlane.xlu0 %3107
        %v3109 = vsel %vm2823, %v3015, 0.0
        %3110 = vadd.xlane.f32.xlu0 %v3109
        %v3111 = vpop.xlane.xlu0 %3110
        %v3112 = vrcp.pop %v3018
        %v3113 = vrcp.pop %v3021
        %v3114 = vrcp.pop %v3024
        %v3115 = vrcp.pop %v3027
        %v3116 = vrcp.pop %v3030
        %v3117 = vrcp.pop %v3033
        %v3118 = vrcp.pop %v3036
        %v3119 = vrcp.pop %v3039
        %v3120 = vrcp.pop %v3042
        %v3121 = vrcp.pop %v3045
        %v3122 = vrcp.pop %v3048
        %v3123 = vrcp.pop %v3051
        %v3124 = vrcp.pop %v3054
        %v3125 = vrcp.pop %v3057
        %v3126 = vrcp.pop %v3060
        %v3127 = vrcp.pop %v3063
        %v3128 = vrcp.pop %v3066
        %v3129 = vrcp.pop %v3069
        %v3130 = vrcp.pop %v3072
        %v3131 = vrcp.pop %v3075
        %v3132 = vrcp.pop %v3078
        %v3133 = vrcp.pop %v3081
        %v3134 = vrcp.pop %v3084
        %v3135 = vrcp.pop %v3087
        %v3136 = vrcp.pop %v3090
        %v3137 = vrcp.pop %v3093
        %v3138 = vrcp.pop %v3096
        %v3139 = vrcp.pop %v3099
        %v3140 = vrcp.pop %v3102
        %v3141 = vrcp.pop %v3105
        %v3142 = vrcp.pop %v3108
        %v3143 = vrcp.pop %v3111
        %v3144 = vmul.f32 %v2953, %v3112
        %v3145 = vmul.f32 %v2955, %v3113
        %v3146 = vmul.f32 %v2957, %v3114
        %v3147 = vmul.f32 %v2959, %v3115
        %v3148 = vmul.f32 %v2961, %v3116
        %v3149 = vmul.f32 %v2963, %v3117
        %v3150 = vmul.f32 %v2965, %v3118
        %v3151 = vmul.f32 %v2967, %v3119
        %v3152 = vmul.f32 %v2969, %v3120
        %v3153 = vmul.f32 %v2971, %v3121
        %v3154 = vmul.f32 %v2973, %v3122
        %v3155 = vmul.f32 %v2975, %v3123
        %v3156 = vmul.f32 %v2977, %v3124
        %v3157 = vmul.f32 %v2979, %v3125
        %v3158 = vmul.f32 %v2981, %v3126
        %v3159 = vmul.f32 %v2983, %v3127
        %v3160 = vmul.f32 %v2985, %v3128
        %v3161 = vmul.f32 %v2987, %v3129
        %v3162 = vmul.f32 %v2989, %v3130
        %v3163 = vmul.f32 %v2991, %v3131
        %v3164 = vmul.f32 %v2993, %v3132
        %v3165 = vmul.f32 %v2995, %v3133
        %v3166 = vmul.f32 %v2997, %v3134
        %v3167 = vmul.f32 %v2999, %v3135
        %v3168 = vmul.f32 %v3001, %v3136
        %v3169 = vmul.f32 %v3003, %v3137
        %v3170 = vmul.f32 %v3005, %v3138
        %v3171 = vmul.f32 %v3007, %v3139
        %v3172 = vmul.f32 %v3009, %v3140
        %v3173 = vmul.f32 %v3011, %v3141
        %v3174 = vmul.f32 %v3013, %v3142
        %v3175 = vmul.f32 %v3015, %v3143
        %v3176 = vpack.c.bf16 %v3144, %v3144
        %v3177 = vpack.c.bf16 %v3145, %v3145
        %v3178 = vpack.c.bf16 %v3146, %v3146
        %v3179 = vpack.c.bf16 %v3147, %v3147
        %v3180 = vpack.c.bf16 %v3148, %v3148
        %v3181 = vpack.c.bf16 %v3149, %v3149
        %v3182 = vpack.c.bf16 %v3150, %v3150
        %v3183 = vpack.c.bf16 %v3151, %v3151
        %v3184 = vpack.c.bf16 %v3152, %v3152
        %v3185 = vpack.c.bf16 %v3153, %v3153
        %v3186 = vpack.c.bf16 %v3154, %v3154
        %v3187 = vpack.c.bf16 %v3155, %v3155
        %v3188 = vpack.c.bf16 %v3156, %v3156
        %v3189 = vpack.c.bf16 %v3157, %v3157
        %v3190 = vpack.c.bf16 %v3158, %v3158
        %v3191 = vpack.c.bf16 %v3159, %v3159
        %v3192 = vpack.c.bf16 %v3160, %v3160
        %v3193 = vpack.c.bf16 %v3161, %v3161
        %v3194 = vpack.c.bf16 %v3162, %v3162
        %v3195 = vpack.c.bf16 %v3163, %v3163
        %v3196 = vpack.c.bf16 %v3164, %v3164
        %v3197 = vpack.c.bf16 %v3165, %v3165
        %v3198 = vpack.c.bf16 %v3166, %v3166
        %v3199 = vpack.c.bf16 %v3167, %v3167
        %v3200 = vpack.c.bf16 %v3168, %v3168
        %v3201 = vpack.c.bf16 %v3169, %v3169
        %v3202 = vpack.c.bf16 %v3170, %v3170
        %v3203 = vpack.c.bf16 %v3171, %v3171
        %v3204 = vpack.c.bf16 %v3172, %v3172
        %v3205 = vpack.c.bf16 %v3173, %v3173
        %v3206 = vpack.c.bf16 %v3174, %v3174
        %v3207 = vpack.c.bf16 %v3175, %v3175
        %vm3208 = vcmask 31744
        %v3210 = vsel %vm3208, %v3176, 0
        %vm3212 = vcmask 1041408
        %v3214 = vsel %vm3212, %v2120, 0
        %3216 = vmatpush.bf16.msra.mxu0 0
        %3217 = vmatpush.bf16.msra.mxu0 0
        %3218 = vmatpush.bf16.msra.mxu0 0
        %3219 = vmatpush.bf16.msra.mxu0 0
        %3220 = vmatpush.bf16.msra.mxu0 0
        %3221 = vmatpush.bf16.msra.mxu0 0
        %3222 = vmatpush.bf16.msra.mxu0 0
        %3223 = vmatpush.bf16.msra.mxu0 %v3214
        %3224 = vmatmul.bf16.gmra.mxu0 %v3210
        %v3225 = vpop.f32.mrf.mxu0
        %v3226 = vadd.f32 0.0, %v3225
        %v3227 = vpop.f32.mrf.mxu0
        %3228 = vdwg.mxu0
        %v3230 = vsel %vm3208, %v3177, 0
        %v3233 = vsel %vm3212, %v2123, 0
        %3235 = vmatpush.bf16.msra.mxu0 0
        %3236 = vmatpush.bf16.msra.mxu0 0
        %3237 = vmatpush.bf16.msra.mxu0 0
        %3238 = vmatpush.bf16.msra.mxu0 0
        %3239 = vmatpush.bf16.msra.mxu0 0
        %3240 = vmatpush.bf16.msra.mxu0 0
        %3241 = vmatpush.bf16.msra.mxu0 0
        %3242 = vmatpush.bf16.msra.mxu0 %v3233
        %3243 = vmatmul.bf16.gmra.mxu0 %v3230
        %v3244 = vpop.f32.mrf.mxu0
        %v3245 = vadd.f32 0.0, %v3244
        %v3246 = vpop.f32.mrf.mxu0
        %3247 = vdwg.mxu0
        %v3249 = vsel %vm3208, %v3178, 0
        %v3252 = vsel %vm3212, %v2126, 0
        %3254 = vmatpush.bf16.msra.mxu0 0
        %3255 = vmatpush.bf16.msra.mxu0 0
        %3256 = vmatpush.bf16.msra.mxu0 0
        %3257 = vmatpush.bf16.msra.mxu0 0
        %3258 = vmatpush.bf16.msra.mxu0 0
        %3259 = vmatpush.bf16.msra.mxu0 0
        %3260 = vmatpush.bf16.msra.mxu0 0
        %3261 = vmatpush.bf16.msra.mxu0 %v3252
        %3262 = vmatmul.bf16.gmra.mxu0 %v3249
        %v3263 = vpop.f32.mrf.mxu0
        %v3264 = vadd.f32 0.0, %v3263
        %v3265 = vpop.f32.mrf.mxu0
        %3266 = vdwg.mxu0
        %v3268 = vsel %vm3208, %v3179, 0
        %v3271 = vsel %vm3212, %v2129, 0
        %3273 = vmatpush.bf16.msra.mxu0 0
        %3274 = vmatpush.bf16.msra.mxu0 0
        %3275 = vmatpush.bf16.msra.mxu0 0
        %3276 = vmatpush.bf16.msra.mxu0 0
        %3277 = vmatpush.bf16.msra.mxu0 0
        %3278 = vmatpush.bf16.msra.mxu0 0
        %3279 = vmatpush.bf16.msra.mxu0 0
        %3280 = vmatpush.bf16.msra.mxu0 %v3271
        %3281 = vmatmul.bf16.gmra.mxu0 %v3268
        %v3282 = vpop.f32.mrf.mxu0
        %v3283 = vadd.f32 0.0, %v3282
        %v3284 = vpop.f32.mrf.mxu0
        %3285 = vdwg.mxu0
        %v3287 = vsel %vm3208, %v3180, 0
        %v3290 = vsel %vm3212, %v2132, 0
        %3292 = vmatpush.bf16.msra.mxu0 0
        %3293 = vmatpush.bf16.msra.mxu0 0
        %3294 = vmatpush.bf16.msra.mxu0 0
        %3295 = vmatpush.bf16.msra.mxu0 0
        %3296 = vmatpush.bf16.msra.mxu0 0
        %3297 = vmatpush.bf16.msra.mxu0 0
        %3298 = vmatpush.bf16.msra.mxu0 0
        %3299 = vmatpush.bf16.msra.mxu0 %v3290
        %3300 = vmatmul.bf16.gmra.mxu0 %v3287
        %v3301 = vpop.f32.mrf.mxu0
        %v3302 = vadd.f32 0.0, %v3301
        %v3303 = vpop.f32.mrf.mxu0
        %3304 = vdwg.mxu0
        %v3306 = vsel %vm3208, %v3181, 0
        %v3309 = vsel %vm3212, %v2135, 0
        %3311 = vmatpush.bf16.msra.mxu0 0
        %3312 = vmatpush.bf16.msra.mxu0 0
        %3313 = vmatpush.bf16.msra.mxu0 0
        %3314 = vmatpush.bf16.msra.mxu0 0
        %3315 = vmatpush.bf16.msra.mxu0 0
        %3316 = vmatpush.bf16.msra.mxu0 0
        %3317 = vmatpush.bf16.msra.mxu0 0
        %3318 = vmatpush.bf16.msra.mxu0 %v3309
        %3319 = vmatmul.bf16.gmra.mxu0 %v3306
        %v3320 = vpop.f32.mrf.mxu0
        %v3321 = vadd.f32 0.0, %v3320
        %v3322 = vpop.f32.mrf.mxu0
        %3323 = vdwg.mxu0
        %v3325 = vsel %vm3208, %v3182, 0
        %v3328 = vsel %vm3212, %v2138, 0
        %3330 = vmatpush.bf16.msra.mxu0 0
        %3331 = vmatpush.bf16.msra.mxu0 0
        %3332 = vmatpush.bf16.msra.mxu0 0
        %3333 = vmatpush.bf16.msra.mxu0 0
        %3334 = vmatpush.bf16.msra.mxu0 0
        %3335 = vmatpush.bf16.msra.mxu0 0
        %3336 = vmatpush.bf16.msra.mxu0 0
        %3337 = vmatpush.bf16.msra.mxu0 %v3328
        %3338 = vmatmul.bf16.gmra.mxu0 %v3325
        %v3339 = vpop.f32.mrf.mxu0
        %v3340 = vadd.f32 0.0, %v3339
        %v3341 = vpop.f32.mrf.mxu0
        %3342 = vdwg.mxu0
        %v3344 = vsel %vm3208, %v3183, 0
        %v3347 = vsel %vm3212, %v2141, 0
        %3349 = vmatpush.bf16.msra.mxu0 0
        %3350 = vmatpush.bf16.msra.mxu0 0
        %3351 = vmatpush.bf16.msra.mxu0 0
        %3352 = vmatpush.bf16.msra.mxu0 0
        %3353 = vmatpush.bf16.msra.mxu0 0
        %3354 = vmatpush.bf16.msra.mxu0 0
        %3355 = vmatpush.bf16.msra.mxu0 0
        %3356 = vmatpush.bf16.msra.mxu0 %v3347
        %3357 = vmatmul.bf16.gmra.mxu0 %v3344
        %v3358 = vpop.f32.mrf.mxu0
        %v3359 = vadd.f32 0.0, %v3358
        %v3360 = vpop.f32.mrf.mxu0
        %3361 = vdwg.mxu0
        %v3363 = vsel %vm3208, %v3184, 0
        %v3366 = vsel %vm3212, %v2144, 0
        %3368 = vmatpush.bf16.msra.mxu0 0
        %3369 = vmatpush.bf16.msra.mxu0 0
        %3370 = vmatpush.bf16.msra.mxu0 0
        %3371 = vmatpush.bf16.msra.mxu0 0
        %3372 = vmatpush.bf16.msra.mxu0 0
        %3373 = vmatpush.bf16.msra.mxu0 0
        %3374 = vmatpush.bf16.msra.mxu0 0
        %3375 = vmatpush.bf16.msra.mxu0 %v3366
        %3376 = vmatmul.bf16.gmra.mxu0 %v3363
        %v3377 = vpop.f32.mrf.mxu0
        %v3378 = vadd.f32 0.0, %v3377
        %v3379 = vpop.f32.mrf.mxu0
        %3380 = vdwg.mxu0
        %v3382 = vsel %vm3208, %v3185, 0
        %v3385 = vsel %vm3212, %v2147, 0
        %3387 = vmatpush.bf16.msra.mxu0 0
        %3388 = vmatpush.bf16.msra.mxu0 0
        %3389 = vmatpush.bf16.msra.mxu0 0
        %3390 = vmatpush.bf16.msra.mxu0 0
        %3391 = vmatpush.bf16.msra.mxu0 0
        %3392 = vmatpush.bf16.msra.mxu0 0
        %3393 = vmatpush.bf16.msra.mxu0 0
        %3394 = vmatpush.bf16.msra.mxu0 %v3385
        %3395 = vmatmul.bf16.gmra.mxu0 %v3382
        %v3396 = vpop.f32.mrf.mxu0
        %v3397 = vadd.f32 0.0, %v3396
        %v3398 = vpop.f32.mrf.mxu0
        %3399 = vdwg.mxu0
        %v3401 = vsel %vm3208, %v3186, 0
        %v3404 = vsel %vm3212, %v2150, 0
        %3406 = vmatpush.bf16.msra.mxu0 0
        %3407 = vmatpush.bf16.msra.mxu0 0
        %3408 = vmatpush.bf16.msra.mxu0 0
        %3409 = vmatpush.bf16.msra.mxu0 0
        %3410 = vmatpush.bf16.msra.mxu0 0
        %3411 = vmatpush.bf16.msra.mxu0 0
        %3412 = vmatpush.bf16.msra.mxu0 0
        %3413 = vmatpush.bf16.msra.mxu0 %v3404
        %3414 = vmatmul.bf16.gmra.mxu0 %v3401
        %v3415 = vpop.f32.mrf.mxu0
        %v3416 = vadd.f32 0.0, %v3415
        %v3417 = vpop.f32.mrf.mxu0
        %3418 = vdwg.mxu0
        %v3420 = vsel %vm3208, %v3187, 0
        %v3423 = vsel %vm3212, %v2153, 0
        %3425 = vmatpush.bf16.msra.mxu0 0
        %3426 = vmatpush.bf16.msra.mxu0 0
        %3427 = vmatpush.bf16.msra.mxu0 0
        %3428 = vmatpush.bf16.msra.mxu0 0
        %3429 = vmatpush.bf16.msra.mxu0 0
        %3430 = vmatpush.bf16.msra.mxu0 0
        %3431 = vmatpush.bf16.msra.mxu0 0
        %3432 = vmatpush.bf16.msra.mxu0 %v3423
        %3433 = vmatmul.bf16.gmra.mxu0 %v3420
        %v3434 = vpop.f32.mrf.mxu0
        %v3435 = vadd.f32 0.0, %v3434
        %v3436 = vpop.f32.mrf.mxu0
        %3437 = vdwg.mxu0
        %v3439 = vsel %vm3208, %v3188, 0
        %v3442 = vsel %vm3212, %v2156, 0
        %3444 = vmatpush.bf16.msra.mxu0 0
        %3445 = vmatpush.bf16.msra.mxu0 0
        %3446 = vmatpush.bf16.msra.mxu0 0
        %3447 = vmatpush.bf16.msra.mxu0 0
        %3448 = vmatpush.bf16.msra.mxu0 0
        %3449 = vmatpush.bf16.msra.mxu0 0
        %3450 = vmatpush.bf16.msra.mxu0 0
        %3451 = vmatpush.bf16.msra.mxu0 %v3442
        %3452 = vmatmul.bf16.gmra.mxu0 %v3439
        %v3453 = vpop.f32.mrf.mxu0
        %v3454 = vadd.f32 0.0, %v3453
        %v3455 = vpop.f32.mrf.mxu0
        %3456 = vdwg.mxu0
        %v3458 = vsel %vm3208, %v3189, 0
        %v3461 = vsel %vm3212, %v2159, 0
        %3463 = vmatpush.bf16.msra.mxu0 0
        %3464 = vmatpush.bf16.msra.mxu0 0
        %3465 = vmatpush.bf16.msra.mxu0 0
        %3466 = vmatpush.bf16.msra.mxu0 0
        %3467 = vmatpush.bf16.msra.mxu0 0
        %3468 = vmatpush.bf16.msra.mxu0 0
        %3469 = vmatpush.bf16.msra.mxu0 0
        %3470 = vmatpush.bf16.msra.mxu0 %v3461
        %3471 = vmatmul.bf16.gmra.mxu0 %v3458
        %v3472 = vpop.f32.mrf.mxu0
        %v3473 = vadd.f32 0.0, %v3472
        %v3474 = vpop.f32.mrf.mxu0
        %3475 = vdwg.mxu0
        %v3477 = vsel %vm3208, %v3190, 0
        %v3480 = vsel %vm3212, %v2162, 0
        %3482 = vmatpush.bf16.msra.mxu0 0
        %3483 = vmatpush.bf16.msra.mxu0 0
        %3484 = vmatpush.bf16.msra.mxu0 0
        %3485 = vmatpush.bf16.msra.mxu0 0
        %3486 = vmatpush.bf16.msra.mxu0 0
        %3487 = vmatpush.bf16.msra.mxu0 0
        %3488 = vmatpush.bf16.msra.mxu0 0
        %3489 = vmatpush.bf16.msra.mxu0 %v3480
        %3490 = vmatmul.bf16.gmra.mxu0 %v3477
        %v3491 = vpop.f32.mrf.mxu0
        %v3492 = vadd.f32 0.0, %v3491
        %v3493 = vpop.f32.mrf.mxu0
        %3494 = vdwg.mxu0
        %v3496 = vsel %vm3208, %v3191, 0
        %v3499 = vsel %vm3212, %v2165, 0
        %3501 = vmatpush.bf16.msra.mxu0 0
        %3502 = vmatpush.bf16.msra.mxu0 0
        %3503 = vmatpush.bf16.msra.mxu0 0
        %3504 = vmatpush.bf16.msra.mxu0 0
        %3505 = vmatpush.bf16.msra.mxu0 0
        %3506 = vmatpush.bf16.msra.mxu0 0
        %3507 = vmatpush.bf16.msra.mxu0 0
        %3508 = vmatpush.bf16.msra.mxu0 %v3499
        %3509 = vmatmul.bf16.gmra.mxu0 %v3496
        %v3510 = vpop.f32.mrf.mxu0
        %v3511 = vadd.f32 0.0, %v3510
        %v3512 = vpop.f32.mrf.mxu0
        %3513 = vdwg.mxu0
        %v3515 = vsel %vm3208, %v3192, 0
        %v3518 = vsel %vm3212, %v2168, 0
        %3520 = vmatpush.bf16.msra.mxu0 0
        %3521 = vmatpush.bf16.msra.mxu0 0
        %3522 = vmatpush.bf16.msra.mxu0 0
        %3523 = vmatpush.bf16.msra.mxu0 0
        %3524 = vmatpush.bf16.msra.mxu0 0
        %3525 = vmatpush.bf16.msra.mxu0 0
        %3526 = vmatpush.bf16.msra.mxu0 0
        %3527 = vmatpush.bf16.msra.mxu0 %v3518
        %3528 = vmatmul.bf16.gmra.mxu0 %v3515
        %v3529 = vpop.f32.mrf.mxu0
        %v3530 = vadd.f32 0.0, %v3529
        %v3531 = vpop.f32.mrf.mxu0
        %3532 = vdwg.mxu0
        %v3534 = vsel %vm3208, %v3193, 0
        %v3537 = vsel %vm3212, %v2171, 0
        %3539 = vmatpush.bf16.msra.mxu0 0
        %3540 = vmatpush.bf16.msra.mxu0 0
        %3541 = vmatpush.bf16.msra.mxu0 0
        %3542 = vmatpush.bf16.msra.mxu0 0
        %3543 = vmatpush.bf16.msra.mxu0 0
        %3544 = vmatpush.bf16.msra.mxu0 0
        %3545 = vmatpush.bf16.msra.mxu0 0
        %3546 = vmatpush.bf16.msra.mxu0 %v3537
        %3547 = vmatmul.bf16.gmra.mxu0 %v3534
        %v3548 = vpop.f32.mrf.mxu0
        %v3549 = vadd.f32 0.0, %v3548
        %v3550 = vpop.f32.mrf.mxu0
        %3551 = vdwg.mxu0
        %v3553 = vsel %vm3208, %v3194, 0
        %v3556 = vsel %vm3212, %v2174, 0
        %3558 = vmatpush.bf16.msra.mxu0 0
        %3559 = vmatpush.bf16.msra.mxu0 0
        %3560 = vmatpush.bf16.msra.mxu0 0
        %3561 = vmatpush.bf16.msra.mxu0 0
        %3562 = vmatpush.bf16.msra.mxu0 0
        %3563 = vmatpush.bf16.msra.mxu0 0
        %3564 = vmatpush.bf16.msra.mxu0 0
        %3565 = vmatpush.bf16.msra.mxu0 %v3556
        %3566 = vmatmul.bf16.gmra.mxu0 %v3553
        %v3567 = vpop.f32.mrf.mxu0
        %v3568 = vadd.f32 0.0, %v3567
        %v3569 = vpop.f32.mrf.mxu0
        %3570 = vdwg.mxu0
        %v3572 = vsel %vm3208, %v3195, 0
        %v3575 = vsel %vm3212, %v2177, 0
        %3577 = vmatpush.bf16.msra.mxu0 0
        %3578 = vmatpush.bf16.msra.mxu0 0
        %3579 = vmatpush.bf16.msra.mxu0 0
        %3580 = vmatpush.bf16.msra.mxu0 0
        %3581 = vmatpush.bf16.msra.mxu0 0
        %3582 = vmatpush.bf16.msra.mxu0 0
        %3583 = vmatpush.bf16.msra.mxu0 0
        %3584 = vmatpush.bf16.msra.mxu0 %v3575
        %3585 = vmatmul.bf16.gmra.mxu0 %v3572
        %v3586 = vpop.f32.mrf.mxu0
        %v3587 = vadd.f32 0.0, %v3586
        %v3588 = vpop.f32.mrf.mxu0
        %3589 = vdwg.mxu0
        %v3591 = vsel %vm3208, %v3196, 0
        %v3594 = vsel %vm3212, %v2180, 0
        %3596 = vmatpush.bf16.msra.mxu0 0
        %3597 = vmatpush.bf16.msra.mxu0 0
        %3598 = vmatpush.bf16.msra.mxu0 0
        %3599 = vmatpush.bf16.msra.mxu0 0
        %3600 = vmatpush.bf16.msra.mxu0 0
        %3601 = vmatpush.bf16.msra.mxu0 0
        %3602 = vmatpush.bf16.msra.mxu0 0
        %3603 = vmatpush.bf16.msra.mxu0 %v3594
        %3604 = vmatmul.bf16.gmra.mxu0 %v3591
        %v3605 = vpop.f32.mrf.mxu0
        %v3606 = vadd.f32 0.0, %v3605
        %v3607 = vpop.f32.mrf.mxu0
        %3608 = vdwg.mxu0
        %v3610 = vsel %vm3208, %v3197, 0
        %v3613 = vsel %vm3212, %v2183, 0
        %3615 = vmatpush.bf16.msra.mxu0 0
        %3616 = vmatpush.bf16.msra.mxu0 0
        %3617 = vmatpush.bf16.msra.mxu0 0
        %3618 = vmatpush.bf16.msra.mxu0 0
        %3619 = vmatpush.bf16.msra.mxu0 0
        %3620 = vmatpush.bf16.msra.mxu0 0
        %3621 = vmatpush.bf16.msra.mxu0 0
        %3622 = vmatpush.bf16.msra.mxu0 %v3613
        %3623 = vmatmul.bf16.gmra.mxu0 %v3610
        %v3624 = vpop.f32.mrf.mxu0
        %v3625 = vadd.f32 0.0, %v3624
        %v3626 = vpop.f32.mrf.mxu0
        %3627 = vdwg.mxu0
        %v3629 = vsel %vm3208, %v3198, 0
        %v3632 = vsel %vm3212, %v2186, 0
        %3634 = vmatpush.bf16.msra.mxu0 0
        %3635 = vmatpush.bf16.msra.mxu0 0
        %3636 = vmatpush.bf16.msra.mxu0 0
        %3637 = vmatpush.bf16.msra.mxu0 0
        %3638 = vmatpush.bf16.msra.mxu0 0
        %3639 = vmatpush.bf16.msra.mxu0 0
        %3640 = vmatpush.bf16.msra.mxu0 0
        %3641 = vmatpush.bf16.msra.mxu0 %v3632
        %3642 = vmatmul.bf16.gmra.mxu0 %v3629
        %v3643 = vpop.f32.mrf.mxu0
        %v3644 = vadd.f32 0.0, %v3643
        %v3645 = vpop.f32.mrf.mxu0
        %3646 = vdwg.mxu0
        %v3648 = vsel %vm3208, %v3199, 0
        %v3651 = vsel %vm3212, %v2189, 0
        %3653 = vmatpush.bf16.msra.mxu0 0
        %3654 = vmatpush.bf16.msra.mxu0 0
        %3655 = vmatpush.bf16.msra.mxu0 0
        %3656 = vmatpush.bf16.msra.mxu0 0
        %3657 = vmatpush.bf16.msra.mxu0 0
        %3658 = vmatpush.bf16.msra.mxu0 0
        %3659 = vmatpush.bf16.msra.mxu0 0
        %3660 = vmatpush.bf16.msra.mxu0 %v3651
        %3661 = vmatmul.bf16.gmra.mxu0 %v3648
        %v3662 = vpop.f32.mrf.mxu0
        %v3663 = vadd.f32 0.0, %v3662
        %v3664 = vpop.f32.mrf.mxu0
        %3665 = vdwg.mxu0
        %v3667 = vsel %vm3208, %v3200, 0
        %v3670 = vsel %vm3212, %v2192, 0
        %3672 = vmatpush.bf16.msra.mxu0 0
        %3673 = vmatpush.bf16.msra.mxu0 0
        %3674 = vmatpush.bf16.msra.mxu0 0
        %3675 = vmatpush.bf16.msra.mxu0 0
        %3676 = vmatpush.bf16.msra.mxu0 0
        %3677 = vmatpush.bf16.msra.mxu0 0
        %3678 = vmatpush.bf16.msra.mxu0 0
        %3679 = vmatpush.bf16.msra.mxu0 %v3670
        %3680 = vmatmul.bf16.gmra.mxu0 %v3667
        %v3681 = vpop.f32.mrf.mxu0
        %v3682 = vadd.f32 0.0, %v3681
        %v3683 = vpop.f32.mrf.mxu0
        %3684 = vdwg.mxu0
        %v3686 = vsel %vm3208, %v3201, 0
        %v3689 = vsel %vm3212, %v2195, 0
        %3691 = vmatpush.bf16.msra.mxu0 0
        %3692 = vmatpush.bf16.msra.mxu0 0
        %3693 = vmatpush.bf16.msra.mxu0 0
        %3694 = vmatpush.bf16.msra.mxu0 0
        %3695 = vmatpush.bf16.msra.mxu0 0
        %3696 = vmatpush.bf16.msra.mxu0 0
        %3697 = vmatpush.bf16.msra.mxu0 0
        %3698 = vmatpush.bf16.msra.mxu0 %v3689
        %3699 = vmatmul.bf16.gmra.mxu0 %v3686
        %v3700 = vpop.f32.mrf.mxu0
        %v3701 = vadd.f32 0.0, %v3700
        %v3702 = vpop.f32.mrf.mxu0
        %3703 = vdwg.mxu0
        %v3705 = vsel %vm3208, %v3202, 0
        %v3708 = vsel %vm3212, %v2198, 0
        %3710 = vmatpush.bf16.msra.mxu0 0
        %3711 = vmatpush.bf16.msra.mxu0 0
        %3712 = vmatpush.bf16.msra.mxu0 0
        %3713 = vmatpush.bf16.msra.mxu0 0
        %3714 = vmatpush.bf16.msra.mxu0 0
        %3715 = vmatpush.bf16.msra.mxu0 0
        %3716 = vmatpush.bf16.msra.mxu0 0
        %3717 = vmatpush.bf16.msra.mxu0 %v3708
        %3718 = vmatmul.bf16.gmra.mxu0 %v3705
        %v3719 = vpop.f32.mrf.mxu0
        %v3720 = vadd.f32 0.0, %v3719
        %v3721 = vpop.f32.mrf.mxu0
        %3722 = vdwg.mxu0
        %v3724 = vsel %vm3208, %v3203, 0
        %v3727 = vsel %vm3212, %v2201, 0
        %3729 = vmatpush.bf16.msra.mxu0 0
        %3730 = vmatpush.bf16.msra.mxu0 0
        %3731 = vmatpush.bf16.msra.mxu0 0
        %3732 = vmatpush.bf16.msra.mxu0 0
        %3733 = vmatpush.bf16.msra.mxu0 0
        %3734 = vmatpush.bf16.msra.mxu0 0
        %3735 = vmatpush.bf16.msra.mxu0 0
        %3736 = vmatpush.bf16.msra.mxu0 %v3727
        %3737 = vmatmul.bf16.gmra.mxu0 %v3724
        %v3738 = vpop.f32.mrf.mxu0
        %v3739 = vadd.f32 0.0, %v3738
        %v3740 = vpop.f32.mrf.mxu0
        %3741 = vdwg.mxu0
        %v3743 = vsel %vm3208, %v3204, 0
        %v3746 = vsel %vm3212, %v2204, 0
        %3748 = vmatpush.bf16.msra.mxu0 0
        %3749 = vmatpush.bf16.msra.mxu0 0
        %3750 = vmatpush.bf16.msra.mxu0 0
        %3751 = vmatpush.bf16.msra.mxu0 0
        %3752 = vmatpush.bf16.msra.mxu0 0
        %3753 = vmatpush.bf16.msra.mxu0 0
        %3754 = vmatpush.bf16.msra.mxu0 0
        %3755 = vmatpush.bf16.msra.mxu0 %v3746
        %3756 = vmatmul.bf16.gmra.mxu0 %v3743
        %v3757 = vpop.f32.mrf.mxu0
        %v3758 = vadd.f32 0.0, %v3757
        %v3759 = vpop.f32.mrf.mxu0
        %3760 = vdwg.mxu0
        %v3762 = vsel %vm3208, %v3205, 0
        %v3765 = vsel %vm3212, %v2207, 0
        %3767 = vmatpush.bf16.msra.mxu0 0
        %3768 = vmatpush.bf16.msra.mxu0 0
        %3769 = vmatpush.bf16.msra.mxu0 0
        %3770 = vmatpush.bf16.msra.mxu0 0
        %3771 = vmatpush.bf16.msra.mxu0 0
        %3772 = vmatpush.bf16.msra.mxu0 0
        %3773 = vmatpush.bf16.msra.mxu0 0
        %3774 = vmatpush.bf16.msra.mxu0 %v3765
        %3775 = vmatmul.bf16.gmra.mxu0 %v3762
        %v3776 = vpop.f32.mrf.mxu0
        %v3777 = vadd.f32 0.0, %v3776
        %v3778 = vpop.f32.mrf.mxu0
        %3779 = vdwg.mxu0
        %v3781 = vsel %vm3208, %v3206, 0
        %v3784 = vsel %vm3212, %v2210, 0
        %3786 = vmatpush.bf16.msra.mxu0 0
        %3787 = vmatpush.bf16.msra.mxu0 0
        %3788 = vmatpush.bf16.msra.mxu0 0
        %3789 = vmatpush.bf16.msra.mxu0 0
        %3790 = vmatpush.bf16.msra.mxu0 0
        %3791 = vmatpush.bf16.msra.mxu0 0
        %3792 = vmatpush.bf16.msra.mxu0 0
        %3793 = vmatpush.bf16.msra.mxu0 %v3784
        %3794 = vmatmul.bf16.gmra.mxu0 %v3781
        %v3795 = vpop.f32.mrf.mxu0
        %v3796 = vadd.f32 0.0, %v3795
        %v3797 = vpop.f32.mrf.mxu0
        %3798 = vdwg.mxu0
        %v3800 = vsel %vm3208, %v3207, 0
        %v3803 = vsel %vm3212, %v2213, 0
        %3805 = vmatpush.bf16.msra.mxu0 0
        %3806 = vmatpush.bf16.msra.mxu0 0
        %3807 = vmatpush.bf16.msra.mxu0 0
        %3808 = vmatpush.bf16.msra.mxu0 0
        %3809 = vmatpush.bf16.msra.mxu0 0
        %3810 = vmatpush.bf16.msra.mxu0 0
        %3811 = vmatpush.bf16.msra.mxu0 0
        %3812 = vmatpush.bf16.msra.mxu0 %v3803
        %3813 = vmatmul.bf16.gmra.mxu0 %v3800
        %v3814 = vpop.f32.mrf.mxu0
        %v3815 = vadd.f32 0.0, %v3814
        %v3816 = vpop.f32.mrf.mxu0
        %3817 = vdwg.mxu0
        %v3818 = vrot.slane %v3264, 4
        %vm3819 = vcmask 1047556
        %v3820 = vsel %vm3819, %v3818, %v3226
        %v3822 = vunpack.c.l.s4 1983009808
        %v3823 = vunpack.c.0.s8 %v3822
        %v3824 = vperm.slane %v3820, %v3823
        %v3825 = vrot.slane %v3283, 4
        %v3826 = vsel %vm3819, %v3825, %v3245
        %v3828 = vunpack.c.l.s4 1983009808
        %v3829 = vunpack.c.0.s8 %v3828
        %v3830 = vperm.slane %v3826, %v3829
        %v3831 = vrot.slane %v3830, 4
        %v3832 = vsel %vm3819, %v3831, %v3824
        %v3833 = vrot.slane %v3824, 4
        %v3834 = vsel %vm3819, %v3830, %v3833
        %v3836 = vunpack.c.l.s4 1934713408
        %v3837 = vunpack.c.0.s8 %v3836
        %v3838 = vperm.slane %v3832, %v3837
        %v3840 = vunpack.c.l.s4 1934713408
        %v3841 = vunpack.c.0.s8 %v3840
        %v3842 = vperm.slane %v3834, %v3841
        %v3843 = vrot.slane %v3838, 4
        %v3844 = vsel %vm3819, 0.0, %v3843
        %v3845 = vrot.slane %v3842, 4
        %v3846 = vsel %vm3819, 0.0, %v3845
        %v3847 = vrot.slane %v3340, 4
        %v3848 = vsel %vm3819, %v3847, %v3302
        %v3850 = vunpack.c.l.s4 1983009808
        %v3851 = vunpack.c.0.s8 %v3850
        %v3852 = vperm.slane %v3848, %v3851
        %v3853 = vrot.slane %v3359, 4
        %v3854 = vsel %vm3819, %v3853, %v3321
        %v3856 = vunpack.c.l.s4 1983009808
        %v3857 = vunpack.c.0.s8 %v3856
        %v3858 = vperm.slane %v3854, %v3857
        %v3859 = vrot.slane %v3858, 4
        %v3860 = vsel %vm3819, %v3859, %v3852
        %v3861 = vrot.slane %v3852, 4
        %v3862 = vsel %vm3819, %v3858, %v3861
        %v3864 = vunpack.c.l.s4 1934713408
        %v3865 = vunpack.c.0.s8 %v3864
        %v3866 = vperm.slane %v3860, %v3865
        %v3868 = vunpack.c.l.s4 1934713408
        %v3869 = vunpack.c.0.s8 %v3868
        %v3870 = vperm.slane %v3862, %v3869
        %v3871 = vrot.slane %v3866, 4
        %v3872 = vsel %vm3819, 0.0, %v3871
        %v3873 = vrot.slane %v3870, 4
        %v3874 = vsel %vm3819, 0.0, %v3873
        %v3875 = vrot.slane %v3416, 4
        %v3876 = vsel %vm3819, %v3875, %v3378
        %v3878 = vunpack.c.l.s4 1983009808
        %v3879 = vunpack.c.0.s8 %v3878
        %v3880 = vperm.slane %v3876, %v3879
        %v3881 = vrot.slane %v3435, 4
        %v3882 = vsel %vm3819, %v3881, %v3397
        %v3884 = vunpack.c.l.s4 1983009808
        %v3885 = vunpack.c.0.s8 %v3884
        %v3886 = vperm.slane %v3882, %v3885
        %v3887 = vrot.slane %v3886, 4
        %v3888 = vsel %vm3819, %v3887, %v3880
        %v3889 = vrot.slane %v3880, 4
        %v3890 = vsel %vm3819, %v3886, %v3889
        %v3892 = vunpack.c.l.s4 1934713408
        %v3893 = vunpack.c.0.s8 %v3892
        %v3894 = vperm.slane %v3888, %v3893
        %v3896 = vunpack.c.l.s4 1934713408
        %v3897 = vunpack.c.0.s8 %v3896
        %v3898 = vperm.slane %v3890, %v3897
        %v3899 = vrot.slane %v3894, 4
        %v3900 = vsel %vm3819, 0.0, %v3899
        %v3901 = vrot.slane %v3898, 4
        %v3902 = vsel %vm3819, 0.0, %v3901
        %v3903 = vrot.slane %v3492, 4
        %v3904 = vsel %vm3819, %v3903, %v3454
        %v3906 = vunpack.c.l.s4 1983009808
        %v3907 = vunpack.c.0.s8 %v3906
        %v3908 = vperm.slane %v3904, %v3907
        %v3909 = vrot.slane %v3511, 4
        %v3910 = vsel %vm3819, %v3909, %v3473
        %v3912 = vunpack.c.l.s4 1983009808
        %v3913 = vunpack.c.0.s8 %v3912
        %v3914 = vperm.slane %v3910, %v3913
        %v3915 = vrot.slane %v3914, 4
        %v3916 = vsel %vm3819, %v3915, %v3908
        %v3917 = vrot.slane %v3908, 4
        %v3918 = vsel %vm3819, %v3914, %v3917
        %v3920 = vunpack.c.l.s4 1934713408
        %v3921 = vunpack.c.0.s8 %v3920
        %v3922 = vperm.slane %v3916, %v3921
        %v3924 = vunpack.c.l.s4 1934713408
        %v3925 = vunpack.c.0.s8 %v3924
        %v3926 = vperm.slane %v3918, %v3925
        %v3927 = vrot.slane %v3922, 4
        %v3928 = vsel %vm3819, 0.0, %v3927
        %v3929 = vrot.slane %v3926, 4
        %v3930 = vsel %vm3819, 0.0, %v3929
        %v3931 = vrot.slane %v3568, 4
        %v3932 = vsel %vm3819, %v3931, %v3530
        %v3934 = vunpack.c.l.s4 1983009808
        %v3935 = vunpack.c.0.s8 %v3934
        %v3936 = vperm.slane %v3932, %v3935
        %v3937 = vrot.slane %v3587, 4
        %v3938 = vsel %vm3819, %v3937, %v3549
        %v3940 = vunpack.c.l.s4 1983009808
        %v3941 = vunpack.c.0.s8 %v3940
        %v3942 = vperm.slane %v3938, %v3941
        %v3943 = vrot.slane %v3942, 4
        %v3944 = vsel %vm3819, %v3943, %v3936
        %v3945 = vrot.slane %v3936, 4
        %v3946 = vsel %vm3819, %v3942, %v3945
        %v3948 = vunpack.c.l.s4 1934713408
        %v3949 = vunpack.c.0.s8 %v3948
        %v3950 = vperm.slane %v3944, %v3949
        %v3952 = vunpack.c.l.s4 1934713408
        %v3953 = vunpack.c.0.s8 %v3952
        %v3954 = vperm.slane %v3946, %v3953
        %v3955 = vrot.slane %v3950, 4
        %v3956 = vsel %vm3819, 0.0, %v3955
        %v3957 = vrot.slane %v3954, 4
        %v3958 = vsel %vm3819, 0.0, %v3957
        %v3959 = vrot.slane %v3644, 4
        %v3960 = vsel %vm3819, %v3959, %v3606
        %v3962 = vunpack.c.l.s4 1983009808
        %v3963 = vunpack.c.0.s8 %v3962
        %v3964 = vperm.slane %v3960, %v3963
        %v3965 = vrot.slane %v3663, 4
        %v3966 = vsel %vm3819, %v3965, %v3625
        %v3968 = vunpack.c.l.s4 1983009808
        %v3969 = vunpack.c.0.s8 %v3968
        %v3970 = vperm.slane %v3966, %v3969
        %v3971 = vrot.slane %v3970, 4
        %v3972 = vsel %vm3819, %v3971, %v3964
        %v3973 = vrot.slane %v3964, 4
        %v3974 = vsel %vm3819, %v3970, %v3973
        %v3976 = vunpack.c.l.s4 1934713408
        %v3977 = vunpack.c.0.s8 %v3976
        %v3978 = vperm.slane %v3972, %v3977
        %v3980 = vunpack.c.l.s4 1934713408
        %v3981 = vunpack.c.0.s8 %v3980
        %v3982 = vperm.slane %v3974, %v3981
        %v3983 = vrot.slane %v3978, 4
        %v3984 = vsel %vm3819, 0.0, %v3983
        %v3985 = vrot.slane %v3982, 4
        %v3986 = vsel %vm3819, 0.0, %v3985
        %v3987 = vrot.slane %v3720, 4
        %v3988 = vsel %vm3819, %v3987, %v3682
        %v3990 = vunpack.c.l.s4 1983009808
        %v3991 = vunpack.c.0.s8 %v3990
        %v3992 = vperm.slane %v3988, %v3991
        %v3993 = vrot.slane %v3739, 4
        %v3994 = vsel %vm3819, %v3993, %v3701
        %v3996 = vunpack.c.l.s4 1983009808
        %v3997 = vunpack.c.0.s8 %v3996
        %v3998 = vperm.slane %v3994, %v3997
        %v3999 = vrot.slane %v3998, 4
        %v4000 = vsel %vm3819, %v3999, %v3992
        %v4001 = vrot.slane %v3992, 4
        %v4002 = vsel %vm3819, %v3998, %v4001
        %v4004 = vunpack.c.l.s4 1934713408
        %v4005 = vunpack.c.0.s8 %v4004
        %v4006 = vperm.slane %v4000, %v4005
        %v4008 = vunpack.c.l.s4 1934713408
        %v4009 = vunpack.c.0.s8 %v4008
        %v4010 = vperm.slane %v4002, %v4009
        %v4011 = vrot.slane %v4006, 4
        %v4012 = vsel %vm3819, 0.0, %v4011
        %v4013 = vrot.slane %v4010, 4
        %v4014 = vsel %vm3819, 0.0, %v4013
        %v4015 = vrot.slane %v3796, 4
        %v4016 = vsel %vm3819, %v4015, %v3758
        %v4018 = vunpack.c.l.s4 1983009808
        %v4019 = vunpack.c.0.s8 %v4018
        %v4020 = vperm.slane %v4016, %v4019
        %v4021 = vrot.slane %v3815, 4
        %v4022 = vsel %vm3819, %v4021, %v3777
        %v4024 = vunpack.c.l.s4 1983009808
        %v4025 = vunpack.c.0.s8 %v4024
        %v4026 = vperm.slane %v4022, %v4025
        %v4027 = vrot.slane %v4026, 4
        %v4028 = vsel %vm3819, %v4027, %v4020
        %v4029 = vrot.slane %v4020, 4
        %v4030 = vsel %vm3819, %v4026, %v4029
        %v4032 = vunpack.c.l.s4 1934713408
        %v4033 = vunpack.c.0.s8 %v4032
        %v4034 = vperm.slane %v4028, %v4033
        %v4036 = vunpack.c.l.s4 1934713408
        %v4037 = vunpack.c.0.s8 %v4036
        %v4038 = vperm.slane %v4030, %v4037
        %v4039 = vrot.slane %v4034, 4
        %v4040 = vsel %vm3819, 0.0, %v4039
        %v4041 = vrot.slane %v4038, 4
        %v4042 = vsel %vm3819, 0.0, %v4041
        %v4043 = vsel %vm3819, %v3845, %v3838
        %v4045 = vunpack.c.l.s4 1983009808
        %v4046 = vunpack.c.0.s8 %v4045
        %v4047 = vperm.slane %v4043, %v4046
        %v4048 = vrot.slane %v3846, 4
        %v4049 = vsel %vm3819, %v4048, %v3844
        %v4051 = vunpack.c.l.s4 1983009808
        %v4052 = vunpack.c.0.s8 %v4051
        %v4053 = vperm.slane %v4049, %v4052
        %v4054 = vsel %vm3819, %v3873, %v3866
        %v4056 = vunpack.c.l.s4 1983009808
        %v4057 = vunpack.c.0.s8 %v4056
        %v4058 = vperm.slane %v4054, %v4057
        %v4059 = vrot.slane %v3874, 4
        %v4060 = vsel %vm3819, %v4059, %v3872
        %v4062 = vunpack.c.l.s4 1983009808
        %v4063 = vunpack.c.0.s8 %v4062
        %v4064 = vperm.slane %v4060, %v4063
        %v4065 = vrot.slane %v4053, 4
        %v4066 = vsel %vm3819, %v4065, %v4047
        %v4067 = vrot.slane %v4047, 4
        %v4068 = vsel %vm3819, %v4053, %v4067
        %v4070 = vunpack.c.l.s4 1934713408
        %v4071 = vunpack.c.0.s8 %v4070
        %v4072 = vperm.slane %v4066, %v4071
        %v4074 = vunpack.c.l.s4 1934713408
        %v4075 = vunpack.c.0.s8 %v4074
        %v4076 = vperm.slane %v4068, %v4075
        %v4077 = vrot.slane %v4064, 4
        %v4078 = vsel %vm3819, %v4077, %v4058
        %v4079 = vrot.slane %v4058, 4
        %v4080 = vsel %vm3819, %v4064, %v4079
        %v4082 = vunpack.c.l.s4 1934713408
        %v4083 = vunpack.c.0.s8 %v4082
        %v4084 = vperm.slane %v4078, %v4083
        %v4086 = vunpack.c.l.s4 1934713408
        %v4087 = vunpack.c.0.s8 %v4086
        %v4088 = vperm.slane %v4080, %v4087
        %v4089 = vrot.slane %v4084, 4
        %v4090 = vsel %vm3819, %v4089, %v4072
        %v4091 = vrot.slane %v4072, 4
        %v4092 = vsel %vm3819, %v4084, %v4091
        %v4093 = vrot.slane %v4088, 4
        %v4094 = vsel %vm3819, %v4093, %v4076
        %v4095 = vrot.slane %v4076, 4
        %v4096 = vsel %vm3819, %v4088, %v4095
        %v4097 = vsel %vm3819, %v3901, %v3894
        %v4099 = vunpack.c.l.s4 1983009808
        %v4100 = vunpack.c.0.s8 %v4099
        %v4101 = vperm.slane %v4097, %v4100
        %v4102 = vrot.slane %v3902, 4
        %v4103 = vsel %vm3819, %v4102, %v3900
        %v4105 = vunpack.c.l.s4 1983009808
        %v4106 = vunpack.c.0.s8 %v4105
        %v4107 = vperm.slane %v4103, %v4106
        %v4108 = vsel %vm3819, %v3929, %v3922
        %v4110 = vunpack.c.l.s4 1983009808
        %v4111 = vunpack.c.0.s8 %v4110
        %v4112 = vperm.slane %v4108, %v4111
        %v4113 = vrot.slane %v3930, 4
        %v4114 = vsel %vm3819, %v4113, %v3928
        %v4116 = vunpack.c.l.s4 1983009808
        %v4117 = vunpack.c.0.s8 %v4116
        %v4118 = vperm.slane %v4114, %v4117
        %v4119 = vrot.slane %v4107, 4
        %v4120 = vsel %vm3819, %v4119, %v4101
        %v4121 = vrot.slane %v4101, 4
        %v4122 = vsel %vm3819, %v4107, %v4121
        %v4124 = vunpack.c.l.s4 1934713408
        %v4125 = vunpack.c.0.s8 %v4124
        %v4126 = vperm.slane %v4120, %v4125
        %v4128 = vunpack.c.l.s4 1934713408
        %v4129 = vunpack.c.0.s8 %v4128
        %v4130 = vperm.slane %v4122, %v4129
        %v4131 = vrot.slane %v4118, 4
        %v4132 = vsel %vm3819, %v4131, %v4112
        %v4133 = vrot.slane %v4112, 4
        %v4134 = vsel %vm3819, %v4118, %v4133
        %v4136 = vunpack.c.l.s4 1934713408
        %v4137 = vunpack.c.0.s8 %v4136
        %v4138 = vperm.slane %v4132, %v4137
        %v4140 = vunpack.c.l.s4 1934713408
        %v4141 = vunpack.c.0.s8 %v4140
        %v4142 = vperm.slane %v4134, %v4141
        %v4143 = vrot.slane %v4138, 4
        %v4144 = vsel %vm3819, %v4143, %v4126
        %v4145 = vrot.slane %v4126, 4
        %v4146 = vsel %vm3819, %v4138, %v4145
        %v4147 = vrot.slane %v4142, 4
        %v4148 = vsel %vm3819, %v4147, %v4130
        %v4149 = vrot.slane %v4130, 4
        %v4150 = vsel %vm3819, %v4142, %v4149
        %v4151 = vsel %vm3819, %v3957, %v3950
        %v4153 = vunpack.c.l.s4 1983009808
        %v4154 = vunpack.c.0.s8 %v4153
        %v4155 = vperm.slane %v4151, %v4154
        %v4156 = vrot.slane %v3958, 4
        %v4157 = vsel %vm3819, %v4156, %v3956
        %v4159 = vunpack.c.l.s4 1983009808
        %v4160 = vunpack.c.0.s8 %v4159
        %v4161 = vperm.slane %v4157, %v4160
        %v4162 = vsel %vm3819, %v3985, %v3978
        %v4164 = vunpack.c.l.s4 1983009808
        %v4165 = vunpack.c.0.s8 %v4164
        %v4166 = vperm.slane %v4162, %v4165
        %v4167 = vrot.slane %v3986, 4
        %v4168 = vsel %vm3819, %v4167, %v3984
        %v4170 = vunpack.c.l.s4 1983009808
        %v4171 = vunpack.c.0.s8 %v4170
        %v4172 = vperm.slane %v4168, %v4171
        %v4173 = vrot.slane %v4161, 4
        %v4174 = vsel %vm3819, %v4173, %v4155
        %v4175 = vrot.slane %v4155, 4
        %v4176 = vsel %vm3819, %v4161, %v4175
        %v4178 = vunpack.c.l.s4 1934713408
        %v4179 = vunpack.c.0.s8 %v4178
        %v4180 = vperm.slane %v4174, %v4179
        %v4182 = vunpack.c.l.s4 1934713408
        %v4183 = vunpack.c.0.s8 %v4182
        %v4184 = vperm.slane %v4176, %v4183
        %v4185 = vrot.slane %v4172, 4
        %v4186 = vsel %vm3819, %v4185, %v4166
        %v4187 = vrot.slane %v4166, 4
        %v4188 = vsel %vm3819, %v4172, %v4187
        %v4190 = vunpack.c.l.s4 1934713408
        %v4191 = vunpack.c.0.s8 %v4190
        %v4192 = vperm.slane %v4186, %v4191
        %v4194 = vunpack.c.l.s4 1934713408
        %v4195 = vunpack.c.0.s8 %v4194
        %v4196 = vperm.slane %v4188, %v4195
        %v4197 = vrot.slane %v4192, 4
        %v4198 = vsel %vm3819, %v4197, %v4180
        %v4199 = vrot.slane %v4180, 4
        %v4200 = vsel %vm3819, %v4192, %v4199
        %v4201 = vrot.slane %v4196, 4
        %v4202 = vsel %vm3819, %v4201, %v4184
        %v4203 = vrot.slane %v4184, 4
        %v4204 = vsel %vm3819, %v4196, %v4203
        %v4205 = vsel %vm3819, %v4013, %v4006
        %v4207 = vunpack.c.l.s4 1983009808
        %v4208 = vunpack.c.0.s8 %v4207
        %v4209 = vperm.slane %v4205, %v4208
        %v4210 = vrot.slane %v4014, 4
        %v4211 = vsel %vm3819, %v4210, %v4012
        %v4213 = vunpack.c.l.s4 1983009808
        %v4214 = vunpack.c.0.s8 %v4213
        %v4215 = vperm.slane %v4211, %v4214
        %v4216 = vsel %vm3819, %v4041, %v4034
        %v4218 = vunpack.c.l.s4 1983009808
        %v4219 = vunpack.c.0.s8 %v4218
        %v4220 = vperm.slane %v4216, %v4219
        %v4221 = vrot.slane %v4042, 4
        %v4222 = vsel %vm3819, %v4221, %v4040
        %v4224 = vunpack.c.l.s4 1983009808
        %v4225 = vunpack.c.0.s8 %v4224
        %v4226 = vperm.slane %v4222, %v4225
        %v4227 = vrot.slane %v4215, 4
        %v4228 = vsel %vm3819, %v4227, %v4209
        %v4229 = vrot.slane %v4209, 4
        %v4230 = vsel %vm3819, %v4215, %v4229
        %v4232 = vunpack.c.l.s4 1934713408
        %v4233 = vunpack.c.0.s8 %v4232
        %v4234 = vperm.slane %v4228, %v4233
        %v4236 = vunpack.c.l.s4 1934713408
        %v4237 = vunpack.c.0.s8 %v4236
        %v4238 = vperm.slane %v4230, %v4237
        %v4239 = vrot.slane %v4226, 4
        %v4240 = vsel %vm3819, %v4239, %v4220
        %v4241 = vrot.slane %v4220, 4
        %v4242 = vsel %vm3819, %v4226, %v4241
        %v4244 = vunpack.c.l.s4 1934713408
        %v4245 = vunpack.c.0.s8 %v4244
        %v4246 = vperm.slane %v4240, %v4245
        %v4248 = vunpack.c.l.s4 1934713408
        %v4249 = vunpack.c.0.s8 %v4248
        %v4250 = vperm.slane %v4242, %v4249
        %v4251 = vrot.slane %v4246, 4
        %v4252 = vsel %vm3819, %v4251, %v4234
        %v4253 = vrot.slane %v4234, 4
        %v4254 = vsel %vm3819, %v4246, %v4253
        %v4255 = vrot.slane %v4250, 4
        %v4256 = vsel %vm3819, %v4255, %v4238
        %v4257 = vrot.slane %v4238, 4
        %v4258 = vsel %vm3819, %v4250, %v4257
        %4263 = vrot.lane.b32.xlu0 %v4092, 16
        %v4264 = vpop.permute.xlu0 %4263
        %4265 = vrot.lane.b32.xlu0 %v4146, 16
        %v4266 = vpop.permute.xlu0 %4265
        %4267 = vrot.lane.b32.xlu0 %v4200, 16
        %v4268 = vpop.permute.xlu0 %4267
        %4269 = vrot.lane.b32.xlu0 %v4254, 16
        %v4270 = vpop.permute.xlu0 %4269
        %4279 = vrot.lane.b32.xlu0 %v4094, 32
        %v4280 = vpop.permute.xlu0 %4279
        %4281 = vrot.lane.b32.xlu0 %v4148, 32
        %v4282 = vpop.permute.xlu0 %4281
        %4283 = vrot.lane.b32.xlu0 %v4202, 32
        %v4284 = vpop.permute.xlu0 %4283
        %4285 = vrot.lane.b32.xlu0 %v4256, 32
        %v4286 = vpop.permute.xlu0 %4285
        %4295 = vrot.lane.b32.xlu0 %v4096, 48
        %v4296 = vpop.permute.xlu0 %4295
        %4297 = vrot.lane.b32.xlu0 %v4150, 48
        %v4298 = vpop.permute.xlu0 %4297
        %4299 = vrot.lane.b32.xlu0 %v4204, 48
        %v4300 = vpop.permute.xlu0 %4299
        %4301 = vrot.lane.b32.xlu0 %v4258, 48
        %v4302 = vpop.permute.xlu0 %4301
        %v4307 = vsel %vm2214, %v4090, %v4264
        %v4308 = vsel %vm2214, %v4144, %v4266
        %v4309 = vsel %vm2214, %v4198, %v4268
        %v4310 = vsel %vm2214, %v4252, %v4270
        %vm4311 = vcmask 261120
        %v4312 = vsel %vm4311, %v4307, %v4280
        %v4313 = vsel %vm4311, %v4308, %v4282
        %v4314 = vsel %vm4311, %v4309, %v4284
        %v4315 = vsel %vm4311, %v4310, %v4286
        %vm4316 = vcmask 392192
        %v4317 = vsel %vm4316, %v4312, %v4296
        %v4318 = vsel %vm4316, %v4313, %v4298
        %v4319 = vsel %vm4316, %v4314, %v4300
        %v4320 = vsel %vm4316, %v4315, %v4302
        %v4321 = vpack.c.bf16 %v4318, %v4317
        %v4322 = vpack.c.bf16 %v4320, %v4319
        %v4324 = vperm.slane %v370, 0
        %v4334 = vunpack.c.l.b16 %v362
        %v4335 = vunpack.c.l.b16 %v363
        %v4336 = vunpack.c.l.b16 %v364
        %v4337 = vunpack.c.l.b16 %v365
        %v4338 = vunpack.c.l.b16 %v366
        %v4339 = vunpack.c.l.b16 %v367
        %v4340 = vunpack.c.l.b16 %v368
        %v4341 = vunpack.c.l.b16 %v369
        %v4342 = vpack.c.b16 %v4335, %v4334
        %v4343 = vpack.c.b16 %v4337, %v4336
        %v4344 = vpack.c.b16 %v4339, %v4338
        %v4345 = vpack.c.b16 %v4341, %v4340
        %v4351 = vsel %vm650, %v4321, 0
        %v4354 = vsel %vm650, %v4322, 0
        %4356 = vmatpush.bf16.msra.mxu0 0
        %4357 = vmatpush.bf16.msra.mxu0 0
        %4358 = vmatpush.bf16.msra.mxu0 0
        %4359 = vmatpush.bf16.msra.mxu0 0
        %4360 = vmatpush.bf16.msra.mxu0 %v4345
        %4361 = vmatpush.bf16.msra.mxu0 %v4344
        %4362 = vmatpush.bf16.msra.mxu0 %v4343
        %4363 = vmatpush.bf16.msra.mxu0 %v4342
        %4364 = vmatmul.bf16.gmra.mxu0 %v4351
        %v4365 = vpop.f32.mrf.mxu0
        %v4366 = vadd.f32 %v4324, %v4365
        %v4367 = vpop.f32.mrf.mxu0
        %v4368 = vadd.f32 %v4324, %v4367
        %4369 = vmatmul.bf16.gmra.mxu0 %v4354
        %v4370 = vpop.f32.mrf.mxu0
        %v4371 = vadd.f32 %v4324, %v4370
        %v4372 = vpop.f32.mrf.mxu0
        %v4373 = vadd.f32 %v4324, %v4372
        %4374 = vdwg.mxu0
        %v4375 = vpack.c.bf16 %v4368, %v4366
        %v4376 = vpack.c.bf16 %v4373, %v4371
        %v4377 = vld [vmem:[#allocation4] sm:$0xf]
        %v4378 = vld [vmem:[#allocation4 + $0x4] sm:$0xf]
        %v4379 = vld [vmem:[#allocation4 + $0x8] sm:$0xf]
        %v4380 = vld [vmem:[#allocation4 + $0xc] sm:$0xf]
        %v4381 = vld [vmem:[#allocation4 + $0x10] sm:$0xf]
        %v4382 = vld [vmem:[#allocation4 + $0x14] sm:$0xf]
        %v4383 = vld [vmem:[#allocation4 + $0x18] sm:$0xf]
        %v4384 = vld [vmem:[#allocation4 + $0x1c] sm:$0xf]
        %v4385 = vld [vmem:[%s7] sm:$0x1]
        %v4387 = vperm.slane %v4385, 0
        %v4397 = vunpack.c.l.b16 %v4377
        %v4398 = vunpack.c.l.b16 %v4378
        %v4399 = vunpack.c.l.b16 %v4379
        %v4400 = vunpack.c.l.b16 %v4380
        %v4401 = vunpack.c.l.b16 %v4381
        %v4402 = vunpack.c.l.b16 %v4382
        %v4403 = vunpack.c.l.b16 %v4383
        %v4404 = vunpack.c.l.b16 %v4384
        %v4405 = vpack.c.b16 %v4398, %v4397
        %v4406 = vpack.c.b16 %v4400, %v4399
        %v4407 = vpack.c.b16 %v4402, %v4401
        %v4408 = vpack.c.b16 %v4404, %v4403
        %v4414 = vsel %vm650, %v4375, 0
        %v4417 = vsel %vm650, %v4376, 0
        %4419 = vmatpush.bf16.msra.mxu0 0
        %4420 = vmatpush.bf16.msra.mxu0 0
        %4421 = vmatpush.bf16.msra.mxu0 0
        %4422 = vmatpush.bf16.msra.mxu0 0
        %4423 = vmatpush.bf16.msra.mxu0 %v4408
        %4424 = vmatpush.bf16.msra.mxu0 %v4407
        %4425 = vmatpush.bf16.msra.mxu0 %v4406
        %4426 = vmatpush.bf16.msra.mxu0 %v4405
        %4427 = vmatmul.bf16.gmra.mxu0 %v4414
        %v4428 = vpop.f32.mrf.mxu0
        %v4429 = vadd.f32 %v4387, %v4428
        %v4430 = vpop.f32.mrf.mxu0
        %v4431 = vadd.f32 %v4387, %v4430
        %4432 = vmatmul.bf16.gmra.mxu0 %v4417
        %v4433 = vpop.f32.mrf.mxu0
        %v4434 = vadd.f32 %v4387, %v4433
        %v4435 = vpop.f32.mrf.mxu0
        %v4436 = vadd.f32 %v4387, %v4435
        %4437 = vdwg.mxu0
        %v4442 = vrot.slane %v4429, 4
        %v4443 = vrot.slane %v4431, 4
        %v4444 = vrot.slane %v4434, 4
        %v4445 = vrot.slane %v4436, 4
        %v4450 = vadd.f32 %v4429, %v344
        %v4451 = vadd.f32 %v4442, %v345
        %v4452 = vadd.f32 %v4431, %v346
        %v4453 = vadd.f32 %v4443, %v347
        %v4454 = vadd.f32 %v4434, %v348
        %v4455 = vadd.f32 %v4444, %v349
        %v4456 = vadd.f32 %v4436, %v350
        %v4457 = vadd.f32 %v4445, %v351
        %4458 = vst.msk [vmem:[%s341] sm:$0xf] %vm371, %v4450
        %4459 = vst.msk [vmem:[%s341 + $0x4] sm:$0xf] %vm371, %v4451
        %4460 = vst.msk [vmem:[%s341 + $0x8] sm:$0xf] %vm371, %v4452
        %4461 = vst.msk [vmem:[%s341 + $0xc] sm:$0xf] %vm371, %v4453
        %4462 = vst.msk [vmem:[%s341 + $0x10] sm:$0xf] %vm371, %v4454
        %4463 = vst.msk [vmem:[%s341 + $0x14] sm:$0xf] %vm371, %v4455
        %4464 = vst.msk [vmem:[%s341 + $0x18] sm:$0xf] %vm371, %v4456
        %4465 = vst.msk [vmem:[%s341 + $0x1c] sm:$0xf] %vm371, %v4457
        %s4466 = smul.u32 8, %s21
        %p4467 = scmp.lt.s32.totalorder %s4466, 15
        %s4468 = scalar_select %p4467, %s4466, 15
        %s4469 = smul.addr %s4468, 4
        %s4470 = scalar_lea.vmem %s8, %s4469
        // Predicated region
        $region61: #{block_forward.4} parent=51 // pred_check
          %p4471 = pneg %p212
        $region62: #{block_forward.4} parent=51 // pred_check_branch
          %4473 = sbr.rel (%p4471) target = $region64
        $region63: #{block_forward.4} parent=51 // pred_region
          %s4474 = smul.u32 8, %s21
        $region64: #{block_forward.4} parent=51 // pred_fallthru
          _
      $region52: #{block_forward.4} parent=5 // pred_fallthru
        _
      %p4475 = scmp.le.s32.totalorder 2, %s16
      // Predicated region
      $region65: #{block_forward.4} parent=5 // pred_check
        %p4476 = pneg %p4475
      $region66: #{block_forward.4} parent=5 // pred_check_branch
        %4478 = sbr.rel (%p4476) target = $region68
      $region67: #{block_forward.4} parent=5 // pred_region
        %s4479 = ssub.s32 %s16, 2
        // Predicated region
        $region69: #{block_forward.4} parent=67 // pred_check
          %p4480 = pneg %p218
        $region70: #{block_forward.4} parent=67 // pred_check_branch
          %4482 = sbr.rel (%p4480) target = $region72
        $region71: #{block_forward.4} parent=67 // pred_region
          %s4483 = smul.u32 8, %s22
          %p4484 = scmp.lt.s32.totalorder %s4483, 15
          %s4485 = scalar_select %p4484, %s4483, 15
          %s4486 = smul.addr %s4485, 4
          %s4487 = scalar_lea.vmem %s8, %s4486
        $region72: #{block_forward.4} parent=67 // pred_fallthru
          _
      $region68: #{block_forward.4} parent=5 // pred_fallthru
        _
    $region6: #{block_forward.4} parent=1 // loop_footer
      %s20 = sadd.s32 1, %s16
    $region7: #{block_forward.4} parent=1 // loop_footer_branch
      %15 = sbr.rel target = $region3
    $region8: #{block_forward.4} parent=1 // loop_exit
      _
    %4488 = vsyncpa [#allocation3], 1
    %s4489 = scalar_lea.sflag [#allocation3], 1
    %4490 = vsyncpa %s4489, 1
    %4491 = vsyncpa [#allocation5], 1

</llo_original>
